<compile_context>
chip_gen: v5e
topology: v5e:2x2
jax: 0.10.0
libtpu: 0.0.40
codegen_flags: <defaults>
</compile_context>

<pallas_src>
import functools

import jax
import jax.numpy as jnp
import numpy as np
from jax.experimental import pallas as pl
from jax.experimental.pallas import tpu as pltpu


# ----------------------------------------------------------------------------
# Host-built constants (scatter matrix for ConvTranspose2d(k=2,s=2) and the 9
# edge-validity masks for the padded 3x3 convs).  Built with numpy at trace
# time, embedded as constants, DMA'd into VMEM exactly once.
# ----------------------------------------------------------------------------
def _build_upconv_scatter(hi, wi, bpi):
    ho, wo = 2 * hi, 2 * wi
    hw_in, hw = hi * wi, ho * wo
    sel = np.zeros((4, bpi, hw_in, bpi, hw), np.float32)
    r = np.arange(hi)[:, None]
    c = np.arange(wi)[None, :]
    p = (r * wi + c).reshape(-1)
    for ki in range(2):
        for kj in range(2):
            q = ((2 * r + ki) * wo + (2 * c + kj)).reshape(-1)
            for b in range(bpi):
                sel[ki * 2 + kj, b, p, b, q] = 1.0
    # rows ordered (parity kij, image b, src pixel p); cols ordered (b, dst q)
    return sel.reshape(4 * bpi * hw_in, bpi * hw)


def _build_edge_masks(hi, wi, bpi):
    ho, wo = 2 * hi, 2 * wi
    y = np.arange(ho)[:, None]
    x = np.arange(wo)[None, :]
    m = np.zeros((9, ho * wo), np.float32)
    for t in range(9):
        dy, dx = t // 3 - 1, t % 3 - 1
        m[t] = ((x + dx >= 0) & (x + dx < wo) &
                (y + dy >= 0) & (y + dy < ho)).reshape(-1).astype(np.float32)
    return np.tile(m, (1, bpi))           # identical mask per image on lanes


def _pick_images_per_block(n, hw_in):
    # Prefer the smallest group that (a) divides n, (b) keeps the x-load lane
    # block >=128 wide, and (c) leaves >=2 grid blocks (both v7x TensorCores
    # get work); otherwise fall back to one fat block (block == full array, so
    # no (8,128) alignment issue).
    for cand in (1, 2, 4, 8):
        if n % cand == 0 and (cand * hw_in) % 128 == 0 and n // cand >= 2:
            return cand
    return n


# ----------------------------------------------------------------------------
# Fused Pallas kernel.  Everything is 2-D channel-major: (channels, B_blk*H*W)
# with the flattened (image, spatial) axis on the 128-lane axis.
# ----------------------------------------------------------------------------
def _upblock_kernel(x_ref, crop_ref, sel_ref, vmask_ref, wup_ref, bup_ref,
                    w1_ref, b1_ref, w2_ref, b2_ref, o_ref, *, wo):
    f32 = jnp.float32
    x = x_ref[...].astype(f32)           # (cin,   Lin)  Lin = bpi*hi*wi
    crop = crop_ref[...].astype(f32)     # (cb,    L)    L   = bpi*ho*wo
    sel = sel_ref[...].astype(f32)       # (4*Lin, L)    constant 0/1 scatter
    vmask = vmask_ref[...].astype(f32)   # (9,     L)    constant edge masks
    l = crop.shape[-1]

    # ---- ConvTranspose2d(k=2, s=2): 4 per-parity channel matmuls, then ONE
    #      fused scatter matmul (K = 4*Lin) interleaves them onto the 2x grid.
    # TODO(synk): cast operands to bf16 on v6e/v7x once the real-size path is
    #             implemented; kept f32 here for bit-close reference matching.
    pieces = [jnp.dot(wup_ref[k].astype(f32), x, preferred_element_type=f32)
              for k in range(4)]                               # 4 x (cout, Lin)
    pieces_cat = jnp.concatenate(pieces, axis=1)               # (cout, 4*Lin)
    up = jnp.dot(pieces_cat, sel, preferred_element_type=f32)  # (cout, L)
    up = up + bup_ref[...].astype(f32)

    # ---- materialize cat([up, crop]) once: shared rolls/masks, K=8 per tap.
    cat = jnp.concatenate([up, crop], axis=0)                  # (cout+cb, L)

    # ---- 3x3 / pad=1 conv + ReLU: 9 shifted+masked taps stacked along K,
    #      single matmul.  Edge masks make the cross-image lane wrap harmless.
    def conv3x3_relu(inp, w_ref, b_ref):
        taps = []
        for t in range(9):
            dy, dx = t // 3 - 1, t % 3 - 1
            if dy == 0 and dx == 0:
                taps.append(inp)
            else:
                shift = (-(dy * wo + dx)) % l
                taps.append(pltpu.roll(inp, shift, axis=1) * vmask[t:t + 1, :])
        stacked = jnp.concatenate(taps, axis=0)                # (9*C, L)
        acc = jnp.dot(w_ref[...].astype(f32), stacked,
                      preferred_element_type=f32)              # (cout, L)
        return jnp.maximum(acc + b_ref[...].astype(f32), 0.0)

    h1 = conv3x3_relu(cat, w1_ref, b1_ref)                     # conv1 + ReLU
    out = conv3x3_relu(h1, w2_ref, b2_ref)                     # conv2 + ReLU
    o_ref[...] = out.astype(o_ref.dtype)


# ----------------------------------------------------------------------------
# Wrapper: NCHW in -> NCHW out; wrapper only does the static center-crop slice
# plus layout plumbing (channel-major, batch folded onto the lane axis).
# ----------------------------------------------------------------------------
def unet_up_block_forward(x_nchw, bridge_nchw, params):
    n, cin, hi, wi = x_nchw.shape
    cout = params["up_w"].shape[1]
    cb = bridge_nchw.shape[1]
    ho, wo = 2 * hi, 2 * wi
    hw_in, hw = hi * wi, ho * wo

    bpi = _pick_images_per_block(n, hw_in)     # images per grid step
    n_groups = n // bpi
    lin, l = bpi * hw_in, bpi * hw

    # center_crop(bridge, up.shape[2:]) -- static slice.
    bh, bw = bridge_nchw.shape[2], bridge_nchw.shape[3]
    dy0, dx0 = (bh - ho) // 2, (bw - wo) // 2
    crop = jax.lax.slice(bridge_nchw, (0, 0, dy0, dx0),
                         (n, cb, dy0 + ho, dx0 + wo))
    crop_f = jnp.transpose(crop.reshape(n, cb, hw), (1, 0, 2)).reshape(cb, n * hw)
    x_f = jnp.transpose(x_nchw.reshape(n, cin, hw_in),
                        (1, 0, 2)).reshape(cin, n * hw_in)

    # Repack weights (PyTorch layouts) into per-tap / stacked-K matrices.
    wup = jnp.transpose(params["up_w"], (2, 3, 1, 0)).reshape(4, cout, cin)
    bup = params["up_b"].reshape(cout, 1)
    w1s = jnp.transpose(params["c1_w"], (0, 2, 3, 1)).reshape(cout, 9 * (cout + cb))
    b1 = params["c1_b"].reshape(cout, 1)
    w2s = jnp.transpose(params["c2_w"], (0, 2, 3, 1)).reshape(cout, 9 * cout)
    b2 = params["c2_b"].reshape(cout, 1)

    # Host-built constants (constant index_map -> DMA'd once, stay resident).
    sel = jnp.asarray(_build_upconv_scatter(hi, wi, bpi))      # (4*lin, l)
    vmask = jnp.asarray(_build_edge_masks(hi, wi, bpi))        # (9, l)

    flops = n_groups * (4 * 2 * cout * cin * lin
                        + 2 * cout * (4 * lin) * l
                        + 2 * cout * (9 * (cout + cb)) * l
                        + 2 * cout * (9 * cout) * l)
    bytes_accessed = 4 * (x_f.size + crop_f.size + n * cout * hw + sel.size
                          + vmask.size + wup.size + bup.size + w1s.size
                          + b1.size + w2s.size + b2.size)

    kern = functools.partial(_upblock_kernel, wo=wo)
    out_f = pl.pallas_call(
        kern,
        out_shape=jax.ShapeDtypeStruct((cout, n * hw), x_nchw.dtype),
        grid=(n_groups,),
        in_specs=[
            pl.BlockSpec((cin, lin), lambda i: (0, i)),
            pl.BlockSpec((cb, l), lambda i: (0, i)),
            pl.BlockSpec((4 * lin, l), lambda i: (0, 0)),
            pl.BlockSpec((9, l), lambda i: (0, 0)),
            pl.BlockSpec((4, cout, cin), lambda i: (0, 0, 0)),
            pl.BlockSpec((cout, 1), lambda i: (0, 0)),
            pl.BlockSpec((cout, 9 * (cout + cb)), lambda i: (0, 0)),
            pl.BlockSpec((cout, 1), lambda i: (0, 0)),
            pl.BlockSpec((cout, 9 * cout), lambda i: (0, 0)),
            pl.BlockSpec((cout, 1), lambda i: (0, 0)),
        ],
        out_specs=pl.BlockSpec((cout, l), lambda i: (0, i)),
        compiler_params=pltpu.CompilerParams(dimension_semantics=("parallel",)),
        cost_estimate=pl.CostEstimate(flops=int(flops), transcendentals=0,
                                      bytes_accessed=int(bytes_accessed)),
    )(x_f, crop_f, sel, vmask, wup, bup, w1s, b1, w2s, b2)

    return jnp.transpose(out_f.reshape(cout, n, ho, wo), (1, 0, 2, 3))


# ----------------------------------------------------------------------------
# Pure-JAX reference (lax.conv, NCHW) for correctness checking.
# ----------------------------------------------------------------------------
def reference_forward(x, bridge, params):
    dn = ("NCHW", "OIHW", "NCHW")

    # transposed conv = conv with lhs_dilation=2, flipped kernel, pad k-1=1
    wt = params["up_w"]                                       # (Cin, Cout, 2, 2)
    w_up = jnp.flip(wt, axis=(2, 3)).transpose(1, 0, 2, 3)    # (Cout, Cin, 2, 2)
    up = jax.lax.conv_general_dilated(
        x, w_up, window_strides=(1, 1), padding=((1, 1), (1, 1)),
        lhs_dilation=(2, 2), dimension_numbers=dn)
    up = up + params["up_b"][None, :, None, None]

    ho, wo = up.shape[2], up.shape[3]
    bh, bw = bridge.shape[2], bridge.shape[3]
    dy, dx = (bh - ho) // 2, (bw - wo) // 2
    crop1 = bridge[:, :, dy:dy + ho, dx:dx + wo]
    cat = jnp.concatenate([up, crop1], axis=1)

    def conv_relu(inp, w, b):
        y = jax.lax.conv_general_dilated(inp, w, (1, 1), ((1, 1), (1, 1)),
                                         dimension_numbers=dn)
        return jnp.maximum(y + b[None, :, None, None], 0.0)

    out = conv_relu(cat, params["c1_w"], params["c1_b"])
    out = conv_relu(out, params["c2_w"], params["c2_b"])
    return out


# ----------------------------------------------------------------------------
# main
# ----------------------------------------------------------------------------
if __name__ == "__main__":
    # Keep f32 dots/convs at full precision so kernel and reference agree.
    jax.config.update("jax_default_matmul_precision", "highest")

    # UNetUpBlock(in_size=8, out_size=4, up_mode='upconv', padding=True,
    #             batch_norm=False, attention=False)
    in_size, out_size = 8, 4
    batch, hi, wi = 2, 8, 8
    bridge_c, bridge_hw = in_size - out_size, 18   # bridge larger -> center_crop

    key = jax.random.PRNGKey(0)
    ks = jax.random.split(key, 8)

    def init(k, shape, fan_in):
        return jax.random.normal(k, shape, jnp.float32) / np.sqrt(fan_in)

    params = {
        # PyTorch layouts: ConvTranspose2d (Cin, Cout, kH, kW); Conv2d OIHW.
        "up_w": init(ks[0], (in_size, out_size, 2, 2), in_size * 4),
        "up_b": init(ks[1], (out_size,), in_size * 4),
        "c1_w": init(ks[2], (out_size, in_size, 3, 3), in_size * 9),
        "c1_b": init(ks[3], (out_size,), in_size * 9),
        "c2_w": init(ks[4], (out_size, out_size, 3, 3), out_size * 9),
        "c2_b": init(ks[5], (out_size,), out_size * 9),
    }

    x = jax.random.normal(ks[6], (batch, in_size, hi, wi), jnp.float32)
    bridge = jax.random.normal(ks[7], (batch, bridge_c, bridge_hw, bridge_hw),
                               jnp.float32)

    out = jax.block_until_ready(jax.jit(unet_up_block_forward)(x, bridge, params))
    ref = jax.block_until_ready(reference_forward(x, bridge, params))

    assert out.shape == (batch, out_size, 2 * hi, 2 * wi), out.shape
    np.testing.assert_allclose(np.asarray(out), np.asarray(ref),
                               rtol=1e-4, atol=1e-4)

    print("KERNEL_OK")
</pallas_src>

<mosaic_0001>
module attributes {stable_mosaic.version = 11 : i64} {
  func.func @_upblock_kernel(%arg0: i32, %arg1: memref<8x128xf32, #tpu.memory_space<vmem>>, %arg2: memref<4x512xf32, #tpu.memory_space<vmem>>, %arg3: memref<512x512xf32, #tpu.memory_space<vmem>>, %arg4: memref<9x512xf32, #tpu.memory_space<vmem>>, %arg5: memref<4x4x8xf32, #tpu.memory_space<vmem>>, %arg6: memref<4x1xf32, #tpu.memory_space<vmem>>, %arg7: memref<4x72xf32, #tpu.memory_space<vmem>>, %arg8: memref<4x1xf32, #tpu.memory_space<vmem>>, %arg9: memref<4x36xf32, #tpu.memory_space<vmem>>, %arg10: memref<4x1xf32, #tpu.memory_space<vmem>>, %arg11: memref<4x512xf32, #tpu.memory_space<vmem>>) attributes {dimension_semantics = [#tpu.dimension_semantics<parallel>], iteration_bounds = array<i64: 1>, scalar_prefetch = 0 : i64, scratch_operands = 0 : i64, tpu.core_type = #tpu.core_type<tc>, window_params = [{transform_indices = @transform_0, window_bounds = array<i64: 8, 128>}, {transform_indices = @transform_1, window_bounds = array<i64: 4, 512>}, {pipeline_mode = #tpu.pipeline_mode<synchronous>, transform_indices = @transform_2, window_bounds = array<i64: 512, 512>}, {pipeline_mode = #tpu.pipeline_mode<synchronous>, transform_indices = @transform_3, window_bounds = array<i64: 9, 512>}, {pipeline_mode = #tpu.pipeline_mode<synchronous>, transform_indices = @transform_4, window_bounds = array<i64: 4, 4, 8>}, {pipeline_mode = #tpu.pipeline_mode<synchronous>, transform_indices = @transform_5, window_bounds = array<i64: 4, 1>}, {pipeline_mode = #tpu.pipeline_mode<synchronous>, transform_indices = @transform_6, window_bounds = array<i64: 4, 72>}, {pipeline_mode = #tpu.pipeline_mode<synchronous>, transform_indices = @transform_7, window_bounds = array<i64: 4, 1>}, {pipeline_mode = #tpu.pipeline_mode<synchronous>, transform_indices = @transform_8, window_bounds = array<i64: 4, 36>}, {pipeline_mode = #tpu.pipeline_mode<synchronous>, transform_indices = @transform_9, window_bounds = array<i64: 4, 1>}, {transform_indices = @transform_10, window_bounds = array<i64: 4, 512>}]} {
    %c0 = arith.constant 0 : index
    %c0_0 = arith.constant 0 : index
    %0 = vector.load %arg1[%c0, %c0_0] : memref<8x128xf32, #tpu.memory_space<vmem>>, vector<8x128xf32>
    %c0_1 = arith.constant 0 : index
    %c0_2 = arith.constant 0 : index
    %1 = vector.load %arg2[%c0_1, %c0_2] : memref<4x512xf32, #tpu.memory_space<vmem>>, vector<4x512xf32>
    %c0_3 = arith.constant 0 : index
    %c0_4 = arith.constant 0 : index
    %2 = vector.load %arg3[%c0_3, %c0_4] : memref<512x512xf32, #tpu.memory_space<vmem>>, vector<512x512xf32>
    %c0_5 = arith.constant 0 : index
    %c0_6 = arith.constant 0 : index
    %3 = vector.load %arg4[%c0_5, %c0_6] : memref<9x512xf32, #tpu.memory_space<vmem>>, vector<9x512xf32>
    %c0_7 = arith.constant 0 : index
    %c0_8 = arith.constant 0 : index
    %c0_9 = arith.constant 0 : index
    %4 = vector.load %arg5[%c0_7, %c0_8, %c0_9] : memref<4x4x8xf32, #tpu.memory_space<vmem>>, vector<1x4x8xf32>
    %5 = vector.shape_cast %4 : vector<1x4x8xf32> to vector<4x8xf32>
    %cst = arith.constant dense<0.000000e+00> : vector<4x128xf32>
    %6 = tpu.matmul %5, %0, %cst {dimension_numbers = #tpu.dot_dimension_numbers<[1], [0], [0], [1], [0, 0, 1, 1], [], []>, precision = #tpu.contract_precision<fp32>} : vector<4x8xf32>, vector<8x128xf32>, vector<4x128xf32> -> vector<4x128xf32>
    %c1 = arith.constant 1 : index
    %c0_10 = arith.constant 0 : index
    %c0_11 = arith.constant 0 : index
    %7 = vector.load %arg5[%c1, %c0_10, %c0_11] : memref<4x4x8xf32, #tpu.memory_space<vmem>>, vector<1x4x8xf32>
    %8 = vector.shape_cast %7 : vector<1x4x8xf32> to vector<4x8xf32>
    %cst_12 = arith.constant dense<0.000000e+00> : vector<4x128xf32>
    %9 = tpu.matmul %8, %0, %cst_12 {dimension_numbers = #tpu.dot_dimension_numbers<[1], [0], [0], [1], [0, 0, 1, 1], [], []>, precision = #tpu.contract_precision<fp32>} : vector<4x8xf32>, vector<8x128xf32>, vector<4x128xf32> -> vector<4x128xf32>
    %c2 = arith.constant 2 : index
    %c0_13 = arith.constant 0 : index
    %c0_14 = arith.constant 0 : index
    %10 = vector.load %arg5[%c2, %c0_13, %c0_14] : memref<4x4x8xf32, #tpu.memory_space<vmem>>, vector<1x4x8xf32>
    %11 = vector.shape_cast %10 : vector<1x4x8xf32> to vector<4x8xf32>
    %cst_15 = arith.constant dense<0.000000e+00> : vector<4x128xf32>
    %12 = tpu.matmul %11, %0, %cst_15 {dimension_numbers = #tpu.dot_dimension_numbers<[1], [0], [0], [1], [0, 0, 1, 1], [], []>, precision = #tpu.contract_precision<fp32>} : vector<4x8xf32>, vector<8x128xf32>, vector<4x128xf32> -> vector<4x128xf32>
    %c3 = arith.constant 3 : index
    %c0_16 = arith.constant 0 : index
    %c0_17 = arith.constant 0 : index
    %13 = vector.load %arg5[%c3, %c0_16, %c0_17] : memref<4x4x8xf32, #tpu.memory_space<vmem>>, vector<1x4x8xf32>
    %14 = vector.shape_cast %13 : vector<1x4x8xf32> to vector<4x8xf32>
    %cst_18 = arith.constant dense<0.000000e+00> : vector<4x128xf32>
    %15 = tpu.matmul %14, %0, %cst_18 {dimension_numbers = #tpu.dot_dimension_numbers<[1], [0], [0], [1], [0, 0, 1, 1], [], []>, precision = #tpu.contract_precision<fp32>} : vector<4x8xf32>, vector<8x128xf32>, vector<4x128xf32> -> vector<4x128xf32>
    %16 = tpu.concatenate %6, %9, %12, %15 in 1 : vector<4x128xf32>, vector<4x128xf32>, vector<4x128xf32>, vector<4x128xf32> -> vector<4x512xf32>
    %cst_19 = arith.constant dense<0.000000e+00> : vector<4x512xf32>
    %17 = tpu.matmul %16, %2, %cst_19 {dimension_numbers = #tpu.dot_dimension_numbers<[1], [0], [0], [1], [0, 0, 1, 1], [], []>, precision = #tpu.contract_precision<fp32>} : vector<4x512xf32>, vector<512x512xf32>, vector<4x512xf32> -> vector<4x512xf32>
    %c0_20 = arith.constant 0 : index
    %c0_21 = arith.constant 0 : index
    %18 = vector.load %arg6[%c0_20, %c0_21] : memref<4x1xf32, #tpu.memory_space<vmem>>, vector<4x1xf32>
    %19 = vector.broadcast %18 : vector<4x1xf32> to vector<4x512xf32>
    %20 = arith.addf %17, %19 : vector<4x512xf32>
    %21 = tpu.concatenate %20, %1 in 0 : vector<4x512xf32>, vector<4x512xf32> -> vector<8x512xf32>
    %c17_i32 = arith.constant 17 : i32
    %22 = tpu.dynamic_rotate %21 by %c17_i32 dim 1 : vector<8x512xf32>, i32 -> vector<8x512xf32>
    %23 = vector.extract_strided_slice %3 {offsets = [0, 0], sizes = [1, 512], strides = [1, 1]} : vector<9x512xf32> to vector<1x512xf32>
    %24 = vector.broadcast %23 : vector<1x512xf32> to vector<8x512xf32>
    %25 = arith.mulf %22, %24 : vector<8x512xf32>
    %c16_i32 = arith.constant 16 : i32
    %26 = tpu.dynamic_rotate %21 by %c16_i32 dim 1 : vector<8x512xf32>, i32 -> vector<8x512xf32>
    %27 = vector.extract_strided_slice %3 {offsets = [1, 0], sizes = [1, 512], strides = [1, 1]} : vector<9x512xf32> to vector<1x512xf32>
    %28 = vector.broadcast %27 : vector<1x512xf32> to vector<8x512xf32>
    %29 = arith.mulf %26, %28 : vector<8x512xf32>
    %c15_i32 = arith.constant 15 : i32
    %30 = tpu.dynamic_rotate %21 by %c15_i32 dim 1 : vector<8x512xf32>, i32 -> vector<8x512xf32>
    %31 = vector.extract_strided_slice %3 {offsets = [2, 0], sizes = [1, 512], strides = [1, 1]} : vector<9x512xf32> to vector<1x512xf32>
    %32 = vector.broadcast %31 : vector<1x512xf32> to vector<8x512xf32>
    %33 = arith.mulf %30, %32 : vector<8x512xf32>
    %c1_i32 = arith.constant 1 : i32
    %34 = tpu.dynamic_rotate %21 by %c1_i32 dim 1 : vector<8x512xf32>, i32 -> vector<8x512xf32>
    %35 = vector.extract_strided_slice %3 {offsets = [3, 0], sizes = [1, 512], strides = [1, 1]} : vector<9x512xf32> to vector<1x512xf32>
    %36 = vector.broadcast %35 : vector<1x512xf32> to vector<8x512xf32>
    %37 = arith.mulf %34, %36 : vector<8x512xf32>
    %c511_i32 = arith.constant 511 : i32
    %38 = tpu.dynamic_rotate %21 by %c511_i32 dim 1 : vector<8x512xf32>, i32 -> vector<8x512xf32>
    %39 = vector.extract_strided_slice %3 {offsets = [5, 0], sizes = [1, 512], strides = [1, 1]} : vector<9x512xf32> to vector<1x512xf32>
    %40 = vector.broadcast %39 : vector<1x512xf32> to vector<8x512xf32>
    %41 = arith.mulf %38, %40 : vector<8x512xf32>
    %c497_i32 = arith.constant 497 : i32
    %42 = tpu.dynamic_rotate %21 by %c497_i32 dim 1 : vector<8x512xf32>, i32 -> vector<8x512xf32>
    %43 = vector.extract_strided_slice %3 {offsets = [6, 0], sizes = [1, 512], strides = [1, 1]} : vector<9x512xf32> to vector<1x512xf32>
    %44 = vector.broadcast %43 : vector<1x512xf32> to vector<8x512xf32>
    %45 = arith.mulf %42, %44 : vector<8x512xf32>
    %c496_i32 = arith.constant 496 : i32
    %46 = tpu.dynamic_rotate %21 by %c496_i32 dim 1 : vector<8x512xf32>, i32 -> vector<8x512xf32>
    %47 = vector.extract_strided_slice %3 {offsets = [7, 0], sizes = [1, 512], strides = [1, 1]} : vector<9x512xf32> to vector<1x512xf32>
    %48 = vector.broadcast %47 : vector<1x512xf32> to vector<8x512xf32>
    %49 = arith.mulf %46, %48 : vector<8x512xf32>
    %c495_i32 = arith.constant 495 : i32
    %50 = tpu.dynamic_rotate %21 by %c495_i32 dim 1 : vector<8x512xf32>, i32 -> vector<8x512xf32>
    %51 = vector.extract_strided_slice %3 {offsets = [8, 0], sizes = [1, 512], strides = [1, 1]} : vector<9x512xf32> to vector<1x512xf32>
    %52 = vector.broadcast %51 : vector<1x512xf32> to vector<8x512xf32>
    %53 = arith.mulf %50, %52 : vector<8x512xf32>
    %54 = tpu.concatenate %25, %29, %33, %37, %21, %41, %45, %49, %53 in 0 : vector<8x512xf32>, vector<8x512xf32>, vector<8x512xf32>, vector<8x512xf32>, vector<8x512xf32>, vector<8x512xf32>, vector<8x512xf32>, vector<8x512xf32>, vector<8x512xf32> -> vector<72x512xf32>
    %c0_22 = arith.constant 0 : index
    %c0_23 = arith.constant 0 : index
    %55 = vector.load %arg7[%c0_22, %c0_23] : memref<4x72xf32, #tpu.memory_space<vmem>>, vector<4x72xf32>
    %cst_24 = arith.constant dense<0.000000e+00> : vector<4x512xf32>
    %56 = tpu.matmul %55, %54, %cst_24 {dimension_numbers = #tpu.dot_dimension_numbers<[1], [0], [0], [1], [0, 0, 1, 1], [], []>, precision = #tpu.contract_precision<fp32>} : vector<4x72xf32>, vector<72x512xf32>, vector<4x512xf32> -> vector<4x512xf32>
    %c0_25 = arith.constant 0 : index
    %c0_26 = arith.constant 0 : index
    %57 = vector.load %arg8[%c0_25, %c0_26] : memref<4x1xf32, #tpu.memory_space<vmem>>, vector<4x1xf32>
    %58 = vector.broadcast %57 : vector<4x1xf32> to vector<4x512xf32>
    %59 = arith.addf %56, %58 : vector<4x512xf32>
    %cst_27 = arith.constant 0.000000e+00 : f32
    %60 = vector.broadcast %cst_27 : f32 to vector<4x512xf32>
    %61 = arith.maximumf %59, %60 : vector<4x512xf32>
    %c17_i32_28 = arith.constant 17 : i32
    %62 = tpu.dynamic_rotate %61 by %c17_i32_28 dim 1 : vector<4x512xf32>, i32 -> vector<4x512xf32>
    %63 = vector.extract_strided_slice %3 {offsets = [0, 0], sizes = [1, 512], strides = [1, 1]} : vector<9x512xf32> to vector<1x512xf32>
    %64 = vector.broadcast %63 : vector<1x512xf32> to vector<4x512xf32>
    %65 = arith.mulf %62, %64 : vector<4x512xf32>
    %c16_i32_29 = arith.constant 16 : i32
    %66 = tpu.dynamic_rotate %61 by %c16_i32_29 dim 1 : vector<4x512xf32>, i32 -> vector<4x512xf32>
    %67 = vector.extract_strided_slice %3 {offsets = [1, 0], sizes = [1, 512], strides = [1, 1]} : vector<9x512xf32> to vector<1x512xf32>
    %68 = vector.broadcast %67 : vector<1x512xf32> to vector<4x512xf32>
    %69 = arith.mulf %66, %68 : vector<4x512xf32>
    %c15_i32_30 = arith.constant 15 : i32
    %70 = tpu.dynamic_rotate %61 by %c15_i32_30 dim 1 : vector<4x512xf32>, i32 -> vector<4x512xf32>
    %71 = vector.extract_strided_slice %3 {offsets = [2, 0], sizes = [1, 512], strides = [1, 1]} : vector<9x512xf32> to vector<1x512xf32>
    %72 = vector.broadcast %71 : vector<1x512xf32> to vector<4x512xf32>
    %73 = arith.mulf %70, %72 : vector<4x512xf32>
    %c1_i32_31 = arith.constant 1 : i32
    %74 = tpu.dynamic_rotate %61 by %c1_i32_31 dim 1 : vector<4x512xf32>, i32 -> vector<4x512xf32>
    %75 = vector.extract_strided_slice %3 {offsets = [3, 0], sizes = [1, 512], strides = [1, 1]} : vector<9x512xf32> to vector<1x512xf32>
    %76 = vector.broadcast %75 : vector<1x512xf32> to vector<4x512xf32>
    %77 = arith.mulf %74, %76 : vector<4x512xf32>
    %c511_i32_32 = arith.constant 511 : i32
    %78 = tpu.dynamic_rotate %61 by %c511_i32_32 dim 1 : vector<4x512xf32>, i32 -> vector<4x512xf32>
    %79 = vector.extract_strided_slice %3 {offsets = [5, 0], sizes = [1, 512], strides = [1, 1]} : vector<9x512xf32> to vector<1x512xf32>
    %80 = vector.broadcast %79 : vector<1x512xf32> to vector<4x512xf32>
    %81 = arith.mulf %78, %80 : vector<4x512xf32>
    %c497_i32_33 = arith.constant 497 : i32
    %82 = tpu.dynamic_rotate %61 by %c497_i32_33 dim 1 : vector<4x512xf32>, i32 -> vector<4x512xf32>
    %83 = vector.extract_strided_slice %3 {offsets = [6, 0], sizes = [1, 512], strides = [1, 1]} : vector<9x512xf32> to vector<1x512xf32>
    %84 = vector.broadcast %83 : vector<1x512xf32> to vector<4x512xf32>
    %85 = arith.mulf %82, %84 : vector<4x512xf32>
    %c496_i32_34 = arith.constant 496 : i32
    %86 = tpu.dynamic_rotate %61 by %c496_i32_34 dim 1 : vector<4x512xf32>, i32 -> vector<4x512xf32>
    %87 = vector.extract_strided_slice %3 {offsets = [7, 0], sizes = [1, 512], strides = [1, 1]} : vector<9x512xf32> to vector<1x512xf32>
    %88 = vector.broadcast %87 : vector<1x512xf32> to vector<4x512xf32>
    %89 = arith.mulf %86, %88 : vector<4x512xf32>
    %c495_i32_35 = arith.constant 495 : i32
    %90 = tpu.dynamic_rotate %61 by %c495_i32_35 dim 1 : vector<4x512xf32>, i32 -> vector<4x512xf32>
    %91 = vector.extract_strided_slice %3 {offsets = [8, 0], sizes = [1, 512], strides = [1, 1]} : vector<9x512xf32> to vector<1x512xf32>
    %92 = vector.broadcast %91 : vector<1x512xf32> to vector<4x512xf32>
    %93 = arith.mulf %90, %92 : vector<4x512xf32>
    %94 = tpu.concatenate %65, %69, %73, %77, %61, %81, %85, %89, %93 in 0 : vector<4x512xf32>, vector<4x512xf32>, vector<4x512xf32>, vector<4x512xf32>, vector<4x512xf32>, vector<4x512xf32>, vector<4x512xf32>, vector<4x512xf32>, vector<4x512xf32> -> vector<36x512xf32>
    %c0_36 = arith.constant 0 : index
    %c0_37 = arith.constant 0 : index
    %95 = vector.load %arg9[%c0_36, %c0_37] : memref<4x36xf32, #tpu.memory_space<vmem>>, vector<4x36xf32>
    %cst_38 = arith.constant dense<0.000000e+00> : vector<4x512xf32>
    %96 = tpu.matmul %95, %94, %cst_38 {dimension_numbers = #tpu.dot_dimension_numbers<[1], [0], [0], [1], [0, 0, 1, 1], [], []>, precision = #tpu.contract_precision<fp32>} : vector<4x36xf32>, vector<36x512xf32>, vector<4x512xf32> -> vector<4x512xf32>
    %c0_39 = arith.constant 0 : index
    %c0_40 = arith.constant 0 : index
    %97 = vector.load %arg10[%c0_39, %c0_40] : memref<4x1xf32, #tpu.memory_space<vmem>>, vector<4x1xf32>
    %98 = vector.broadcast %97 : vector<4x1xf32> to vector<4x512xf32>
    %99 = arith.addf %96, %98 : vector<4x512xf32>
    %cst_41 = arith.constant 0.000000e+00 : f32
    %100 = vector.broadcast %cst_41 : f32 to vector<4x512xf32>
    %101 = arith.maximumf %99, %100 : vector<4x512xf32>
    %c0_42 = arith.constant 0 : index
    %c0_43 = arith.constant 0 : index
    %102 = vector.load %arg11[%c0_42, %c0_43] : memref<4x512xf32, #tpu.memory_space<vmem>>, vector<4x512xf32>
    tpu.vector_store %arg11[%c0_42, %c0_43], %101 {strides = array<i32>} : memref<4x512xf32, #tpu.memory_space<vmem>>, vector<4x512xf32>,
    return
  }
  func.func @transform_0(%arg0: i32) -> (i32, i32) {
    %c0_i32 = arith.constant 0 : i32
    %c0_i32_0 = arith.constant 0 : i32
    return %c0_i32, %arg0 : i32, i32
  }
  func.func @transform_1(%arg0: i32) -> (i32, i32) {
    %c0_i32 = arith.constant 0 : i32
    %c0_i32_0 = arith.constant 0 : i32
    return %c0_i32, %arg0 : i32, i32
  }
  func.func @transform_2(%arg0: i32) -> (i32, i32) {
    %c0_i32 = arith.constant 0 : i32
    %c0_i32_0 = arith.constant 0 : i32
    %c0_i32_1 = arith.constant 0 : i32
    return %c0_i32, %c0_i32_0 : i32, i32
  }
  func.func @transform_3(%arg0: i32) -> (i32, i32) {
    %c0_i32 = arith.constant 0 : i32
    %c0_i32_0 = arith.constant 0 : i32
    %c0_i32_1 = arith.constant 0 : i32
    return %c0_i32, %c0_i32_0 : i32, i32
  }
  func.func @transform_4(%arg0: i32) -> (i32, i32, i32) {
    %c0_i32 = arith.constant 0 : i32
    %c0_i32_0 = arith.constant 0 : i32
    %c0_i32_1 = arith.constant 0 : i32
    %c0_i32_2 = arith.constant 0 : i32
    return %c0_i32, %c0_i32_0, %c0_i32_1 : i32, i32, i32
  }
  func.func @transform_5(%arg0: i32) -> (i32, i32) {
    %c0_i32 = arith.constant 0 : i32
    %c0_i32_0 = arith.constant 0 : i32
    %c0_i32_1 = arith.constant 0 : i32
    return %c0_i32, %c0_i32_0 : i32, i32
  }
  func.func @transform_6(%arg0: i32) -> (i32, i32) {
    %c0_i32 = arith.constant 0 : i32
    %c0_i32_0 = arith.constant 0 : i32
    %c0_i32_1 = arith.constant 0 : i32
    return %c0_i32, %c0_i32_0 : i32, i32
  }
  func.func @transform_7(%arg0: i32) -> (i32, i32) {
    %c0_i32 = arith.constant 0 : i32
    %c0_i32_0 = arith.constant 0 : i32
    %c0_i32_1 = arith.constant 0 : i32
    return %c0_i32, %c0_i32_0 : i32, i32
  }
  func.func @transform_8(%arg0: i32) -> (i32, i32) {
    %c0_i32 = arith.constant 0 : i32
    %c0_i32_0 = arith.constant 0 : i32
    %c0_i32_1 = arith.constant 0 : i32
    return %c0_i32, %c0_i32_0 : i32, i32
  }
  func.func @transform_9(%arg0: i32) -> (i32, i32) {
    %c0_i32 = arith.constant 0 : i32
    %c0_i32_0 = arith.constant 0 : i32
    %c0_i32_1 = arith.constant 0 : i32
    return %c0_i32, %c0_i32_0 : i32, i32
  }
  func.func @transform_10(%arg0: i32) -> (i32, i32) {
    %c0_i32 = arith.constant 0 : i32
    %c0_i32_0 = arith.constant 0 : i32
    return %c0_i32, %arg0 : i32, i32
  }
}

</mosaic_0001>

<llo_original>
// kernel: unet_up_block_forward.1
$region0: #{unet_up_block_forward.1}
  #allocation0 [shape = 'u32[]', space=smem, size = 0x4, offset = 0x4, fixed_abs, tag = 'smem constant byte address 0x4 - core index']
  #allocation1 [shape = 'u32[72,128]{1,0:T(1,128)}', space=vmem, size = 0x9000, scoped, tag = 'internal scratch']
  %s0 = inlined_call_operand.vmem [shape: f32[8,128], index: 0, kind: input, shape index: {}]
  %s1 = inlined_call_operand.vmem [shape: f32[4,512], index: 1, kind: input, shape index: {}]
  %s2 = inlined_call_operand.hbm [shape: f32[512,512], index: 2, kind: input, shape index: {}]
  %s3 = inlined_call_operand.vmem [shape: f32[9,512], index: 3, kind: input, shape index: {}]
  %s4 = inlined_call_operand.vmem [shape: f32[4,4,8], index: 4, kind: input, shape index: {}]
  %s5 = inlined_call_operand.vmem [shape: f32[4,1], index: 5, kind: input, shape index: {}]
  %s6 = inlined_call_operand.vmem [shape: f32[4,72], index: 6, kind: input, shape index: {}]
  %s7 = inlined_call_operand.vmem [shape: f32[4,1], index: 7, kind: input, shape index: {}]
  %s8 = inlined_call_operand.vmem [shape: f32[4,36], index: 8, kind: input, shape index: {}]
  %s9 = inlined_call_operand.vmem [shape: f32[4,1], index: 9, kind: input, shape index: {}]
  %s10 = inlined_call_operand.vmem [shape: f32[4,512], index: 10, kind: output, shape index: {}]
  %s11 = sld [smem:[#allocation0]]
  $region54: #{unet_up_block_forward.1} parent=0
    _
  %s13 = ssub.s32 1, %s11
  %s14 = scalar_select 0, %s13, %s11
  $region1: #{unet_up_block_forward.1} parent=0
    #allocation2 [shape = 'u8[1048576]{0}', space=vmem, size = 0x100000, scoped, tag = 'input window, operand 2, single buffered']
    #allocation3 [shape = 's32[1]{0}', space=sflag, size = 0x4, scoped, tag = 'scoped memory for unet_up_block_forward.1']
    %15 = vsyncpa [#allocation3], 0
    // Predicated region
    $region2: #{unet_up_block_forward.1} parent=1 // pred_check
      _
    $region3: #{unet_up_block_forward.1} parent=1 // pred_check_branch
      %17 = sbr.rel (0) target = $region5
    $region4: #{unet_up_block_forward.1} parent=1 // pred_region
      _
    $region5: #{unet_up_block_forward.1} parent=1 // pred_fallthru
      _
    // Predicated region
    $region6: #{unet_up_block_forward.1} parent=1 // pred_check
      _
    $region7: #{unet_up_block_forward.1} parent=1 // pred_check_branch
      %19 = sbr.rel (0) target = $region9
    $region8: #{unet_up_block_forward.1} parent=1 // pred_region
      _
    $region9: #{unet_up_block_forward.1} parent=1 // pred_fallthru
      _
    // Predicated region
    $region10: #{unet_up_block_forward.1} parent=1 // pred_check
      _
    $region11: #{unet_up_block_forward.1} parent=1 // pred_check_branch
      %21 = sbr.rel (0) target = $region13
    $region12: #{unet_up_block_forward.1} parent=1 // pred_region
      %23 = vsyncadd [#allocation3], 0
      %s24 = sshll.u32 %s2, 4
      %s25 = int_to_ptr.hbm [resolvable:$true] %s24
      %s26 = sshll.u32 [#allocation2], 4
      %s27 = int_to_ptr.vmem [resolvable:$true] %s26
      %32 = dma.hbm_to_vmem [thread:$0]  %s25, 32768, %s27, [#allocation3], 512, 512, 32
    $region13: #{unet_up_block_forward.1} parent=1 // pred_fallthru
      _
    // Predicated region
    $region14: #{unet_up_block_forward.1} parent=1 // pred_check
      _
    $region15: #{unet_up_block_forward.1} parent=1 // pred_check_branch
      %34 = sbr.rel (0) target = $region17
    $region16: #{unet_up_block_forward.1} parent=1 // pred_region
      _
    $region17: #{unet_up_block_forward.1} parent=1 // pred_fallthru
      _
    // Predicated region
    $region18: #{unet_up_block_forward.1} parent=1 // pred_check
      _
    $region19: #{unet_up_block_forward.1} parent=1 // pred_check_branch
      %36 = sbr.rel (0) target = $region21
    $region20: #{unet_up_block_forward.1} parent=1 // pred_region
      _
    $region21: #{unet_up_block_forward.1} parent=1 // pred_fallthru
      _
    // Predicated region
    $region22: #{unet_up_block_forward.1} parent=1 // pred_check
      _
    $region23: #{unet_up_block_forward.1} parent=1 // pred_check_branch
      %38 = sbr.rel (0) target = $region25
    $region24: #{unet_up_block_forward.1} parent=1 // pred_region
      _
    $region25: #{unet_up_block_forward.1} parent=1 // pred_fallthru
      _
    // Predicated region
    $region26: #{unet_up_block_forward.1} parent=1 // pred_check
      _
    $region27: #{unet_up_block_forward.1} parent=1 // pred_check_branch
      %40 = sbr.rel (0) target = $region29
    $region28: #{unet_up_block_forward.1} parent=1 // pred_region
      _
    $region29: #{unet_up_block_forward.1} parent=1 // pred_fallthru
      _
    // Predicated region
    $region30: #{unet_up_block_forward.1} parent=1 // pred_check
      _
    $region31: #{unet_up_block_forward.1} parent=1 // pred_check_branch
      %42 = sbr.rel (0) target = $region33
    $region32: #{unet_up_block_forward.1} parent=1 // pred_region
      _
    $region33: #{unet_up_block_forward.1} parent=1 // pred_fallthru
      _
    // Predicated region
    $region34: #{unet_up_block_forward.1} parent=1 // pred_check
      _
    $region35: #{unet_up_block_forward.1} parent=1 // pred_check_branch
      %44 = sbr.rel (0) target = $region37
    $region36: #{unet_up_block_forward.1} parent=1 // pred_region
      _
    $region37: #{unet_up_block_forward.1} parent=1 // pred_fallthru
      _
    // Predicated region
    $region38: #{unet_up_block_forward.1} parent=1 // pred_check
      _
    $region39: #{unet_up_block_forward.1} parent=1 // pred_check_branch
      %46 = sbr.rel (0) target = $region41
    $region40: #{unet_up_block_forward.1} parent=1 // pred_region
      _
    $region41: #{unet_up_block_forward.1} parent=1 // pred_fallthru
      _
    // Predicated region
    $region42: #{unet_up_block_forward.1} parent=1 // pred_check
      _
    $region43: #{unet_up_block_forward.1} parent=1 // pred_check_branch
      %48 = sbr.rel (0) target = $region45
    $region44: #{unet_up_block_forward.1} parent=1 // pred_region
      %50 = dma.done [#allocation3], 32768
    $region45: #{unet_up_block_forward.1} parent=1 // pred_fallthru
      _
    %v51 = vld [vmem:[%s0] sm:$0xff]
    %v52 = vld [vmem:[%s1] sm:$0xff]
    %v53 = vld [vmem:[%s1 + $0x8] sm:$0xff]
    %v54 = vld [vmem:[#allocation2] sm:$0xff]
    %v55 = vld [vmem:[#allocation2 + $0x8] sm:$0xff]
    %v56 = vld [vmem:[#allocation2 + $0x10] sm:$0xff]
    %v57 = vld [vmem:[#allocation2 + $0x18] sm:$0xff]
    %v58 = vld [vmem:[#allocation2 + $0x20] sm:$0xff]
    %v59 = vld [vmem:[#allocation2 + $0x28] sm:$0xff]
    %v60 = vld [vmem:[#allocation2 + $0x30] sm:$0xff]
    %v61 = vld [vmem:[#allocation2 + $0x38] sm:$0xff]
    %v62 = vld [vmem:[#allocation2 + $0x40] sm:$0xff]
    %v63 = vld [vmem:[#allocation2 + $0x48] sm:$0xff]
    %v64 = vld [vmem:[#allocation2 + $0x50] sm:$0xff]
    %v65 = vld [vmem:[#allocation2 + $0x58] sm:$0xff]
    %v66 = vld [vmem:[#allocation2 + $0x60] sm:$0xff]
    %v67 = vld [vmem:[#allocation2 + $0x68] sm:$0xff]
    %v68 = vld [vmem:[#allocation2 + $0x70] sm:$0xff]
    %v69 = vld [vmem:[#allocation2 + $0x78] sm:$0xff]
    %v70 = vld [vmem:[#allocation2 + $0x80] sm:$0xff]
    %v71 = vld [vmem:[#allocation2 + $0x88] sm:$0xff]
    %v72 = vld [vmem:[#allocation2 + $0x90] sm:$0xff]
    %v73 = vld [vmem:[#allocation2 + $0x98] sm:$0xff]
    %v74 = vld [vmem:[#allocation2 + $0xa0] sm:$0xff]
    %v75 = vld [vmem:[#allocation2 + $0xa8] sm:$0xff]
    %v76 = vld [vmem:[#allocation2 + $0xb0] sm:$0xff]
    %v77 = vld [vmem:[#allocation2 + $0xb8] sm:$0xff]
    %v78 = vld [vmem:[#allocation2 + $0xc0] sm:$0xff]
    %v79 = vld [vmem:[#allocation2 + $0xc8] sm:$0xff]
    %v80 = vld [vmem:[#allocation2 + $0xd0] sm:$0xff]
    %v81 = vld [vmem:[#allocation2 + $0xd8] sm:$0xff]
    %v82 = vld [vmem:[#allocation2 + $0xe0] sm:$0xff]
    %v83 = vld [vmem:[#allocation2 + $0xe8] sm:$0xff]
    %v84 = vld [vmem:[#allocation2 + $0xf0] sm:$0xff]
    %v85 = vld [vmem:[#allocation2 + $0xf8] sm:$0xff]
    %v86 = vld [vmem:[#allocation2 + $0x100] sm:$0xff]
    %v87 = vld [vmem:[#allocation2 + $0x108] sm:$0xff]
    %v88 = vld [vmem:[#allocation2 + $0x110] sm:$0xff]
    %v89 = vld [vmem:[#allocation2 + $0x118] sm:$0xff]
    %v90 = vld [vmem:[#allocation2 + $0x120] sm:$0xff]
    %v91 = vld [vmem:[#allocation2 + $0x128] sm:$0xff]
    %v92 = vld [vmem:[#allocation2 + $0x130] sm:$0xff]
    %v93 = vld [vmem:[#allocation2 + $0x138] sm:$0xff]
    %v94 = vld [vmem:[#allocation2 + $0x140] sm:$0xff]
    %v95 = vld [vmem:[#allocation2 + $0x148] sm:$0xff]
    %v96 = vld [vmem:[#allocation2 + $0x150] sm:$0xff]
    %v97 = vld [vmem:[#allocation2 + $0x158] sm:$0xff]
    %v98 = vld [vmem:[#allocation2 + $0x160] sm:$0xff]
    %v99 = vld [vmem:[#allocation2 + $0x168] sm:$0xff]
    %v100 = vld [vmem:[#allocation2 + $0x170] sm:$0xff]
    %v101 = vld [vmem:[#allocation2 + $0x178] sm:$0xff]
    %v102 = vld [vmem:[#allocation2 + $0x180] sm:$0xff]
    %v103 = vld [vmem:[#allocation2 + $0x188] sm:$0xff]
    %v104 = vld [vmem:[#allocation2 + $0x190] sm:$0xff]
    %v105 = vld [vmem:[#allocation2 + $0x198] sm:$0xff]
    %v106 = vld [vmem:[#allocation2 + $0x1a0] sm:$0xff]
    %v107 = vld [vmem:[#allocation2 + $0x1a8] sm:$0xff]
    %v108 = vld [vmem:[#allocation2 + $0x1b0] sm:$0xff]
    %v109 = vld [vmem:[#allocation2 + $0x1b8] sm:$0xff]
    %v110 = vld [vmem:[#allocation2 + $0x1c0] sm:$0xff]
    %v111 = vld [vmem:[#allocation2 + $0x1c8] sm:$0xff]
    %v112 = vld [vmem:[#allocation2 + $0x1d0] sm:$0xff]
    %v113 = vld [vmem:[#allocation2 + $0x1d8] sm:$0xff]
    %v114 = vld [vmem:[#allocation2 + $0x1e0] sm:$0xff]
    %v115 = vld [vmem:[#allocation2 + $0x1e8] sm:$0xff]
    %v116 = vld [vmem:[#allocation2 + $0x1f0] sm:$0xff]
    %v117 = vld [vmem:[#allocation2 + $0x1f8] sm:$0xff]
    %v118 = vld [vmem:[#allocation2 + $0x200] sm:$0xff]
    %v119 = vld [vmem:[#allocation2 + $0x208] sm:$0xff]
    %v120 = vld [vmem:[#allocation2 + $0x210] sm:$0xff]
    %v121 = vld [vmem:[#allocation2 + $0x218] sm:$0xff]
    %v122 = vld [vmem:[#allocation2 + $0x220] sm:$0xff]
    %v123 = vld [vmem:[#allocation2 + $0x228] sm:$0xff]
    %v124 = vld [vmem:[#allocation2 + $0x230] sm:$0xff]
    %v125 = vld [vmem:[#allocation2 + $0x238] sm:$0xff]
    %v126 = vld [vmem:[#allocation2 + $0x240] sm:$0xff]
    %v127 = vld [vmem:[#allocation2 + $0x248] sm:$0xff]
    %v128 = vld [vmem:[#allocation2 + $0x250] sm:$0xff]
    %v129 = vld [vmem:[#allocation2 + $0x258] sm:$0xff]
    %v130 = vld [vmem:[#allocation2 + $0x260] sm:$0xff]
    %v131 = vld [vmem:[#allocation2 + $0x268] sm:$0xff]
    %v132 = vld [vmem:[#allocation2 + $0x270] sm:$0xff]
    %v133 = vld [vmem:[#allocation2 + $0x278] sm:$0xff]
    %v134 = vld [vmem:[#allocation2 + $0x280] sm:$0xff]
    %v135 = vld [vmem:[#allocation2 + $0x288] sm:$0xff]
    %v136 = vld [vmem:[#allocation2 + $0x290] sm:$0xff]
    %v137 = vld [vmem:[#allocation2 + $0x298] sm:$0xff]
    %v138 = vld [vmem:[#allocation2 + $0x2a0] sm:$0xff]
    %v139 = vld [vmem:[#allocation2 + $0x2a8] sm:$0xff]
    %v140 = vld [vmem:[#allocation2 + $0x2b0] sm:$0xff]
    %v141 = vld [vmem:[#allocation2 + $0x2b8] sm:$0xff]
    %v142 = vld [vmem:[#allocation2 + $0x2c0] sm:$0xff]
    %v143 = vld [vmem:[#allocation2 + $0x2c8] sm:$0xff]
    %v144 = vld [vmem:[#allocation2 + $0x2d0] sm:$0xff]
    %v145 = vld [vmem:[#allocation2 + $0x2d8] sm:$0xff]
    %v146 = vld [vmem:[#allocation2 + $0x2e0] sm:$0xff]
    %v147 = vld [vmem:[#allocation2 + $0x2e8] sm:$0xff]
    %v148 = vld [vmem:[#allocation2 + $0x2f0] sm:$0xff]
    %v149 = vld [vmem:[#allocation2 + $0x2f8] sm:$0xff]
    %v150 = vld [vmem:[#allocation2 + $0x300] sm:$0xff]
    %v151 = vld [vmem:[#allocation2 + $0x308] sm:$0xff]
    %v152 = vld [vmem:[#allocation2 + $0x310] sm:$0xff]
    %v153 = vld [vmem:[#allocation2 + $0x318] sm:$0xff]
    %v154 = vld [vmem:[#allocation2 + $0x320] sm:$0xff]
    %v155 = vld [vmem:[#allocation2 + $0x328] sm:$0xff]
    %v156 = vld [vmem:[#allocation2 + $0x330] sm:$0xff]
    %v157 = vld [vmem:[#allocation2 + $0x338] sm:$0xff]
    %v158 = vld [vmem:[#allocation2 + $0x340] sm:$0xff]
    %v159 = vld [vmem:[#allocation2 + $0x348] sm:$0xff]
    %v160 = vld [vmem:[#allocation2 + $0x350] sm:$0xff]
    %v161 = vld [vmem:[#allocation2 + $0x358] sm:$0xff]
    %v162 = vld [vmem:[#allocation2 + $0x360] sm:$0xff]
    %v163 = vld [vmem:[#allocation2 + $0x368] sm:$0xff]
    %v164 = vld [vmem:[#allocation2 + $0x370] sm:$0xff]
    %v165 = vld [vmem:[#allocation2 + $0x378] sm:$0xff]
    %v166 = vld [vmem:[#allocation2 + $0x380] sm:$0xff]
    %v167 = vld [vmem:[#allocation2 + $0x388] sm:$0xff]
    %v168 = vld [vmem:[#allocation2 + $0x390] sm:$0xff]
    %v169 = vld [vmem:[#allocation2 + $0x398] sm:$0xff]
    %v170 = vld [vmem:[#allocation2 + $0x3a0] sm:$0xff]
    %v171 = vld [vmem:[#allocation2 + $0x3a8] sm:$0xff]
    %v172 = vld [vmem:[#allocation2 + $0x3b0] sm:$0xff]
    %v173 = vld [vmem:[#allocation2 + $0x3b8] sm:$0xff]
    %v174 = vld [vmem:[#allocation2 + $0x3c0] sm:$0xff]
    %v175 = vld [vmem:[#allocation2 + $0x3c8] sm:$0xff]
    %v176 = vld [vmem:[#allocation2 + $0x3d0] sm:$0xff]
    %v177 = vld [vmem:[#allocation2 + $0x3d8] sm:$0xff]
    %v178 = vld [vmem:[#allocation2 + $0x3e0] sm:$0xff]
    %v179 = vld [vmem:[#allocation2 + $0x3e8] sm:$0xff]
    %v180 = vld [vmem:[#allocation2 + $0x3f0] sm:$0xff]
    %v181 = vld [vmem:[#allocation2 + $0x3f8] sm:$0xff]
    %v182 = vld [vmem:[#allocation2 + $0x400] sm:$0xff]
    %v183 = vld [vmem:[#allocation2 + $0x408] sm:$0xff]
    %v184 = vld [vmem:[#allocation2 + $0x410] sm:$0xff]
    %v185 = vld [vmem:[#allocation2 + $0x418] sm:$0xff]
    %v186 = vld [vmem:[#allocation2 + $0x420] sm:$0xff]
    %v187 = vld [vmem:[#allocation2 + $0x428] sm:$0xff]
    %v188 = vld [vmem:[#allocation2 + $0x430] sm:$0xff]
    %v189 = vld [vmem:[#allocation2 + $0x438] sm:$0xff]
    %v190 = vld [vmem:[#allocation2 + $0x440] sm:$0xff]
    %v191 = vld [vmem:[#allocation2 + $0x448] sm:$0xff]
    %v192 = vld [vmem:[#allocation2 + $0x450] sm:$0xff]
    %v193 = vld [vmem:[#allocation2 + $0x458] sm:$0xff]
    %v194 = vld [vmem:[#allocation2 + $0x460] sm:$0xff]
    %v195 = vld [vmem:[#allocation2 + $0x468] sm:$0xff]
    %v196 = vld [vmem:[#allocation2 + $0x470] sm:$0xff]
    %v197 = vld [vmem:[#allocation2 + $0x478] sm:$0xff]
    %v198 = vld [vmem:[#allocation2 + $0x480] sm:$0xff]
    %v199 = vld [vmem:[#allocation2 + $0x488] sm:$0xff]
    %v200 = vld [vmem:[#allocation2 + $0x490] sm:$0xff]
    %v201 = vld [vmem:[#allocation2 + $0x498] sm:$0xff]
    %v202 = vld [vmem:[#allocation2 + $0x4a0] sm:$0xff]
    %v203 = vld [vmem:[#allocation2 + $0x4a8] sm:$0xff]
    %v204 = vld [vmem:[#allocation2 + $0x4b0] sm:$0xff]
    %v205 = vld [vmem:[#allocation2 + $0x4b8] sm:$0xff]
    %v206 = vld [vmem:[#allocation2 + $0x4c0] sm:$0xff]
    %v207 = vld [vmem:[#allocation2 + $0x4c8] sm:$0xff]
    %v208 = vld [vmem:[#allocation2 + $0x4d0] sm:$0xff]
    %v209 = vld [vmem:[#allocation2 + $0x4d8] sm:$0xff]
    %v210 = vld [vmem:[#allocation2 + $0x4e0] sm:$0xff]
    %v211 = vld [vmem:[#allocation2 + $0x4e8] sm:$0xff]
    %v212 = vld [vmem:[#allocation2 + $0x4f0] sm:$0xff]
    %v213 = vld [vmem:[#allocation2 + $0x4f8] sm:$0xff]
    %v214 = vld [vmem:[#allocation2 + $0x500] sm:$0xff]
    %v215 = vld [vmem:[#allocation2 + $0x508] sm:$0xff]
    %v216 = vld [vmem:[#allocation2 + $0x510] sm:$0xff]
    %v217 = vld [vmem:[#allocation2 + $0x518] sm:$0xff]
    %v218 = vld [vmem:[#allocation2 + $0x520] sm:$0xff]
    %v219 = vld [vmem:[#allocation2 + $0x528] sm:$0xff]
    %v220 = vld [vmem:[#allocation2 + $0x530] sm:$0xff]
    %v221 = vld [vmem:[#allocation2 + $0x538] sm:$0xff]
    %v222 = vld [vmem:[#allocation2 + $0x540] sm:$0xff]
    %v223 = vld [vmem:[#allocation2 + $0x548] sm:$0xff]
    %v224 = vld [vmem:[#allocation2 + $0x550] sm:$0xff]
    %v225 = vld [vmem:[#allocation2 + $0x558] sm:$0xff]
    %v226 = vld [vmem:[#allocation2 + $0x560] sm:$0xff]
    %v227 = vld [vmem:[#allocation2 + $0x568] sm:$0xff]
    %v228 = vld [vmem:[#allocation2 + $0x570] sm:$0xff]
    %v229 = vld [vmem:[#allocation2 + $0x578] sm:$0xff]
    %v230 = vld [vmem:[#allocation2 + $0x580] sm:$0xff]
    %v231 = vld [vmem:[#allocation2 + $0x588] sm:$0xff]
    %v232 = vld [vmem:[#allocation2 + $0x590] sm:$0xff]
    %v233 = vld [vmem:[#allocation2 + $0x598] sm:$0xff]
    %v234 = vld [vmem:[#allocation2 + $0x5a0] sm:$0xff]
    %v235 = vld [vmem:[#allocation2 + $0x5a8] sm:$0xff]
    %v236 = vld [vmem:[#allocation2 + $0x5b0] sm:$0xff]
    %v237 = vld [vmem:[#allocation2 + $0x5b8] sm:$0xff]
    %v238 = vld [vmem:[#allocation2 + $0x5c0] sm:$0xff]
    %v239 = vld [vmem:[#allocation2 + $0x5c8] sm:$0xff]
    %v240 = vld [vmem:[#allocation2 + $0x5d0] sm:$0xff]
    %v241 = vld [vmem:[#allocation2 + $0x5d8] sm:$0xff]
    %v242 = vld [vmem:[#allocation2 + $0x5e0] sm:$0xff]
    %v243 = vld [vmem:[#allocation2 + $0x5e8] sm:$0xff]
    %v244 = vld [vmem:[#allocation2 + $0x5f0] sm:$0xff]
    %v245 = vld [vmem:[#allocation2 + $0x5f8] sm:$0xff]
    %v246 = vld [vmem:[#allocation2 + $0x600] sm:$0xff]
    %v247 = vld [vmem:[#allocation2 + $0x608] sm:$0xff]
    %v248 = vld [vmem:[#allocation2 + $0x610] sm:$0xff]
    %v249 = vld [vmem:[#allocation2 + $0x618] sm:$0xff]
    %v250 = vld [vmem:[#allocation2 + $0x620] sm:$0xff]
    %v251 = vld [vmem:[#allocation2 + $0x628] sm:$0xff]
    %v252 = vld [vmem:[#allocation2 + $0x630] sm:$0xff]
    %v253 = vld [vmem:[#allocation2 + $0x638] sm:$0xff]
    %v254 = vld [vmem:[#allocation2 + $0x640] sm:$0xff]
    %v255 = vld [vmem:[#allocation2 + $0x648] sm:$0xff]
    %v256 = vld [vmem:[#allocation2 + $0x650] sm:$0xff]
    %v257 = vld [vmem:[#allocation2 + $0x658] sm:$0xff]
    %v258 = vld [vmem:[#allocation2 + $0x660] sm:$0xff]
    %v259 = vld [vmem:[#allocation2 + $0x668] sm:$0xff]
    %v260 = vld [vmem:[#allocation2 + $0x670] sm:$0xff]
    %v261 = vld [vmem:[#allocation2 + $0x678] sm:$0xff]
    %v262 = vld [vmem:[#allocation2 + $0x680] sm:$0xff]
    %v263 = vld [vmem:[#allocation2 + $0x688] sm:$0xff]
    %v264 = vld [vmem:[#allocation2 + $0x690] sm:$0xff]
    %v265 = vld [vmem:[#allocation2 + $0x698] sm:$0xff]
    %v266 = vld [vmem:[#allocation2 + $0x6a0] sm:$0xff]
    %v267 = vld [vmem:[#allocation2 + $0x6a8] sm:$0xff]
    %v268 = vld [vmem:[#allocation2 + $0x6b0] sm:$0xff]
    %v269 = vld [vmem:[#allocation2 + $0x6b8] sm:$0xff]
    %v270 = vld [vmem:[#allocation2 + $0x6c0] sm:$0xff]
    %v271 = vld [vmem:[#allocation2 + $0x6c8] sm:$0xff]
    %v272 = vld [vmem:[#allocation2 + $0x6d0] sm:$0xff]
    %v273 = vld [vmem:[#allocation2 + $0x6d8] sm:$0xff]
    %v274 = vld [vmem:[#allocation2 + $0x6e0] sm:$0xff]
    %v275 = vld [vmem:[#allocation2 + $0x6e8] sm:$0xff]
    %v276 = vld [vmem:[#allocation2 + $0x6f0] sm:$0xff]
    %v277 = vld [vmem:[#allocation2 + $0x6f8] sm:$0xff]
    %v278 = vld [vmem:[#allocation2 + $0x700] sm:$0xff]
    %v279 = vld [vmem:[#allocation2 + $0x708] sm:$0xff]
    %v280 = vld [vmem:[#allocation2 + $0x710] sm:$0xff]
    %v281 = vld [vmem:[#allocation2 + $0x718] sm:$0xff]
    %v282 = vld [vmem:[#allocation2 + $0x720] sm:$0xff]
    %v283 = vld [vmem:[#allocation2 + $0x728] sm:$0xff]
    %v284 = vld [vmem:[#allocation2 + $0x730] sm:$0xff]
    %v285 = vld [vmem:[#allocation2 + $0x738] sm:$0xff]
    %v286 = vld [vmem:[#allocation2 + $0x740] sm:$0xff]
    %v287 = vld [vmem:[#allocation2 + $0x748] sm:$0xff]
    %v288 = vld [vmem:[#allocation2 + $0x750] sm:$0xff]
    %v289 = vld [vmem:[#allocation2 + $0x758] sm:$0xff]
    %v290 = vld [vmem:[#allocation2 + $0x760] sm:$0xff]
    %v291 = vld [vmem:[#allocation2 + $0x768] sm:$0xff]
    %v292 = vld [vmem:[#allocation2 + $0x770] sm:$0xff]
    %v293 = vld [vmem:[#allocation2 + $0x778] sm:$0xff]
    %v294 = vld [vmem:[#allocation2 + $0x780] sm:$0xff]
    %v295 = vld [vmem:[#allocation2 + $0x788] sm:$0xff]
    %v296 = vld [vmem:[#allocation2 + $0x790] sm:$0xff]
    %v297 = vld [vmem:[#allocation2 + $0x798] sm:$0xff]
    %v298 = vld [vmem:[#allocation2 + $0x7a0] sm:$0xff]
    %v299 = vld [vmem:[#allocation2 + $0x7a8] sm:$0xff]
    %v300 = vld [vmem:[#allocation2 + $0x7b0] sm:$0xff]
    %v301 = vld [vmem:[#allocation2 + $0x7b8] sm:$0xff]
    %v302 = vld [vmem:[#allocation2 + $0x7c0] sm:$0xff]
    %v303 = vld [vmem:[#allocation2 + $0x7c8] sm:$0xff]
    %v304 = vld [vmem:[#allocation2 + $0x7d0] sm:$0xff]
    %v305 = vld [vmem:[#allocation2 + $0x7d8] sm:$0xff]
    %v306 = vld [vmem:[#allocation2 + $0x7e0] sm:$0xff]
    %v307 = vld [vmem:[#allocation2 + $0x7e8] sm:$0xff]
    %v308 = vld [vmem:[#allocation2 + $0x7f0] sm:$0xff]
    %v309 = vld [vmem:[#allocation2 + $0x7f8] sm:$0xff]
    %v310 = vld [vmem:[%s3] sm:$0xff]
    %v311 = vld [vmem:[%s3 + $0x8] sm:$0xff]
    %v312 = vld [vmem:[%s3 + $0x10] sm:$0xff]
    %v313 = vld [vmem:[%s3 + $0x18] sm:$0xff]
    %v314 = vld [vmem:[%s3 + $0x20] sm:$0x1]
    %v315 = vld [vmem:[%s3 + $0x28] sm:$0x1]
    %v316 = vld [vmem:[%s3 + $0x30] sm:$0x1]
    %v317 = vld [vmem:[%s3 + $0x38] sm:$0x1]
    %v318 = vld [vmem:[%s4] sm:$0xf]
    %vm319 = vcmask 64512
    %v321 = vsel %vm319, %v318, 0
    %323 = vmatpush.msra.mxu0 0.0
    %324 = vmatpush.msra.mxu0 0.0
    %325 = vmatpush.msra.mxu0 0.0
    %326 = vmatpush.msra.mxu0 0.0
    %327 = vmatpush.msra.mxu0 0.0
    %328 = vmatpush.msra.mxu0 0.0
    %329 = vmatpush.msra.mxu0 0.0
    %330 = vmatpush.msra.mxu0 0.0
    %331 = vmatpush.msra.mxu0 0.0
    %332 = vmatpush.msra.mxu0 0.0
    %333 = vmatpush.msra.mxu0 0.0
    %334 = vmatpush.msra.mxu0 0.0
    %335 = vmatpush.msra.mxu0 0.0
    %336 = vmatpush.msra.mxu0 0.0
    %337 = vmatpush.msra.mxu0 0.0
    %v338 = vand.u32 %v51, 4294901760
    %339 = vmatpush.msra.mxu0 %v338
    %v340 = vand.u32 %v321, 4294901760
    %v341 = vsub.f32 %v321, %v340
    %v342 = vand.u32 %v341, 4294901760
    %v343 = vsub.f32 %v341, %v342
    %v344 = vand.u32 %v343, 4294901760
    %345 = vmatmul.f32.gmra.mxu0 %v344
    %v346 = vpop.f32.mrf.mxu0
    %v347 = vadd.f32 0.0, %v346
    %348 = vdwg.mxu0
    %349 = vmatpush.msra.mxu0 0.0
    %350 = vmatpush.msra.mxu0 0.0
    %351 = vmatpush.msra.mxu0 0.0
    %352 = vmatpush.msra.mxu0 0.0
    %353 = vmatpush.msra.mxu0 0.0
    %354 = vmatpush.msra.mxu0 0.0
    %355 = vmatpush.msra.mxu0 0.0
    %356 = vmatpush.msra.mxu0 0.0
    %357 = vmatpush.msra.mxu0 0.0
    %358 = vmatpush.msra.mxu0 0.0
    %359 = vmatpush.msra.mxu0 0.0
    %360 = vmatpush.msra.mxu0 0.0
    %361 = vmatpush.msra.mxu0 0.0
    %362 = vmatpush.msra.mxu0 0.0
    %363 = vmatpush.msra.mxu0 0.0
    %v364 = vand.u32 %v51, 4294901760
    %v365 = vsub.f32 %v51, %v364
    %v366 = vand.u32 %v365, 4294901760
    %v367 = vsub.f32 %v365, %v366
    %v368 = vand.u32 %v367, 4294901760
    %369 = vmatpush.msra.mxu0 %v368
    %v370 = vand.u32 %v321, 4294901760
    %371 = vmatmul.f32.gmra.mxu0 %v370
    %v372 = vpop.f32.mrf.mxu0
    %v373 = vadd.f32 %v347, %v372
    %374 = vdwg.mxu0
    %375 = vmatpush.msra.mxu0 0.0
    %376 = vmatpush.msra.mxu0 0.0
    %377 = vmatpush.msra.mxu0 0.0
    %378 = vmatpush.msra.mxu0 0.0
    %379 = vmatpush.msra.mxu0 0.0
    %380 = vmatpush.msra.mxu0 0.0
    %381 = vmatpush.msra.mxu0 0.0
    %382 = vmatpush.msra.mxu0 0.0
    %383 = vmatpush.msra.mxu0 0.0
    %384 = vmatpush.msra.mxu0 0.0
    %385 = vmatpush.msra.mxu0 0.0
    %386 = vmatpush.msra.mxu0 0.0
    %387 = vmatpush.msra.mxu0 0.0
    %388 = vmatpush.msra.mxu0 0.0
    %389 = vmatpush.msra.mxu0 0.0
    %v390 = vand.u32 %v51, 4294901760
    %v391 = vsub.f32 %v51, %v390
    %392 = vmatpush.msra.mxu0 %v391
    %v393 = vand.u32 %v321, 4294901760
    %v394 = vsub.f32 %v321, %v393
    %395 = vmatmul.f32.gmra.mxu0 %v394
    %v396 = vpop.f32.mrf.mxu0
    %v397 = vadd.f32 %v373, %v396
    %398 = vdwg.mxu0
    %399 = vmatpush.msra.mxu0 0.0
    %400 = vmatpush.msra.mxu0 0.0
    %401 = vmatpush.msra.mxu0 0.0
    %402 = vmatpush.msra.mxu0 0.0
    %403 = vmatpush.msra.mxu0 0.0
    %404 = vmatpush.msra.mxu0 0.0
    %405 = vmatpush.msra.mxu0 0.0
    %406 = vmatpush.msra.mxu0 0.0
    %407 = vmatpush.msra.mxu0 0.0
    %408 = vmatpush.msra.mxu0 0.0
    %409 = vmatpush.msra.mxu0 0.0
    %410 = vmatpush.msra.mxu0 0.0
    %411 = vmatpush.msra.mxu0 0.0
    %412 = vmatpush.msra.mxu0 0.0
    %413 = vmatpush.msra.mxu0 0.0
    %v414 = vand.u32 %v51, 4294901760
    %415 = vmatpush.msra.mxu0 %v414
    %v416 = vand.u32 %v321, 4294901760
    %v417 = vsub.f32 %v321, %v416
    %v418 = vand.u32 %v417, 4294901760
    %419 = vmatmul.f32.gmra.mxu0 %v418
    %v420 = vpop.f32.mrf.mxu0
    %v421 = vadd.f32 %v397, %v420
    %422 = vdwg.mxu0
    %423 = vmatpush.msra.mxu0 0.0
    %424 = vmatpush.msra.mxu0 0.0
    %425 = vmatpush.msra.mxu0 0.0
    %426 = vmatpush.msra.mxu0 0.0
    %427 = vmatpush.msra.mxu0 0.0
    %428 = vmatpush.msra.mxu0 0.0
    %429 = vmatpush.msra.mxu0 0.0
    %430 = vmatpush.msra.mxu0 0.0
    %431 = vmatpush.msra.mxu0 0.0
    %432 = vmatpush.msra.mxu0 0.0
    %433 = vmatpush.msra.mxu0 0.0
    %434 = vmatpush.msra.mxu0 0.0
    %435 = vmatpush.msra.mxu0 0.0
    %436 = vmatpush.msra.mxu0 0.0
    %437 = vmatpush.msra.mxu0 0.0
    %v438 = vand.u32 %v51, 4294901760
    %v439 = vsub.f32 %v51, %v438
    %v440 = vand.u32 %v439, 4294901760
    %441 = vmatpush.msra.mxu0 %v440
    %v442 = vand.u32 %v321, 4294901760
    %443 = vmatmul.f32.gmra.mxu0 %v442
    %v444 = vpop.f32.mrf.mxu0
    %v445 = vadd.f32 %v421, %v444
    %446 = vdwg.mxu0
    %447 = vmatpush.msra.mxu0 0.0
    %448 = vmatpush.msra.mxu0 0.0
    %449 = vmatpush.msra.mxu0 0.0
    %450 = vmatpush.msra.mxu0 0.0
    %451 = vmatpush.msra.mxu0 0.0
    %452 = vmatpush.msra.mxu0 0.0
    %453 = vmatpush.msra.mxu0 0.0
    %454 = vmatpush.msra.mxu0 0.0
    %455 = vmatpush.msra.mxu0 0.0
    %456 = vmatpush.msra.mxu0 0.0
    %457 = vmatpush.msra.mxu0 0.0
    %458 = vmatpush.msra.mxu0 0.0
    %459 = vmatpush.msra.mxu0 0.0
    %460 = vmatpush.msra.mxu0 0.0
    %461 = vmatpush.msra.mxu0 0.0
    %v462 = vand.u32 %v51, 4294901760
    %463 = vmatpush.msra.mxu0 %v462
    %v464 = vand.u32 %v321, 4294901760
    %465 = vmatmul.f32.gmra.mxu0 %v464
    %v466 = vpop.f32.mrf.mxu0
    %v467 = vadd.f32 %v445, %v466
    %468 = vdwg.mxu0
    %s469 = scalar_lea.vmem %s4, 4
    %v470 = vld [vmem:[%s469] sm:$0xf]
    %v472 = vsel %vm319, %v470, 0
    %474 = vmatpush.msra.mxu0 0.0
    %475 = vmatpush.msra.mxu0 0.0
    %476 = vmatpush.msra.mxu0 0.0
    %477 = vmatpush.msra.mxu0 0.0
    %478 = vmatpush.msra.mxu0 0.0
    %479 = vmatpush.msra.mxu0 0.0
    %480 = vmatpush.msra.mxu0 0.0
    %481 = vmatpush.msra.mxu0 0.0
    %482 = vmatpush.msra.mxu0 0.0
    %483 = vmatpush.msra.mxu0 0.0
    %484 = vmatpush.msra.mxu0 0.0
    %485 = vmatpush.msra.mxu0 0.0
    %486 = vmatpush.msra.mxu0 0.0
    %487 = vmatpush.msra.mxu0 0.0
    %488 = vmatpush.msra.mxu0 0.0
    %v489 = vand.u32 %v51, 4294901760
    %490 = vmatpush.msra.mxu0 %v489
    %v491 = vand.u32 %v472, 4294901760
    %v492 = vsub.f32 %v472, %v491
    %v493 = vand.u32 %v492, 4294901760
    %v494 = vsub.f32 %v492, %v493
    %v495 = vand.u32 %v494, 4294901760
    %496 = vmatmul.f32.gmra.mxu0 %v495
    %v497 = vpop.f32.mrf.mxu0
    %v498 = vadd.f32 0.0, %v497
    %499 = vdwg.mxu0
    %500 = vmatpush.msra.mxu0 0.0
    %501 = vmatpush.msra.mxu0 0.0
    %502 = vmatpush.msra.mxu0 0.0
    %503 = vmatpush.msra.mxu0 0.0
    %504 = vmatpush.msra.mxu0 0.0
    %505 = vmatpush.msra.mxu0 0.0
    %506 = vmatpush.msra.mxu0 0.0
    %507 = vmatpush.msra.mxu0 0.0
    %508 = vmatpush.msra.mxu0 0.0
    %509 = vmatpush.msra.mxu0 0.0
    %510 = vmatpush.msra.mxu0 0.0
    %511 = vmatpush.msra.mxu0 0.0
    %512 = vmatpush.msra.mxu0 0.0
    %513 = vmatpush.msra.mxu0 0.0
    %514 = vmatpush.msra.mxu0 0.0
    %v515 = vand.u32 %v51, 4294901760
    %v516 = vsub.f32 %v51, %v515
    %v517 = vand.u32 %v516, 4294901760
    %v518 = vsub.f32 %v516, %v517
    %v519 = vand.u32 %v518, 4294901760
    %520 = vmatpush.msra.mxu0 %v519
    %v521 = vand.u32 %v472, 4294901760
    %522 = vmatmul.f32.gmra.mxu0 %v521
    %v523 = vpop.f32.mrf.mxu0
    %v524 = vadd.f32 %v498, %v523
    %525 = vdwg.mxu0
    %526 = vmatpush.msra.mxu0 0.0
    %527 = vmatpush.msra.mxu0 0.0
    %528 = vmatpush.msra.mxu0 0.0
    %529 = vmatpush.msra.mxu0 0.0
    %530 = vmatpush.msra.mxu0 0.0
    %531 = vmatpush.msra.mxu0 0.0
    %532 = vmatpush.msra.mxu0 0.0
    %533 = vmatpush.msra.mxu0 0.0
    %534 = vmatpush.msra.mxu0 0.0
    %535 = vmatpush.msra.mxu0 0.0
    %536 = vmatpush.msra.mxu0 0.0
    %537 = vmatpush.msra.mxu0 0.0
    %538 = vmatpush.msra.mxu0 0.0
    %539 = vmatpush.msra.mxu0 0.0
    %540 = vmatpush.msra.mxu0 0.0
    %v541 = vand.u32 %v51, 4294901760
    %v542 = vsub.f32 %v51, %v541
    %543 = vmatpush.msra.mxu0 %v542
    %v544 = vand.u32 %v472, 4294901760
    %v545 = vsub.f32 %v472, %v544
    %546 = vmatmul.f32.gmra.mxu0 %v545
    %v547 = vpop.f32.mrf.mxu0
    %v548 = vadd.f32 %v524, %v547
    %549 = vdwg.mxu0
    %550 = vmatpush.msra.mxu0 0.0
    %551 = vmatpush.msra.mxu0 0.0
    %552 = vmatpush.msra.mxu0 0.0
    %553 = vmatpush.msra.mxu0 0.0
    %554 = vmatpush.msra.mxu0 0.0
    %555 = vmatpush.msra.mxu0 0.0
    %556 = vmatpush.msra.mxu0 0.0
    %557 = vmatpush.msra.mxu0 0.0
    %558 = vmatpush.msra.mxu0 0.0
    %559 = vmatpush.msra.mxu0 0.0
    %560 = vmatpush.msra.mxu0 0.0
    %561 = vmatpush.msra.mxu0 0.0
    %562 = vmatpush.msra.mxu0 0.0
    %563 = vmatpush.msra.mxu0 0.0
    %564 = vmatpush.msra.mxu0 0.0
    %v565 = vand.u32 %v51, 4294901760
    %566 = vmatpush.msra.mxu0 %v565
    %v567 = vand.u32 %v472, 4294901760
    %v568 = vsub.f32 %v472, %v567
    %v569 = vand.u32 %v568, 4294901760
    %570 = vmatmul.f32.gmra.mxu0 %v569
    %v571 = vpop.f32.mrf.mxu0
    %v572 = vadd.f32 %v548, %v571
    %573 = vdwg.mxu0
    %574 = vmatpush.msra.mxu0 0.0
    %575 = vmatpush.msra.mxu0 0.0
    %576 = vmatpush.msra.mxu0 0.0
    %577 = vmatpush.msra.mxu0 0.0
    %578 = vmatpush.msra.mxu0 0.0
    %579 = vmatpush.msra.mxu0 0.0
    %580 = vmatpush.msra.mxu0 0.0
    %581 = vmatpush.msra.mxu0 0.0
    %582 = vmatpush.msra.mxu0 0.0
    %583 = vmatpush.msra.mxu0 0.0
    %584 = vmatpush.msra.mxu0 0.0
    %585 = vmatpush.msra.mxu0 0.0
    %586 = vmatpush.msra.mxu0 0.0
    %587 = vmatpush.msra.mxu0 0.0
    %588 = vmatpush.msra.mxu0 0.0
    %v589 = vand.u32 %v51, 4294901760
    %v590 = vsub.f32 %v51, %v589
    %v591 = vand.u32 %v590, 4294901760
    %592 = vmatpush.msra.mxu0 %v591
    %v593 = vand.u32 %v472, 4294901760
    %594 = vmatmul.f32.gmra.mxu0 %v593
    %v595 = vpop.f32.mrf.mxu0
    %v596 = vadd.f32 %v572, %v595
    %597 = vdwg.mxu0
    %598 = vmatpush.msra.mxu0 0.0
    %599 = vmatpush.msra.mxu0 0.0
    %600 = vmatpush.msra.mxu0 0.0
    %601 = vmatpush.msra.mxu0 0.0
    %602 = vmatpush.msra.mxu0 0.0
    %603 = vmatpush.msra.mxu0 0.0
    %604 = vmatpush.msra.mxu0 0.0
    %605 = vmatpush.msra.mxu0 0.0
    %606 = vmatpush.msra.mxu0 0.0
    %607 = vmatpush.msra.mxu0 0.0
    %608 = vmatpush.msra.mxu0 0.0
    %609 = vmatpush.msra.mxu0 0.0
    %610 = vmatpush.msra.mxu0 0.0
    %611 = vmatpush.msra.mxu0 0.0
    %612 = vmatpush.msra.mxu0 0.0
    %v613 = vand.u32 %v51, 4294901760
    %614 = vmatpush.msra.mxu0 %v613
    %v615 = vand.u32 %v472, 4294901760
    %616 = vmatmul.f32.gmra.mxu0 %v615
    %v617 = vpop.f32.mrf.mxu0
    %v618 = vadd.f32 %v596, %v617
    %619 = vdwg.mxu0
    %s620 = scalar_lea.vmem %s4, 8
    %v621 = vld [vmem:[%s620] sm:$0xf]
    %v623 = vsel %vm319, %v621, 0
    %625 = vmatpush.msra.mxu0 0.0
    %626 = vmatpush.msra.mxu0 0.0
    %627 = vmatpush.msra.mxu0 0.0
    %628 = vmatpush.msra.mxu0 0.0
    %629 = vmatpush.msra.mxu0 0.0
    %630 = vmatpush.msra.mxu0 0.0
    %631 = vmatpush.msra.mxu0 0.0
    %632 = vmatpush.msra.mxu0 0.0
    %633 = vmatpush.msra.mxu0 0.0
    %634 = vmatpush.msra.mxu0 0.0
    %635 = vmatpush.msra.mxu0 0.0
    %636 = vmatpush.msra.mxu0 0.0
    %637 = vmatpush.msra.mxu0 0.0
    %638 = vmatpush.msra.mxu0 0.0
    %639 = vmatpush.msra.mxu0 0.0
    %v640 = vand.u32 %v51, 4294901760
    %641 = vmatpush.msra.mxu0 %v640
    %v642 = vand.u32 %v623, 4294901760
    %v643 = vsub.f32 %v623, %v642
    %v644 = vand.u32 %v643, 4294901760
    %v645 = vsub.f32 %v643, %v644
    %v646 = vand.u32 %v645, 4294901760
    %647 = vmatmul.f32.gmra.mxu0 %v646
    %v648 = vpop.f32.mrf.mxu0
    %v649 = vadd.f32 0.0, %v648
    %650 = vdwg.mxu0
    %651 = vmatpush.msra.mxu0 0.0
    %652 = vmatpush.msra.mxu0 0.0
    %653 = vmatpush.msra.mxu0 0.0
    %654 = vmatpush.msra.mxu0 0.0
    %655 = vmatpush.msra.mxu0 0.0
    %656 = vmatpush.msra.mxu0 0.0
    %657 = vmatpush.msra.mxu0 0.0
    %658 = vmatpush.msra.mxu0 0.0
    %659 = vmatpush.msra.mxu0 0.0
    %660 = vmatpush.msra.mxu0 0.0
    %661 = vmatpush.msra.mxu0 0.0
    %662 = vmatpush.msra.mxu0 0.0
    %663 = vmatpush.msra.mxu0 0.0
    %664 = vmatpush.msra.mxu0 0.0
    %665 = vmatpush.msra.mxu0 0.0
    %v666 = vand.u32 %v51, 4294901760
    %v667 = vsub.f32 %v51, %v666
    %v668 = vand.u32 %v667, 4294901760
    %v669 = vsub.f32 %v667, %v668
    %v670 = vand.u32 %v669, 4294901760
    %671 = vmatpush.msra.mxu0 %v670
    %v672 = vand.u32 %v623, 4294901760
    %673 = vmatmul.f32.gmra.mxu0 %v672
    %v674 = vpop.f32.mrf.mxu0
    %v675 = vadd.f32 %v649, %v674
    %676 = vdwg.mxu0
    %677 = vmatpush.msra.mxu0 0.0
    %678 = vmatpush.msra.mxu0 0.0
    %679 = vmatpush.msra.mxu0 0.0
    %680 = vmatpush.msra.mxu0 0.0
    %681 = vmatpush.msra.mxu0 0.0
    %682 = vmatpush.msra.mxu0 0.0
    %683 = vmatpush.msra.mxu0 0.0
    %684 = vmatpush.msra.mxu0 0.0
    %685 = vmatpush.msra.mxu0 0.0
    %686 = vmatpush.msra.mxu0 0.0
    %687 = vmatpush.msra.mxu0 0.0
    %688 = vmatpush.msra.mxu0 0.0
    %689 = vmatpush.msra.mxu0 0.0
    %690 = vmatpush.msra.mxu0 0.0
    %691 = vmatpush.msra.mxu0 0.0
    %v692 = vand.u32 %v51, 4294901760
    %v693 = vsub.f32 %v51, %v692
    %694 = vmatpush.msra.mxu0 %v693
    %v695 = vand.u32 %v623, 4294901760
    %v696 = vsub.f32 %v623, %v695
    %697 = vmatmul.f32.gmra.mxu0 %v696
    %v698 = vpop.f32.mrf.mxu0
    %v699 = vadd.f32 %v675, %v698
    %700 = vdwg.mxu0
    %701 = vmatpush.msra.mxu0 0.0
    %702 = vmatpush.msra.mxu0 0.0
    %703 = vmatpush.msra.mxu0 0.0
    %704 = vmatpush.msra.mxu0 0.0
    %705 = vmatpush.msra.mxu0 0.0
    %706 = vmatpush.msra.mxu0 0.0
    %707 = vmatpush.msra.mxu0 0.0
    %708 = vmatpush.msra.mxu0 0.0
    %709 = vmatpush.msra.mxu0 0.0
    %710 = vmatpush.msra.mxu0 0.0
    %711 = vmatpush.msra.mxu0 0.0
    %712 = vmatpush.msra.mxu0 0.0
    %713 = vmatpush.msra.mxu0 0.0
    %714 = vmatpush.msra.mxu0 0.0
    %715 = vmatpush.msra.mxu0 0.0
    %v716 = vand.u32 %v51, 4294901760
    %717 = vmatpush.msra.mxu0 %v716
    %v718 = vand.u32 %v623, 4294901760
    %v719 = vsub.f32 %v623, %v718
    %v720 = vand.u32 %v719, 4294901760
    %721 = vmatmul.f32.gmra.mxu0 %v720
    %v722 = vpop.f32.mrf.mxu0
    %v723 = vadd.f32 %v699, %v722
    %724 = vdwg.mxu0
    %725 = vmatpush.msra.mxu0 0.0
    %726 = vmatpush.msra.mxu0 0.0
    %727 = vmatpush.msra.mxu0 0.0
    %728 = vmatpush.msra.mxu0 0.0
    %729 = vmatpush.msra.mxu0 0.0
    %730 = vmatpush.msra.mxu0 0.0
    %731 = vmatpush.msra.mxu0 0.0
    %732 = vmatpush.msra.mxu0 0.0
    %733 = vmatpush.msra.mxu0 0.0
    %734 = vmatpush.msra.mxu0 0.0
    %735 = vmatpush.msra.mxu0 0.0
    %736 = vmatpush.msra.mxu0 0.0
    %737 = vmatpush.msra.mxu0 0.0
    %738 = vmatpush.msra.mxu0 0.0
    %739 = vmatpush.msra.mxu0 0.0
    %v740 = vand.u32 %v51, 4294901760
    %v741 = vsub.f32 %v51, %v740
    %v742 = vand.u32 %v741, 4294901760
    %743 = vmatpush.msra.mxu0 %v742
    %v744 = vand.u32 %v623, 4294901760
    %745 = vmatmul.f32.gmra.mxu0 %v744
    %v746 = vpop.f32.mrf.mxu0
    %v747 = vadd.f32 %v723, %v746
    %748 = vdwg.mxu0
    %749 = vmatpush.msra.mxu0 0.0
    %750 = vmatpush.msra.mxu0 0.0
    %751 = vmatpush.msra.mxu0 0.0
    %752 = vmatpush.msra.mxu0 0.0
    %753 = vmatpush.msra.mxu0 0.0
    %754 = vmatpush.msra.mxu0 0.0
    %755 = vmatpush.msra.mxu0 0.0
    %756 = vmatpush.msra.mxu0 0.0
    %757 = vmatpush.msra.mxu0 0.0
    %758 = vmatpush.msra.mxu0 0.0
    %759 = vmatpush.msra.mxu0 0.0
    %760 = vmatpush.msra.mxu0 0.0
    %761 = vmatpush.msra.mxu0 0.0
    %762 = vmatpush.msra.mxu0 0.0
    %763 = vmatpush.msra.mxu0 0.0
    %v764 = vand.u32 %v51, 4294901760
    %765 = vmatpush.msra.mxu0 %v764
    %v766 = vand.u32 %v623, 4294901760
    %767 = vmatmul.f32.gmra.mxu0 %v766
    %v768 = vpop.f32.mrf.mxu0
    %v769 = vadd.f32 %v747, %v768
    %770 = vdwg.mxu0
    %s771 = scalar_lea.vmem %s4, 12
    %v772 = vld [vmem:[%s771] sm:$0xf]
    %v774 = vsel %vm319, %v772, 0
    %776 = vmatpush.msra.mxu0 0.0
    %777 = vmatpush.msra.mxu0 0.0
    %778 = vmatpush.msra.mxu0 0.0
    %779 = vmatpush.msra.mxu0 0.0
    %780 = vmatpush.msra.mxu0 0.0
    %781 = vmatpush.msra.mxu0 0.0
    %782 = vmatpush.msra.mxu0 0.0
    %783 = vmatpush.msra.mxu0 0.0
    %784 = vmatpush.msra.mxu0 0.0
    %785 = vmatpush.msra.mxu0 0.0
    %786 = vmatpush.msra.mxu0 0.0
    %787 = vmatpush.msra.mxu0 0.0
    %788 = vmatpush.msra.mxu0 0.0
    %789 = vmatpush.msra.mxu0 0.0
    %790 = vmatpush.msra.mxu0 0.0
    %v791 = vand.u32 %v51, 4294901760
    %792 = vmatpush.msra.mxu0 %v791
    %v793 = vand.u32 %v774, 4294901760
    %v794 = vsub.f32 %v774, %v793
    %v795 = vand.u32 %v794, 4294901760
    %v796 = vsub.f32 %v794, %v795
    %v797 = vand.u32 %v796, 4294901760
    %798 = vmatmul.f32.gmra.mxu0 %v797
    %v799 = vpop.f32.mrf.mxu0
    %v800 = vadd.f32 0.0, %v799
    %801 = vdwg.mxu0
    %802 = vmatpush.msra.mxu0 0.0
    %803 = vmatpush.msra.mxu0 0.0
    %804 = vmatpush.msra.mxu0 0.0
    %805 = vmatpush.msra.mxu0 0.0
    %806 = vmatpush.msra.mxu0 0.0
    %807 = vmatpush.msra.mxu0 0.0
    %808 = vmatpush.msra.mxu0 0.0
    %809 = vmatpush.msra.mxu0 0.0
    %810 = vmatpush.msra.mxu0 0.0
    %811 = vmatpush.msra.mxu0 0.0
    %812 = vmatpush.msra.mxu0 0.0
    %813 = vmatpush.msra.mxu0 0.0
    %814 = vmatpush.msra.mxu0 0.0
    %815 = vmatpush.msra.mxu0 0.0
    %816 = vmatpush.msra.mxu0 0.0
    %v817 = vand.u32 %v51, 4294901760
    %v818 = vsub.f32 %v51, %v817
    %v819 = vand.u32 %v818, 4294901760
    %v820 = vsub.f32 %v818, %v819
    %v821 = vand.u32 %v820, 4294901760
    %822 = vmatpush.msra.mxu0 %v821
    %v823 = vand.u32 %v774, 4294901760
    %824 = vmatmul.f32.gmra.mxu0 %v823
    %v825 = vpop.f32.mrf.mxu0
    %v826 = vadd.f32 %v800, %v825
    %827 = vdwg.mxu0
    %828 = vmatpush.msra.mxu0 0.0
    %829 = vmatpush.msra.mxu0 0.0
    %830 = vmatpush.msra.mxu0 0.0
    %831 = vmatpush.msra.mxu0 0.0
    %832 = vmatpush.msra.mxu0 0.0
    %833 = vmatpush.msra.mxu0 0.0
    %834 = vmatpush.msra.mxu0 0.0
    %835 = vmatpush.msra.mxu0 0.0
    %836 = vmatpush.msra.mxu0 0.0
    %837 = vmatpush.msra.mxu0 0.0
    %838 = vmatpush.msra.mxu0 0.0
    %839 = vmatpush.msra.mxu0 0.0
    %840 = vmatpush.msra.mxu0 0.0
    %841 = vmatpush.msra.mxu0 0.0
    %842 = vmatpush.msra.mxu0 0.0
    %v843 = vand.u32 %v51, 4294901760
    %v844 = vsub.f32 %v51, %v843
    %845 = vmatpush.msra.mxu0 %v844
    %v846 = vand.u32 %v774, 4294901760
    %v847 = vsub.f32 %v774, %v846
    %848 = vmatmul.f32.gmra.mxu0 %v847
    %v849 = vpop.f32.mrf.mxu0
    %v850 = vadd.f32 %v826, %v849
    %851 = vdwg.mxu0
    %852 = vmatpush.msra.mxu0 0.0
    %853 = vmatpush.msra.mxu0 0.0
    %854 = vmatpush.msra.mxu0 0.0
    %855 = vmatpush.msra.mxu0 0.0
    %856 = vmatpush.msra.mxu0 0.0
    %857 = vmatpush.msra.mxu0 0.0
    %858 = vmatpush.msra.mxu0 0.0
    %859 = vmatpush.msra.mxu0 0.0
    %860 = vmatpush.msra.mxu0 0.0
    %861 = vmatpush.msra.mxu0 0.0
    %862 = vmatpush.msra.mxu0 0.0
    %863 = vmatpush.msra.mxu0 0.0
    %864 = vmatpush.msra.mxu0 0.0
    %865 = vmatpush.msra.mxu0 0.0
    %866 = vmatpush.msra.mxu0 0.0
    %v867 = vand.u32 %v51, 4294901760
    %868 = vmatpush.msra.mxu0 %v867
    %v869 = vand.u32 %v774, 4294901760
    %v870 = vsub.f32 %v774, %v869
    %v871 = vand.u32 %v870, 4294901760
    %872 = vmatmul.f32.gmra.mxu0 %v871
    %v873 = vpop.f32.mrf.mxu0
    %v874 = vadd.f32 %v850, %v873
    %875 = vdwg.mxu0
    %876 = vmatpush.msra.mxu0 0.0
    %877 = vmatpush.msra.mxu0 0.0
    %878 = vmatpush.msra.mxu0 0.0
    %879 = vmatpush.msra.mxu0 0.0
    %880 = vmatpush.msra.mxu0 0.0
    %881 = vmatpush.msra.mxu0 0.0
    %882 = vmatpush.msra.mxu0 0.0
    %883 = vmatpush.msra.mxu0 0.0
    %884 = vmatpush.msra.mxu0 0.0
    %885 = vmatpush.msra.mxu0 0.0
    %886 = vmatpush.msra.mxu0 0.0
    %887 = vmatpush.msra.mxu0 0.0
    %888 = vmatpush.msra.mxu0 0.0
    %889 = vmatpush.msra.mxu0 0.0
    %890 = vmatpush.msra.mxu0 0.0
    %v891 = vand.u32 %v51, 4294901760
    %v892 = vsub.f32 %v51, %v891
    %v893 = vand.u32 %v892, 4294901760
    %894 = vmatpush.msra.mxu0 %v893
    %v895 = vand.u32 %v774, 4294901760
    %896 = vmatmul.f32.gmra.mxu0 %v895
    %v897 = vpop.f32.mrf.mxu0
    %v898 = vadd.f32 %v874, %v897
    %899 = vdwg.mxu0
    %900 = vmatpush.msra.mxu0 0.0
    %901 = vmatpush.msra.mxu0 0.0
    %902 = vmatpush.msra.mxu0 0.0
    %903 = vmatpush.msra.mxu0 0.0
    %904 = vmatpush.msra.mxu0 0.0
    %905 = vmatpush.msra.mxu0 0.0
    %906 = vmatpush.msra.mxu0 0.0
    %907 = vmatpush.msra.mxu0 0.0
    %908 = vmatpush.msra.mxu0 0.0
    %909 = vmatpush.msra.mxu0 0.0
    %910 = vmatpush.msra.mxu0 0.0
    %911 = vmatpush.msra.mxu0 0.0
    %912 = vmatpush.msra.mxu0 0.0
    %913 = vmatpush.msra.mxu0 0.0
    %914 = vmatpush.msra.mxu0 0.0
    %v915 = vand.u32 %v51, 4294901760
    %916 = vmatpush.msra.mxu0 %v915
    %v917 = vand.u32 %v774, 4294901760
    %918 = vmatmul.f32.gmra.mxu0 %v917
    %v919 = vpop.f32.mrf.mxu0
    %v920 = vadd.f32 %v898, %v919
    %921 = vdwg.mxu0
    %v922 = vld [vmem:[%s5] sm:$0xf]
    %924 = vset.pattern.permute.xlu0 0
    %925 = vperm.xlu0 %924, %v922
    %v926 = vpop.permute.xlu0 %925
    %v928 = vand.u32 %v114, 4294901760
    %929 = vmatpush.msra.mxu0 %v928
    %v930 = vand.u32 %v110, 4294901760
    %931 = vmatpush.msra.mxu0 %v930
    %v932 = vand.u32 %v106, 4294901760
    %933 = vmatpush.msra.mxu0 %v932
    %v934 = vand.u32 %v102, 4294901760
    %935 = vmatpush.msra.mxu0 %v934
    %v936 = vand.u32 %v98, 4294901760
    %937 = vmatpush.msra.mxu0 %v936
    %v938 = vand.u32 %v94, 4294901760
    %939 = vmatpush.msra.mxu0 %v938
    %v940 = vand.u32 %v90, 4294901760
    %941 = vmatpush.msra.mxu0 %v940
    %v942 = vand.u32 %v86, 4294901760
    %943 = vmatpush.msra.mxu0 %v942
    %v944 = vand.u32 %v82, 4294901760
    %945 = vmatpush.msra.mxu0 %v944
    %v946 = vand.u32 %v78, 4294901760
    %947 = vmatpush.msra.mxu0 %v946
    %v948 = vand.u32 %v74, 4294901760
    %949 = vmatpush.msra.mxu0 %v948
    %v950 = vand.u32 %v70, 4294901760
    %951 = vmatpush.msra.mxu0 %v950
    %v952 = vand.u32 %v66, 4294901760
    %953 = vmatpush.msra.mxu0 %v952
    %v954 = vand.u32 %v62, 4294901760
    %955 = vmatpush.msra.mxu0 %v954
    %v956 = vand.u32 %v58, 4294901760
    %957 = vmatpush.msra.mxu0 %v956
    %v958 = vand.u32 %v54, 4294901760
    %959 = vmatpush.msra.mxu0 %v958
    %v960 = vand.u32 %v467, 4294901760
    %v961 = vsub.f32 %v467, %v960
    %v962 = vand.u32 %v961, 4294901760
    %v963 = vsub.f32 %v961, %v962
    %v964 = vand.u32 %v963, 4294901760
    %965 = vmatmul.f32.gmra.mxu0 %v964
    %v966 = vpop.f32.mrf.mxu0
    %v967 = vadd.f32 %v926, %v966
    %968 = vdwg.mxu0
    %v969 = vand.u32 %v114, 4294901760
    %v970 = vsub.f32 %v114, %v969
    %v971 = vand.u32 %v970, 4294901760
    %v972 = vsub.f32 %v970, %v971
    %v973 = vand.u32 %v972, 4294901760
    %974 = vmatpush.msra.mxu0 %v973
    %v975 = vand.u32 %v110, 4294901760
    %v976 = vsub.f32 %v110, %v975
    %v977 = vand.u32 %v976, 4294901760
    %v978 = vsub.f32 %v976, %v977
    %v979 = vand.u32 %v978, 4294901760
    %980 = vmatpush.msra.mxu0 %v979
    %v981 = vand.u32 %v106, 4294901760
    %v982 = vsub.f32 %v106, %v981
    %v983 = vand.u32 %v982, 4294901760
    %v984 = vsub.f32 %v982, %v983
    %v985 = vand.u32 %v984, 4294901760
    %986 = vmatpush.msra.mxu0 %v985
    %v987 = vand.u32 %v102, 4294901760
    %v988 = vsub.f32 %v102, %v987
    %v989 = vand.u32 %v988, 4294901760
    %v990 = vsub.f32 %v988, %v989
    %v991 = vand.u32 %v990, 4294901760
    %992 = vmatpush.msra.mxu0 %v991
    %v993 = vand.u32 %v98, 4294901760
    %v994 = vsub.f32 %v98, %v993
    %v995 = vand.u32 %v994, 4294901760
    %v996 = vsub.f32 %v994, %v995
    %v997 = vand.u32 %v996, 4294901760
    %998 = vmatpush.msra.mxu0 %v997
    %v999 = vand.u32 %v94, 4294901760
    %v1000 = vsub.f32 %v94, %v999
    %v1001 = vand.u32 %v1000, 4294901760
    %v1002 = vsub.f32 %v1000, %v1001
    %v1003 = vand.u32 %v1002, 4294901760
    %1004 = vmatpush.msra.mxu0 %v1003
    %v1005 = vand.u32 %v90, 4294901760
    %v1006 = vsub.f32 %v90, %v1005
    %v1007 = vand.u32 %v1006, 4294901760
    %v1008 = vsub.f32 %v1006, %v1007
    %v1009 = vand.u32 %v1008, 4294901760
    %1010 = vmatpush.msra.mxu0 %v1009
    %v1011 = vand.u32 %v86, 4294901760
    %v1012 = vsub.f32 %v86, %v1011
    %v1013 = vand.u32 %v1012, 4294901760
    %v1014 = vsub.f32 %v1012, %v1013
    %v1015 = vand.u32 %v1014, 4294901760
    %1016 = vmatpush.msra.mxu0 %v1015
    %v1017 = vand.u32 %v82, 4294901760
    %v1018 = vsub.f32 %v82, %v1017
    %v1019 = vand.u32 %v1018, 4294901760
    %v1020 = vsub.f32 %v1018, %v1019
    %v1021 = vand.u32 %v1020, 4294901760
    %1022 = vmatpush.msra.mxu0 %v1021
    %v1023 = vand.u32 %v78, 4294901760
    %v1024 = vsub.f32 %v78, %v1023
    %v1025 = vand.u32 %v1024, 4294901760
    %v1026 = vsub.f32 %v1024, %v1025
    %v1027 = vand.u32 %v1026, 4294901760
    %1028 = vmatpush.msra.mxu0 %v1027
    %v1029 = vand.u32 %v74, 4294901760
    %v1030 = vsub.f32 %v74, %v1029
    %v1031 = vand.u32 %v1030, 4294901760
    %v1032 = vsub.f32 %v1030, %v1031
    %v1033 = vand.u32 %v1032, 4294901760
    %1034 = vmatpush.msra.mxu0 %v1033
    %v1035 = vand.u32 %v70, 4294901760
    %v1036 = vsub.f32 %v70, %v1035
    %v1037 = vand.u32 %v1036, 4294901760
    %v1038 = vsub.f32 %v1036, %v1037
    %v1039 = vand.u32 %v1038, 4294901760
    %1040 = vmatpush.msra.mxu0 %v1039
    %v1041 = vand.u32 %v66, 4294901760
    %v1042 = vsub.f32 %v66, %v1041
    %v1043 = vand.u32 %v1042, 4294901760
    %v1044 = vsub.f32 %v1042, %v1043
    %v1045 = vand.u32 %v1044, 4294901760
    %1046 = vmatpush.msra.mxu0 %v1045
    %v1047 = vand.u32 %v62, 4294901760
    %v1048 = vsub.f32 %v62, %v1047
    %v1049 = vand.u32 %v1048, 4294901760
    %v1050 = vsub.f32 %v1048, %v1049
    %v1051 = vand.u32 %v1050, 4294901760
    %1052 = vmatpush.msra.mxu0 %v1051
    %v1053 = vand.u32 %v58, 4294901760
    %v1054 = vsub.f32 %v58, %v1053
    %v1055 = vand.u32 %v1054, 4294901760
    %v1056 = vsub.f32 %v1054, %v1055
    %v1057 = vand.u32 %v1056, 4294901760
    %1058 = vmatpush.msra.mxu0 %v1057
    %v1059 = vand.u32 %v54, 4294901760
    %v1060 = vsub.f32 %v54, %v1059
    %v1061 = vand.u32 %v1060, 4294901760
    %v1062 = vsub.f32 %v1060, %v1061
    %v1063 = vand.u32 %v1062, 4294901760
    %1064 = vmatpush.msra.mxu0 %v1063
    %v1065 = vand.u32 %v467, 4294901760
    %1066 = vmatmul.f32.gmra.mxu0 %v1065
    %v1067 = vpop.f32.mrf.mxu0
    %v1068 = vadd.f32 %v967, %v1067
    %1069 = vdwg.mxu0
    %v1070 = vand.u32 %v114, 4294901760
    %v1071 = vsub.f32 %v114, %v1070
    %1072 = vmatpush.msra.mxu0 %v1071
    %v1073 = vand.u32 %v110, 4294901760
    %v1074 = vsub.f32 %v110, %v1073
    %1075 = vmatpush.msra.mxu0 %v1074
    %v1076 = vand.u32 %v106, 4294901760
    %v1077 = vsub.f32 %v106, %v1076
    %1078 = vmatpush.msra.mxu0 %v1077
    %v1079 = vand.u32 %v102, 4294901760
    %v1080 = vsub.f32 %v102, %v1079
    %1081 = vmatpush.msra.mxu0 %v1080
    %v1082 = vand.u32 %v98, 4294901760
    %v1083 = vsub.f32 %v98, %v1082
    %1084 = vmatpush.msra.mxu0 %v1083
    %v1085 = vand.u32 %v94, 4294901760
    %v1086 = vsub.f32 %v94, %v1085
    %1087 = vmatpush.msra.mxu0 %v1086
    %v1088 = vand.u32 %v90, 4294901760
    %v1089 = vsub.f32 %v90, %v1088
    %1090 = vmatpush.msra.mxu0 %v1089
    %v1091 = vand.u32 %v86, 4294901760
    %v1092 = vsub.f32 %v86, %v1091
    %1093 = vmatpush.msra.mxu0 %v1092
    %v1094 = vand.u32 %v82, 4294901760
    %v1095 = vsub.f32 %v82, %v1094
    %1096 = vmatpush.msra.mxu0 %v1095
    %v1097 = vand.u32 %v78, 4294901760
    %v1098 = vsub.f32 %v78, %v1097
    %1099 = vmatpush.msra.mxu0 %v1098
    %v1100 = vand.u32 %v74, 4294901760
    %v1101 = vsub.f32 %v74, %v1100
    %1102 = vmatpush.msra.mxu0 %v1101
    %v1103 = vand.u32 %v70, 4294901760
    %v1104 = vsub.f32 %v70, %v1103
    %1105 = vmatpush.msra.mxu0 %v1104
    %v1106 = vand.u32 %v66, 4294901760
    %v1107 = vsub.f32 %v66, %v1106
    %1108 = vmatpush.msra.mxu0 %v1107
    %v1109 = vand.u32 %v62, 4294901760
    %v1110 = vsub.f32 %v62, %v1109
    %1111 = vmatpush.msra.mxu0 %v1110
    %v1112 = vand.u32 %v58, 4294901760
    %v1113 = vsub.f32 %v58, %v1112
    %1114 = vmatpush.msra.mxu0 %v1113
    %v1115 = vand.u32 %v54, 4294901760
    %v1116 = vsub.f32 %v54, %v1115
    %1117 = vmatpush.msra.mxu0 %v1116
    %v1118 = vand.u32 %v467, 4294901760
    %v1119 = vsub.f32 %v467, %v1118
    %1120 = vmatmul.f32.gmra.mxu0 %v1119
    %v1121 = vpop.f32.mrf.mxu0
    %v1122 = vadd.f32 %v1068, %v1121
    %1123 = vdwg.mxu0
    %v1124 = vand.u32 %v114, 4294901760
    %1125 = vmatpush.msra.mxu0 %v1124
    %v1126 = vand.u32 %v110, 4294901760
    %1127 = vmatpush.msra.mxu0 %v1126
    %v1128 = vand.u32 %v106, 4294901760
    %1129 = vmatpush.msra.mxu0 %v1128
    %v1130 = vand.u32 %v102, 4294901760
    %1131 = vmatpush.msra.mxu0 %v1130
    %v1132 = vand.u32 %v98, 4294901760
    %1133 = vmatpush.msra.mxu0 %v1132
    %v1134 = vand.u32 %v94, 4294901760
    %1135 = vmatpush.msra.mxu0 %v1134
    %v1136 = vand.u32 %v90, 4294901760
    %1137 = vmatpush.msra.mxu0 %v1136
    %v1138 = vand.u32 %v86, 4294901760
    %1139 = vmatpush.msra.mxu0 %v1138
    %v1140 = vand.u32 %v82, 4294901760
    %1141 = vmatpush.msra.mxu0 %v1140
    %v1142 = vand.u32 %v78, 4294901760
    %1143 = vmatpush.msra.mxu0 %v1142
    %v1144 = vand.u32 %v74, 4294901760
    %1145 = vmatpush.msra.mxu0 %v1144
    %v1146 = vand.u32 %v70, 4294901760
    %1147 = vmatpush.msra.mxu0 %v1146
    %v1148 = vand.u32 %v66, 4294901760
    %1149 = vmatpush.msra.mxu0 %v1148
    %v1150 = vand.u32 %v62, 4294901760
    %1151 = vmatpush.msra.mxu0 %v1150
    %v1152 = vand.u32 %v58, 4294901760
    %1153 = vmatpush.msra.mxu0 %v1152
    %v1154 = vand.u32 %v54, 4294901760
    %1155 = vmatpush.msra.mxu0 %v1154
    %v1156 = vand.u32 %v467, 4294901760
    %v1157 = vsub.f32 %v467, %v1156
    %v1158 = vand.u32 %v1157, 4294901760
    %1159 = vmatmul.f32.gmra.mxu0 %v1158
    %v1160 = vpop.f32.mrf.mxu0
    %v1161 = vadd.f32 %v1122, %v1160
    %1162 = vdwg.mxu0
    %v1163 = vand.u32 %v114, 4294901760
    %v1164 = vsub.f32 %v114, %v1163
    %v1165 = vand.u32 %v1164, 4294901760
    %1166 = vmatpush.msra.mxu0 %v1165
    %v1167 = vand.u32 %v110, 4294901760
    %v1168 = vsub.f32 %v110, %v1167
    %v1169 = vand.u32 %v1168, 4294901760
    %1170 = vmatpush.msra.mxu0 %v1169
    %v1171 = vand.u32 %v106, 4294901760
    %v1172 = vsub.f32 %v106, %v1171
    %v1173 = vand.u32 %v1172, 4294901760
    %1174 = vmatpush.msra.mxu0 %v1173
    %v1175 = vand.u32 %v102, 4294901760
    %v1176 = vsub.f32 %v102, %v1175
    %v1177 = vand.u32 %v1176, 4294901760
    %1178 = vmatpush.msra.mxu0 %v1177
    %v1179 = vand.u32 %v98, 4294901760
    %v1180 = vsub.f32 %v98, %v1179
    %v1181 = vand.u32 %v1180, 4294901760
    %1182 = vmatpush.msra.mxu0 %v1181
    %v1183 = vand.u32 %v94, 4294901760
    %v1184 = vsub.f32 %v94, %v1183
    %v1185 = vand.u32 %v1184, 4294901760
    %1186 = vmatpush.msra.mxu0 %v1185
    %v1187 = vand.u32 %v90, 4294901760
    %v1188 = vsub.f32 %v90, %v1187
    %v1189 = vand.u32 %v1188, 4294901760
    %1190 = vmatpush.msra.mxu0 %v1189
    %v1191 = vand.u32 %v86, 4294901760
    %v1192 = vsub.f32 %v86, %v1191
    %v1193 = vand.u32 %v1192, 4294901760
    %1194 = vmatpush.msra.mxu0 %v1193
    %v1195 = vand.u32 %v82, 4294901760
    %v1196 = vsub.f32 %v82, %v1195
    %v1197 = vand.u32 %v1196, 4294901760
    %1198 = vmatpush.msra.mxu0 %v1197
    %v1199 = vand.u32 %v78, 4294901760
    %v1200 = vsub.f32 %v78, %v1199
    %v1201 = vand.u32 %v1200, 4294901760
    %1202 = vmatpush.msra.mxu0 %v1201
    %v1203 = vand.u32 %v74, 4294901760
    %v1204 = vsub.f32 %v74, %v1203
    %v1205 = vand.u32 %v1204, 4294901760
    %1206 = vmatpush.msra.mxu0 %v1205
    %v1207 = vand.u32 %v70, 4294901760
    %v1208 = vsub.f32 %v70, %v1207
    %v1209 = vand.u32 %v1208, 4294901760
    %1210 = vmatpush.msra.mxu0 %v1209
    %v1211 = vand.u32 %v66, 4294901760
    %v1212 = vsub.f32 %v66, %v1211
    %v1213 = vand.u32 %v1212, 4294901760
    %1214 = vmatpush.msra.mxu0 %v1213
    %v1215 = vand.u32 %v62, 4294901760
    %v1216 = vsub.f32 %v62, %v1215
    %v1217 = vand.u32 %v1216, 4294901760
    %1218 = vmatpush.msra.mxu0 %v1217
    %v1219 = vand.u32 %v58, 4294901760
    %v1220 = vsub.f32 %v58, %v1219
    %v1221 = vand.u32 %v1220, 4294901760
    %1222 = vmatpush.msra.mxu0 %v1221
    %v1223 = vand.u32 %v54, 4294901760
    %v1224 = vsub.f32 %v54, %v1223
    %v1225 = vand.u32 %v1224, 4294901760
    %1226 = vmatpush.msra.mxu0 %v1225
    %v1227 = vand.u32 %v467, 4294901760
    %1228 = vmatmul.f32.gmra.mxu0 %v1227
    %v1229 = vpop.f32.mrf.mxu0
    %v1230 = vadd.f32 %v1161, %v1229
    %1231 = vdwg.mxu0
    %v1232 = vand.u32 %v114, 4294901760
    %1233 = vmatpush.msra.mxu0 %v1232
    %v1234 = vand.u32 %v110, 4294901760
    %1235 = vmatpush.msra.mxu0 %v1234
    %v1236 = vand.u32 %v106, 4294901760
    %1237 = vmatpush.msra.mxu0 %v1236
    %v1238 = vand.u32 %v102, 4294901760
    %1239 = vmatpush.msra.mxu0 %v1238
    %v1240 = vand.u32 %v98, 4294901760
    %1241 = vmatpush.msra.mxu0 %v1240
    %v1242 = vand.u32 %v94, 4294901760
    %1243 = vmatpush.msra.mxu0 %v1242
    %v1244 = vand.u32 %v90, 4294901760
    %1245 = vmatpush.msra.mxu0 %v1244
    %v1246 = vand.u32 %v86, 4294901760
    %1247 = vmatpush.msra.mxu0 %v1246
    %v1248 = vand.u32 %v82, 4294901760
    %1249 = vmatpush.msra.mxu0 %v1248
    %v1250 = vand.u32 %v78, 4294901760
    %1251 = vmatpush.msra.mxu0 %v1250
    %v1252 = vand.u32 %v74, 4294901760
    %1253 = vmatpush.msra.mxu0 %v1252
    %v1254 = vand.u32 %v70, 4294901760
    %1255 = vmatpush.msra.mxu0 %v1254
    %v1256 = vand.u32 %v66, 4294901760
    %1257 = vmatpush.msra.mxu0 %v1256
    %v1258 = vand.u32 %v62, 4294901760
    %1259 = vmatpush.msra.mxu0 %v1258
    %v1260 = vand.u32 %v58, 4294901760
    %1261 = vmatpush.msra.mxu0 %v1260
    %v1262 = vand.u32 %v54, 4294901760
    %1263 = vmatpush.msra.mxu0 %v1262
    %v1264 = vand.u32 %v467, 4294901760
    %1265 = vmatmul.f32.gmra.mxu0 %v1264
    %v1266 = vpop.f32.mrf.mxu0
    %v1267 = vadd.f32 %v1230, %v1266
    %1268 = vdwg.mxu0
    %v1269 = vand.u32 %v178, 4294901760
    %1270 = vmatpush.msra.mxu0 %v1269
    %v1271 = vand.u32 %v174, 4294901760
    %1272 = vmatpush.msra.mxu0 %v1271
    %v1273 = vand.u32 %v170, 4294901760
    %1274 = vmatpush.msra.mxu0 %v1273
    %v1275 = vand.u32 %v166, 4294901760
    %1276 = vmatpush.msra.mxu0 %v1275
    %v1277 = vand.u32 %v162, 4294901760
    %1278 = vmatpush.msra.mxu0 %v1277
    %v1279 = vand.u32 %v158, 4294901760
    %1280 = vmatpush.msra.mxu0 %v1279
    %v1281 = vand.u32 %v154, 4294901760
    %1282 = vmatpush.msra.mxu0 %v1281
    %v1283 = vand.u32 %v150, 4294901760
    %1284 = vmatpush.msra.mxu0 %v1283
    %v1285 = vand.u32 %v146, 4294901760
    %1286 = vmatpush.msra.mxu0 %v1285
    %v1287 = vand.u32 %v142, 4294901760
    %1288 = vmatpush.msra.mxu0 %v1287
    %v1289 = vand.u32 %v138, 4294901760
    %1290 = vmatpush.msra.mxu0 %v1289
    %v1291 = vand.u32 %v134, 4294901760
    %1292 = vmatpush.msra.mxu0 %v1291
    %v1293 = vand.u32 %v130, 4294901760
    %1294 = vmatpush.msra.mxu0 %v1293
    %v1295 = vand.u32 %v126, 4294901760
    %1296 = vmatpush.msra.mxu0 %v1295
    %v1297 = vand.u32 %v122, 4294901760
    %1298 = vmatpush.msra.mxu0 %v1297
    %v1299 = vand.u32 %v118, 4294901760
    %1300 = vmatpush.msra.mxu0 %v1299
    %v1301 = vand.u32 %v618, 4294901760
    %v1302 = vsub.f32 %v618, %v1301
    %v1303 = vand.u32 %v1302, 4294901760
    %v1304 = vsub.f32 %v1302, %v1303
    %v1305 = vand.u32 %v1304, 4294901760
    %1306 = vmatmul.f32.gmra.mxu0 %v1305
    %v1307 = vpop.f32.mrf.mxu0
    %v1308 = vadd.f32 %v1267, %v1307
    %1309 = vdwg.mxu0
    %v1310 = vand.u32 %v178, 4294901760
    %v1311 = vsub.f32 %v178, %v1310
    %v1312 = vand.u32 %v1311, 4294901760
    %v1313 = vsub.f32 %v1311, %v1312
    %v1314 = vand.u32 %v1313, 4294901760
    %1315 = vmatpush.msra.mxu0 %v1314
    %v1316 = vand.u32 %v174, 4294901760
    %v1317 = vsub.f32 %v174, %v1316
    %v1318 = vand.u32 %v1317, 4294901760
    %v1319 = vsub.f32 %v1317, %v1318
    %v1320 = vand.u32 %v1319, 4294901760
    %1321 = vmatpush.msra.mxu0 %v1320
    %v1322 = vand.u32 %v170, 4294901760
    %v1323 = vsub.f32 %v170, %v1322
    %v1324 = vand.u32 %v1323, 4294901760
    %v1325 = vsub.f32 %v1323, %v1324
    %v1326 = vand.u32 %v1325, 4294901760
    %1327 = vmatpush.msra.mxu0 %v1326
    %v1328 = vand.u32 %v166, 4294901760
    %v1329 = vsub.f32 %v166, %v1328
    %v1330 = vand.u32 %v1329, 4294901760
    %v1331 = vsub.f32 %v1329, %v1330
    %v1332 = vand.u32 %v1331, 4294901760
    %1333 = vmatpush.msra.mxu0 %v1332
    %v1334 = vand.u32 %v162, 4294901760
    %v1335 = vsub.f32 %v162, %v1334
    %v1336 = vand.u32 %v1335, 4294901760
    %v1337 = vsub.f32 %v1335, %v1336
    %v1338 = vand.u32 %v1337, 4294901760
    %1339 = vmatpush.msra.mxu0 %v1338
    %v1340 = vand.u32 %v158, 4294901760
    %v1341 = vsub.f32 %v158, %v1340
    %v1342 = vand.u32 %v1341, 4294901760
    %v1343 = vsub.f32 %v1341, %v1342
    %v1344 = vand.u32 %v1343, 4294901760
    %1345 = vmatpush.msra.mxu0 %v1344
    %v1346 = vand.u32 %v154, 4294901760
    %v1347 = vsub.f32 %v154, %v1346
    %v1348 = vand.u32 %v1347, 4294901760
    %v1349 = vsub.f32 %v1347, %v1348
    %v1350 = vand.u32 %v1349, 4294901760
    %1351 = vmatpush.msra.mxu0 %v1350
    %v1352 = vand.u32 %v150, 4294901760
    %v1353 = vsub.f32 %v150, %v1352
    %v1354 = vand.u32 %v1353, 4294901760
    %v1355 = vsub.f32 %v1353, %v1354
    %v1356 = vand.u32 %v1355, 4294901760
    %1357 = vmatpush.msra.mxu0 %v1356
    %v1358 = vand.u32 %v146, 4294901760
    %v1359 = vsub.f32 %v146, %v1358
    %v1360 = vand.u32 %v1359, 4294901760
    %v1361 = vsub.f32 %v1359, %v1360
    %v1362 = vand.u32 %v1361, 4294901760
    %1363 = vmatpush.msra.mxu0 %v1362
    %v1364 = vand.u32 %v142, 4294901760
    %v1365 = vsub.f32 %v142, %v1364
    %v1366 = vand.u32 %v1365, 4294901760
    %v1367 = vsub.f32 %v1365, %v1366
    %v1368 = vand.u32 %v1367, 4294901760
    %1369 = vmatpush.msra.mxu0 %v1368
    %v1370 = vand.u32 %v138, 4294901760
    %v1371 = vsub.f32 %v138, %v1370
    %v1372 = vand.u32 %v1371, 4294901760
    %v1373 = vsub.f32 %v1371, %v1372
    %v1374 = vand.u32 %v1373, 4294901760
    %1375 = vmatpush.msra.mxu0 %v1374
    %v1376 = vand.u32 %v134, 4294901760
    %v1377 = vsub.f32 %v134, %v1376
    %v1378 = vand.u32 %v1377, 4294901760
    %v1379 = vsub.f32 %v1377, %v1378
    %v1380 = vand.u32 %v1379, 4294901760
    %1381 = vmatpush.msra.mxu0 %v1380
    %v1382 = vand.u32 %v130, 4294901760
    %v1383 = vsub.f32 %v130, %v1382
    %v1384 = vand.u32 %v1383, 4294901760
    %v1385 = vsub.f32 %v1383, %v1384
    %v1386 = vand.u32 %v1385, 4294901760
    %1387 = vmatpush.msra.mxu0 %v1386
    %v1388 = vand.u32 %v126, 4294901760
    %v1389 = vsub.f32 %v126, %v1388
    %v1390 = vand.u32 %v1389, 4294901760
    %v1391 = vsub.f32 %v1389, %v1390
    %v1392 = vand.u32 %v1391, 4294901760
    %1393 = vmatpush.msra.mxu0 %v1392
    %v1394 = vand.u32 %v122, 4294901760
    %v1395 = vsub.f32 %v122, %v1394
    %v1396 = vand.u32 %v1395, 4294901760
    %v1397 = vsub.f32 %v1395, %v1396
    %v1398 = vand.u32 %v1397, 4294901760
    %1399 = vmatpush.msra.mxu0 %v1398
    %v1400 = vand.u32 %v118, 4294901760
    %v1401 = vsub.f32 %v118, %v1400
    %v1402 = vand.u32 %v1401, 4294901760
    %v1403 = vsub.f32 %v1401, %v1402
    %v1404 = vand.u32 %v1403, 4294901760
    %1405 = vmatpush.msra.mxu0 %v1404
    %v1406 = vand.u32 %v618, 4294901760
    %1407 = vmatmul.f32.gmra.mxu0 %v1406
    %v1408 = vpop.f32.mrf.mxu0
    %v1409 = vadd.f32 %v1308, %v1408
    %1410 = vdwg.mxu0
    %v1411 = vand.u32 %v178, 4294901760
    %v1412 = vsub.f32 %v178, %v1411
    %1413 = vmatpush.msra.mxu0 %v1412
    %v1414 = vand.u32 %v174, 4294901760
    %v1415 = vsub.f32 %v174, %v1414
    %1416 = vmatpush.msra.mxu0 %v1415
    %v1417 = vand.u32 %v170, 4294901760
    %v1418 = vsub.f32 %v170, %v1417
    %1419 = vmatpush.msra.mxu0 %v1418
    %v1420 = vand.u32 %v166, 4294901760
    %v1421 = vsub.f32 %v166, %v1420
    %1422 = vmatpush.msra.mxu0 %v1421
    %v1423 = vand.u32 %v162, 4294901760
    %v1424 = vsub.f32 %v162, %v1423
    %1425 = vmatpush.msra.mxu0 %v1424
    %v1426 = vand.u32 %v158, 4294901760
    %v1427 = vsub.f32 %v158, %v1426
    %1428 = vmatpush.msra.mxu0 %v1427
    %v1429 = vand.u32 %v154, 4294901760
    %v1430 = vsub.f32 %v154, %v1429
    %1431 = vmatpush.msra.mxu0 %v1430
    %v1432 = vand.u32 %v150, 4294901760
    %v1433 = vsub.f32 %v150, %v1432
    %1434 = vmatpush.msra.mxu0 %v1433
    %v1435 = vand.u32 %v146, 4294901760
    %v1436 = vsub.f32 %v146, %v1435
    %1437 = vmatpush.msra.mxu0 %v1436
    %v1438 = vand.u32 %v142, 4294901760
    %v1439 = vsub.f32 %v142, %v1438
    %1440 = vmatpush.msra.mxu0 %v1439
    %v1441 = vand.u32 %v138, 4294901760
    %v1442 = vsub.f32 %v138, %v1441
    %1443 = vmatpush.msra.mxu0 %v1442
    %v1444 = vand.u32 %v134, 4294901760
    %v1445 = vsub.f32 %v134, %v1444
    %1446 = vmatpush.msra.mxu0 %v1445
    %v1447 = vand.u32 %v130, 4294901760
    %v1448 = vsub.f32 %v130, %v1447
    %1449 = vmatpush.msra.mxu0 %v1448
    %v1450 = vand.u32 %v126, 4294901760
    %v1451 = vsub.f32 %v126, %v1450
    %1452 = vmatpush.msra.mxu0 %v1451
    %v1453 = vand.u32 %v122, 4294901760
    %v1454 = vsub.f32 %v122, %v1453
    %1455 = vmatpush.msra.mxu0 %v1454
    %v1456 = vand.u32 %v118, 4294901760
    %v1457 = vsub.f32 %v118, %v1456
    %1458 = vmatpush.msra.mxu0 %v1457
    %v1459 = vand.u32 %v618, 4294901760
    %v1460 = vsub.f32 %v618, %v1459
    %1461 = vmatmul.f32.gmra.mxu0 %v1460
    %v1462 = vpop.f32.mrf.mxu0
    %v1463 = vadd.f32 %v1409, %v1462
    %1464 = vdwg.mxu0
    %v1465 = vand.u32 %v178, 4294901760
    %1466 = vmatpush.msra.mxu0 %v1465
    %v1467 = vand.u32 %v174, 4294901760
    %1468 = vmatpush.msra.mxu0 %v1467
    %v1469 = vand.u32 %v170, 4294901760
    %1470 = vmatpush.msra.mxu0 %v1469
    %v1471 = vand.u32 %v166, 4294901760
    %1472 = vmatpush.msra.mxu0 %v1471
    %v1473 = vand.u32 %v162, 4294901760
    %1474 = vmatpush.msra.mxu0 %v1473
    %v1475 = vand.u32 %v158, 4294901760
    %1476 = vmatpush.msra.mxu0 %v1475
    %v1477 = vand.u32 %v154, 4294901760
    %1478 = vmatpush.msra.mxu0 %v1477
    %v1479 = vand.u32 %v150, 4294901760
    %1480 = vmatpush.msra.mxu0 %v1479
    %v1481 = vand.u32 %v146, 4294901760
    %1482 = vmatpush.msra.mxu0 %v1481
    %v1483 = vand.u32 %v142, 4294901760
    %1484 = vmatpush.msra.mxu0 %v1483
    %v1485 = vand.u32 %v138, 4294901760
    %1486 = vmatpush.msra.mxu0 %v1485
    %v1487 = vand.u32 %v134, 4294901760
    %1488 = vmatpush.msra.mxu0 %v1487
    %v1489 = vand.u32 %v130, 4294901760
    %1490 = vmatpush.msra.mxu0 %v1489
    %v1491 = vand.u32 %v126, 4294901760
    %1492 = vmatpush.msra.mxu0 %v1491
    %v1493 = vand.u32 %v122, 4294901760
    %1494 = vmatpush.msra.mxu0 %v1493
    %v1495 = vand.u32 %v118, 4294901760
    %1496 = vmatpush.msra.mxu0 %v1495
    %v1497 = vand.u32 %v618, 4294901760
    %v1498 = vsub.f32 %v618, %v1497
    %v1499 = vand.u32 %v1498, 4294901760
    %1500 = vmatmul.f32.gmra.mxu0 %v1499
    %v1501 = vpop.f32.mrf.mxu0
    %v1502 = vadd.f32 %v1463, %v1501
    %1503 = vdwg.mxu0
    %v1504 = vand.u32 %v178, 4294901760
    %v1505 = vsub.f32 %v178, %v1504
    %v1506 = vand.u32 %v1505, 4294901760
    %1507 = vmatpush.msra.mxu0 %v1506
    %v1508 = vand.u32 %v174, 4294901760
    %v1509 = vsub.f32 %v174, %v1508
    %v1510 = vand.u32 %v1509, 4294901760
    %1511 = vmatpush.msra.mxu0 %v1510
    %v1512 = vand.u32 %v170, 4294901760
    %v1513 = vsub.f32 %v170, %v1512
    %v1514 = vand.u32 %v1513, 4294901760
    %1515 = vmatpush.msra.mxu0 %v1514
    %v1516 = vand.u32 %v166, 4294901760
    %v1517 = vsub.f32 %v166, %v1516
    %v1518 = vand.u32 %v1517, 4294901760
    %1519 = vmatpush.msra.mxu0 %v1518
    %v1520 = vand.u32 %v162, 4294901760
    %v1521 = vsub.f32 %v162, %v1520
    %v1522 = vand.u32 %v1521, 4294901760
    %1523 = vmatpush.msra.mxu0 %v1522
    %v1524 = vand.u32 %v158, 4294901760
    %v1525 = vsub.f32 %v158, %v1524
    %v1526 = vand.u32 %v1525, 4294901760
    %1527 = vmatpush.msra.mxu0 %v1526
    %v1528 = vand.u32 %v154, 4294901760
    %v1529 = vsub.f32 %v154, %v1528
    %v1530 = vand.u32 %v1529, 4294901760
    %1531 = vmatpush.msra.mxu0 %v1530
    %v1532 = vand.u32 %v150, 4294901760
    %v1533 = vsub.f32 %v150, %v1532
    %v1534 = vand.u32 %v1533, 4294901760
    %1535 = vmatpush.msra.mxu0 %v1534
    %v1536 = vand.u32 %v146, 4294901760
    %v1537 = vsub.f32 %v146, %v1536
    %v1538 = vand.u32 %v1537, 4294901760
    %1539 = vmatpush.msra.mxu0 %v1538
    %v1540 = vand.u32 %v142, 4294901760
    %v1541 = vsub.f32 %v142, %v1540
    %v1542 = vand.u32 %v1541, 4294901760
    %1543 = vmatpush.msra.mxu0 %v1542
    %v1544 = vand.u32 %v138, 4294901760
    %v1545 = vsub.f32 %v138, %v1544
    %v1546 = vand.u32 %v1545, 4294901760
    %1547 = vmatpush.msra.mxu0 %v1546
    %v1548 = vand.u32 %v134, 4294901760
    %v1549 = vsub.f32 %v134, %v1548
    %v1550 = vand.u32 %v1549, 4294901760
    %1551 = vmatpush.msra.mxu0 %v1550
    %v1552 = vand.u32 %v130, 4294901760
    %v1553 = vsub.f32 %v130, %v1552
    %v1554 = vand.u32 %v1553, 4294901760
    %1555 = vmatpush.msra.mxu0 %v1554
    %v1556 = vand.u32 %v126, 4294901760
    %v1557 = vsub.f32 %v126, %v1556
    %v1558 = vand.u32 %v1557, 4294901760
    %1559 = vmatpush.msra.mxu0 %v1558
    %v1560 = vand.u32 %v122, 4294901760
    %v1561 = vsub.f32 %v122, %v1560
    %v1562 = vand.u32 %v1561, 4294901760
    %1563 = vmatpush.msra.mxu0 %v1562
    %v1564 = vand.u32 %v118, 4294901760
    %v1565 = vsub.f32 %v118, %v1564
    %v1566 = vand.u32 %v1565, 4294901760
    %1567 = vmatpush.msra.mxu0 %v1566
    %v1568 = vand.u32 %v618, 4294901760
    %1569 = vmatmul.f32.gmra.mxu0 %v1568
    %v1570 = vpop.f32.mrf.mxu0
    %v1571 = vadd.f32 %v1502, %v1570
    %1572 = vdwg.mxu0
    %v1573 = vand.u32 %v178, 4294901760
    %1574 = vmatpush.msra.mxu0 %v1573
    %v1575 = vand.u32 %v174, 4294901760
    %1576 = vmatpush.msra.mxu0 %v1575
    %v1577 = vand.u32 %v170, 4294901760
    %1578 = vmatpush.msra.mxu0 %v1577
    %v1579 = vand.u32 %v166, 4294901760
    %1580 = vmatpush.msra.mxu0 %v1579
    %v1581 = vand.u32 %v162, 4294901760
    %1582 = vmatpush.msra.mxu0 %v1581
    %v1583 = vand.u32 %v158, 4294901760
    %1584 = vmatpush.msra.mxu0 %v1583
    %v1585 = vand.u32 %v154, 4294901760
    %1586 = vmatpush.msra.mxu0 %v1585
    %v1587 = vand.u32 %v150, 4294901760
    %1588 = vmatpush.msra.mxu0 %v1587
    %v1589 = vand.u32 %v146, 4294901760
    %1590 = vmatpush.msra.mxu0 %v1589
    %v1591 = vand.u32 %v142, 4294901760
    %1592 = vmatpush.msra.mxu0 %v1591
    %v1593 = vand.u32 %v138, 4294901760
    %1594 = vmatpush.msra.mxu0 %v1593
    %v1595 = vand.u32 %v134, 4294901760
    %1596 = vmatpush.msra.mxu0 %v1595
    %v1597 = vand.u32 %v130, 4294901760
    %1598 = vmatpush.msra.mxu0 %v1597
    %v1599 = vand.u32 %v126, 4294901760
    %1600 = vmatpush.msra.mxu0 %v1599
    %v1601 = vand.u32 %v122, 4294901760
    %1602 = vmatpush.msra.mxu0 %v1601
    %v1603 = vand.u32 %v118, 4294901760
    %1604 = vmatpush.msra.mxu0 %v1603
    %v1605 = vand.u32 %v618, 4294901760
    %1606 = vmatmul.f32.gmra.mxu0 %v1605
    %v1607 = vpop.f32.mrf.mxu0
    %v1608 = vadd.f32 %v1571, %v1607
    %1609 = vdwg.mxu0
    %v1610 = vand.u32 %v242, 4294901760
    %1611 = vmatpush.msra.mxu0 %v1610
    %v1612 = vand.u32 %v238, 4294901760
    %1613 = vmatpush.msra.mxu0 %v1612
    %v1614 = vand.u32 %v234, 4294901760
    %1615 = vmatpush.msra.mxu0 %v1614
    %v1616 = vand.u32 %v230, 4294901760
    %1617 = vmatpush.msra.mxu0 %v1616
    %v1618 = vand.u32 %v226, 4294901760
    %1619 = vmatpush.msra.mxu0 %v1618
    %v1620 = vand.u32 %v222, 4294901760
    %1621 = vmatpush.msra.mxu0 %v1620
    %v1622 = vand.u32 %v218, 4294901760
    %1623 = vmatpush.msra.mxu0 %v1622
    %v1624 = vand.u32 %v214, 4294901760
    %1625 = vmatpush.msra.mxu0 %v1624
    %v1626 = vand.u32 %v210, 4294901760
    %1627 = vmatpush.msra.mxu0 %v1626
    %v1628 = vand.u32 %v206, 4294901760
    %1629 = vmatpush.msra.mxu0 %v1628
    %v1630 = vand.u32 %v202, 4294901760
    %1631 = vmatpush.msra.mxu0 %v1630
    %v1632 = vand.u32 %v198, 4294901760
    %1633 = vmatpush.msra.mxu0 %v1632
    %v1634 = vand.u32 %v194, 4294901760
    %1635 = vmatpush.msra.mxu0 %v1634
    %v1636 = vand.u32 %v190, 4294901760
    %1637 = vmatpush.msra.mxu0 %v1636
    %v1638 = vand.u32 %v186, 4294901760
    %1639 = vmatpush.msra.mxu0 %v1638
    %v1640 = vand.u32 %v182, 4294901760
    %1641 = vmatpush.msra.mxu0 %v1640
    %v1642 = vand.u32 %v769, 4294901760
    %v1643 = vsub.f32 %v769, %v1642
    %v1644 = vand.u32 %v1643, 4294901760
    %v1645 = vsub.f32 %v1643, %v1644
    %v1646 = vand.u32 %v1645, 4294901760
    %1647 = vmatmul.f32.gmra.mxu0 %v1646
    %v1648 = vpop.f32.mrf.mxu0
    %v1649 = vadd.f32 %v1608, %v1648
    %1650 = vdwg.mxu0
    %v1651 = vand.u32 %v242, 4294901760
    %v1652 = vsub.f32 %v242, %v1651
    %v1653 = vand.u32 %v1652, 4294901760
    %v1654 = vsub.f32 %v1652, %v1653
    %v1655 = vand.u32 %v1654, 4294901760
    %1656 = vmatpush.msra.mxu0 %v1655
    %v1657 = vand.u32 %v238, 4294901760
    %v1658 = vsub.f32 %v238, %v1657
    %v1659 = vand.u32 %v1658, 4294901760
    %v1660 = vsub.f32 %v1658, %v1659
    %v1661 = vand.u32 %v1660, 4294901760
    %1662 = vmatpush.msra.mxu0 %v1661
    %v1663 = vand.u32 %v234, 4294901760
    %v1664 = vsub.f32 %v234, %v1663
    %v1665 = vand.u32 %v1664, 4294901760
    %v1666 = vsub.f32 %v1664, %v1665
    %v1667 = vand.u32 %v1666, 4294901760
    %1668 = vmatpush.msra.mxu0 %v1667
    %v1669 = vand.u32 %v230, 4294901760
    %v1670 = vsub.f32 %v230, %v1669
    %v1671 = vand.u32 %v1670, 4294901760
    %v1672 = vsub.f32 %v1670, %v1671
    %v1673 = vand.u32 %v1672, 4294901760
    %1674 = vmatpush.msra.mxu0 %v1673
    %v1675 = vand.u32 %v226, 4294901760
    %v1676 = vsub.f32 %v226, %v1675
    %v1677 = vand.u32 %v1676, 4294901760
    %v1678 = vsub.f32 %v1676, %v1677
    %v1679 = vand.u32 %v1678, 4294901760
    %1680 = vmatpush.msra.mxu0 %v1679
    %v1681 = vand.u32 %v222, 4294901760
    %v1682 = vsub.f32 %v222, %v1681
    %v1683 = vand.u32 %v1682, 4294901760
    %v1684 = vsub.f32 %v1682, %v1683
    %v1685 = vand.u32 %v1684, 4294901760
    %1686 = vmatpush.msra.mxu0 %v1685
    %v1687 = vand.u32 %v218, 4294901760
    %v1688 = vsub.f32 %v218, %v1687
    %v1689 = vand.u32 %v1688, 4294901760
    %v1690 = vsub.f32 %v1688, %v1689
    %v1691 = vand.u32 %v1690, 4294901760
    %1692 = vmatpush.msra.mxu0 %v1691
    %v1693 = vand.u32 %v214, 4294901760
    %v1694 = vsub.f32 %v214, %v1693
    %v1695 = vand.u32 %v1694, 4294901760
    %v1696 = vsub.f32 %v1694, %v1695
    %v1697 = vand.u32 %v1696, 4294901760
    %1698 = vmatpush.msra.mxu0 %v1697
    %v1699 = vand.u32 %v210, 4294901760
    %v1700 = vsub.f32 %v210, %v1699
    %v1701 = vand.u32 %v1700, 4294901760
    %v1702 = vsub.f32 %v1700, %v1701
    %v1703 = vand.u32 %v1702, 4294901760
    %1704 = vmatpush.msra.mxu0 %v1703
    %v1705 = vand.u32 %v206, 4294901760
    %v1706 = vsub.f32 %v206, %v1705
    %v1707 = vand.u32 %v1706, 4294901760
    %v1708 = vsub.f32 %v1706, %v1707
    %v1709 = vand.u32 %v1708, 4294901760
    %1710 = vmatpush.msra.mxu0 %v1709
    %v1711 = vand.u32 %v202, 4294901760
    %v1712 = vsub.f32 %v202, %v1711
    %v1713 = vand.u32 %v1712, 4294901760
    %v1714 = vsub.f32 %v1712, %v1713
    %v1715 = vand.u32 %v1714, 4294901760
    %1716 = vmatpush.msra.mxu0 %v1715
    %v1717 = vand.u32 %v198, 4294901760
    %v1718 = vsub.f32 %v198, %v1717
    %v1719 = vand.u32 %v1718, 4294901760
    %v1720 = vsub.f32 %v1718, %v1719
    %v1721 = vand.u32 %v1720, 4294901760
    %1722 = vmatpush.msra.mxu0 %v1721
    %v1723 = vand.u32 %v194, 4294901760
    %v1724 = vsub.f32 %v194, %v1723
    %v1725 = vand.u32 %v1724, 4294901760
    %v1726 = vsub.f32 %v1724, %v1725
    %v1727 = vand.u32 %v1726, 4294901760
    %1728 = vmatpush.msra.mxu0 %v1727
    %v1729 = vand.u32 %v190, 4294901760
    %v1730 = vsub.f32 %v190, %v1729
    %v1731 = vand.u32 %v1730, 4294901760
    %v1732 = vsub.f32 %v1730, %v1731
    %v1733 = vand.u32 %v1732, 4294901760
    %1734 = vmatpush.msra.mxu0 %v1733
    %v1735 = vand.u32 %v186, 4294901760
    %v1736 = vsub.f32 %v186, %v1735
    %v1737 = vand.u32 %v1736, 4294901760
    %v1738 = vsub.f32 %v1736, %v1737
    %v1739 = vand.u32 %v1738, 4294901760
    %1740 = vmatpush.msra.mxu0 %v1739
    %v1741 = vand.u32 %v182, 4294901760
    %v1742 = vsub.f32 %v182, %v1741
    %v1743 = vand.u32 %v1742, 4294901760
    %v1744 = vsub.f32 %v1742, %v1743
    %v1745 = vand.u32 %v1744, 4294901760
    %1746 = vmatpush.msra.mxu0 %v1745
    %v1747 = vand.u32 %v769, 4294901760
    %1748 = vmatmul.f32.gmra.mxu0 %v1747
    %v1749 = vpop.f32.mrf.mxu0
    %v1750 = vadd.f32 %v1649, %v1749
    %1751 = vdwg.mxu0
    %v1752 = vand.u32 %v242, 4294901760
    %v1753 = vsub.f32 %v242, %v1752
    %1754 = vmatpush.msra.mxu0 %v1753
    %v1755 = vand.u32 %v238, 4294901760
    %v1756 = vsub.f32 %v238, %v1755
    %1757 = vmatpush.msra.mxu0 %v1756
    %v1758 = vand.u32 %v234, 4294901760
    %v1759 = vsub.f32 %v234, %v1758
    %1760 = vmatpush.msra.mxu0 %v1759
    %v1761 = vand.u32 %v230, 4294901760
    %v1762 = vsub.f32 %v230, %v1761
    %1763 = vmatpush.msra.mxu0 %v1762
    %v1764 = vand.u32 %v226, 4294901760
    %v1765 = vsub.f32 %v226, %v1764
    %1766 = vmatpush.msra.mxu0 %v1765
    %v1767 = vand.u32 %v222, 4294901760
    %v1768 = vsub.f32 %v222, %v1767
    %1769 = vmatpush.msra.mxu0 %v1768
    %v1770 = vand.u32 %v218, 4294901760
    %v1771 = vsub.f32 %v218, %v1770
    %1772 = vmatpush.msra.mxu0 %v1771
    %v1773 = vand.u32 %v214, 4294901760
    %v1774 = vsub.f32 %v214, %v1773
    %1775 = vmatpush.msra.mxu0 %v1774
    %v1776 = vand.u32 %v210, 4294901760
    %v1777 = vsub.f32 %v210, %v1776
    %1778 = vmatpush.msra.mxu0 %v1777
    %v1779 = vand.u32 %v206, 4294901760
    %v1780 = vsub.f32 %v206, %v1779
    %1781 = vmatpush.msra.mxu0 %v1780
    %v1782 = vand.u32 %v202, 4294901760
    %v1783 = vsub.f32 %v202, %v1782
    %1784 = vmatpush.msra.mxu0 %v1783
    %v1785 = vand.u32 %v198, 4294901760
    %v1786 = vsub.f32 %v198, %v1785
    %1787 = vmatpush.msra.mxu0 %v1786
    %v1788 = vand.u32 %v194, 4294901760
    %v1789 = vsub.f32 %v194, %v1788
    %1790 = vmatpush.msra.mxu0 %v1789
    %v1791 = vand.u32 %v190, 4294901760
    %v1792 = vsub.f32 %v190, %v1791
    %1793 = vmatpush.msra.mxu0 %v1792
    %v1794 = vand.u32 %v186, 4294901760
    %v1795 = vsub.f32 %v186, %v1794
    %1796 = vmatpush.msra.mxu0 %v1795
    %v1797 = vand.u32 %v182, 4294901760
    %v1798 = vsub.f32 %v182, %v1797
    %1799 = vmatpush.msra.mxu0 %v1798
    %v1800 = vand.u32 %v769, 4294901760
    %v1801 = vsub.f32 %v769, %v1800
    %1802 = vmatmul.f32.gmra.mxu0 %v1801
    %v1803 = vpop.f32.mrf.mxu0
    %v1804 = vadd.f32 %v1750, %v1803
    %1805 = vdwg.mxu0
    %v1806 = vand.u32 %v242, 4294901760
    %1807 = vmatpush.msra.mxu0 %v1806
    %v1808 = vand.u32 %v238, 4294901760
    %1809 = vmatpush.msra.mxu0 %v1808
    %v1810 = vand.u32 %v234, 4294901760
    %1811 = vmatpush.msra.mxu0 %v1810
    %v1812 = vand.u32 %v230, 4294901760
    %1813 = vmatpush.msra.mxu0 %v1812
    %v1814 = vand.u32 %v226, 4294901760
    %1815 = vmatpush.msra.mxu0 %v1814
    %v1816 = vand.u32 %v222, 4294901760
    %1817 = vmatpush.msra.mxu0 %v1816
    %v1818 = vand.u32 %v218, 4294901760
    %1819 = vmatpush.msra.mxu0 %v1818
    %v1820 = vand.u32 %v214, 4294901760
    %1821 = vmatpush.msra.mxu0 %v1820
    %v1822 = vand.u32 %v210, 4294901760
    %1823 = vmatpush.msra.mxu0 %v1822
    %v1824 = vand.u32 %v206, 4294901760
    %1825 = vmatpush.msra.mxu0 %v1824
    %v1826 = vand.u32 %v202, 4294901760
    %1827 = vmatpush.msra.mxu0 %v1826
    %v1828 = vand.u32 %v198, 4294901760
    %1829 = vmatpush.msra.mxu0 %v1828
    %v1830 = vand.u32 %v194, 4294901760
    %1831 = vmatpush.msra.mxu0 %v1830
    %v1832 = vand.u32 %v190, 4294901760
    %1833 = vmatpush.msra.mxu0 %v1832
    %v1834 = vand.u32 %v186, 4294901760
    %1835 = vmatpush.msra.mxu0 %v1834
    %v1836 = vand.u32 %v182, 4294901760
    %1837 = vmatpush.msra.mxu0 %v1836
    %v1838 = vand.u32 %v769, 4294901760
    %v1839 = vsub.f32 %v769, %v1838
    %v1840 = vand.u32 %v1839, 4294901760
    %1841 = vmatmul.f32.gmra.mxu0 %v1840
    %v1842 = vpop.f32.mrf.mxu0
    %v1843 = vadd.f32 %v1804, %v1842
    %1844 = vdwg.mxu0
    %v1845 = vand.u32 %v242, 4294901760
    %v1846 = vsub.f32 %v242, %v1845
    %v1847 = vand.u32 %v1846, 4294901760
    %1848 = vmatpush.msra.mxu0 %v1847
    %v1849 = vand.u32 %v238, 4294901760
    %v1850 = vsub.f32 %v238, %v1849
    %v1851 = vand.u32 %v1850, 4294901760
    %1852 = vmatpush.msra.mxu0 %v1851
    %v1853 = vand.u32 %v234, 4294901760
    %v1854 = vsub.f32 %v234, %v1853
    %v1855 = vand.u32 %v1854, 4294901760
    %1856 = vmatpush.msra.mxu0 %v1855
    %v1857 = vand.u32 %v230, 4294901760
    %v1858 = vsub.f32 %v230, %v1857
    %v1859 = vand.u32 %v1858, 4294901760
    %1860 = vmatpush.msra.mxu0 %v1859
    %v1861 = vand.u32 %v226, 4294901760
    %v1862 = vsub.f32 %v226, %v1861
    %v1863 = vand.u32 %v1862, 4294901760
    %1864 = vmatpush.msra.mxu0 %v1863
    %v1865 = vand.u32 %v222, 4294901760
    %v1866 = vsub.f32 %v222, %v1865
    %v1867 = vand.u32 %v1866, 4294901760
    %1868 = vmatpush.msra.mxu0 %v1867
    %v1869 = vand.u32 %v218, 4294901760
    %v1870 = vsub.f32 %v218, %v1869
    %v1871 = vand.u32 %v1870, 4294901760
    %1872 = vmatpush.msra.mxu0 %v1871
    %v1873 = vand.u32 %v214, 4294901760
    %v1874 = vsub.f32 %v214, %v1873
    %v1875 = vand.u32 %v1874, 4294901760
    %1876 = vmatpush.msra.mxu0 %v1875
    %v1877 = vand.u32 %v210, 4294901760
    %v1878 = vsub.f32 %v210, %v1877
    %v1879 = vand.u32 %v1878, 4294901760
    %1880 = vmatpush.msra.mxu0 %v1879
    %v1881 = vand.u32 %v206, 4294901760
    %v1882 = vsub.f32 %v206, %v1881
    %v1883 = vand.u32 %v1882, 4294901760
    %1884 = vmatpush.msra.mxu0 %v1883
    %v1885 = vand.u32 %v202, 4294901760
    %v1886 = vsub.f32 %v202, %v1885
    %v1887 = vand.u32 %v1886, 4294901760
    %1888 = vmatpush.msra.mxu0 %v1887
    %v1889 = vand.u32 %v198, 4294901760
    %v1890 = vsub.f32 %v198, %v1889
    %v1891 = vand.u32 %v1890, 4294901760
    %1892 = vmatpush.msra.mxu0 %v1891
    %v1893 = vand.u32 %v194, 4294901760
    %v1894 = vsub.f32 %v194, %v1893
    %v1895 = vand.u32 %v1894, 4294901760
    %1896 = vmatpush.msra.mxu0 %v1895
    %v1897 = vand.u32 %v190, 4294901760
    %v1898 = vsub.f32 %v190, %v1897
    %v1899 = vand.u32 %v1898, 4294901760
    %1900 = vmatpush.msra.mxu0 %v1899
    %v1901 = vand.u32 %v186, 4294901760
    %v1902 = vsub.f32 %v186, %v1901
    %v1903 = vand.u32 %v1902, 4294901760
    %1904 = vmatpush.msra.mxu0 %v1903
    %v1905 = vand.u32 %v182, 4294901760
    %v1906 = vsub.f32 %v182, %v1905
    %v1907 = vand.u32 %v1906, 4294901760
    %1908 = vmatpush.msra.mxu0 %v1907
    %v1909 = vand.u32 %v769, 4294901760
    %1910 = vmatmul.f32.gmra.mxu0 %v1909
    %v1911 = vpop.f32.mrf.mxu0
    %v1912 = vadd.f32 %v1843, %v1911
    %1913 = vdwg.mxu0
    %v1914 = vand.u32 %v242, 4294901760
    %1915 = vmatpush.msra.mxu0 %v1914
    %v1916 = vand.u32 %v238, 4294901760
    %1917 = vmatpush.msra.mxu0 %v1916
    %v1918 = vand.u32 %v234, 4294901760
    %1919 = vmatpush.msra.mxu0 %v1918
    %v1920 = vand.u32 %v230, 4294901760
    %1921 = vmatpush.msra.mxu0 %v1920
    %v1922 = vand.u32 %v226, 4294901760
    %1923 = vmatpush.msra.mxu0 %v1922
    %v1924 = vand.u32 %v222, 4294901760
    %1925 = vmatpush.msra.mxu0 %v1924
    %v1926 = vand.u32 %v218, 4294901760
    %1927 = vmatpush.msra.mxu0 %v1926
    %v1928 = vand.u32 %v214, 4294901760
    %1929 = vmatpush.msra.mxu0 %v1928
    %v1930 = vand.u32 %v210, 4294901760
    %1931 = vmatpush.msra.mxu0 %v1930
    %v1932 = vand.u32 %v206, 4294901760
    %1933 = vmatpush.msra.mxu0 %v1932
    %v1934 = vand.u32 %v202, 4294901760
    %1935 = vmatpush.msra.mxu0 %v1934
    %v1936 = vand.u32 %v198, 4294901760
    %1937 = vmatpush.msra.mxu0 %v1936
    %v1938 = vand.u32 %v194, 4294901760
    %1939 = vmatpush.msra.mxu0 %v1938
    %v1940 = vand.u32 %v190, 4294901760
    %1941 = vmatpush.msra.mxu0 %v1940
    %v1942 = vand.u32 %v186, 4294901760
    %1943 = vmatpush.msra.mxu0 %v1942
    %v1944 = vand.u32 %v182, 4294901760
    %1945 = vmatpush.msra.mxu0 %v1944
    %v1946 = vand.u32 %v769, 4294901760
    %1947 = vmatmul.f32.gmra.mxu0 %v1946
    %v1948 = vpop.f32.mrf.mxu0
    %v1949 = vadd.f32 %v1912, %v1948
    %1950 = vdwg.mxu0
    %v1951 = vand.u32 %v306, 4294901760
    %1952 = vmatpush.msra.mxu0 %v1951
    %v1953 = vand.u32 %v302, 4294901760
    %1954 = vmatpush.msra.mxu0 %v1953
    %v1955 = vand.u32 %v298, 4294901760
    %1956 = vmatpush.msra.mxu0 %v1955
    %v1957 = vand.u32 %v294, 4294901760
    %1958 = vmatpush.msra.mxu0 %v1957
    %v1959 = vand.u32 %v290, 4294901760
    %1960 = vmatpush.msra.mxu0 %v1959
    %v1961 = vand.u32 %v286, 4294901760
    %1962 = vmatpush.msra.mxu0 %v1961
    %v1963 = vand.u32 %v282, 4294901760
    %1964 = vmatpush.msra.mxu0 %v1963
    %v1965 = vand.u32 %v278, 4294901760
    %1966 = vmatpush.msra.mxu0 %v1965
    %v1967 = vand.u32 %v274, 4294901760
    %1968 = vmatpush.msra.mxu0 %v1967
    %v1969 = vand.u32 %v270, 4294901760
    %1970 = vmatpush.msra.mxu0 %v1969
    %v1971 = vand.u32 %v266, 4294901760
    %1972 = vmatpush.msra.mxu0 %v1971
    %v1973 = vand.u32 %v262, 4294901760
    %1974 = vmatpush.msra.mxu0 %v1973
    %v1975 = vand.u32 %v258, 4294901760
    %1976 = vmatpush.msra.mxu0 %v1975
    %v1977 = vand.u32 %v254, 4294901760
    %1978 = vmatpush.msra.mxu0 %v1977
    %v1979 = vand.u32 %v250, 4294901760
    %1980 = vmatpush.msra.mxu0 %v1979
    %v1981 = vand.u32 %v246, 4294901760
    %1982 = vmatpush.msra.mxu0 %v1981
    %v1983 = vand.u32 %v920, 4294901760
    %v1984 = vsub.f32 %v920, %v1983
    %v1985 = vand.u32 %v1984, 4294901760
    %v1986 = vsub.f32 %v1984, %v1985
    %v1987 = vand.u32 %v1986, 4294901760
    %1988 = vmatmul.f32.gmra.mxu0 %v1987
    %v1989 = vpop.f32.mrf.mxu0
    %v1990 = vadd.f32 %v1949, %v1989
    %1991 = vdwg.mxu0
    %v1992 = vand.u32 %v306, 4294901760
    %v1993 = vsub.f32 %v306, %v1992
    %v1994 = vand.u32 %v1993, 4294901760
    %v1995 = vsub.f32 %v1993, %v1994
    %v1996 = vand.u32 %v1995, 4294901760
    %1997 = vmatpush.msra.mxu0 %v1996
    %v1998 = vand.u32 %v302, 4294901760
    %v1999 = vsub.f32 %v302, %v1998
    %v2000 = vand.u32 %v1999, 4294901760
    %v2001 = vsub.f32 %v1999, %v2000
    %v2002 = vand.u32 %v2001, 4294901760
    %2003 = vmatpush.msra.mxu0 %v2002
    %v2004 = vand.u32 %v298, 4294901760
    %v2005 = vsub.f32 %v298, %v2004
    %v2006 = vand.u32 %v2005, 4294901760
    %v2007 = vsub.f32 %v2005, %v2006
    %v2008 = vand.u32 %v2007, 4294901760
    %2009 = vmatpush.msra.mxu0 %v2008
    %v2010 = vand.u32 %v294, 4294901760
    %v2011 = vsub.f32 %v294, %v2010
    %v2012 = vand.u32 %v2011, 4294901760
    %v2013 = vsub.f32 %v2011, %v2012
    %v2014 = vand.u32 %v2013, 4294901760
    %2015 = vmatpush.msra.mxu0 %v2014
    %v2016 = vand.u32 %v290, 4294901760
    %v2017 = vsub.f32 %v290, %v2016
    %v2018 = vand.u32 %v2017, 4294901760
    %v2019 = vsub.f32 %v2017, %v2018
    %v2020 = vand.u32 %v2019, 4294901760
    %2021 = vmatpush.msra.mxu0 %v2020
    %v2022 = vand.u32 %v286, 4294901760
    %v2023 = vsub.f32 %v286, %v2022
    %v2024 = vand.u32 %v2023, 4294901760
    %v2025 = vsub.f32 %v2023, %v2024
    %v2026 = vand.u32 %v2025, 4294901760
    %2027 = vmatpush.msra.mxu0 %v2026
    %v2028 = vand.u32 %v282, 4294901760
    %v2029 = vsub.f32 %v282, %v2028
    %v2030 = vand.u32 %v2029, 4294901760
    %v2031 = vsub.f32 %v2029, %v2030
    %v2032 = vand.u32 %v2031, 4294901760
    %2033 = vmatpush.msra.mxu0 %v2032
    %v2034 = vand.u32 %v278, 4294901760
    %v2035 = vsub.f32 %v278, %v2034
    %v2036 = vand.u32 %v2035, 4294901760
    %v2037 = vsub.f32 %v2035, %v2036
    %v2038 = vand.u32 %v2037, 4294901760
    %2039 = vmatpush.msra.mxu0 %v2038
    %v2040 = vand.u32 %v274, 4294901760
    %v2041 = vsub.f32 %v274, %v2040
    %v2042 = vand.u32 %v2041, 4294901760
    %v2043 = vsub.f32 %v2041, %v2042
    %v2044 = vand.u32 %v2043, 4294901760
    %2045 = vmatpush.msra.mxu0 %v2044
    %v2046 = vand.u32 %v270, 4294901760
    %v2047 = vsub.f32 %v270, %v2046
    %v2048 = vand.u32 %v2047, 4294901760
    %v2049 = vsub.f32 %v2047, %v2048
    %v2050 = vand.u32 %v2049, 4294901760
    %2051 = vmatpush.msra.mxu0 %v2050
    %v2052 = vand.u32 %v266, 4294901760
    %v2053 = vsub.f32 %v266, %v2052
    %v2054 = vand.u32 %v2053, 4294901760
    %v2055 = vsub.f32 %v2053, %v2054
    %v2056 = vand.u32 %v2055, 4294901760
    %2057 = vmatpush.msra.mxu0 %v2056
    %v2058 = vand.u32 %v262, 4294901760
    %v2059 = vsub.f32 %v262, %v2058
    %v2060 = vand.u32 %v2059, 4294901760
    %v2061 = vsub.f32 %v2059, %v2060
    %v2062 = vand.u32 %v2061, 4294901760
    %2063 = vmatpush.msra.mxu0 %v2062
    %v2064 = vand.u32 %v258, 4294901760
    %v2065 = vsub.f32 %v258, %v2064
    %v2066 = vand.u32 %v2065, 4294901760
    %v2067 = vsub.f32 %v2065, %v2066
    %v2068 = vand.u32 %v2067, 4294901760
    %2069 = vmatpush.msra.mxu0 %v2068
    %v2070 = vand.u32 %v254, 4294901760
    %v2071 = vsub.f32 %v254, %v2070
    %v2072 = vand.u32 %v2071, 4294901760
    %v2073 = vsub.f32 %v2071, %v2072
    %v2074 = vand.u32 %v2073, 4294901760
    %2075 = vmatpush.msra.mxu0 %v2074
    %v2076 = vand.u32 %v250, 4294901760
    %v2077 = vsub.f32 %v250, %v2076
    %v2078 = vand.u32 %v2077, 4294901760
    %v2079 = vsub.f32 %v2077, %v2078
    %v2080 = vand.u32 %v2079, 4294901760
    %2081 = vmatpush.msra.mxu0 %v2080
    %v2082 = vand.u32 %v246, 4294901760
    %v2083 = vsub.f32 %v246, %v2082
    %v2084 = vand.u32 %v2083, 4294901760
    %v2085 = vsub.f32 %v2083, %v2084
    %v2086 = vand.u32 %v2085, 4294901760
    %2087 = vmatpush.msra.mxu0 %v2086
    %v2088 = vand.u32 %v920, 4294901760
    %2089 = vmatmul.f32.gmra.mxu0 %v2088
    %v2090 = vpop.f32.mrf.mxu0
    %v2091 = vadd.f32 %v1990, %v2090
    %2092 = vdwg.mxu0
    %v2093 = vand.u32 %v306, 4294901760
    %v2094 = vsub.f32 %v306, %v2093
    %2095 = vmatpush.msra.mxu0 %v2094
    %v2096 = vand.u32 %v302, 4294901760
    %v2097 = vsub.f32 %v302, %v2096
    %2098 = vmatpush.msra.mxu0 %v2097
    %v2099 = vand.u32 %v298, 4294901760
    %v2100 = vsub.f32 %v298, %v2099
    %2101 = vmatpush.msra.mxu0 %v2100
    %v2102 = vand.u32 %v294, 4294901760
    %v2103 = vsub.f32 %v294, %v2102
    %2104 = vmatpush.msra.mxu0 %v2103
    %v2105 = vand.u32 %v290, 4294901760
    %v2106 = vsub.f32 %v290, %v2105
    %2107 = vmatpush.msra.mxu0 %v2106
    %v2108 = vand.u32 %v286, 4294901760
    %v2109 = vsub.f32 %v286, %v2108
    %2110 = vmatpush.msra.mxu0 %v2109
    %v2111 = vand.u32 %v282, 4294901760
    %v2112 = vsub.f32 %v282, %v2111
    %2113 = vmatpush.msra.mxu0 %v2112
    %v2114 = vand.u32 %v278, 4294901760
    %v2115 = vsub.f32 %v278, %v2114
    %2116 = vmatpush.msra.mxu0 %v2115
    %v2117 = vand.u32 %v274, 4294901760
    %v2118 = vsub.f32 %v274, %v2117
    %2119 = vmatpush.msra.mxu0 %v2118
    %v2120 = vand.u32 %v270, 4294901760
    %v2121 = vsub.f32 %v270, %v2120
    %2122 = vmatpush.msra.mxu0 %v2121
    %v2123 = vand.u32 %v266, 4294901760
    %v2124 = vsub.f32 %v266, %v2123
    %2125 = vmatpush.msra.mxu0 %v2124
    %v2126 = vand.u32 %v262, 4294901760
    %v2127 = vsub.f32 %v262, %v2126
    %2128 = vmatpush.msra.mxu0 %v2127
    %v2129 = vand.u32 %v258, 4294901760
    %v2130 = vsub.f32 %v258, %v2129
    %2131 = vmatpush.msra.mxu0 %v2130
    %v2132 = vand.u32 %v254, 4294901760
    %v2133 = vsub.f32 %v254, %v2132
    %2134 = vmatpush.msra.mxu0 %v2133
    %v2135 = vand.u32 %v250, 4294901760
    %v2136 = vsub.f32 %v250, %v2135
    %2137 = vmatpush.msra.mxu0 %v2136
    %v2138 = vand.u32 %v246, 4294901760
    %v2139 = vsub.f32 %v246, %v2138
    %2140 = vmatpush.msra.mxu0 %v2139
    %v2141 = vand.u32 %v920, 4294901760
    %v2142 = vsub.f32 %v920, %v2141
    %2143 = vmatmul.f32.gmra.mxu0 %v2142
    %v2144 = vpop.f32.mrf.mxu0
    %v2145 = vadd.f32 %v2091, %v2144
    %2146 = vdwg.mxu0
    %v2147 = vand.u32 %v306, 4294901760
    %2148 = vmatpush.msra.mxu0 %v2147
    %v2149 = vand.u32 %v302, 4294901760
    %2150 = vmatpush.msra.mxu0 %v2149
    %v2151 = vand.u32 %v298, 4294901760
    %2152 = vmatpush.msra.mxu0 %v2151
    %v2153 = vand.u32 %v294, 4294901760
    %2154 = vmatpush.msra.mxu0 %v2153
    %v2155 = vand.u32 %v290, 4294901760
    %2156 = vmatpush.msra.mxu0 %v2155
    %v2157 = vand.u32 %v286, 4294901760
    %2158 = vmatpush.msra.mxu0 %v2157
    %v2159 = vand.u32 %v282, 4294901760
    %2160 = vmatpush.msra.mxu0 %v2159
    %v2161 = vand.u32 %v278, 4294901760
    %2162 = vmatpush.msra.mxu0 %v2161
    %v2163 = vand.u32 %v274, 4294901760
    %2164 = vmatpush.msra.mxu0 %v2163
    %v2165 = vand.u32 %v270, 4294901760
    %2166 = vmatpush.msra.mxu0 %v2165
    %v2167 = vand.u32 %v266, 4294901760
    %2168 = vmatpush.msra.mxu0 %v2167
    %v2169 = vand.u32 %v262, 4294901760
    %2170 = vmatpush.msra.mxu0 %v2169
    %v2171 = vand.u32 %v258, 4294901760
    %2172 = vmatpush.msra.mxu0 %v2171
    %v2173 = vand.u32 %v254, 4294901760
    %2174 = vmatpush.msra.mxu0 %v2173
    %v2175 = vand.u32 %v250, 4294901760
    %2176 = vmatpush.msra.mxu0 %v2175
    %v2177 = vand.u32 %v246, 4294901760
    %2178 = vmatpush.msra.mxu0 %v2177
    %v2179 = vand.u32 %v920, 4294901760
    %v2180 = vsub.f32 %v920, %v2179
    %v2181 = vand.u32 %v2180, 4294901760
    %2182 = vmatmul.f32.gmra.mxu0 %v2181
    %v2183 = vpop.f32.mrf.mxu0
    %v2184 = vadd.f32 %v2145, %v2183
    %2185 = vdwg.mxu0
    %v2186 = vand.u32 %v306, 4294901760
    %v2187 = vsub.f32 %v306, %v2186
    %v2188 = vand.u32 %v2187, 4294901760
    %2189 = vmatpush.msra.mxu0 %v2188
    %v2190 = vand.u32 %v302, 4294901760
    %v2191 = vsub.f32 %v302, %v2190
    %v2192 = vand.u32 %v2191, 4294901760
    %2193 = vmatpush.msra.mxu0 %v2192
    %v2194 = vand.u32 %v298, 4294901760
    %v2195 = vsub.f32 %v298, %v2194
    %v2196 = vand.u32 %v2195, 4294901760
    %2197 = vmatpush.msra.mxu0 %v2196
    %v2198 = vand.u32 %v294, 4294901760
    %v2199 = vsub.f32 %v294, %v2198
    %v2200 = vand.u32 %v2199, 4294901760
    %2201 = vmatpush.msra.mxu0 %v2200
    %v2202 = vand.u32 %v290, 4294901760
    %v2203 = vsub.f32 %v290, %v2202
    %v2204 = vand.u32 %v2203, 4294901760
    %2205 = vmatpush.msra.mxu0 %v2204
    %v2206 = vand.u32 %v286, 4294901760
    %v2207 = vsub.f32 %v286, %v2206
    %v2208 = vand.u32 %v2207, 4294901760
    %2209 = vmatpush.msra.mxu0 %v2208
    %v2210 = vand.u32 %v282, 4294901760
    %v2211 = vsub.f32 %v282, %v2210
    %v2212 = vand.u32 %v2211, 4294901760
    %2213 = vmatpush.msra.mxu0 %v2212
    %v2214 = vand.u32 %v278, 4294901760
    %v2215 = vsub.f32 %v278, %v2214
    %v2216 = vand.u32 %v2215, 4294901760
    %2217 = vmatpush.msra.mxu0 %v2216
    %v2218 = vand.u32 %v274, 4294901760
    %v2219 = vsub.f32 %v274, %v2218
    %v2220 = vand.u32 %v2219, 4294901760
    %2221 = vmatpush.msra.mxu0 %v2220
    %v2222 = vand.u32 %v270, 4294901760
    %v2223 = vsub.f32 %v270, %v2222
    %v2224 = vand.u32 %v2223, 4294901760
    %2225 = vmatpush.msra.mxu0 %v2224
    %v2226 = vand.u32 %v266, 4294901760
    %v2227 = vsub.f32 %v266, %v2226
    %v2228 = vand.u32 %v2227, 4294901760
    %2229 = vmatpush.msra.mxu0 %v2228
    %v2230 = vand.u32 %v262, 4294901760
    %v2231 = vsub.f32 %v262, %v2230
    %v2232 = vand.u32 %v2231, 4294901760
    %2233 = vmatpush.msra.mxu0 %v2232
    %v2234 = vand.u32 %v258, 4294901760
    %v2235 = vsub.f32 %v258, %v2234
    %v2236 = vand.u32 %v2235, 4294901760
    %2237 = vmatpush.msra.mxu0 %v2236
    %v2238 = vand.u32 %v254, 4294901760
    %v2239 = vsub.f32 %v254, %v2238
    %v2240 = vand.u32 %v2239, 4294901760
    %2241 = vmatpush.msra.mxu0 %v2240
    %v2242 = vand.u32 %v250, 4294901760
    %v2243 = vsub.f32 %v250, %v2242
    %v2244 = vand.u32 %v2243, 4294901760
    %2245 = vmatpush.msra.mxu0 %v2244
    %v2246 = vand.u32 %v246, 4294901760
    %v2247 = vsub.f32 %v246, %v2246
    %v2248 = vand.u32 %v2247, 4294901760
    %2249 = vmatpush.msra.mxu0 %v2248
    %v2250 = vand.u32 %v920, 4294901760
    %2251 = vmatmul.f32.gmra.mxu0 %v2250
    %v2252 = vpop.f32.mrf.mxu0
    %v2253 = vadd.f32 %v2184, %v2252
    %2254 = vdwg.mxu0
    %v2255 = vand.u32 %v306, 4294901760
    %2256 = vmatpush.msra.mxu0 %v2255
    %v2257 = vand.u32 %v302, 4294901760
    %2258 = vmatpush.msra.mxu0 %v2257
    %v2259 = vand.u32 %v298, 4294901760
    %2260 = vmatpush.msra.mxu0 %v2259
    %v2261 = vand.u32 %v294, 4294901760
    %2262 = vmatpush.msra.mxu0 %v2261
    %v2263 = vand.u32 %v290, 4294901760
    %2264 = vmatpush.msra.mxu0 %v2263
    %v2265 = vand.u32 %v286, 4294901760
    %2266 = vmatpush.msra.mxu0 %v2265
    %v2267 = vand.u32 %v282, 4294901760
    %2268 = vmatpush.msra.mxu0 %v2267
    %v2269 = vand.u32 %v278, 4294901760
    %2270 = vmatpush.msra.mxu0 %v2269
    %v2271 = vand.u32 %v274, 4294901760
    %2272 = vmatpush.msra.mxu0 %v2271
    %v2273 = vand.u32 %v270, 4294901760
    %2274 = vmatpush.msra.mxu0 %v2273
    %v2275 = vand.u32 %v266, 4294901760
    %2276 = vmatpush.msra.mxu0 %v2275
    %v2277 = vand.u32 %v262, 4294901760
    %2278 = vmatpush.msra.mxu0 %v2277
    %v2279 = vand.u32 %v258, 4294901760
    %2280 = vmatpush.msra.mxu0 %v2279
    %v2281 = vand.u32 %v254, 4294901760
    %2282 = vmatpush.msra.mxu0 %v2281
    %v2283 = vand.u32 %v250, 4294901760
    %2284 = vmatpush.msra.mxu0 %v2283
    %v2285 = vand.u32 %v246, 4294901760
    %2286 = vmatpush.msra.mxu0 %v2285
    %v2287 = vand.u32 %v920, 4294901760
    %2288 = vmatmul.f32.gmra.mxu0 %v2287
    %v2289 = vpop.f32.mrf.mxu0
    %v2290 = vadd.f32 %v2253, %v2289
    %2291 = vdwg.mxu0
    %v2292 = vand.u32 %v115, 4294901760
    %2293 = vmatpush.msra.mxu0 %v2292
    %v2294 = vand.u32 %v111, 4294901760
    %2295 = vmatpush.msra.mxu0 %v2294
    %v2296 = vand.u32 %v107, 4294901760
    %2297 = vmatpush.msra.mxu0 %v2296
    %v2298 = vand.u32 %v103, 4294901760
    %2299 = vmatpush.msra.mxu0 %v2298
    %v2300 = vand.u32 %v99, 4294901760
    %2301 = vmatpush.msra.mxu0 %v2300
    %v2302 = vand.u32 %v95, 4294901760
    %2303 = vmatpush.msra.mxu0 %v2302
    %v2304 = vand.u32 %v91, 4294901760
    %2305 = vmatpush.msra.mxu0 %v2304
    %v2306 = vand.u32 %v87, 4294901760
    %2307 = vmatpush.msra.mxu0 %v2306
    %v2308 = vand.u32 %v83, 4294901760
    %2309 = vmatpush.msra.mxu0 %v2308
    %v2310 = vand.u32 %v79, 4294901760
    %2311 = vmatpush.msra.mxu0 %v2310
    %v2312 = vand.u32 %v75, 4294901760
    %2313 = vmatpush.msra.mxu0 %v2312
    %v2314 = vand.u32 %v71, 4294901760
    %2315 = vmatpush.msra.mxu0 %v2314
    %v2316 = vand.u32 %v67, 4294901760
    %2317 = vmatpush.msra.mxu0 %v2316
    %v2318 = vand.u32 %v63, 4294901760
    %2319 = vmatpush.msra.mxu0 %v2318
    %v2320 = vand.u32 %v59, 4294901760
    %2321 = vmatpush.msra.mxu0 %v2320
    %v2322 = vand.u32 %v55, 4294901760
    %2323 = vmatpush.msra.mxu0 %v2322
    %v2324 = vand.u32 %v467, 4294901760
    %v2325 = vsub.f32 %v467, %v2324
    %v2326 = vand.u32 %v2325, 4294901760
    %v2327 = vsub.f32 %v2325, %v2326
    %v2328 = vand.u32 %v2327, 4294901760
    %2329 = vmatmul.f32.gmra.mxu0 %v2328
    %v2330 = vpop.f32.mrf.mxu0
    %v2331 = vadd.f32 %v926, %v2330
    %2332 = vdwg.mxu0
    %v2333 = vand.u32 %v115, 4294901760
    %v2334 = vsub.f32 %v115, %v2333
    %v2335 = vand.u32 %v2334, 4294901760
    %v2336 = vsub.f32 %v2334, %v2335
    %v2337 = vand.u32 %v2336, 4294901760
    %2338 = vmatpush.msra.mxu0 %v2337
    %v2339 = vand.u32 %v111, 4294901760
    %v2340 = vsub.f32 %v111, %v2339
    %v2341 = vand.u32 %v2340, 4294901760
    %v2342 = vsub.f32 %v2340, %v2341
    %v2343 = vand.u32 %v2342, 4294901760
    %2344 = vmatpush.msra.mxu0 %v2343
    %v2345 = vand.u32 %v107, 4294901760
    %v2346 = vsub.f32 %v107, %v2345
    %v2347 = vand.u32 %v2346, 4294901760
    %v2348 = vsub.f32 %v2346, %v2347
    %v2349 = vand.u32 %v2348, 4294901760
    %2350 = vmatpush.msra.mxu0 %v2349
    %v2351 = vand.u32 %v103, 4294901760
    %v2352 = vsub.f32 %v103, %v2351
    %v2353 = vand.u32 %v2352, 4294901760
    %v2354 = vsub.f32 %v2352, %v2353
    %v2355 = vand.u32 %v2354, 4294901760
    %2356 = vmatpush.msra.mxu0 %v2355
    %v2357 = vand.u32 %v99, 4294901760
    %v2358 = vsub.f32 %v99, %v2357
    %v2359 = vand.u32 %v2358, 4294901760
    %v2360 = vsub.f32 %v2358, %v2359
    %v2361 = vand.u32 %v2360, 4294901760
    %2362 = vmatpush.msra.mxu0 %v2361
    %v2363 = vand.u32 %v95, 4294901760
    %v2364 = vsub.f32 %v95, %v2363
    %v2365 = vand.u32 %v2364, 4294901760
    %v2366 = vsub.f32 %v2364, %v2365
    %v2367 = vand.u32 %v2366, 4294901760
    %2368 = vmatpush.msra.mxu0 %v2367
    %v2369 = vand.u32 %v91, 4294901760
    %v2370 = vsub.f32 %v91, %v2369
    %v2371 = vand.u32 %v2370, 4294901760
    %v2372 = vsub.f32 %v2370, %v2371
    %v2373 = vand.u32 %v2372, 4294901760
    %2374 = vmatpush.msra.mxu0 %v2373
    %v2375 = vand.u32 %v87, 4294901760
    %v2376 = vsub.f32 %v87, %v2375
    %v2377 = vand.u32 %v2376, 4294901760
    %v2378 = vsub.f32 %v2376, %v2377
    %v2379 = vand.u32 %v2378, 4294901760
    %2380 = vmatpush.msra.mxu0 %v2379
    %v2381 = vand.u32 %v83, 4294901760
    %v2382 = vsub.f32 %v83, %v2381
    %v2383 = vand.u32 %v2382, 4294901760
    %v2384 = vsub.f32 %v2382, %v2383
    %v2385 = vand.u32 %v2384, 4294901760
    %2386 = vmatpush.msra.mxu0 %v2385
    %v2387 = vand.u32 %v79, 4294901760
    %v2388 = vsub.f32 %v79, %v2387
    %v2389 = vand.u32 %v2388, 4294901760
    %v2390 = vsub.f32 %v2388, %v2389
    %v2391 = vand.u32 %v2390, 4294901760
    %2392 = vmatpush.msra.mxu0 %v2391
    %v2393 = vand.u32 %v75, 4294901760
    %v2394 = vsub.f32 %v75, %v2393
    %v2395 = vand.u32 %v2394, 4294901760
    %v2396 = vsub.f32 %v2394, %v2395
    %v2397 = vand.u32 %v2396, 4294901760
    %2398 = vmatpush.msra.mxu0 %v2397
    %v2399 = vand.u32 %v71, 4294901760
    %v2400 = vsub.f32 %v71, %v2399
    %v2401 = vand.u32 %v2400, 4294901760
    %v2402 = vsub.f32 %v2400, %v2401
    %v2403 = vand.u32 %v2402, 4294901760
    %2404 = vmatpush.msra.mxu0 %v2403
    %v2405 = vand.u32 %v67, 4294901760
    %v2406 = vsub.f32 %v67, %v2405
    %v2407 = vand.u32 %v2406, 4294901760
    %v2408 = vsub.f32 %v2406, %v2407
    %v2409 = vand.u32 %v2408, 4294901760
    %2410 = vmatpush.msra.mxu0 %v2409
    %v2411 = vand.u32 %v63, 4294901760
    %v2412 = vsub.f32 %v63, %v2411
    %v2413 = vand.u32 %v2412, 4294901760
    %v2414 = vsub.f32 %v2412, %v2413
    %v2415 = vand.u32 %v2414, 4294901760
    %2416 = vmatpush.msra.mxu0 %v2415
    %v2417 = vand.u32 %v59, 4294901760
    %v2418 = vsub.f32 %v59, %v2417
    %v2419 = vand.u32 %v2418, 4294901760
    %v2420 = vsub.f32 %v2418, %v2419
    %v2421 = vand.u32 %v2420, 4294901760
    %2422 = vmatpush.msra.mxu0 %v2421
    %v2423 = vand.u32 %v55, 4294901760
    %v2424 = vsub.f32 %v55, %v2423
    %v2425 = vand.u32 %v2424, 4294901760
    %v2426 = vsub.f32 %v2424, %v2425
    %v2427 = vand.u32 %v2426, 4294901760
    %2428 = vmatpush.msra.mxu0 %v2427
    %v2429 = vand.u32 %v467, 4294901760
    %2430 = vmatmul.f32.gmra.mxu0 %v2429
    %v2431 = vpop.f32.mrf.mxu0
    %v2432 = vadd.f32 %v2331, %v2431
    %2433 = vdwg.mxu0
    %v2434 = vand.u32 %v115, 4294901760
    %v2435 = vsub.f32 %v115, %v2434
    %2436 = vmatpush.msra.mxu0 %v2435
    %v2437 = vand.u32 %v111, 4294901760
    %v2438 = vsub.f32 %v111, %v2437
    %2439 = vmatpush.msra.mxu0 %v2438
    %v2440 = vand.u32 %v107, 4294901760
    %v2441 = vsub.f32 %v107, %v2440
    %2442 = vmatpush.msra.mxu0 %v2441
    %v2443 = vand.u32 %v103, 4294901760
    %v2444 = vsub.f32 %v103, %v2443
    %2445 = vmatpush.msra.mxu0 %v2444
    %v2446 = vand.u32 %v99, 4294901760
    %v2447 = vsub.f32 %v99, %v2446
    %2448 = vmatpush.msra.mxu0 %v2447
    %v2449 = vand.u32 %v95, 4294901760
    %v2450 = vsub.f32 %v95, %v2449
    %2451 = vmatpush.msra.mxu0 %v2450
    %v2452 = vand.u32 %v91, 4294901760
    %v2453 = vsub.f32 %v91, %v2452
    %2454 = vmatpush.msra.mxu0 %v2453
    %v2455 = vand.u32 %v87, 4294901760
    %v2456 = vsub.f32 %v87, %v2455
    %2457 = vmatpush.msra.mxu0 %v2456
    %v2458 = vand.u32 %v83, 4294901760
    %v2459 = vsub.f32 %v83, %v2458
    %2460 = vmatpush.msra.mxu0 %v2459
    %v2461 = vand.u32 %v79, 4294901760
    %v2462 = vsub.f32 %v79, %v2461
    %2463 = vmatpush.msra.mxu0 %v2462
    %v2464 = vand.u32 %v75, 4294901760
    %v2465 = vsub.f32 %v75, %v2464
    %2466 = vmatpush.msra.mxu0 %v2465
    %v2467 = vand.u32 %v71, 4294901760
    %v2468 = vsub.f32 %v71, %v2467
    %2469 = vmatpush.msra.mxu0 %v2468
    %v2470 = vand.u32 %v67, 4294901760
    %v2471 = vsub.f32 %v67, %v2470
    %2472 = vmatpush.msra.mxu0 %v2471
    %v2473 = vand.u32 %v63, 4294901760
    %v2474 = vsub.f32 %v63, %v2473
    %2475 = vmatpush.msra.mxu0 %v2474
    %v2476 = vand.u32 %v59, 4294901760
    %v2477 = vsub.f32 %v59, %v2476
    %2478 = vmatpush.msra.mxu0 %v2477
    %v2479 = vand.u32 %v55, 4294901760
    %v2480 = vsub.f32 %v55, %v2479
    %2481 = vmatpush.msra.mxu0 %v2480
    %v2482 = vand.u32 %v467, 4294901760
    %v2483 = vsub.f32 %v467, %v2482
    %2484 = vmatmul.f32.gmra.mxu0 %v2483
    %v2485 = vpop.f32.mrf.mxu0
    %v2486 = vadd.f32 %v2432, %v2485
    %2487 = vdwg.mxu0
    %v2488 = vand.u32 %v115, 4294901760
    %2489 = vmatpush.msra.mxu0 %v2488
    %v2490 = vand.u32 %v111, 4294901760
    %2491 = vmatpush.msra.mxu0 %v2490
    %v2492 = vand.u32 %v107, 4294901760
    %2493 = vmatpush.msra.mxu0 %v2492
    %v2494 = vand.u32 %v103, 4294901760
    %2495 = vmatpush.msra.mxu0 %v2494
    %v2496 = vand.u32 %v99, 4294901760
    %2497 = vmatpush.msra.mxu0 %v2496
    %v2498 = vand.u32 %v95, 4294901760
    %2499 = vmatpush.msra.mxu0 %v2498
    %v2500 = vand.u32 %v91, 4294901760
    %2501 = vmatpush.msra.mxu0 %v2500
    %v2502 = vand.u32 %v87, 4294901760
    %2503 = vmatpush.msra.mxu0 %v2502
    %v2504 = vand.u32 %v83, 4294901760
    %2505 = vmatpush.msra.mxu0 %v2504
    %v2506 = vand.u32 %v79, 4294901760
    %2507 = vmatpush.msra.mxu0 %v2506
    %v2508 = vand.u32 %v75, 4294901760
    %2509 = vmatpush.msra.mxu0 %v2508
    %v2510 = vand.u32 %v71, 4294901760
    %2511 = vmatpush.msra.mxu0 %v2510
    %v2512 = vand.u32 %v67, 4294901760
    %2513 = vmatpush.msra.mxu0 %v2512
    %v2514 = vand.u32 %v63, 4294901760
    %2515 = vmatpush.msra.mxu0 %v2514
    %v2516 = vand.u32 %v59, 4294901760
    %2517 = vmatpush.msra.mxu0 %v2516
    %v2518 = vand.u32 %v55, 4294901760
    %2519 = vmatpush.msra.mxu0 %v2518
    %v2520 = vand.u32 %v467, 4294901760
    %v2521 = vsub.f32 %v467, %v2520
    %v2522 = vand.u32 %v2521, 4294901760
    %2523 = vmatmul.f32.gmra.mxu0 %v2522
    %v2524 = vpop.f32.mrf.mxu0
    %v2525 = vadd.f32 %v2486, %v2524
    %2526 = vdwg.mxu0
    %v2527 = vand.u32 %v115, 4294901760
    %v2528 = vsub.f32 %v115, %v2527
    %v2529 = vand.u32 %v2528, 4294901760
    %2530 = vmatpush.msra.mxu0 %v2529
    %v2531 = vand.u32 %v111, 4294901760
    %v2532 = vsub.f32 %v111, %v2531
    %v2533 = vand.u32 %v2532, 4294901760
    %2534 = vmatpush.msra.mxu0 %v2533
    %v2535 = vand.u32 %v107, 4294901760
    %v2536 = vsub.f32 %v107, %v2535
    %v2537 = vand.u32 %v2536, 4294901760
    %2538 = vmatpush.msra.mxu0 %v2537
    %v2539 = vand.u32 %v103, 4294901760
    %v2540 = vsub.f32 %v103, %v2539
    %v2541 = vand.u32 %v2540, 4294901760
    %2542 = vmatpush.msra.mxu0 %v2541
    %v2543 = vand.u32 %v99, 4294901760
    %v2544 = vsub.f32 %v99, %v2543
    %v2545 = vand.u32 %v2544, 4294901760
    %2546 = vmatpush.msra.mxu0 %v2545
    %v2547 = vand.u32 %v95, 4294901760
    %v2548 = vsub.f32 %v95, %v2547
    %v2549 = vand.u32 %v2548, 4294901760
    %2550 = vmatpush.msra.mxu0 %v2549
    %v2551 = vand.u32 %v91, 4294901760
    %v2552 = vsub.f32 %v91, %v2551
    %v2553 = vand.u32 %v2552, 4294901760
    %2554 = vmatpush.msra.mxu0 %v2553
    %v2555 = vand.u32 %v87, 4294901760
    %v2556 = vsub.f32 %v87, %v2555
    %v2557 = vand.u32 %v2556, 4294901760
    %2558 = vmatpush.msra.mxu0 %v2557
    %v2559 = vand.u32 %v83, 4294901760
    %v2560 = vsub.f32 %v83, %v2559
    %v2561 = vand.u32 %v2560, 4294901760
    %2562 = vmatpush.msra.mxu0 %v2561
    %v2563 = vand.u32 %v79, 4294901760
    %v2564 = vsub.f32 %v79, %v2563
    %v2565 = vand.u32 %v2564, 4294901760
    %2566 = vmatpush.msra.mxu0 %v2565
    %v2567 = vand.u32 %v75, 4294901760
    %v2568 = vsub.f32 %v75, %v2567
    %v2569 = vand.u32 %v2568, 4294901760
    %2570 = vmatpush.msra.mxu0 %v2569
    %v2571 = vand.u32 %v71, 4294901760
    %v2572 = vsub.f32 %v71, %v2571
    %v2573 = vand.u32 %v2572, 4294901760
    %2574 = vmatpush.msra.mxu0 %v2573
    %v2575 = vand.u32 %v67, 4294901760
    %v2576 = vsub.f32 %v67, %v2575
    %v2577 = vand.u32 %v2576, 4294901760
    %2578 = vmatpush.msra.mxu0 %v2577
    %v2579 = vand.u32 %v63, 4294901760
    %v2580 = vsub.f32 %v63, %v2579
    %v2581 = vand.u32 %v2580, 4294901760
    %2582 = vmatpush.msra.mxu0 %v2581
    %v2583 = vand.u32 %v59, 4294901760
    %v2584 = vsub.f32 %v59, %v2583
    %v2585 = vand.u32 %v2584, 4294901760
    %2586 = vmatpush.msra.mxu0 %v2585
    %v2587 = vand.u32 %v55, 4294901760
    %v2588 = vsub.f32 %v55, %v2587
    %v2589 = vand.u32 %v2588, 4294901760
    %2590 = vmatpush.msra.mxu0 %v2589
    %v2591 = vand.u32 %v467, 4294901760
    %2592 = vmatmul.f32.gmra.mxu0 %v2591
    %v2593 = vpop.f32.mrf.mxu0
    %v2594 = vadd.f32 %v2525, %v2593
    %2595 = vdwg.mxu0
    %v2596 = vand.u32 %v115, 4294901760
    %2597 = vmatpush.msra.mxu0 %v2596
    %v2598 = vand.u32 %v111, 4294901760
    %2599 = vmatpush.msra.mxu0 %v2598
    %v2600 = vand.u32 %v107, 4294901760
    %2601 = vmatpush.msra.mxu0 %v2600
    %v2602 = vand.u32 %v103, 4294901760
    %2603 = vmatpush.msra.mxu0 %v2602
    %v2604 = vand.u32 %v99, 4294901760
    %2605 = vmatpush.msra.mxu0 %v2604
    %v2606 = vand.u32 %v95, 4294901760
    %2607 = vmatpush.msra.mxu0 %v2606
    %v2608 = vand.u32 %v91, 4294901760
    %2609 = vmatpush.msra.mxu0 %v2608
    %v2610 = vand.u32 %v87, 4294901760
    %2611 = vmatpush.msra.mxu0 %v2610
    %v2612 = vand.u32 %v83, 4294901760
    %2613 = vmatpush.msra.mxu0 %v2612
    %v2614 = vand.u32 %v79, 4294901760
    %2615 = vmatpush.msra.mxu0 %v2614
    %v2616 = vand.u32 %v75, 4294901760
    %2617 = vmatpush.msra.mxu0 %v2616
    %v2618 = vand.u32 %v71, 4294901760
    %2619 = vmatpush.msra.mxu0 %v2618
    %v2620 = vand.u32 %v67, 4294901760
    %2621 = vmatpush.msra.mxu0 %v2620
    %v2622 = vand.u32 %v63, 4294901760
    %2623 = vmatpush.msra.mxu0 %v2622
    %v2624 = vand.u32 %v59, 4294901760
    %2625 = vmatpush.msra.mxu0 %v2624
    %v2626 = vand.u32 %v55, 4294901760
    %2627 = vmatpush.msra.mxu0 %v2626
    %v2628 = vand.u32 %v467, 4294901760
    %2629 = vmatmul.f32.gmra.mxu0 %v2628
    %v2630 = vpop.f32.mrf.mxu0
    %v2631 = vadd.f32 %v2594, %v2630
    %2632 = vdwg.mxu0
    %v2633 = vand.u32 %v179, 4294901760
    %2634 = vmatpush.msra.mxu0 %v2633
    %v2635 = vand.u32 %v175, 4294901760
    %2636 = vmatpush.msra.mxu0 %v2635
    %v2637 = vand.u32 %v171, 4294901760
    %2638 = vmatpush.msra.mxu0 %v2637
    %v2639 = vand.u32 %v167, 4294901760
    %2640 = vmatpush.msra.mxu0 %v2639
    %v2641 = vand.u32 %v163, 4294901760
    %2642 = vmatpush.msra.mxu0 %v2641
    %v2643 = vand.u32 %v159, 4294901760
    %2644 = vmatpush.msra.mxu0 %v2643
    %v2645 = vand.u32 %v155, 4294901760
    %2646 = vmatpush.msra.mxu0 %v2645
    %v2647 = vand.u32 %v151, 4294901760
    %2648 = vmatpush.msra.mxu0 %v2647
    %v2649 = vand.u32 %v147, 4294901760
    %2650 = vmatpush.msra.mxu0 %v2649
    %v2651 = vand.u32 %v143, 4294901760
    %2652 = vmatpush.msra.mxu0 %v2651
    %v2653 = vand.u32 %v139, 4294901760
    %2654 = vmatpush.msra.mxu0 %v2653
    %v2655 = vand.u32 %v135, 4294901760
    %2656 = vmatpush.msra.mxu0 %v2655
    %v2657 = vand.u32 %v131, 4294901760
    %2658 = vmatpush.msra.mxu0 %v2657
    %v2659 = vand.u32 %v127, 4294901760
    %2660 = vmatpush.msra.mxu0 %v2659
    %v2661 = vand.u32 %v123, 4294901760
    %2662 = vmatpush.msra.mxu0 %v2661
    %v2663 = vand.u32 %v119, 4294901760
    %2664 = vmatpush.msra.mxu0 %v2663
    %v2665 = vand.u32 %v618, 4294901760
    %v2666 = vsub.f32 %v618, %v2665
    %v2667 = vand.u32 %v2666, 4294901760
    %v2668 = vsub.f32 %v2666, %v2667
    %v2669 = vand.u32 %v2668, 4294901760
    %2670 = vmatmul.f32.gmra.mxu0 %v2669
    %v2671 = vpop.f32.mrf.mxu0
    %v2672 = vadd.f32 %v2631, %v2671
    %2673 = vdwg.mxu0
    %v2674 = vand.u32 %v179, 4294901760
    %v2675 = vsub.f32 %v179, %v2674
    %v2676 = vand.u32 %v2675, 4294901760
    %v2677 = vsub.f32 %v2675, %v2676
    %v2678 = vand.u32 %v2677, 4294901760
    %2679 = vmatpush.msra.mxu0 %v2678
    %v2680 = vand.u32 %v175, 4294901760
    %v2681 = vsub.f32 %v175, %v2680
    %v2682 = vand.u32 %v2681, 4294901760
    %v2683 = vsub.f32 %v2681, %v2682
    %v2684 = vand.u32 %v2683, 4294901760
    %2685 = vmatpush.msra.mxu0 %v2684
    %v2686 = vand.u32 %v171, 4294901760
    %v2687 = vsub.f32 %v171, %v2686
    %v2688 = vand.u32 %v2687, 4294901760
    %v2689 = vsub.f32 %v2687, %v2688
    %v2690 = vand.u32 %v2689, 4294901760
    %2691 = vmatpush.msra.mxu0 %v2690
    %v2692 = vand.u32 %v167, 4294901760
    %v2693 = vsub.f32 %v167, %v2692
    %v2694 = vand.u32 %v2693, 4294901760
    %v2695 = vsub.f32 %v2693, %v2694
    %v2696 = vand.u32 %v2695, 4294901760
    %2697 = vmatpush.msra.mxu0 %v2696
    %v2698 = vand.u32 %v163, 4294901760
    %v2699 = vsub.f32 %v163, %v2698
    %v2700 = vand.u32 %v2699, 4294901760
    %v2701 = vsub.f32 %v2699, %v2700
    %v2702 = vand.u32 %v2701, 4294901760
    %2703 = vmatpush.msra.mxu0 %v2702
    %v2704 = vand.u32 %v159, 4294901760
    %v2705 = vsub.f32 %v159, %v2704
    %v2706 = vand.u32 %v2705, 4294901760
    %v2707 = vsub.f32 %v2705, %v2706
    %v2708 = vand.u32 %v2707, 4294901760
    %2709 = vmatpush.msra.mxu0 %v2708
    %v2710 = vand.u32 %v155, 4294901760
    %v2711 = vsub.f32 %v155, %v2710
    %v2712 = vand.u32 %v2711, 4294901760
    %v2713 = vsub.f32 %v2711, %v2712
    %v2714 = vand.u32 %v2713, 4294901760
    %2715 = vmatpush.msra.mxu0 %v2714
    %v2716 = vand.u32 %v151, 4294901760
    %v2717 = vsub.f32 %v151, %v2716
    %v2718 = vand.u32 %v2717, 4294901760
    %v2719 = vsub.f32 %v2717, %v2718
    %v2720 = vand.u32 %v2719, 4294901760
    %2721 = vmatpush.msra.mxu0 %v2720
    %v2722 = vand.u32 %v147, 4294901760
    %v2723 = vsub.f32 %v147, %v2722
    %v2724 = vand.u32 %v2723, 4294901760
    %v2725 = vsub.f32 %v2723, %v2724
    %v2726 = vand.u32 %v2725, 4294901760
    %2727 = vmatpush.msra.mxu0 %v2726
    %v2728 = vand.u32 %v143, 4294901760
    %v2729 = vsub.f32 %v143, %v2728
    %v2730 = vand.u32 %v2729, 4294901760
    %v2731 = vsub.f32 %v2729, %v2730
    %v2732 = vand.u32 %v2731, 4294901760
    %2733 = vmatpush.msra.mxu0 %v2732
    %v2734 = vand.u32 %v139, 4294901760
    %v2735 = vsub.f32 %v139, %v2734
    %v2736 = vand.u32 %v2735, 4294901760
    %v2737 = vsub.f32 %v2735, %v2736
    %v2738 = vand.u32 %v2737, 4294901760
    %2739 = vmatpush.msra.mxu0 %v2738
    %v2740 = vand.u32 %v135, 4294901760
    %v2741 = vsub.f32 %v135, %v2740
    %v2742 = vand.u32 %v2741, 4294901760
    %v2743 = vsub.f32 %v2741, %v2742
    %v2744 = vand.u32 %v2743, 4294901760
    %2745 = vmatpush.msra.mxu0 %v2744
    %v2746 = vand.u32 %v131, 4294901760
    %v2747 = vsub.f32 %v131, %v2746
    %v2748 = vand.u32 %v2747, 4294901760
    %v2749 = vsub.f32 %v2747, %v2748
    %v2750 = vand.u32 %v2749, 4294901760
    %2751 = vmatpush.msra.mxu0 %v2750
    %v2752 = vand.u32 %v127, 4294901760
    %v2753 = vsub.f32 %v127, %v2752
    %v2754 = vand.u32 %v2753, 4294901760
    %v2755 = vsub.f32 %v2753, %v2754
    %v2756 = vand.u32 %v2755, 4294901760
    %2757 = vmatpush.msra.mxu0 %v2756
    %v2758 = vand.u32 %v123, 4294901760
    %v2759 = vsub.f32 %v123, %v2758
    %v2760 = vand.u32 %v2759, 4294901760
    %v2761 = vsub.f32 %v2759, %v2760
    %v2762 = vand.u32 %v2761, 4294901760
    %2763 = vmatpush.msra.mxu0 %v2762
    %v2764 = vand.u32 %v119, 4294901760
    %v2765 = vsub.f32 %v119, %v2764
    %v2766 = vand.u32 %v2765, 4294901760
    %v2767 = vsub.f32 %v2765, %v2766
    %v2768 = vand.u32 %v2767, 4294901760
    %2769 = vmatpush.msra.mxu0 %v2768
    %v2770 = vand.u32 %v618, 4294901760
    %2771 = vmatmul.f32.gmra.mxu0 %v2770
    %v2772 = vpop.f32.mrf.mxu0
    %v2773 = vadd.f32 %v2672, %v2772
    %2774 = vdwg.mxu0
    %v2775 = vand.u32 %v179, 4294901760
    %v2776 = vsub.f32 %v179, %v2775
    %2777 = vmatpush.msra.mxu0 %v2776
    %v2778 = vand.u32 %v175, 4294901760
    %v2779 = vsub.f32 %v175, %v2778
    %2780 = vmatpush.msra.mxu0 %v2779
    %v2781 = vand.u32 %v171, 4294901760
    %v2782 = vsub.f32 %v171, %v2781
    %2783 = vmatpush.msra.mxu0 %v2782
    %v2784 = vand.u32 %v167, 4294901760
    %v2785 = vsub.f32 %v167, %v2784
    %2786 = vmatpush.msra.mxu0 %v2785
    %v2787 = vand.u32 %v163, 4294901760
    %v2788 = vsub.f32 %v163, %v2787
    %2789 = vmatpush.msra.mxu0 %v2788
    %v2790 = vand.u32 %v159, 4294901760
    %v2791 = vsub.f32 %v159, %v2790
    %2792 = vmatpush.msra.mxu0 %v2791
    %v2793 = vand.u32 %v155, 4294901760
    %v2794 = vsub.f32 %v155, %v2793
    %2795 = vmatpush.msra.mxu0 %v2794
    %v2796 = vand.u32 %v151, 4294901760
    %v2797 = vsub.f32 %v151, %v2796
    %2798 = vmatpush.msra.mxu0 %v2797
    %v2799 = vand.u32 %v147, 4294901760
    %v2800 = vsub.f32 %v147, %v2799
    %2801 = vmatpush.msra.mxu0 %v2800
    %v2802 = vand.u32 %v143, 4294901760
    %v2803 = vsub.f32 %v143, %v2802
    %2804 = vmatpush.msra.mxu0 %v2803
    %v2805 = vand.u32 %v139, 4294901760
    %v2806 = vsub.f32 %v139, %v2805
    %2807 = vmatpush.msra.mxu0 %v2806
    %v2808 = vand.u32 %v135, 4294901760
    %v2809 = vsub.f32 %v135, %v2808
    %2810 = vmatpush.msra.mxu0 %v2809
    %v2811 = vand.u32 %v131, 4294901760
    %v2812 = vsub.f32 %v131, %v2811
    %2813 = vmatpush.msra.mxu0 %v2812
    %v2814 = vand.u32 %v127, 4294901760
    %v2815 = vsub.f32 %v127, %v2814
    %2816 = vmatpush.msra.mxu0 %v2815
    %v2817 = vand.u32 %v123, 4294901760
    %v2818 = vsub.f32 %v123, %v2817
    %2819 = vmatpush.msra.mxu0 %v2818
    %v2820 = vand.u32 %v119, 4294901760
    %v2821 = vsub.f32 %v119, %v2820
    %2822 = vmatpush.msra.mxu0 %v2821
    %v2823 = vand.u32 %v618, 4294901760
    %v2824 = vsub.f32 %v618, %v2823
    %2825 = vmatmul.f32.gmra.mxu0 %v2824
    %v2826 = vpop.f32.mrf.mxu0
    %v2827 = vadd.f32 %v2773, %v2826
    %2828 = vdwg.mxu0
    %v2829 = vand.u32 %v179, 4294901760
    %2830 = vmatpush.msra.mxu0 %v2829
    %v2831 = vand.u32 %v175, 4294901760
    %2832 = vmatpush.msra.mxu0 %v2831
    %v2833 = vand.u32 %v171, 4294901760
    %2834 = vmatpush.msra.mxu0 %v2833
    %v2835 = vand.u32 %v167, 4294901760
    %2836 = vmatpush.msra.mxu0 %v2835
    %v2837 = vand.u32 %v163, 4294901760
    %2838 = vmatpush.msra.mxu0 %v2837
    %v2839 = vand.u32 %v159, 4294901760
    %2840 = vmatpush.msra.mxu0 %v2839
    %v2841 = vand.u32 %v155, 4294901760
    %2842 = vmatpush.msra.mxu0 %v2841
    %v2843 = vand.u32 %v151, 4294901760
    %2844 = vmatpush.msra.mxu0 %v2843
    %v2845 = vand.u32 %v147, 4294901760
    %2846 = vmatpush.msra.mxu0 %v2845
    %v2847 = vand.u32 %v143, 4294901760
    %2848 = vmatpush.msra.mxu0 %v2847
    %v2849 = vand.u32 %v139, 4294901760
    %2850 = vmatpush.msra.mxu0 %v2849
    %v2851 = vand.u32 %v135, 4294901760
    %2852 = vmatpush.msra.mxu0 %v2851
    %v2853 = vand.u32 %v131, 4294901760
    %2854 = vmatpush.msra.mxu0 %v2853
    %v2855 = vand.u32 %v127, 4294901760
    %2856 = vmatpush.msra.mxu0 %v2855
    %v2857 = vand.u32 %v123, 4294901760
    %2858 = vmatpush.msra.mxu0 %v2857
    %v2859 = vand.u32 %v119, 4294901760
    %2860 = vmatpush.msra.mxu0 %v2859
    %v2861 = vand.u32 %v618, 4294901760
    %v2862 = vsub.f32 %v618, %v2861
    %v2863 = vand.u32 %v2862, 4294901760
    %2864 = vmatmul.f32.gmra.mxu0 %v2863
    %v2865 = vpop.f32.mrf.mxu0
    %v2866 = vadd.f32 %v2827, %v2865
    %2867 = vdwg.mxu0
    %v2868 = vand.u32 %v179, 4294901760
    %v2869 = vsub.f32 %v179, %v2868
    %v2870 = vand.u32 %v2869, 4294901760
    %2871 = vmatpush.msra.mxu0 %v2870
    %v2872 = vand.u32 %v175, 4294901760
    %v2873 = vsub.f32 %v175, %v2872
    %v2874 = vand.u32 %v2873, 4294901760
    %2875 = vmatpush.msra.mxu0 %v2874
    %v2876 = vand.u32 %v171, 4294901760
    %v2877 = vsub.f32 %v171, %v2876
    %v2878 = vand.u32 %v2877, 4294901760
    %2879 = vmatpush.msra.mxu0 %v2878
    %v2880 = vand.u32 %v167, 4294901760
    %v2881 = vsub.f32 %v167, %v2880
    %v2882 = vand.u32 %v2881, 4294901760
    %2883 = vmatpush.msra.mxu0 %v2882
    %v2884 = vand.u32 %v163, 4294901760
    %v2885 = vsub.f32 %v163, %v2884
    %v2886 = vand.u32 %v2885, 4294901760
    %2887 = vmatpush.msra.mxu0 %v2886
    %v2888 = vand.u32 %v159, 4294901760
    %v2889 = vsub.f32 %v159, %v2888
    %v2890 = vand.u32 %v2889, 4294901760
    %2891 = vmatpush.msra.mxu0 %v2890
    %v2892 = vand.u32 %v155, 4294901760
    %v2893 = vsub.f32 %v155, %v2892
    %v2894 = vand.u32 %v2893, 4294901760
    %2895 = vmatpush.msra.mxu0 %v2894
    %v2896 = vand.u32 %v151, 4294901760
    %v2897 = vsub.f32 %v151, %v2896
    %v2898 = vand.u32 %v2897, 4294901760
    %2899 = vmatpush.msra.mxu0 %v2898
    %v2900 = vand.u32 %v147, 4294901760
    %v2901 = vsub.f32 %v147, %v2900
    %v2902 = vand.u32 %v2901, 4294901760
    %2903 = vmatpush.msra.mxu0 %v2902
    %v2904 = vand.u32 %v143, 4294901760
    %v2905 = vsub.f32 %v143, %v2904
    %v2906 = vand.u32 %v2905, 4294901760
    %2907 = vmatpush.msra.mxu0 %v2906
    %v2908 = vand.u32 %v139, 4294901760
    %v2909 = vsub.f32 %v139, %v2908
    %v2910 = vand.u32 %v2909, 4294901760
    %2911 = vmatpush.msra.mxu0 %v2910
    %v2912 = vand.u32 %v135, 4294901760
    %v2913 = vsub.f32 %v135, %v2912
    %v2914 = vand.u32 %v2913, 4294901760
    %2915 = vmatpush.msra.mxu0 %v2914
    %v2916 = vand.u32 %v131, 4294901760
    %v2917 = vsub.f32 %v131, %v2916
    %v2918 = vand.u32 %v2917, 4294901760
    %2919 = vmatpush.msra.mxu0 %v2918
    %v2920 = vand.u32 %v127, 4294901760
    %v2921 = vsub.f32 %v127, %v2920
    %v2922 = vand.u32 %v2921, 4294901760
    %2923 = vmatpush.msra.mxu0 %v2922
    %v2924 = vand.u32 %v123, 4294901760
    %v2925 = vsub.f32 %v123, %v2924
    %v2926 = vand.u32 %v2925, 4294901760
    %2927 = vmatpush.msra.mxu0 %v2926
    %v2928 = vand.u32 %v119, 4294901760
    %v2929 = vsub.f32 %v119, %v2928
    %v2930 = vand.u32 %v2929, 4294901760
    %2931 = vmatpush.msra.mxu0 %v2930
    %v2932 = vand.u32 %v618, 4294901760
    %2933 = vmatmul.f32.gmra.mxu0 %v2932
    %v2934 = vpop.f32.mrf.mxu0
    %v2935 = vadd.f32 %v2866, %v2934
    %2936 = vdwg.mxu0
    %v2937 = vand.u32 %v179, 4294901760
    %2938 = vmatpush.msra.mxu0 %v2937
    %v2939 = vand.u32 %v175, 4294901760
    %2940 = vmatpush.msra.mxu0 %v2939
    %v2941 = vand.u32 %v171, 4294901760
    %2942 = vmatpush.msra.mxu0 %v2941
    %v2943 = vand.u32 %v167, 4294901760
    %2944 = vmatpush.msra.mxu0 %v2943
    %v2945 = vand.u32 %v163, 4294901760
    %2946 = vmatpush.msra.mxu0 %v2945
    %v2947 = vand.u32 %v159, 4294901760
    %2948 = vmatpush.msra.mxu0 %v2947
    %v2949 = vand.u32 %v155, 4294901760
    %2950 = vmatpush.msra.mxu0 %v2949
    %v2951 = vand.u32 %v151, 4294901760
    %2952 = vmatpush.msra.mxu0 %v2951
    %v2953 = vand.u32 %v147, 4294901760
    %2954 = vmatpush.msra.mxu0 %v2953
    %v2955 = vand.u32 %v143, 4294901760
    %2956 = vmatpush.msra.mxu0 %v2955
    %v2957 = vand.u32 %v139, 4294901760
    %2958 = vmatpush.msra.mxu0 %v2957
    %v2959 = vand.u32 %v135, 4294901760
    %2960 = vmatpush.msra.mxu0 %v2959
    %v2961 = vand.u32 %v131, 4294901760
    %2962 = vmatpush.msra.mxu0 %v2961
    %v2963 = vand.u32 %v127, 4294901760
    %2964 = vmatpush.msra.mxu0 %v2963
    %v2965 = vand.u32 %v123, 4294901760
    %2966 = vmatpush.msra.mxu0 %v2965
    %v2967 = vand.u32 %v119, 4294901760
    %2968 = vmatpush.msra.mxu0 %v2967
    %v2969 = vand.u32 %v618, 4294901760
    %2970 = vmatmul.f32.gmra.mxu0 %v2969
    %v2971 = vpop.f32.mrf.mxu0
    %v2972 = vadd.f32 %v2935, %v2971
    %2973 = vdwg.mxu0
    %v2974 = vand.u32 %v243, 4294901760
    %2975 = vmatpush.msra.mxu0 %v2974
    %v2976 = vand.u32 %v239, 4294901760
    %2977 = vmatpush.msra.mxu0 %v2976
    %v2978 = vand.u32 %v235, 4294901760
    %2979 = vmatpush.msra.mxu0 %v2978
    %v2980 = vand.u32 %v231, 4294901760
    %2981 = vmatpush.msra.mxu0 %v2980
    %v2982 = vand.u32 %v227, 4294901760
    %2983 = vmatpush.msra.mxu0 %v2982
    %v2984 = vand.u32 %v223, 4294901760
    %2985 = vmatpush.msra.mxu0 %v2984
    %v2986 = vand.u32 %v219, 4294901760
    %2987 = vmatpush.msra.mxu0 %v2986
    %v2988 = vand.u32 %v215, 4294901760
    %2989 = vmatpush.msra.mxu0 %v2988
    %v2990 = vand.u32 %v211, 4294901760
    %2991 = vmatpush.msra.mxu0 %v2990
    %v2992 = vand.u32 %v207, 4294901760
    %2993 = vmatpush.msra.mxu0 %v2992
    %v2994 = vand.u32 %v203, 4294901760
    %2995 = vmatpush.msra.mxu0 %v2994
    %v2996 = vand.u32 %v199, 4294901760
    %2997 = vmatpush.msra.mxu0 %v2996
    %v2998 = vand.u32 %v195, 4294901760
    %2999 = vmatpush.msra.mxu0 %v2998
    %v3000 = vand.u32 %v191, 4294901760
    %3001 = vmatpush.msra.mxu0 %v3000
    %v3002 = vand.u32 %v187, 4294901760
    %3003 = vmatpush.msra.mxu0 %v3002
    %v3004 = vand.u32 %v183, 4294901760
    %3005 = vmatpush.msra.mxu0 %v3004
    %v3006 = vand.u32 %v769, 4294901760
    %v3007 = vsub.f32 %v769, %v3006
    %v3008 = vand.u32 %v3007, 4294901760
    %v3009 = vsub.f32 %v3007, %v3008
    %v3010 = vand.u32 %v3009, 4294901760
    %3011 = vmatmul.f32.gmra.mxu0 %v3010
    %v3012 = vpop.f32.mrf.mxu0
    %v3013 = vadd.f32 %v2972, %v3012
    %3014 = vdwg.mxu0
    %v3015 = vand.u32 %v243, 4294901760
    %v3016 = vsub.f32 %v243, %v3015
    %v3017 = vand.u32 %v3016, 4294901760
    %v3018 = vsub.f32 %v3016, %v3017
    %v3019 = vand.u32 %v3018, 4294901760
    %3020 = vmatpush.msra.mxu0 %v3019
    %v3021 = vand.u32 %v239, 4294901760
    %v3022 = vsub.f32 %v239, %v3021
    %v3023 = vand.u32 %v3022, 4294901760
    %v3024 = vsub.f32 %v3022, %v3023
    %v3025 = vand.u32 %v3024, 4294901760
    %3026 = vmatpush.msra.mxu0 %v3025
    %v3027 = vand.u32 %v235, 4294901760
    %v3028 = vsub.f32 %v235, %v3027
    %v3029 = vand.u32 %v3028, 4294901760
    %v3030 = vsub.f32 %v3028, %v3029
    %v3031 = vand.u32 %v3030, 4294901760
    %3032 = vmatpush.msra.mxu0 %v3031
    %v3033 = vand.u32 %v231, 4294901760
    %v3034 = vsub.f32 %v231, %v3033
    %v3035 = vand.u32 %v3034, 4294901760
    %v3036 = vsub.f32 %v3034, %v3035
    %v3037 = vand.u32 %v3036, 4294901760
    %3038 = vmatpush.msra.mxu0 %v3037
    %v3039 = vand.u32 %v227, 4294901760
    %v3040 = vsub.f32 %v227, %v3039
    %v3041 = vand.u32 %v3040, 4294901760
    %v3042 = vsub.f32 %v3040, %v3041
    %v3043 = vand.u32 %v3042, 4294901760
    %3044 = vmatpush.msra.mxu0 %v3043
    %v3045 = vand.u32 %v223, 4294901760
    %v3046 = vsub.f32 %v223, %v3045
    %v3047 = vand.u32 %v3046, 4294901760
    %v3048 = vsub.f32 %v3046, %v3047
    %v3049 = vand.u32 %v3048, 4294901760
    %3050 = vmatpush.msra.mxu0 %v3049
    %v3051 = vand.u32 %v219, 4294901760
    %v3052 = vsub.f32 %v219, %v3051
    %v3053 = vand.u32 %v3052, 4294901760
    %v3054 = vsub.f32 %v3052, %v3053
    %v3055 = vand.u32 %v3054, 4294901760
    %3056 = vmatpush.msra.mxu0 %v3055
    %v3057 = vand.u32 %v215, 4294901760
    %v3058 = vsub.f32 %v215, %v3057
    %v3059 = vand.u32 %v3058, 4294901760
    %v3060 = vsub.f32 %v3058, %v3059
    %v3061 = vand.u32 %v3060, 4294901760
    %3062 = vmatpush.msra.mxu0 %v3061
    %v3063 = vand.u32 %v211, 4294901760
    %v3064 = vsub.f32 %v211, %v3063
    %v3065 = vand.u32 %v3064, 4294901760
    %v3066 = vsub.f32 %v3064, %v3065
    %v3067 = vand.u32 %v3066, 4294901760
    %3068 = vmatpush.msra.mxu0 %v3067
    %v3069 = vand.u32 %v207, 4294901760
    %v3070 = vsub.f32 %v207, %v3069
    %v3071 = vand.u32 %v3070, 4294901760
    %v3072 = vsub.f32 %v3070, %v3071
    %v3073 = vand.u32 %v3072, 4294901760
    %3074 = vmatpush.msra.mxu0 %v3073
    %v3075 = vand.u32 %v203, 4294901760
    %v3076 = vsub.f32 %v203, %v3075
    %v3077 = vand.u32 %v3076, 4294901760
    %v3078 = vsub.f32 %v3076, %v3077
    %v3079 = vand.u32 %v3078, 4294901760
    %3080 = vmatpush.msra.mxu0 %v3079
    %v3081 = vand.u32 %v199, 4294901760
    %v3082 = vsub.f32 %v199, %v3081
    %v3083 = vand.u32 %v3082, 4294901760
    %v3084 = vsub.f32 %v3082, %v3083
    %v3085 = vand.u32 %v3084, 4294901760
    %3086 = vmatpush.msra.mxu0 %v3085
    %v3087 = vand.u32 %v195, 4294901760
    %v3088 = vsub.f32 %v195, %v3087
    %v3089 = vand.u32 %v3088, 4294901760
    %v3090 = vsub.f32 %v3088, %v3089
    %v3091 = vand.u32 %v3090, 4294901760
    %3092 = vmatpush.msra.mxu0 %v3091
    %v3093 = vand.u32 %v191, 4294901760
    %v3094 = vsub.f32 %v191, %v3093
    %v3095 = vand.u32 %v3094, 4294901760
    %v3096 = vsub.f32 %v3094, %v3095
    %v3097 = vand.u32 %v3096, 4294901760
    %3098 = vmatpush.msra.mxu0 %v3097
    %v3099 = vand.u32 %v187, 4294901760
    %v3100 = vsub.f32 %v187, %v3099
    %v3101 = vand.u32 %v3100, 4294901760
    %v3102 = vsub.f32 %v3100, %v3101
    %v3103 = vand.u32 %v3102, 4294901760
    %3104 = vmatpush.msra.mxu0 %v3103
    %v3105 = vand.u32 %v183, 4294901760
    %v3106 = vsub.f32 %v183, %v3105
    %v3107 = vand.u32 %v3106, 4294901760
    %v3108 = vsub.f32 %v3106, %v3107
    %v3109 = vand.u32 %v3108, 4294901760
    %3110 = vmatpush.msra.mxu0 %v3109
    %v3111 = vand.u32 %v769, 4294901760
    %3112 = vmatmul.f32.gmra.mxu0 %v3111
    %v3113 = vpop.f32.mrf.mxu0
    %v3114 = vadd.f32 %v3013, %v3113
    %3115 = vdwg.mxu0
    %v3116 = vand.u32 %v243, 4294901760
    %v3117 = vsub.f32 %v243, %v3116
    %3118 = vmatpush.msra.mxu0 %v3117
    %v3119 = vand.u32 %v239, 4294901760
    %v3120 = vsub.f32 %v239, %v3119
    %3121 = vmatpush.msra.mxu0 %v3120
    %v3122 = vand.u32 %v235, 4294901760
    %v3123 = vsub.f32 %v235, %v3122
    %3124 = vmatpush.msra.mxu0 %v3123
    %v3125 = vand.u32 %v231, 4294901760
    %v3126 = vsub.f32 %v231, %v3125
    %3127 = vmatpush.msra.mxu0 %v3126
    %v3128 = vand.u32 %v227, 4294901760
    %v3129 = vsub.f32 %v227, %v3128
    %3130 = vmatpush.msra.mxu0 %v3129
    %v3131 = vand.u32 %v223, 4294901760
    %v3132 = vsub.f32 %v223, %v3131
    %3133 = vmatpush.msra.mxu0 %v3132
    %v3134 = vand.u32 %v219, 4294901760
    %v3135 = vsub.f32 %v219, %v3134
    %3136 = vmatpush.msra.mxu0 %v3135
    %v3137 = vand.u32 %v215, 4294901760
    %v3138 = vsub.f32 %v215, %v3137
    %3139 = vmatpush.msra.mxu0 %v3138
    %v3140 = vand.u32 %v211, 4294901760
    %v3141 = vsub.f32 %v211, %v3140
    %3142 = vmatpush.msra.mxu0 %v3141
    %v3143 = vand.u32 %v207, 4294901760
    %v3144 = vsub.f32 %v207, %v3143
    %3145 = vmatpush.msra.mxu0 %v3144
    %v3146 = vand.u32 %v203, 4294901760
    %v3147 = vsub.f32 %v203, %v3146
    %3148 = vmatpush.msra.mxu0 %v3147
    %v3149 = vand.u32 %v199, 4294901760
    %v3150 = vsub.f32 %v199, %v3149
    %3151 = vmatpush.msra.mxu0 %v3150
    %v3152 = vand.u32 %v195, 4294901760
    %v3153 = vsub.f32 %v195, %v3152
    %3154 = vmatpush.msra.mxu0 %v3153
    %v3155 = vand.u32 %v191, 4294901760
    %v3156 = vsub.f32 %v191, %v3155
    %3157 = vmatpush.msra.mxu0 %v3156
    %v3158 = vand.u32 %v187, 4294901760
    %v3159 = vsub.f32 %v187, %v3158
    %3160 = vmatpush.msra.mxu0 %v3159
    %v3161 = vand.u32 %v183, 4294901760
    %v3162 = vsub.f32 %v183, %v3161
    %3163 = vmatpush.msra.mxu0 %v3162
    %v3164 = vand.u32 %v769, 4294901760
    %v3165 = vsub.f32 %v769, %v3164
    %3166 = vmatmul.f32.gmra.mxu0 %v3165
    %v3167 = vpop.f32.mrf.mxu0
    %v3168 = vadd.f32 %v3114, %v3167
    %3169 = vdwg.mxu0
    %v3170 = vand.u32 %v243, 4294901760
    %3171 = vmatpush.msra.mxu0 %v3170
    %v3172 = vand.u32 %v239, 4294901760
    %3173 = vmatpush.msra.mxu0 %v3172
    %v3174 = vand.u32 %v235, 4294901760
    %3175 = vmatpush.msra.mxu0 %v3174
    %v3176 = vand.u32 %v231, 4294901760
    %3177 = vmatpush.msra.mxu0 %v3176
    %v3178 = vand.u32 %v227, 4294901760
    %3179 = vmatpush.msra.mxu0 %v3178
    %v3180 = vand.u32 %v223, 4294901760
    %3181 = vmatpush.msra.mxu0 %v3180
    %v3182 = vand.u32 %v219, 4294901760
    %3183 = vmatpush.msra.mxu0 %v3182
    %v3184 = vand.u32 %v215, 4294901760
    %3185 = vmatpush.msra.mxu0 %v3184
    %v3186 = vand.u32 %v211, 4294901760
    %3187 = vmatpush.msra.mxu0 %v3186
    %v3188 = vand.u32 %v207, 4294901760
    %3189 = vmatpush.msra.mxu0 %v3188
    %v3190 = vand.u32 %v203, 4294901760
    %3191 = vmatpush.msra.mxu0 %v3190
    %v3192 = vand.u32 %v199, 4294901760
    %3193 = vmatpush.msra.mxu0 %v3192
    %v3194 = vand.u32 %v195, 4294901760
    %3195 = vmatpush.msra.mxu0 %v3194
    %v3196 = vand.u32 %v191, 4294901760
    %3197 = vmatpush.msra.mxu0 %v3196
    %v3198 = vand.u32 %v187, 4294901760
    %3199 = vmatpush.msra.mxu0 %v3198
    %v3200 = vand.u32 %v183, 4294901760
    %3201 = vmatpush.msra.mxu0 %v3200
    %v3202 = vand.u32 %v769, 4294901760
    %v3203 = vsub.f32 %v769, %v3202
    %v3204 = vand.u32 %v3203, 4294901760
    %3205 = vmatmul.f32.gmra.mxu0 %v3204
    %v3206 = vpop.f32.mrf.mxu0
    %v3207 = vadd.f32 %v3168, %v3206
    %3208 = vdwg.mxu0
    %v3209 = vand.u32 %v243, 4294901760
    %v3210 = vsub.f32 %v243, %v3209
    %v3211 = vand.u32 %v3210, 4294901760
    %3212 = vmatpush.msra.mxu0 %v3211
    %v3213 = vand.u32 %v239, 4294901760
    %v3214 = vsub.f32 %v239, %v3213
    %v3215 = vand.u32 %v3214, 4294901760
    %3216 = vmatpush.msra.mxu0 %v3215
    %v3217 = vand.u32 %v235, 4294901760
    %v3218 = vsub.f32 %v235, %v3217
    %v3219 = vand.u32 %v3218, 4294901760
    %3220 = vmatpush.msra.mxu0 %v3219
    %v3221 = vand.u32 %v231, 4294901760
    %v3222 = vsub.f32 %v231, %v3221
    %v3223 = vand.u32 %v3222, 4294901760
    %3224 = vmatpush.msra.mxu0 %v3223
    %v3225 = vand.u32 %v227, 4294901760
    %v3226 = vsub.f32 %v227, %v3225
    %v3227 = vand.u32 %v3226, 4294901760
    %3228 = vmatpush.msra.mxu0 %v3227
    %v3229 = vand.u32 %v223, 4294901760
    %v3230 = vsub.f32 %v223, %v3229
    %v3231 = vand.u32 %v3230, 4294901760
    %3232 = vmatpush.msra.mxu0 %v3231
    %v3233 = vand.u32 %v219, 4294901760
    %v3234 = vsub.f32 %v219, %v3233
    %v3235 = vand.u32 %v3234, 4294901760
    %3236 = vmatpush.msra.mxu0 %v3235
    %v3237 = vand.u32 %v215, 4294901760
    %v3238 = vsub.f32 %v215, %v3237
    %v3239 = vand.u32 %v3238, 4294901760
    %3240 = vmatpush.msra.mxu0 %v3239
    %v3241 = vand.u32 %v211, 4294901760
    %v3242 = vsub.f32 %v211, %v3241
    %v3243 = vand.u32 %v3242, 4294901760
    %3244 = vmatpush.msra.mxu0 %v3243
    %v3245 = vand.u32 %v207, 4294901760
    %v3246 = vsub.f32 %v207, %v3245
    %v3247 = vand.u32 %v3246, 4294901760
    %3248 = vmatpush.msra.mxu0 %v3247
    %v3249 = vand.u32 %v203, 4294901760
    %v3250 = vsub.f32 %v203, %v3249
    %v3251 = vand.u32 %v3250, 4294901760
    %3252 = vmatpush.msra.mxu0 %v3251
    %v3253 = vand.u32 %v199, 4294901760
    %v3254 = vsub.f32 %v199, %v3253
    %v3255 = vand.u32 %v3254, 4294901760
    %3256 = vmatpush.msra.mxu0 %v3255
    %v3257 = vand.u32 %v195, 4294901760
    %v3258 = vsub.f32 %v195, %v3257
    %v3259 = vand.u32 %v3258, 4294901760
    %3260 = vmatpush.msra.mxu0 %v3259
    %v3261 = vand.u32 %v191, 4294901760
    %v3262 = vsub.f32 %v191, %v3261
    %v3263 = vand.u32 %v3262, 4294901760
    %3264 = vmatpush.msra.mxu0 %v3263
    %v3265 = vand.u32 %v187, 4294901760
    %v3266 = vsub.f32 %v187, %v3265
    %v3267 = vand.u32 %v3266, 4294901760
    %3268 = vmatpush.msra.mxu0 %v3267
    %v3269 = vand.u32 %v183, 4294901760
    %v3270 = vsub.f32 %v183, %v3269
    %v3271 = vand.u32 %v3270, 4294901760
    %3272 = vmatpush.msra.mxu0 %v3271
    %v3273 = vand.u32 %v769, 4294901760
    %3274 = vmatmul.f32.gmra.mxu0 %v3273
    %v3275 = vpop.f32.mrf.mxu0
    %v3276 = vadd.f32 %v3207, %v3275
    %3277 = vdwg.mxu0
    %v3278 = vand.u32 %v243, 4294901760
    %3279 = vmatpush.msra.mxu0 %v3278
    %v3280 = vand.u32 %v239, 4294901760
    %3281 = vmatpush.msra.mxu0 %v3280
    %v3282 = vand.u32 %v235, 4294901760
    %3283 = vmatpush.msra.mxu0 %v3282
    %v3284 = vand.u32 %v231, 4294901760
    %3285 = vmatpush.msra.mxu0 %v3284
    %v3286 = vand.u32 %v227, 4294901760
    %3287 = vmatpush.msra.mxu0 %v3286
    %v3288 = vand.u32 %v223, 4294901760
    %3289 = vmatpush.msra.mxu0 %v3288
    %v3290 = vand.u32 %v219, 4294901760
    %3291 = vmatpush.msra.mxu0 %v3290
    %v3292 = vand.u32 %v215, 4294901760
    %3293 = vmatpush.msra.mxu0 %v3292
    %v3294 = vand.u32 %v211, 4294901760
    %3295 = vmatpush.msra.mxu0 %v3294
    %v3296 = vand.u32 %v207, 4294901760
    %3297 = vmatpush.msra.mxu0 %v3296
    %v3298 = vand.u32 %v203, 4294901760
    %3299 = vmatpush.msra.mxu0 %v3298
    %v3300 = vand.u32 %v199, 4294901760
    %3301 = vmatpush.msra.mxu0 %v3300
    %v3302 = vand.u32 %v195, 4294901760
    %3303 = vmatpush.msra.mxu0 %v3302
    %v3304 = vand.u32 %v191, 4294901760
    %3305 = vmatpush.msra.mxu0 %v3304
    %v3306 = vand.u32 %v187, 4294901760
    %3307 = vmatpush.msra.mxu0 %v3306
    %v3308 = vand.u32 %v183, 4294901760
    %3309 = vmatpush.msra.mxu0 %v3308
    %v3310 = vand.u32 %v769, 4294901760
    %3311 = vmatmul.f32.gmra.mxu0 %v3310
    %v3312 = vpop.f32.mrf.mxu0
    %v3313 = vadd.f32 %v3276, %v3312
    %3314 = vdwg.mxu0
    %v3315 = vand.u32 %v307, 4294901760
    %3316 = vmatpush.msra.mxu0 %v3315
    %v3317 = vand.u32 %v303, 4294901760
    %3318 = vmatpush.msra.mxu0 %v3317
    %v3319 = vand.u32 %v299, 4294901760
    %3320 = vmatpush.msra.mxu0 %v3319
    %v3321 = vand.u32 %v295, 4294901760
    %3322 = vmatpush.msra.mxu0 %v3321
    %v3323 = vand.u32 %v291, 4294901760
    %3324 = vmatpush.msra.mxu0 %v3323
    %v3325 = vand.u32 %v287, 4294901760
    %3326 = vmatpush.msra.mxu0 %v3325
    %v3327 = vand.u32 %v283, 4294901760
    %3328 = vmatpush.msra.mxu0 %v3327
    %v3329 = vand.u32 %v279, 4294901760
    %3330 = vmatpush.msra.mxu0 %v3329
    %v3331 = vand.u32 %v275, 4294901760
    %3332 = vmatpush.msra.mxu0 %v3331
    %v3333 = vand.u32 %v271, 4294901760
    %3334 = vmatpush.msra.mxu0 %v3333
    %v3335 = vand.u32 %v267, 4294901760
    %3336 = vmatpush.msra.mxu0 %v3335
    %v3337 = vand.u32 %v263, 4294901760
    %3338 = vmatpush.msra.mxu0 %v3337
    %v3339 = vand.u32 %v259, 4294901760
    %3340 = vmatpush.msra.mxu0 %v3339
    %v3341 = vand.u32 %v255, 4294901760
    %3342 = vmatpush.msra.mxu0 %v3341
    %v3343 = vand.u32 %v251, 4294901760
    %3344 = vmatpush.msra.mxu0 %v3343
    %v3345 = vand.u32 %v247, 4294901760
    %3346 = vmatpush.msra.mxu0 %v3345
    %v3347 = vand.u32 %v920, 4294901760
    %v3348 = vsub.f32 %v920, %v3347
    %v3349 = vand.u32 %v3348, 4294901760
    %v3350 = vsub.f32 %v3348, %v3349
    %v3351 = vand.u32 %v3350, 4294901760
    %3352 = vmatmul.f32.gmra.mxu0 %v3351
    %v3353 = vpop.f32.mrf.mxu0
    %v3354 = vadd.f32 %v3313, %v3353
    %3355 = vdwg.mxu0
    %v3356 = vand.u32 %v307, 4294901760
    %v3357 = vsub.f32 %v307, %v3356
    %v3358 = vand.u32 %v3357, 4294901760
    %v3359 = vsub.f32 %v3357, %v3358
    %v3360 = vand.u32 %v3359, 4294901760
    %3361 = vmatpush.msra.mxu0 %v3360
    %v3362 = vand.u32 %v303, 4294901760
    %v3363 = vsub.f32 %v303, %v3362
    %v3364 = vand.u32 %v3363, 4294901760
    %v3365 = vsub.f32 %v3363, %v3364
    %v3366 = vand.u32 %v3365, 4294901760
    %3367 = vmatpush.msra.mxu0 %v3366
    %v3368 = vand.u32 %v299, 4294901760
    %v3369 = vsub.f32 %v299, %v3368
    %v3370 = vand.u32 %v3369, 4294901760
    %v3371 = vsub.f32 %v3369, %v3370
    %v3372 = vand.u32 %v3371, 4294901760
    %3373 = vmatpush.msra.mxu0 %v3372
    %v3374 = vand.u32 %v295, 4294901760
    %v3375 = vsub.f32 %v295, %v3374
    %v3376 = vand.u32 %v3375, 4294901760
    %v3377 = vsub.f32 %v3375, %v3376
    %v3378 = vand.u32 %v3377, 4294901760
    %3379 = vmatpush.msra.mxu0 %v3378
    %v3380 = vand.u32 %v291, 4294901760
    %v3381 = vsub.f32 %v291, %v3380
    %v3382 = vand.u32 %v3381, 4294901760
    %v3383 = vsub.f32 %v3381, %v3382
    %v3384 = vand.u32 %v3383, 4294901760
    %3385 = vmatpush.msra.mxu0 %v3384
    %v3386 = vand.u32 %v287, 4294901760
    %v3387 = vsub.f32 %v287, %v3386
    %v3388 = vand.u32 %v3387, 4294901760
    %v3389 = vsub.f32 %v3387, %v3388
    %v3390 = vand.u32 %v3389, 4294901760
    %3391 = vmatpush.msra.mxu0 %v3390
    %v3392 = vand.u32 %v283, 4294901760
    %v3393 = vsub.f32 %v283, %v3392
    %v3394 = vand.u32 %v3393, 4294901760
    %v3395 = vsub.f32 %v3393, %v3394
    %v3396 = vand.u32 %v3395, 4294901760
    %3397 = vmatpush.msra.mxu0 %v3396
    %v3398 = vand.u32 %v279, 4294901760
    %v3399 = vsub.f32 %v279, %v3398
    %v3400 = vand.u32 %v3399, 4294901760
    %v3401 = vsub.f32 %v3399, %v3400
    %v3402 = vand.u32 %v3401, 4294901760
    %3403 = vmatpush.msra.mxu0 %v3402
    %v3404 = vand.u32 %v275, 4294901760
    %v3405 = vsub.f32 %v275, %v3404
    %v3406 = vand.u32 %v3405, 4294901760
    %v3407 = vsub.f32 %v3405, %v3406
    %v3408 = vand.u32 %v3407, 4294901760
    %3409 = vmatpush.msra.mxu0 %v3408
    %v3410 = vand.u32 %v271, 4294901760
    %v3411 = vsub.f32 %v271, %v3410
    %v3412 = vand.u32 %v3411, 4294901760
    %v3413 = vsub.f32 %v3411, %v3412
    %v3414 = vand.u32 %v3413, 4294901760
    %3415 = vmatpush.msra.mxu0 %v3414
    %v3416 = vand.u32 %v267, 4294901760
    %v3417 = vsub.f32 %v267, %v3416
    %v3418 = vand.u32 %v3417, 4294901760
    %v3419 = vsub.f32 %v3417, %v3418
    %v3420 = vand.u32 %v3419, 4294901760
    %3421 = vmatpush.msra.mxu0 %v3420
    %v3422 = vand.u32 %v263, 4294901760
    %v3423 = vsub.f32 %v263, %v3422
    %v3424 = vand.u32 %v3423, 4294901760
    %v3425 = vsub.f32 %v3423, %v3424
    %v3426 = vand.u32 %v3425, 4294901760
    %3427 = vmatpush.msra.mxu0 %v3426
    %v3428 = vand.u32 %v259, 4294901760
    %v3429 = vsub.f32 %v259, %v3428
    %v3430 = vand.u32 %v3429, 4294901760
    %v3431 = vsub.f32 %v3429, %v3430
    %v3432 = vand.u32 %v3431, 4294901760
    %3433 = vmatpush.msra.mxu0 %v3432
    %v3434 = vand.u32 %v255, 4294901760
    %v3435 = vsub.f32 %v255, %v3434
    %v3436 = vand.u32 %v3435, 4294901760
    %v3437 = vsub.f32 %v3435, %v3436
    %v3438 = vand.u32 %v3437, 4294901760
    %3439 = vmatpush.msra.mxu0 %v3438
    %v3440 = vand.u32 %v251, 4294901760
    %v3441 = vsub.f32 %v251, %v3440
    %v3442 = vand.u32 %v3441, 4294901760
    %v3443 = vsub.f32 %v3441, %v3442
    %v3444 = vand.u32 %v3443, 4294901760
    %3445 = vmatpush.msra.mxu0 %v3444
    %v3446 = vand.u32 %v247, 4294901760
    %v3447 = vsub.f32 %v247, %v3446
    %v3448 = vand.u32 %v3447, 4294901760
    %v3449 = vsub.f32 %v3447, %v3448
    %v3450 = vand.u32 %v3449, 4294901760
    %3451 = vmatpush.msra.mxu0 %v3450
    %v3452 = vand.u32 %v920, 4294901760
    %3453 = vmatmul.f32.gmra.mxu0 %v3452
    %v3454 = vpop.f32.mrf.mxu0
    %v3455 = vadd.f32 %v3354, %v3454
    %3456 = vdwg.mxu0
    %v3457 = vand.u32 %v307, 4294901760
    %v3458 = vsub.f32 %v307, %v3457
    %3459 = vmatpush.msra.mxu0 %v3458
    %v3460 = vand.u32 %v303, 4294901760
    %v3461 = vsub.f32 %v303, %v3460
    %3462 = vmatpush.msra.mxu0 %v3461
    %v3463 = vand.u32 %v299, 4294901760
    %v3464 = vsub.f32 %v299, %v3463
    %3465 = vmatpush.msra.mxu0 %v3464
    %v3466 = vand.u32 %v295, 4294901760
    %v3467 = vsub.f32 %v295, %v3466
    %3468 = vmatpush.msra.mxu0 %v3467
    %v3469 = vand.u32 %v291, 4294901760
    %v3470 = vsub.f32 %v291, %v3469
    %3471 = vmatpush.msra.mxu0 %v3470
    %v3472 = vand.u32 %v287, 4294901760
    %v3473 = vsub.f32 %v287, %v3472
    %3474 = vmatpush.msra.mxu0 %v3473
    %v3475 = vand.u32 %v283, 4294901760
    %v3476 = vsub.f32 %v283, %v3475
    %3477 = vmatpush.msra.mxu0 %v3476
    %v3478 = vand.u32 %v279, 4294901760
    %v3479 = vsub.f32 %v279, %v3478
    %3480 = vmatpush.msra.mxu0 %v3479
    %v3481 = vand.u32 %v275, 4294901760
    %v3482 = vsub.f32 %v275, %v3481
    %3483 = vmatpush.msra.mxu0 %v3482
    %v3484 = vand.u32 %v271, 4294901760
    %v3485 = vsub.f32 %v271, %v3484
    %3486 = vmatpush.msra.mxu0 %v3485
    %v3487 = vand.u32 %v267, 4294901760
    %v3488 = vsub.f32 %v267, %v3487
    %3489 = vmatpush.msra.mxu0 %v3488
    %v3490 = vand.u32 %v263, 4294901760
    %v3491 = vsub.f32 %v263, %v3490
    %3492 = vmatpush.msra.mxu0 %v3491
    %v3493 = vand.u32 %v259, 4294901760
    %v3494 = vsub.f32 %v259, %v3493
    %3495 = vmatpush.msra.mxu0 %v3494
    %v3496 = vand.u32 %v255, 4294901760
    %v3497 = vsub.f32 %v255, %v3496
    %3498 = vmatpush.msra.mxu0 %v3497
    %v3499 = vand.u32 %v251, 4294901760
    %v3500 = vsub.f32 %v251, %v3499
    %3501 = vmatpush.msra.mxu0 %v3500
    %v3502 = vand.u32 %v247, 4294901760
    %v3503 = vsub.f32 %v247, %v3502
    %3504 = vmatpush.msra.mxu0 %v3503
    %v3505 = vand.u32 %v920, 4294901760
    %v3506 = vsub.f32 %v920, %v3505
    %3507 = vmatmul.f32.gmra.mxu0 %v3506
    %v3508 = vpop.f32.mrf.mxu0
    %v3509 = vadd.f32 %v3455, %v3508
    %3510 = vdwg.mxu0
    %v3511 = vand.u32 %v307, 4294901760
    %3512 = vmatpush.msra.mxu0 %v3511
    %v3513 = vand.u32 %v303, 4294901760
    %3514 = vmatpush.msra.mxu0 %v3513
    %v3515 = vand.u32 %v299, 4294901760
    %3516 = vmatpush.msra.mxu0 %v3515
    %v3517 = vand.u32 %v295, 4294901760
    %3518 = vmatpush.msra.mxu0 %v3517
    %v3519 = vand.u32 %v291, 4294901760
    %3520 = vmatpush.msra.mxu0 %v3519
    %v3521 = vand.u32 %v287, 4294901760
    %3522 = vmatpush.msra.mxu0 %v3521
    %v3523 = vand.u32 %v283, 4294901760
    %3524 = vmatpush.msra.mxu0 %v3523
    %v3525 = vand.u32 %v279, 4294901760
    %3526 = vmatpush.msra.mxu0 %v3525
    %v3527 = vand.u32 %v275, 4294901760
    %3528 = vmatpush.msra.mxu0 %v3527
    %v3529 = vand.u32 %v271, 4294901760
    %3530 = vmatpush.msra.mxu0 %v3529
    %v3531 = vand.u32 %v267, 4294901760
    %3532 = vmatpush.msra.mxu0 %v3531
    %v3533 = vand.u32 %v263, 4294901760
    %3534 = vmatpush.msra.mxu0 %v3533
    %v3535 = vand.u32 %v259, 4294901760
    %3536 = vmatpush.msra.mxu0 %v3535
    %v3537 = vand.u32 %v255, 4294901760
    %3538 = vmatpush.msra.mxu0 %v3537
    %v3539 = vand.u32 %v251, 4294901760
    %3540 = vmatpush.msra.mxu0 %v3539
    %v3541 = vand.u32 %v247, 4294901760
    %3542 = vmatpush.msra.mxu0 %v3541
    %v3543 = vand.u32 %v920, 4294901760
    %v3544 = vsub.f32 %v920, %v3543
    %v3545 = vand.u32 %v3544, 4294901760
    %3546 = vmatmul.f32.gmra.mxu0 %v3545
    %v3547 = vpop.f32.mrf.mxu0
    %v3548 = vadd.f32 %v3509, %v3547
    %3549 = vdwg.mxu0
    %v3550 = vand.u32 %v307, 4294901760
    %v3551 = vsub.f32 %v307, %v3550
    %v3552 = vand.u32 %v3551, 4294901760
    %3553 = vmatpush.msra.mxu0 %v3552
    %v3554 = vand.u32 %v303, 4294901760
    %v3555 = vsub.f32 %v303, %v3554
    %v3556 = vand.u32 %v3555, 4294901760
    %3557 = vmatpush.msra.mxu0 %v3556
    %v3558 = vand.u32 %v299, 4294901760
    %v3559 = vsub.f32 %v299, %v3558
    %v3560 = vand.u32 %v3559, 4294901760
    %3561 = vmatpush.msra.mxu0 %v3560
    %v3562 = vand.u32 %v295, 4294901760
    %v3563 = vsub.f32 %v295, %v3562
    %v3564 = vand.u32 %v3563, 4294901760
    %3565 = vmatpush.msra.mxu0 %v3564
    %v3566 = vand.u32 %v291, 4294901760
    %v3567 = vsub.f32 %v291, %v3566
    %v3568 = vand.u32 %v3567, 4294901760
    %3569 = vmatpush.msra.mxu0 %v3568
    %v3570 = vand.u32 %v287, 4294901760
    %v3571 = vsub.f32 %v287, %v3570
    %v3572 = vand.u32 %v3571, 4294901760
    %3573 = vmatpush.msra.mxu0 %v3572
    %v3574 = vand.u32 %v283, 4294901760
    %v3575 = vsub.f32 %v283, %v3574
    %v3576 = vand.u32 %v3575, 4294901760
    %3577 = vmatpush.msra.mxu0 %v3576
    %v3578 = vand.u32 %v279, 4294901760
    %v3579 = vsub.f32 %v279, %v3578
    %v3580 = vand.u32 %v3579, 4294901760
    %3581 = vmatpush.msra.mxu0 %v3580
    %v3582 = vand.u32 %v275, 4294901760
    %v3583 = vsub.f32 %v275, %v3582
    %v3584 = vand.u32 %v3583, 4294901760
    %3585 = vmatpush.msra.mxu0 %v3584
    %v3586 = vand.u32 %v271, 4294901760
    %v3587 = vsub.f32 %v271, %v3586
    %v3588 = vand.u32 %v3587, 4294901760
    %3589 = vmatpush.msra.mxu0 %v3588
    %v3590 = vand.u32 %v267, 4294901760
    %v3591 = vsub.f32 %v267, %v3590
    %v3592 = vand.u32 %v3591, 4294901760
    %3593 = vmatpush.msra.mxu0 %v3592
    %v3594 = vand.u32 %v263, 4294901760
    %v3595 = vsub.f32 %v263, %v3594
    %v3596 = vand.u32 %v3595, 4294901760
    %3597 = vmatpush.msra.mxu0 %v3596
    %v3598 = vand.u32 %v259, 4294901760
    %v3599 = vsub.f32 %v259, %v3598
    %v3600 = vand.u32 %v3599, 4294901760
    %3601 = vmatpush.msra.mxu0 %v3600
    %v3602 = vand.u32 %v255, 4294901760
    %v3603 = vsub.f32 %v255, %v3602
    %v3604 = vand.u32 %v3603, 4294901760
    %3605 = vmatpush.msra.mxu0 %v3604
    %v3606 = vand.u32 %v251, 4294901760
    %v3607 = vsub.f32 %v251, %v3606
    %v3608 = vand.u32 %v3607, 4294901760
    %3609 = vmatpush.msra.mxu0 %v3608
    %v3610 = vand.u32 %v247, 4294901760
    %v3611 = vsub.f32 %v247, %v3610
    %v3612 = vand.u32 %v3611, 4294901760
    %3613 = vmatpush.msra.mxu0 %v3612
    %v3614 = vand.u32 %v920, 4294901760
    %3615 = vmatmul.f32.gmra.mxu0 %v3614
    %v3616 = vpop.f32.mrf.mxu0
    %v3617 = vadd.f32 %v3548, %v3616
    %3618 = vdwg.mxu0
    %v3619 = vand.u32 %v307, 4294901760
    %3620 = vmatpush.msra.mxu0 %v3619
    %v3621 = vand.u32 %v303, 4294901760
    %3622 = vmatpush.msra.mxu0 %v3621
    %v3623 = vand.u32 %v299, 4294901760
    %3624 = vmatpush.msra.mxu0 %v3623
    %v3625 = vand.u32 %v295, 4294901760
    %3626 = vmatpush.msra.mxu0 %v3625
    %v3627 = vand.u32 %v291, 4294901760
    %3628 = vmatpush.msra.mxu0 %v3627
    %v3629 = vand.u32 %v287, 4294901760
    %3630 = vmatpush.msra.mxu0 %v3629
    %v3631 = vand.u32 %v283, 4294901760
    %3632 = vmatpush.msra.mxu0 %v3631
    %v3633 = vand.u32 %v279, 4294901760
    %3634 = vmatpush.msra.mxu0 %v3633
    %v3635 = vand.u32 %v275, 4294901760
    %3636 = vmatpush.msra.mxu0 %v3635
    %v3637 = vand.u32 %v271, 4294901760
    %3638 = vmatpush.msra.mxu0 %v3637
    %v3639 = vand.u32 %v267, 4294901760
    %3640 = vmatpush.msra.mxu0 %v3639
    %v3641 = vand.u32 %v263, 4294901760
    %3642 = vmatpush.msra.mxu0 %v3641
    %v3643 = vand.u32 %v259, 4294901760
    %3644 = vmatpush.msra.mxu0 %v3643
    %v3645 = vand.u32 %v255, 4294901760
    %3646 = vmatpush.msra.mxu0 %v3645
    %v3647 = vand.u32 %v251, 4294901760
    %3648 = vmatpush.msra.mxu0 %v3647
    %v3649 = vand.u32 %v247, 4294901760
    %3650 = vmatpush.msra.mxu0 %v3649
    %v3651 = vand.u32 %v920, 4294901760
    %3652 = vmatmul.f32.gmra.mxu0 %v3651
    %v3653 = vpop.f32.mrf.mxu0
    %v3654 = vadd.f32 %v3617, %v3653
    %3655 = vdwg.mxu0
    %v3656 = vand.u32 %v116, 4294901760
    %3657 = vmatpush.msra.mxu0 %v3656
    %v3658 = vand.u32 %v112, 4294901760
    %3659 = vmatpush.msra.mxu0 %v3658
    %v3660 = vand.u32 %v108, 4294901760
    %3661 = vmatpush.msra.mxu0 %v3660
    %v3662 = vand.u32 %v104, 4294901760
    %3663 = vmatpush.msra.mxu0 %v3662
    %v3664 = vand.u32 %v100, 4294901760
    %3665 = vmatpush.msra.mxu0 %v3664
    %v3666 = vand.u32 %v96, 4294901760
    %3667 = vmatpush.msra.mxu0 %v3666
    %v3668 = vand.u32 %v92, 4294901760
    %3669 = vmatpush.msra.mxu0 %v3668
    %v3670 = vand.u32 %v88, 4294901760
    %3671 = vmatpush.msra.mxu0 %v3670
    %v3672 = vand.u32 %v84, 4294901760
    %3673 = vmatpush.msra.mxu0 %v3672
    %v3674 = vand.u32 %v80, 4294901760
    %3675 = vmatpush.msra.mxu0 %v3674
    %v3676 = vand.u32 %v76, 4294901760
    %3677 = vmatpush.msra.mxu0 %v3676
    %v3678 = vand.u32 %v72, 4294901760
    %3679 = vmatpush.msra.mxu0 %v3678
    %v3680 = vand.u32 %v68, 4294901760
    %3681 = vmatpush.msra.mxu0 %v3680
    %v3682 = vand.u32 %v64, 4294901760
    %3683 = vmatpush.msra.mxu0 %v3682
    %v3684 = vand.u32 %v60, 4294901760
    %3685 = vmatpush.msra.mxu0 %v3684
    %v3686 = vand.u32 %v56, 4294901760
    %3687 = vmatpush.msra.mxu0 %v3686
    %v3688 = vand.u32 %v467, 4294901760
    %v3689 = vsub.f32 %v467, %v3688
    %v3690 = vand.u32 %v3689, 4294901760
    %v3691 = vsub.f32 %v3689, %v3690
    %v3692 = vand.u32 %v3691, 4294901760
    %3693 = vmatmul.f32.gmra.mxu0 %v3692
    %v3694 = vpop.f32.mrf.mxu0
    %v3695 = vadd.f32 %v926, %v3694
    %3696 = vdwg.mxu0
    %v3697 = vand.u32 %v116, 4294901760
    %v3698 = vsub.f32 %v116, %v3697
    %v3699 = vand.u32 %v3698, 4294901760
    %v3700 = vsub.f32 %v3698, %v3699
    %v3701 = vand.u32 %v3700, 4294901760
    %3702 = vmatpush.msra.mxu0 %v3701
    %v3703 = vand.u32 %v112, 4294901760
    %v3704 = vsub.f32 %v112, %v3703
    %v3705 = vand.u32 %v3704, 4294901760
    %v3706 = vsub.f32 %v3704, %v3705
    %v3707 = vand.u32 %v3706, 4294901760
    %3708 = vmatpush.msra.mxu0 %v3707
    %v3709 = vand.u32 %v108, 4294901760
    %v3710 = vsub.f32 %v108, %v3709
    %v3711 = vand.u32 %v3710, 4294901760
    %v3712 = vsub.f32 %v3710, %v3711
    %v3713 = vand.u32 %v3712, 4294901760
    %3714 = vmatpush.msra.mxu0 %v3713
    %v3715 = vand.u32 %v104, 4294901760
    %v3716 = vsub.f32 %v104, %v3715
    %v3717 = vand.u32 %v3716, 4294901760
    %v3718 = vsub.f32 %v3716, %v3717
    %v3719 = vand.u32 %v3718, 4294901760
    %3720 = vmatpush.msra.mxu0 %v3719
    %v3721 = vand.u32 %v100, 4294901760
    %v3722 = vsub.f32 %v100, %v3721
    %v3723 = vand.u32 %v3722, 4294901760
    %v3724 = vsub.f32 %v3722, %v3723
    %v3725 = vand.u32 %v3724, 4294901760
    %3726 = vmatpush.msra.mxu0 %v3725
    %v3727 = vand.u32 %v96, 4294901760
    %v3728 = vsub.f32 %v96, %v3727
    %v3729 = vand.u32 %v3728, 4294901760
    %v3730 = vsub.f32 %v3728, %v3729
    %v3731 = vand.u32 %v3730, 4294901760
    %3732 = vmatpush.msra.mxu0 %v3731
    %v3733 = vand.u32 %v92, 4294901760
    %v3734 = vsub.f32 %v92, %v3733
    %v3735 = vand.u32 %v3734, 4294901760
    %v3736 = vsub.f32 %v3734, %v3735
    %v3737 = vand.u32 %v3736, 4294901760
    %3738 = vmatpush.msra.mxu0 %v3737
    %v3739 = vand.u32 %v88, 4294901760
    %v3740 = vsub.f32 %v88, %v3739
    %v3741 = vand.u32 %v3740, 4294901760
    %v3742 = vsub.f32 %v3740, %v3741
    %v3743 = vand.u32 %v3742, 4294901760
    %3744 = vmatpush.msra.mxu0 %v3743
    %v3745 = vand.u32 %v84, 4294901760
    %v3746 = vsub.f32 %v84, %v3745
    %v3747 = vand.u32 %v3746, 4294901760
    %v3748 = vsub.f32 %v3746, %v3747
    %v3749 = vand.u32 %v3748, 4294901760
    %3750 = vmatpush.msra.mxu0 %v3749
    %v3751 = vand.u32 %v80, 4294901760
    %v3752 = vsub.f32 %v80, %v3751
    %v3753 = vand.u32 %v3752, 4294901760
    %v3754 = vsub.f32 %v3752, %v3753
    %v3755 = vand.u32 %v3754, 4294901760
    %3756 = vmatpush.msra.mxu0 %v3755
    %v3757 = vand.u32 %v76, 4294901760
    %v3758 = vsub.f32 %v76, %v3757
    %v3759 = vand.u32 %v3758, 4294901760
    %v3760 = vsub.f32 %v3758, %v3759
    %v3761 = vand.u32 %v3760, 4294901760
    %3762 = vmatpush.msra.mxu0 %v3761
    %v3763 = vand.u32 %v72, 4294901760
    %v3764 = vsub.f32 %v72, %v3763
    %v3765 = vand.u32 %v3764, 4294901760
    %v3766 = vsub.f32 %v3764, %v3765
    %v3767 = vand.u32 %v3766, 4294901760
    %3768 = vmatpush.msra.mxu0 %v3767
    %v3769 = vand.u32 %v68, 4294901760
    %v3770 = vsub.f32 %v68, %v3769
    %v3771 = vand.u32 %v3770, 4294901760
    %v3772 = vsub.f32 %v3770, %v3771
    %v3773 = vand.u32 %v3772, 4294901760
    %3774 = vmatpush.msra.mxu0 %v3773
    %v3775 = vand.u32 %v64, 4294901760
    %v3776 = vsub.f32 %v64, %v3775
    %v3777 = vand.u32 %v3776, 4294901760
    %v3778 = vsub.f32 %v3776, %v3777
    %v3779 = vand.u32 %v3778, 4294901760
    %3780 = vmatpush.msra.mxu0 %v3779
    %v3781 = vand.u32 %v60, 4294901760
    %v3782 = vsub.f32 %v60, %v3781
    %v3783 = vand.u32 %v3782, 4294901760
    %v3784 = vsub.f32 %v3782, %v3783
    %v3785 = vand.u32 %v3784, 4294901760
    %3786 = vmatpush.msra.mxu0 %v3785
    %v3787 = vand.u32 %v56, 4294901760
    %v3788 = vsub.f32 %v56, %v3787
    %v3789 = vand.u32 %v3788, 4294901760
    %v3790 = vsub.f32 %v3788, %v3789
    %v3791 = vand.u32 %v3790, 4294901760
    %3792 = vmatpush.msra.mxu0 %v3791
    %v3793 = vand.u32 %v467, 4294901760
    %3794 = vmatmul.f32.gmra.mxu0 %v3793
    %v3795 = vpop.f32.mrf.mxu0
    %v3796 = vadd.f32 %v3695, %v3795
    %3797 = vdwg.mxu0
    %v3798 = vand.u32 %v116, 4294901760
    %v3799 = vsub.f32 %v116, %v3798
    %3800 = vmatpush.msra.mxu0 %v3799
    %v3801 = vand.u32 %v112, 4294901760
    %v3802 = vsub.f32 %v112, %v3801
    %3803 = vmatpush.msra.mxu0 %v3802
    %v3804 = vand.u32 %v108, 4294901760
    %v3805 = vsub.f32 %v108, %v3804
    %3806 = vmatpush.msra.mxu0 %v3805
    %v3807 = vand.u32 %v104, 4294901760
    %v3808 = vsub.f32 %v104, %v3807
    %3809 = vmatpush.msra.mxu0 %v3808
    %v3810 = vand.u32 %v100, 4294901760
    %v3811 = vsub.f32 %v100, %v3810
    %3812 = vmatpush.msra.mxu0 %v3811
    %v3813 = vand.u32 %v96, 4294901760
    %v3814 = vsub.f32 %v96, %v3813
    %3815 = vmatpush.msra.mxu0 %v3814
    %v3816 = vand.u32 %v92, 4294901760
    %v3817 = vsub.f32 %v92, %v3816
    %3818 = vmatpush.msra.mxu0 %v3817
    %v3819 = vand.u32 %v88, 4294901760
    %v3820 = vsub.f32 %v88, %v3819
    %3821 = vmatpush.msra.mxu0 %v3820
    %v3822 = vand.u32 %v84, 4294901760
    %v3823 = vsub.f32 %v84, %v3822
    %3824 = vmatpush.msra.mxu0 %v3823
    %v3825 = vand.u32 %v80, 4294901760
    %v3826 = vsub.f32 %v80, %v3825
    %3827 = vmatpush.msra.mxu0 %v3826
    %v3828 = vand.u32 %v76, 4294901760
    %v3829 = vsub.f32 %v76, %v3828
    %3830 = vmatpush.msra.mxu0 %v3829
    %v3831 = vand.u32 %v72, 4294901760
    %v3832 = vsub.f32 %v72, %v3831
    %3833 = vmatpush.msra.mxu0 %v3832
    %v3834 = vand.u32 %v68, 4294901760
    %v3835 = vsub.f32 %v68, %v3834
    %3836 = vmatpush.msra.mxu0 %v3835
    %v3837 = vand.u32 %v64, 4294901760
    %v3838 = vsub.f32 %v64, %v3837
    %3839 = vmatpush.msra.mxu0 %v3838
    %v3840 = vand.u32 %v60, 4294901760
    %v3841 = vsub.f32 %v60, %v3840
    %3842 = vmatpush.msra.mxu0 %v3841
    %v3843 = vand.u32 %v56, 4294901760
    %v3844 = vsub.f32 %v56, %v3843
    %3845 = vmatpush.msra.mxu0 %v3844
    %v3846 = vand.u32 %v467, 4294901760
    %v3847 = vsub.f32 %v467, %v3846
    %3848 = vmatmul.f32.gmra.mxu0 %v3847
    %v3849 = vpop.f32.mrf.mxu0
    %v3850 = vadd.f32 %v3796, %v3849
    %3851 = vdwg.mxu0
    %v3852 = vand.u32 %v116, 4294901760
    %3853 = vmatpush.msra.mxu0 %v3852
    %v3854 = vand.u32 %v112, 4294901760
    %3855 = vmatpush.msra.mxu0 %v3854
    %v3856 = vand.u32 %v108, 4294901760
    %3857 = vmatpush.msra.mxu0 %v3856
    %v3858 = vand.u32 %v104, 4294901760
    %3859 = vmatpush.msra.mxu0 %v3858
    %v3860 = vand.u32 %v100, 4294901760
    %3861 = vmatpush.msra.mxu0 %v3860
    %v3862 = vand.u32 %v96, 4294901760
    %3863 = vmatpush.msra.mxu0 %v3862
    %v3864 = vand.u32 %v92, 4294901760
    %3865 = vmatpush.msra.mxu0 %v3864
    %v3866 = vand.u32 %v88, 4294901760
    %3867 = vmatpush.msra.mxu0 %v3866
    %v3868 = vand.u32 %v84, 4294901760
    %3869 = vmatpush.msra.mxu0 %v3868
    %v3870 = vand.u32 %v80, 4294901760
    %3871 = vmatpush.msra.mxu0 %v3870
    %v3872 = vand.u32 %v76, 4294901760
    %3873 = vmatpush.msra.mxu0 %v3872
    %v3874 = vand.u32 %v72, 4294901760
    %3875 = vmatpush.msra.mxu0 %v3874
    %v3876 = vand.u32 %v68, 4294901760
    %3877 = vmatpush.msra.mxu0 %v3876
    %v3878 = vand.u32 %v64, 4294901760
    %3879 = vmatpush.msra.mxu0 %v3878
    %v3880 = vand.u32 %v60, 4294901760
    %3881 = vmatpush.msra.mxu0 %v3880
    %v3882 = vand.u32 %v56, 4294901760
    %3883 = vmatpush.msra.mxu0 %v3882
    %v3884 = vand.u32 %v467, 4294901760
    %v3885 = vsub.f32 %v467, %v3884
    %v3886 = vand.u32 %v3885, 4294901760
    %3887 = vmatmul.f32.gmra.mxu0 %v3886
    %v3888 = vpop.f32.mrf.mxu0
    %v3889 = vadd.f32 %v3850, %v3888
    %3890 = vdwg.mxu0
    %v3891 = vand.u32 %v116, 4294901760
    %v3892 = vsub.f32 %v116, %v3891
    %v3893 = vand.u32 %v3892, 4294901760
    %3894 = vmatpush.msra.mxu0 %v3893
    %v3895 = vand.u32 %v112, 4294901760
    %v3896 = vsub.f32 %v112, %v3895
    %v3897 = vand.u32 %v3896, 4294901760
    %3898 = vmatpush.msra.mxu0 %v3897
    %v3899 = vand.u32 %v108, 4294901760
    %v3900 = vsub.f32 %v108, %v3899
    %v3901 = vand.u32 %v3900, 4294901760
    %3902 = vmatpush.msra.mxu0 %v3901
    %v3903 = vand.u32 %v104, 4294901760
    %v3904 = vsub.f32 %v104, %v3903
    %v3905 = vand.u32 %v3904, 4294901760
    %3906 = vmatpush.msra.mxu0 %v3905
    %v3907 = vand.u32 %v100, 4294901760
    %v3908 = vsub.f32 %v100, %v3907
    %v3909 = vand.u32 %v3908, 4294901760
    %3910 = vmatpush.msra.mxu0 %v3909
    %v3911 = vand.u32 %v96, 4294901760
    %v3912 = vsub.f32 %v96, %v3911
    %v3913 = vand.u32 %v3912, 4294901760
    %3914 = vmatpush.msra.mxu0 %v3913
    %v3915 = vand.u32 %v92, 4294901760
    %v3916 = vsub.f32 %v92, %v3915
    %v3917 = vand.u32 %v3916, 4294901760
    %3918 = vmatpush.msra.mxu0 %v3917
    %v3919 = vand.u32 %v88, 4294901760
    %v3920 = vsub.f32 %v88, %v3919
    %v3921 = vand.u32 %v3920, 4294901760
    %3922 = vmatpush.msra.mxu0 %v3921
    %v3923 = vand.u32 %v84, 4294901760
    %v3924 = vsub.f32 %v84, %v3923
    %v3925 = vand.u32 %v3924, 4294901760
    %3926 = vmatpush.msra.mxu0 %v3925
    %v3927 = vand.u32 %v80, 4294901760
    %v3928 = vsub.f32 %v80, %v3927
    %v3929 = vand.u32 %v3928, 4294901760
    %3930 = vmatpush.msra.mxu0 %v3929
    %v3931 = vand.u32 %v76, 4294901760
    %v3932 = vsub.f32 %v76, %v3931
    %v3933 = vand.u32 %v3932, 4294901760
    %3934 = vmatpush.msra.mxu0 %v3933
    %v3935 = vand.u32 %v72, 4294901760
    %v3936 = vsub.f32 %v72, %v3935
    %v3937 = vand.u32 %v3936, 4294901760
    %3938 = vmatpush.msra.mxu0 %v3937
    %v3939 = vand.u32 %v68, 4294901760
    %v3940 = vsub.f32 %v68, %v3939
    %v3941 = vand.u32 %v3940, 4294901760
    %3942 = vmatpush.msra.mxu0 %v3941
    %v3943 = vand.u32 %v64, 4294901760
    %v3944 = vsub.f32 %v64, %v3943
    %v3945 = vand.u32 %v3944, 4294901760
    %3946 = vmatpush.msra.mxu0 %v3945
    %v3947 = vand.u32 %v60, 4294901760
    %v3948 = vsub.f32 %v60, %v3947
    %v3949 = vand.u32 %v3948, 4294901760
    %3950 = vmatpush.msra.mxu0 %v3949
    %v3951 = vand.u32 %v56, 4294901760
    %v3952 = vsub.f32 %v56, %v3951
    %v3953 = vand.u32 %v3952, 4294901760
    %3954 = vmatpush.msra.mxu0 %v3953
    %v3955 = vand.u32 %v467, 4294901760
    %3956 = vmatmul.f32.gmra.mxu0 %v3955
    %v3957 = vpop.f32.mrf.mxu0
    %v3958 = vadd.f32 %v3889, %v3957
    %3959 = vdwg.mxu0
    %v3960 = vand.u32 %v116, 4294901760
    %3961 = vmatpush.msra.mxu0 %v3960
    %v3962 = vand.u32 %v112, 4294901760
    %3963 = vmatpush.msra.mxu0 %v3962
    %v3964 = vand.u32 %v108, 4294901760
    %3965 = vmatpush.msra.mxu0 %v3964
    %v3966 = vand.u32 %v104, 4294901760
    %3967 = vmatpush.msra.mxu0 %v3966
    %v3968 = vand.u32 %v100, 4294901760
    %3969 = vmatpush.msra.mxu0 %v3968
    %v3970 = vand.u32 %v96, 4294901760
    %3971 = vmatpush.msra.mxu0 %v3970
    %v3972 = vand.u32 %v92, 4294901760
    %3973 = vmatpush.msra.mxu0 %v3972
    %v3974 = vand.u32 %v88, 4294901760
    %3975 = vmatpush.msra.mxu0 %v3974
    %v3976 = vand.u32 %v84, 4294901760
    %3977 = vmatpush.msra.mxu0 %v3976
    %v3978 = vand.u32 %v80, 4294901760
    %3979 = vmatpush.msra.mxu0 %v3978
    %v3980 = vand.u32 %v76, 4294901760
    %3981 = vmatpush.msra.mxu0 %v3980
    %v3982 = vand.u32 %v72, 4294901760
    %3983 = vmatpush.msra.mxu0 %v3982
    %v3984 = vand.u32 %v68, 4294901760
    %3985 = vmatpush.msra.mxu0 %v3984
    %v3986 = vand.u32 %v64, 4294901760
    %3987 = vmatpush.msra.mxu0 %v3986
    %v3988 = vand.u32 %v60, 4294901760
    %3989 = vmatpush.msra.mxu0 %v3988
    %v3990 = vand.u32 %v56, 4294901760
    %3991 = vmatpush.msra.mxu0 %v3990
    %v3992 = vand.u32 %v467, 4294901760
    %3993 = vmatmul.f32.gmra.mxu0 %v3992
    %v3994 = vpop.f32.mrf.mxu0
    %v3995 = vadd.f32 %v3958, %v3994
    %3996 = vdwg.mxu0
    %v3997 = vand.u32 %v180, 4294901760
    %3998 = vmatpush.msra.mxu0 %v3997
    %v3999 = vand.u32 %v176, 4294901760
    %4000 = vmatpush.msra.mxu0 %v3999
    %v4001 = vand.u32 %v172, 4294901760
    %4002 = vmatpush.msra.mxu0 %v4001
    %v4003 = vand.u32 %v168, 4294901760
    %4004 = vmatpush.msra.mxu0 %v4003
    %v4005 = vand.u32 %v164, 4294901760
    %4006 = vmatpush.msra.mxu0 %v4005
    %v4007 = vand.u32 %v160, 4294901760
    %4008 = vmatpush.msra.mxu0 %v4007
    %v4009 = vand.u32 %v156, 4294901760
    %4010 = vmatpush.msra.mxu0 %v4009
    %v4011 = vand.u32 %v152, 4294901760
    %4012 = vmatpush.msra.mxu0 %v4011
    %v4013 = vand.u32 %v148, 4294901760
    %4014 = vmatpush.msra.mxu0 %v4013
    %v4015 = vand.u32 %v144, 4294901760
    %4016 = vmatpush.msra.mxu0 %v4015
    %v4017 = vand.u32 %v140, 4294901760
    %4018 = vmatpush.msra.mxu0 %v4017
    %v4019 = vand.u32 %v136, 4294901760
    %4020 = vmatpush.msra.mxu0 %v4019
    %v4021 = vand.u32 %v132, 4294901760
    %4022 = vmatpush.msra.mxu0 %v4021
    %v4023 = vand.u32 %v128, 4294901760
    %4024 = vmatpush.msra.mxu0 %v4023
    %v4025 = vand.u32 %v124, 4294901760
    %4026 = vmatpush.msra.mxu0 %v4025
    %v4027 = vand.u32 %v120, 4294901760
    %4028 = vmatpush.msra.mxu0 %v4027
    %v4029 = vand.u32 %v618, 4294901760
    %v4030 = vsub.f32 %v618, %v4029
    %v4031 = vand.u32 %v4030, 4294901760
    %v4032 = vsub.f32 %v4030, %v4031
    %v4033 = vand.u32 %v4032, 4294901760
    %4034 = vmatmul.f32.gmra.mxu0 %v4033
    %v4035 = vpop.f32.mrf.mxu0
    %v4036 = vadd.f32 %v3995, %v4035
    %4037 = vdwg.mxu0
    %v4038 = vand.u32 %v180, 4294901760
    %v4039 = vsub.f32 %v180, %v4038
    %v4040 = vand.u32 %v4039, 4294901760
    %v4041 = vsub.f32 %v4039, %v4040
    %v4042 = vand.u32 %v4041, 4294901760
    %4043 = vmatpush.msra.mxu0 %v4042
    %v4044 = vand.u32 %v176, 4294901760
    %v4045 = vsub.f32 %v176, %v4044
    %v4046 = vand.u32 %v4045, 4294901760
    %v4047 = vsub.f32 %v4045, %v4046
    %v4048 = vand.u32 %v4047, 4294901760
    %4049 = vmatpush.msra.mxu0 %v4048
    %v4050 = vand.u32 %v172, 4294901760
    %v4051 = vsub.f32 %v172, %v4050
    %v4052 = vand.u32 %v4051, 4294901760
    %v4053 = vsub.f32 %v4051, %v4052
    %v4054 = vand.u32 %v4053, 4294901760
    %4055 = vmatpush.msra.mxu0 %v4054
    %v4056 = vand.u32 %v168, 4294901760
    %v4057 = vsub.f32 %v168, %v4056
    %v4058 = vand.u32 %v4057, 4294901760
    %v4059 = vsub.f32 %v4057, %v4058
    %v4060 = vand.u32 %v4059, 4294901760
    %4061 = vmatpush.msra.mxu0 %v4060
    %v4062 = vand.u32 %v164, 4294901760
    %v4063 = vsub.f32 %v164, %v4062
    %v4064 = vand.u32 %v4063, 4294901760
    %v4065 = vsub.f32 %v4063, %v4064
    %v4066 = vand.u32 %v4065, 4294901760
    %4067 = vmatpush.msra.mxu0 %v4066
    %v4068 = vand.u32 %v160, 4294901760
    %v4069 = vsub.f32 %v160, %v4068
    %v4070 = vand.u32 %v4069, 4294901760
    %v4071 = vsub.f32 %v4069, %v4070
    %v4072 = vand.u32 %v4071, 4294901760
    %4073 = vmatpush.msra.mxu0 %v4072
    %v4074 = vand.u32 %v156, 4294901760
    %v4075 = vsub.f32 %v156, %v4074
    %v4076 = vand.u32 %v4075, 4294901760
    %v4077 = vsub.f32 %v4075, %v4076
    %v4078 = vand.u32 %v4077, 4294901760
    %4079 = vmatpush.msra.mxu0 %v4078
    %v4080 = vand.u32 %v152, 4294901760
    %v4081 = vsub.f32 %v152, %v4080
    %v4082 = vand.u32 %v4081, 4294901760
    %v4083 = vsub.f32 %v4081, %v4082
    %v4084 = vand.u32 %v4083, 4294901760
    %4085 = vmatpush.msra.mxu0 %v4084
    %v4086 = vand.u32 %v148, 4294901760
    %v4087 = vsub.f32 %v148, %v4086
    %v4088 = vand.u32 %v4087, 4294901760
    %v4089 = vsub.f32 %v4087, %v4088
    %v4090 = vand.u32 %v4089, 4294901760
    %4091 = vmatpush.msra.mxu0 %v4090
    %v4092 = vand.u32 %v144, 4294901760
    %v4093 = vsub.f32 %v144, %v4092
    %v4094 = vand.u32 %v4093, 4294901760
    %v4095 = vsub.f32 %v4093, %v4094
    %v4096 = vand.u32 %v4095, 4294901760
    %4097 = vmatpush.msra.mxu0 %v4096
    %v4098 = vand.u32 %v140, 4294901760
    %v4099 = vsub.f32 %v140, %v4098
    %v4100 = vand.u32 %v4099, 4294901760
    %v4101 = vsub.f32 %v4099, %v4100
    %v4102 = vand.u32 %v4101, 4294901760
    %4103 = vmatpush.msra.mxu0 %v4102
    %v4104 = vand.u32 %v136, 4294901760
    %v4105 = vsub.f32 %v136, %v4104
    %v4106 = vand.u32 %v4105, 4294901760
    %v4107 = vsub.f32 %v4105, %v4106
    %v4108 = vand.u32 %v4107, 4294901760
    %4109 = vmatpush.msra.mxu0 %v4108
    %v4110 = vand.u32 %v132, 4294901760
    %v4111 = vsub.f32 %v132, %v4110
    %v4112 = vand.u32 %v4111, 4294901760
    %v4113 = vsub.f32 %v4111, %v4112
    %v4114 = vand.u32 %v4113, 4294901760
    %4115 = vmatpush.msra.mxu0 %v4114
    %v4116 = vand.u32 %v128, 4294901760
    %v4117 = vsub.f32 %v128, %v4116
    %v4118 = vand.u32 %v4117, 4294901760
    %v4119 = vsub.f32 %v4117, %v4118
    %v4120 = vand.u32 %v4119, 4294901760
    %4121 = vmatpush.msra.mxu0 %v4120
    %v4122 = vand.u32 %v124, 4294901760
    %v4123 = vsub.f32 %v124, %v4122
    %v4124 = vand.u32 %v4123, 4294901760
    %v4125 = vsub.f32 %v4123, %v4124
    %v4126 = vand.u32 %v4125, 4294901760
    %4127 = vmatpush.msra.mxu0 %v4126
    %v4128 = vand.u32 %v120, 4294901760
    %v4129 = vsub.f32 %v120, %v4128
    %v4130 = vand.u32 %v4129, 4294901760
    %v4131 = vsub.f32 %v4129, %v4130
    %v4132 = vand.u32 %v4131, 4294901760
    %4133 = vmatpush.msra.mxu0 %v4132
    %v4134 = vand.u32 %v618, 4294901760
    %4135 = vmatmul.f32.gmra.mxu0 %v4134
    %v4136 = vpop.f32.mrf.mxu0
    %v4137 = vadd.f32 %v4036, %v4136
    %4138 = vdwg.mxu0
    %v4139 = vand.u32 %v180, 4294901760
    %v4140 = vsub.f32 %v180, %v4139
    %4141 = vmatpush.msra.mxu0 %v4140
    %v4142 = vand.u32 %v176, 4294901760
    %v4143 = vsub.f32 %v176, %v4142
    %4144 = vmatpush.msra.mxu0 %v4143
    %v4145 = vand.u32 %v172, 4294901760
    %v4146 = vsub.f32 %v172, %v4145
    %4147 = vmatpush.msra.mxu0 %v4146
    %v4148 = vand.u32 %v168, 4294901760
    %v4149 = vsub.f32 %v168, %v4148
    %4150 = vmatpush.msra.mxu0 %v4149
    %v4151 = vand.u32 %v164, 4294901760
    %v4152 = vsub.f32 %v164, %v4151
    %4153 = vmatpush.msra.mxu0 %v4152
    %v4154 = vand.u32 %v160, 4294901760
    %v4155 = vsub.f32 %v160, %v4154
    %4156 = vmatpush.msra.mxu0 %v4155
    %v4157 = vand.u32 %v156, 4294901760
    %v4158 = vsub.f32 %v156, %v4157
    %4159 = vmatpush.msra.mxu0 %v4158
    %v4160 = vand.u32 %v152, 4294901760
    %v4161 = vsub.f32 %v152, %v4160
    %4162 = vmatpush.msra.mxu0 %v4161
    %v4163 = vand.u32 %v148, 4294901760
    %v4164 = vsub.f32 %v148, %v4163
    %4165 = vmatpush.msra.mxu0 %v4164
    %v4166 = vand.u32 %v144, 4294901760
    %v4167 = vsub.f32 %v144, %v4166
    %4168 = vmatpush.msra.mxu0 %v4167
    %v4169 = vand.u32 %v140, 4294901760
    %v4170 = vsub.f32 %v140, %v4169
    %4171 = vmatpush.msra.mxu0 %v4170
    %v4172 = vand.u32 %v136, 4294901760
    %v4173 = vsub.f32 %v136, %v4172
    %4174 = vmatpush.msra.mxu0 %v4173
    %v4175 = vand.u32 %v132, 4294901760
    %v4176 = vsub.f32 %v132, %v4175
    %4177 = vmatpush.msra.mxu0 %v4176
    %v4178 = vand.u32 %v128, 4294901760
    %v4179 = vsub.f32 %v128, %v4178
    %4180 = vmatpush.msra.mxu0 %v4179
    %v4181 = vand.u32 %v124, 4294901760
    %v4182 = vsub.f32 %v124, %v4181
    %4183 = vmatpush.msra.mxu0 %v4182
    %v4184 = vand.u32 %v120, 4294901760
    %v4185 = vsub.f32 %v120, %v4184
    %4186 = vmatpush.msra.mxu0 %v4185
    %v4187 = vand.u32 %v618, 4294901760
    %v4188 = vsub.f32 %v618, %v4187
    %4189 = vmatmul.f32.gmra.mxu0 %v4188
    %v4190 = vpop.f32.mrf.mxu0
    %v4191 = vadd.f32 %v4137, %v4190
    %4192 = vdwg.mxu0
    %v4193 = vand.u32 %v180, 4294901760
    %4194 = vmatpush.msra.mxu0 %v4193
    %v4195 = vand.u32 %v176, 4294901760
    %4196 = vmatpush.msra.mxu0 %v4195
    %v4197 = vand.u32 %v172, 4294901760
    %4198 = vmatpush.msra.mxu0 %v4197
    %v4199 = vand.u32 %v168, 4294901760
    %4200 = vmatpush.msra.mxu0 %v4199
    %v4201 = vand.u32 %v164, 4294901760
    %4202 = vmatpush.msra.mxu0 %v4201
    %v4203 = vand.u32 %v160, 4294901760
    %4204 = vmatpush.msra.mxu0 %v4203
    %v4205 = vand.u32 %v156, 4294901760
    %4206 = vmatpush.msra.mxu0 %v4205
    %v4207 = vand.u32 %v152, 4294901760
    %4208 = vmatpush.msra.mxu0 %v4207
    %v4209 = vand.u32 %v148, 4294901760
    %4210 = vmatpush.msra.mxu0 %v4209
    %v4211 = vand.u32 %v144, 4294901760
    %4212 = vmatpush.msra.mxu0 %v4211
    %v4213 = vand.u32 %v140, 4294901760
    %4214 = vmatpush.msra.mxu0 %v4213
    %v4215 = vand.u32 %v136, 4294901760
    %4216 = vmatpush.msra.mxu0 %v4215
    %v4217 = vand.u32 %v132, 4294901760
    %4218 = vmatpush.msra.mxu0 %v4217
    %v4219 = vand.u32 %v128, 4294901760
    %4220 = vmatpush.msra.mxu0 %v4219
    %v4221 = vand.u32 %v124, 4294901760
    %4222 = vmatpush.msra.mxu0 %v4221
    %v4223 = vand.u32 %v120, 4294901760
    %4224 = vmatpush.msra.mxu0 %v4223
    %v4225 = vand.u32 %v618, 4294901760
    %v4226 = vsub.f32 %v618, %v4225
    %v4227 = vand.u32 %v4226, 4294901760
    %4228 = vmatmul.f32.gmra.mxu0 %v4227
    %v4229 = vpop.f32.mrf.mxu0
    %v4230 = vadd.f32 %v4191, %v4229
    %4231 = vdwg.mxu0
    %v4232 = vand.u32 %v180, 4294901760
    %v4233 = vsub.f32 %v180, %v4232
    %v4234 = vand.u32 %v4233, 4294901760
    %4235 = vmatpush.msra.mxu0 %v4234
    %v4236 = vand.u32 %v176, 4294901760
    %v4237 = vsub.f32 %v176, %v4236
    %v4238 = vand.u32 %v4237, 4294901760
    %4239 = vmatpush.msra.mxu0 %v4238
    %v4240 = vand.u32 %v172, 4294901760
    %v4241 = vsub.f32 %v172, %v4240
    %v4242 = vand.u32 %v4241, 4294901760
    %4243 = vmatpush.msra.mxu0 %v4242
    %v4244 = vand.u32 %v168, 4294901760
    %v4245 = vsub.f32 %v168, %v4244
    %v4246 = vand.u32 %v4245, 4294901760
    %4247 = vmatpush.msra.mxu0 %v4246
    %v4248 = vand.u32 %v164, 4294901760
    %v4249 = vsub.f32 %v164, %v4248
    %v4250 = vand.u32 %v4249, 4294901760
    %4251 = vmatpush.msra.mxu0 %v4250
    %v4252 = vand.u32 %v160, 4294901760
    %v4253 = vsub.f32 %v160, %v4252
    %v4254 = vand.u32 %v4253, 4294901760
    %4255 = vmatpush.msra.mxu0 %v4254
    %v4256 = vand.u32 %v156, 4294901760
    %v4257 = vsub.f32 %v156, %v4256
    %v4258 = vand.u32 %v4257, 4294901760
    %4259 = vmatpush.msra.mxu0 %v4258
    %v4260 = vand.u32 %v152, 4294901760
    %v4261 = vsub.f32 %v152, %v4260
    %v4262 = vand.u32 %v4261, 4294901760
    %4263 = vmatpush.msra.mxu0 %v4262
    %v4264 = vand.u32 %v148, 4294901760
    %v4265 = vsub.f32 %v148, %v4264
    %v4266 = vand.u32 %v4265, 4294901760
    %4267 = vmatpush.msra.mxu0 %v4266
    %v4268 = vand.u32 %v144, 4294901760
    %v4269 = vsub.f32 %v144, %v4268
    %v4270 = vand.u32 %v4269, 4294901760
    %4271 = vmatpush.msra.mxu0 %v4270
    %v4272 = vand.u32 %v140, 4294901760
    %v4273 = vsub.f32 %v140, %v4272
    %v4274 = vand.u32 %v4273, 4294901760
    %4275 = vmatpush.msra.mxu0 %v4274
    %v4276 = vand.u32 %v136, 4294901760
    %v4277 = vsub.f32 %v136, %v4276
    %v4278 = vand.u32 %v4277, 4294901760
    %4279 = vmatpush.msra.mxu0 %v4278
    %v4280 = vand.u32 %v132, 4294901760
    %v4281 = vsub.f32 %v132, %v4280
    %v4282 = vand.u32 %v4281, 4294901760
    %4283 = vmatpush.msra.mxu0 %v4282
    %v4284 = vand.u32 %v128, 4294901760
    %v4285 = vsub.f32 %v128, %v4284
    %v4286 = vand.u32 %v4285, 4294901760
    %4287 = vmatpush.msra.mxu0 %v4286
    %v4288 = vand.u32 %v124, 4294901760
    %v4289 = vsub.f32 %v124, %v4288
    %v4290 = vand.u32 %v4289, 4294901760
    %4291 = vmatpush.msra.mxu0 %v4290
    %v4292 = vand.u32 %v120, 4294901760
    %v4293 = vsub.f32 %v120, %v4292
    %v4294 = vand.u32 %v4293, 4294901760
    %4295 = vmatpush.msra.mxu0 %v4294
    %v4296 = vand.u32 %v618, 4294901760
    %4297 = vmatmul.f32.gmra.mxu0 %v4296
    %v4298 = vpop.f32.mrf.mxu0
    %v4299 = vadd.f32 %v4230, %v4298
    %4300 = vdwg.mxu0
    %v4301 = vand.u32 %v180, 4294901760
    %4302 = vmatpush.msra.mxu0 %v4301
    %v4303 = vand.u32 %v176, 4294901760
    %4304 = vmatpush.msra.mxu0 %v4303
    %v4305 = vand.u32 %v172, 4294901760
    %4306 = vmatpush.msra.mxu0 %v4305
    %v4307 = vand.u32 %v168, 4294901760
    %4308 = vmatpush.msra.mxu0 %v4307
    %v4309 = vand.u32 %v164, 4294901760
    %4310 = vmatpush.msra.mxu0 %v4309
    %v4311 = vand.u32 %v160, 4294901760
    %4312 = vmatpush.msra.mxu0 %v4311
    %v4313 = vand.u32 %v156, 4294901760
    %4314 = vmatpush.msra.mxu0 %v4313
    %v4315 = vand.u32 %v152, 4294901760
    %4316 = vmatpush.msra.mxu0 %v4315
    %v4317 = vand.u32 %v148, 4294901760
    %4318 = vmatpush.msra.mxu0 %v4317
    %v4319 = vand.u32 %v144, 4294901760
    %4320 = vmatpush.msra.mxu0 %v4319
    %v4321 = vand.u32 %v140, 4294901760
    %4322 = vmatpush.msra.mxu0 %v4321
    %v4323 = vand.u32 %v136, 4294901760
    %4324 = vmatpush.msra.mxu0 %v4323
    %v4325 = vand.u32 %v132, 4294901760
    %4326 = vmatpush.msra.mxu0 %v4325
    %v4327 = vand.u32 %v128, 4294901760
    %4328 = vmatpush.msra.mxu0 %v4327
    %v4329 = vand.u32 %v124, 4294901760
    %4330 = vmatpush.msra.mxu0 %v4329
    %v4331 = vand.u32 %v120, 4294901760
    %4332 = vmatpush.msra.mxu0 %v4331
    %v4333 = vand.u32 %v618, 4294901760
    %4334 = vmatmul.f32.gmra.mxu0 %v4333
    %v4335 = vpop.f32.mrf.mxu0
    %v4336 = vadd.f32 %v4299, %v4335
    %4337 = vdwg.mxu0
    %v4338 = vand.u32 %v244, 4294901760
    %4339 = vmatpush.msra.mxu0 %v4338
    %v4340 = vand.u32 %v240, 4294901760
    %4341 = vmatpush.msra.mxu0 %v4340
    %v4342 = vand.u32 %v236, 4294901760
    %4343 = vmatpush.msra.mxu0 %v4342
    %v4344 = vand.u32 %v232, 4294901760
    %4345 = vmatpush.msra.mxu0 %v4344
    %v4346 = vand.u32 %v228, 4294901760
    %4347 = vmatpush.msra.mxu0 %v4346
    %v4348 = vand.u32 %v224, 4294901760
    %4349 = vmatpush.msra.mxu0 %v4348
    %v4350 = vand.u32 %v220, 4294901760
    %4351 = vmatpush.msra.mxu0 %v4350
    %v4352 = vand.u32 %v216, 4294901760
    %4353 = vmatpush.msra.mxu0 %v4352
    %v4354 = vand.u32 %v212, 4294901760
    %4355 = vmatpush.msra.mxu0 %v4354
    %v4356 = vand.u32 %v208, 4294901760
    %4357 = vmatpush.msra.mxu0 %v4356
    %v4358 = vand.u32 %v204, 4294901760
    %4359 = vmatpush.msra.mxu0 %v4358
    %v4360 = vand.u32 %v200, 4294901760
    %4361 = vmatpush.msra.mxu0 %v4360
    %v4362 = vand.u32 %v196, 4294901760
    %4363 = vmatpush.msra.mxu0 %v4362
    %v4364 = vand.u32 %v192, 4294901760
    %4365 = vmatpush.msra.mxu0 %v4364
    %v4366 = vand.u32 %v188, 4294901760
    %4367 = vmatpush.msra.mxu0 %v4366
    %v4368 = vand.u32 %v184, 4294901760
    %4369 = vmatpush.msra.mxu0 %v4368
    %v4370 = vand.u32 %v769, 4294901760
    %v4371 = vsub.f32 %v769, %v4370
    %v4372 = vand.u32 %v4371, 4294901760
    %v4373 = vsub.f32 %v4371, %v4372
    %v4374 = vand.u32 %v4373, 4294901760
    %4375 = vmatmul.f32.gmra.mxu0 %v4374
    %v4376 = vpop.f32.mrf.mxu0
    %v4377 = vadd.f32 %v4336, %v4376
    %4378 = vdwg.mxu0
    %v4379 = vand.u32 %v244, 4294901760
    %v4380 = vsub.f32 %v244, %v4379
    %v4381 = vand.u32 %v4380, 4294901760
    %v4382 = vsub.f32 %v4380, %v4381
    %v4383 = vand.u32 %v4382, 4294901760
    %4384 = vmatpush.msra.mxu0 %v4383
    %v4385 = vand.u32 %v240, 4294901760
    %v4386 = vsub.f32 %v240, %v4385
    %v4387 = vand.u32 %v4386, 4294901760
    %v4388 = vsub.f32 %v4386, %v4387
    %v4389 = vand.u32 %v4388, 4294901760
    %4390 = vmatpush.msra.mxu0 %v4389
    %v4391 = vand.u32 %v236, 4294901760
    %v4392 = vsub.f32 %v236, %v4391
    %v4393 = vand.u32 %v4392, 4294901760
    %v4394 = vsub.f32 %v4392, %v4393
    %v4395 = vand.u32 %v4394, 4294901760
    %4396 = vmatpush.msra.mxu0 %v4395
    %v4397 = vand.u32 %v232, 4294901760
    %v4398 = vsub.f32 %v232, %v4397
    %v4399 = vand.u32 %v4398, 4294901760
    %v4400 = vsub.f32 %v4398, %v4399
    %v4401 = vand.u32 %v4400, 4294901760
    %4402 = vmatpush.msra.mxu0 %v4401
    %v4403 = vand.u32 %v228, 4294901760
    %v4404 = vsub.f32 %v228, %v4403
    %v4405 = vand.u32 %v4404, 4294901760
    %v4406 = vsub.f32 %v4404, %v4405
    %v4407 = vand.u32 %v4406, 4294901760
    %4408 = vmatpush.msra.mxu0 %v4407
    %v4409 = vand.u32 %v224, 4294901760
    %v4410 = vsub.f32 %v224, %v4409
    %v4411 = vand.u32 %v4410, 4294901760
    %v4412 = vsub.f32 %v4410, %v4411
    %v4413 = vand.u32 %v4412, 4294901760
    %4414 = vmatpush.msra.mxu0 %v4413
    %v4415 = vand.u32 %v220, 4294901760
    %v4416 = vsub.f32 %v220, %v4415
    %v4417 = vand.u32 %v4416, 4294901760
    %v4418 = vsub.f32 %v4416, %v4417
    %v4419 = vand.u32 %v4418, 4294901760
    %4420 = vmatpush.msra.mxu0 %v4419
    %v4421 = vand.u32 %v216, 4294901760
    %v4422 = vsub.f32 %v216, %v4421
    %v4423 = vand.u32 %v4422, 4294901760
    %v4424 = vsub.f32 %v4422, %v4423
    %v4425 = vand.u32 %v4424, 4294901760
    %4426 = vmatpush.msra.mxu0 %v4425
    %v4427 = vand.u32 %v212, 4294901760
    %v4428 = vsub.f32 %v212, %v4427
    %v4429 = vand.u32 %v4428, 4294901760
    %v4430 = vsub.f32 %v4428, %v4429
    %v4431 = vand.u32 %v4430, 4294901760
    %4432 = vmatpush.msra.mxu0 %v4431
    %v4433 = vand.u32 %v208, 4294901760
    %v4434 = vsub.f32 %v208, %v4433
    %v4435 = vand.u32 %v4434, 4294901760
    %v4436 = vsub.f32 %v4434, %v4435
    %v4437 = vand.u32 %v4436, 4294901760
    %4438 = vmatpush.msra.mxu0 %v4437
    %v4439 = vand.u32 %v204, 4294901760
    %v4440 = vsub.f32 %v204, %v4439
    %v4441 = vand.u32 %v4440, 4294901760
    %v4442 = vsub.f32 %v4440, %v4441
    %v4443 = vand.u32 %v4442, 4294901760
    %4444 = vmatpush.msra.mxu0 %v4443
    %v4445 = vand.u32 %v200, 4294901760
    %v4446 = vsub.f32 %v200, %v4445
    %v4447 = vand.u32 %v4446, 4294901760
    %v4448 = vsub.f32 %v4446, %v4447
    %v4449 = vand.u32 %v4448, 4294901760
    %4450 = vmatpush.msra.mxu0 %v4449
    %v4451 = vand.u32 %v196, 4294901760
    %v4452 = vsub.f32 %v196, %v4451
    %v4453 = vand.u32 %v4452, 4294901760
    %v4454 = vsub.f32 %v4452, %v4453
    %v4455 = vand.u32 %v4454, 4294901760
    %4456 = vmatpush.msra.mxu0 %v4455
    %v4457 = vand.u32 %v192, 4294901760
    %v4458 = vsub.f32 %v192, %v4457
    %v4459 = vand.u32 %v4458, 4294901760
    %v4460 = vsub.f32 %v4458, %v4459
    %v4461 = vand.u32 %v4460, 4294901760
    %4462 = vmatpush.msra.mxu0 %v4461
    %v4463 = vand.u32 %v188, 4294901760
    %v4464 = vsub.f32 %v188, %v4463
    %v4465 = vand.u32 %v4464, 4294901760
    %v4466 = vsub.f32 %v4464, %v4465
    %v4467 = vand.u32 %v4466, 4294901760
    %4468 = vmatpush.msra.mxu0 %v4467
    %v4469 = vand.u32 %v184, 4294901760
    %v4470 = vsub.f32 %v184, %v4469
    %v4471 = vand.u32 %v4470, 4294901760
    %v4472 = vsub.f32 %v4470, %v4471
    %v4473 = vand.u32 %v4472, 4294901760
    %4474 = vmatpush.msra.mxu0 %v4473
    %v4475 = vand.u32 %v769, 4294901760
    %4476 = vmatmul.f32.gmra.mxu0 %v4475
    %v4477 = vpop.f32.mrf.mxu0
    %v4478 = vadd.f32 %v4377, %v4477
    %4479 = vdwg.mxu0
    %v4480 = vand.u32 %v244, 4294901760
    %v4481 = vsub.f32 %v244, %v4480
    %4482 = vmatpush.msra.mxu0 %v4481
    %v4483 = vand.u32 %v240, 4294901760
    %v4484 = vsub.f32 %v240, %v4483
    %4485 = vmatpush.msra.mxu0 %v4484
    %v4486 = vand.u32 %v236, 4294901760
    %v4487 = vsub.f32 %v236, %v4486
    %4488 = vmatpush.msra.mxu0 %v4487
    %v4489 = vand.u32 %v232, 4294901760
    %v4490 = vsub.f32 %v232, %v4489
    %4491 = vmatpush.msra.mxu0 %v4490
    %v4492 = vand.u32 %v228, 4294901760
    %v4493 = vsub.f32 %v228, %v4492
    %4494 = vmatpush.msra.mxu0 %v4493
    %v4495 = vand.u32 %v224, 4294901760
    %v4496 = vsub.f32 %v224, %v4495
    %4497 = vmatpush.msra.mxu0 %v4496
    %v4498 = vand.u32 %v220, 4294901760
    %v4499 = vsub.f32 %v220, %v4498
    %4500 = vmatpush.msra.mxu0 %v4499
    %v4501 = vand.u32 %v216, 4294901760
    %v4502 = vsub.f32 %v216, %v4501
    %4503 = vmatpush.msra.mxu0 %v4502
    %v4504 = vand.u32 %v212, 4294901760
    %v4505 = vsub.f32 %v212, %v4504
    %4506 = vmatpush.msra.mxu0 %v4505
    %v4507 = vand.u32 %v208, 4294901760
    %v4508 = vsub.f32 %v208, %v4507
    %4509 = vmatpush.msra.mxu0 %v4508
    %v4510 = vand.u32 %v204, 4294901760
    %v4511 = vsub.f32 %v204, %v4510
    %4512 = vmatpush.msra.mxu0 %v4511
    %v4513 = vand.u32 %v200, 4294901760
    %v4514 = vsub.f32 %v200, %v4513
    %4515 = vmatpush.msra.mxu0 %v4514
    %v4516 = vand.u32 %v196, 4294901760
    %v4517 = vsub.f32 %v196, %v4516
    %4518 = vmatpush.msra.mxu0 %v4517
    %v4519 = vand.u32 %v192, 4294901760
    %v4520 = vsub.f32 %v192, %v4519
    %4521 = vmatpush.msra.mxu0 %v4520
    %v4522 = vand.u32 %v188, 4294901760
    %v4523 = vsub.f32 %v188, %v4522
    %4524 = vmatpush.msra.mxu0 %v4523
    %v4525 = vand.u32 %v184, 4294901760
    %v4526 = vsub.f32 %v184, %v4525
    %4527 = vmatpush.msra.mxu0 %v4526
    %v4528 = vand.u32 %v769, 4294901760
    %v4529 = vsub.f32 %v769, %v4528
    %4530 = vmatmul.f32.gmra.mxu0 %v4529
    %v4531 = vpop.f32.mrf.mxu0
    %v4532 = vadd.f32 %v4478, %v4531
    %4533 = vdwg.mxu0
    %v4534 = vand.u32 %v244, 4294901760
    %4535 = vmatpush.msra.mxu0 %v4534
    %v4536 = vand.u32 %v240, 4294901760
    %4537 = vmatpush.msra.mxu0 %v4536
    %v4538 = vand.u32 %v236, 4294901760
    %4539 = vmatpush.msra.mxu0 %v4538
    %v4540 = vand.u32 %v232, 4294901760
    %4541 = vmatpush.msra.mxu0 %v4540
    %v4542 = vand.u32 %v228, 4294901760
    %4543 = vmatpush.msra.mxu0 %v4542
    %v4544 = vand.u32 %v224, 4294901760
    %4545 = vmatpush.msra.mxu0 %v4544
    %v4546 = vand.u32 %v220, 4294901760
    %4547 = vmatpush.msra.mxu0 %v4546
    %v4548 = vand.u32 %v216, 4294901760
    %4549 = vmatpush.msra.mxu0 %v4548
    %v4550 = vand.u32 %v212, 4294901760
    %4551 = vmatpush.msra.mxu0 %v4550
    %v4552 = vand.u32 %v208, 4294901760
    %4553 = vmatpush.msra.mxu0 %v4552
    %v4554 = vand.u32 %v204, 4294901760
    %4555 = vmatpush.msra.mxu0 %v4554
    %v4556 = vand.u32 %v200, 4294901760
    %4557 = vmatpush.msra.mxu0 %v4556
    %v4558 = vand.u32 %v196, 4294901760
    %4559 = vmatpush.msra.mxu0 %v4558
    %v4560 = vand.u32 %v192, 4294901760
    %4561 = vmatpush.msra.mxu0 %v4560
    %v4562 = vand.u32 %v188, 4294901760
    %4563 = vmatpush.msra.mxu0 %v4562
    %v4564 = vand.u32 %v184, 4294901760
    %4565 = vmatpush.msra.mxu0 %v4564
    %v4566 = vand.u32 %v769, 4294901760
    %v4567 = vsub.f32 %v769, %v4566
    %v4568 = vand.u32 %v4567, 4294901760
    %4569 = vmatmul.f32.gmra.mxu0 %v4568
    %v4570 = vpop.f32.mrf.mxu0
    %v4571 = vadd.f32 %v4532, %v4570
    %4572 = vdwg.mxu0
    %v4573 = vand.u32 %v244, 4294901760
    %v4574 = vsub.f32 %v244, %v4573
    %v4575 = vand.u32 %v4574, 4294901760
    %4576 = vmatpush.msra.mxu0 %v4575
    %v4577 = vand.u32 %v240, 4294901760
    %v4578 = vsub.f32 %v240, %v4577
    %v4579 = vand.u32 %v4578, 4294901760
    %4580 = vmatpush.msra.mxu0 %v4579
    %v4581 = vand.u32 %v236, 4294901760
    %v4582 = vsub.f32 %v236, %v4581
    %v4583 = vand.u32 %v4582, 4294901760
    %4584 = vmatpush.msra.mxu0 %v4583
    %v4585 = vand.u32 %v232, 4294901760
    %v4586 = vsub.f32 %v232, %v4585
    %v4587 = vand.u32 %v4586, 4294901760
    %4588 = vmatpush.msra.mxu0 %v4587
    %v4589 = vand.u32 %v228, 4294901760
    %v4590 = vsub.f32 %v228, %v4589
    %v4591 = vand.u32 %v4590, 4294901760
    %4592 = vmatpush.msra.mxu0 %v4591
    %v4593 = vand.u32 %v224, 4294901760
    %v4594 = vsub.f32 %v224, %v4593
    %v4595 = vand.u32 %v4594, 4294901760
    %4596 = vmatpush.msra.mxu0 %v4595
    %v4597 = vand.u32 %v220, 4294901760
    %v4598 = vsub.f32 %v220, %v4597
    %v4599 = vand.u32 %v4598, 4294901760
    %4600 = vmatpush.msra.mxu0 %v4599
    %v4601 = vand.u32 %v216, 4294901760
    %v4602 = vsub.f32 %v216, %v4601
    %v4603 = vand.u32 %v4602, 4294901760
    %4604 = vmatpush.msra.mxu0 %v4603
    %v4605 = vand.u32 %v212, 4294901760
    %v4606 = vsub.f32 %v212, %v4605
    %v4607 = vand.u32 %v4606, 4294901760
    %4608 = vmatpush.msra.mxu0 %v4607
    %v4609 = vand.u32 %v208, 4294901760
    %v4610 = vsub.f32 %v208, %v4609
    %v4611 = vand.u32 %v4610, 4294901760
    %4612 = vmatpush.msra.mxu0 %v4611
    %v4613 = vand.u32 %v204, 4294901760
    %v4614 = vsub.f32 %v204, %v4613
    %v4615 = vand.u32 %v4614, 4294901760
    %4616 = vmatpush.msra.mxu0 %v4615
    %v4617 = vand.u32 %v200, 4294901760
    %v4618 = vsub.f32 %v200, %v4617
    %v4619 = vand.u32 %v4618, 4294901760
    %4620 = vmatpush.msra.mxu0 %v4619
    %v4621 = vand.u32 %v196, 4294901760
    %v4622 = vsub.f32 %v196, %v4621
    %v4623 = vand.u32 %v4622, 4294901760
    %4624 = vmatpush.msra.mxu0 %v4623
    %v4625 = vand.u32 %v192, 4294901760
    %v4626 = vsub.f32 %v192, %v4625
    %v4627 = vand.u32 %v4626, 4294901760
    %4628 = vmatpush.msra.mxu0 %v4627
    %v4629 = vand.u32 %v188, 4294901760
    %v4630 = vsub.f32 %v188, %v4629
    %v4631 = vand.u32 %v4630, 4294901760
    %4632 = vmatpush.msra.mxu0 %v4631
    %v4633 = vand.u32 %v184, 4294901760
    %v4634 = vsub.f32 %v184, %v4633
    %v4635 = vand.u32 %v4634, 4294901760
    %4636 = vmatpush.msra.mxu0 %v4635
    %v4637 = vand.u32 %v769, 4294901760
    %4638 = vmatmul.f32.gmra.mxu0 %v4637
    %v4639 = vpop.f32.mrf.mxu0
    %v4640 = vadd.f32 %v4571, %v4639
    %4641 = vdwg.mxu0
    %v4642 = vand.u32 %v244, 4294901760
    %4643 = vmatpush.msra.mxu0 %v4642
    %v4644 = vand.u32 %v240, 4294901760
    %4645 = vmatpush.msra.mxu0 %v4644
    %v4646 = vand.u32 %v236, 4294901760
    %4647 = vmatpush.msra.mxu0 %v4646
    %v4648 = vand.u32 %v232, 4294901760
    %4649 = vmatpush.msra.mxu0 %v4648
    %v4650 = vand.u32 %v228, 4294901760
    %4651 = vmatpush.msra.mxu0 %v4650
    %v4652 = vand.u32 %v224, 4294901760
    %4653 = vmatpush.msra.mxu0 %v4652
    %v4654 = vand.u32 %v220, 4294901760
    %4655 = vmatpush.msra.mxu0 %v4654
    %v4656 = vand.u32 %v216, 4294901760
    %4657 = vmatpush.msra.mxu0 %v4656
    %v4658 = vand.u32 %v212, 4294901760
    %4659 = vmatpush.msra.mxu0 %v4658
    %v4660 = vand.u32 %v208, 4294901760
    %4661 = vmatpush.msra.mxu0 %v4660
    %v4662 = vand.u32 %v204, 4294901760
    %4663 = vmatpush.msra.mxu0 %v4662
    %v4664 = vand.u32 %v200, 4294901760
    %4665 = vmatpush.msra.mxu0 %v4664
    %v4666 = vand.u32 %v196, 4294901760
    %4667 = vmatpush.msra.mxu0 %v4666
    %v4668 = vand.u32 %v192, 4294901760
    %4669 = vmatpush.msra.mxu0 %v4668
    %v4670 = vand.u32 %v188, 4294901760
    %4671 = vmatpush.msra.mxu0 %v4670
    %v4672 = vand.u32 %v184, 4294901760
    %4673 = vmatpush.msra.mxu0 %v4672
    %v4674 = vand.u32 %v769, 4294901760
    %4675 = vmatmul.f32.gmra.mxu0 %v4674
    %v4676 = vpop.f32.mrf.mxu0
    %v4677 = vadd.f32 %v4640, %v4676
    %4678 = vdwg.mxu0
    %v4679 = vand.u32 %v308, 4294901760
    %4680 = vmatpush.msra.mxu0 %v4679
    %v4681 = vand.u32 %v304, 4294901760
    %4682 = vmatpush.msra.mxu0 %v4681
    %v4683 = vand.u32 %v300, 4294901760
    %4684 = vmatpush.msra.mxu0 %v4683
    %v4685 = vand.u32 %v296, 4294901760
    %4686 = vmatpush.msra.mxu0 %v4685
    %v4687 = vand.u32 %v292, 4294901760
    %4688 = vmatpush.msra.mxu0 %v4687
    %v4689 = vand.u32 %v288, 4294901760
    %4690 = vmatpush.msra.mxu0 %v4689
    %v4691 = vand.u32 %v284, 4294901760
    %4692 = vmatpush.msra.mxu0 %v4691
    %v4693 = vand.u32 %v280, 4294901760
    %4694 = vmatpush.msra.mxu0 %v4693
    %v4695 = vand.u32 %v276, 4294901760
    %4696 = vmatpush.msra.mxu0 %v4695
    %v4697 = vand.u32 %v272, 4294901760
    %4698 = vmatpush.msra.mxu0 %v4697
    %v4699 = vand.u32 %v268, 4294901760
    %4700 = vmatpush.msra.mxu0 %v4699
    %v4701 = vand.u32 %v264, 4294901760
    %4702 = vmatpush.msra.mxu0 %v4701
    %v4703 = vand.u32 %v260, 4294901760
    %4704 = vmatpush.msra.mxu0 %v4703
    %v4705 = vand.u32 %v256, 4294901760
    %4706 = vmatpush.msra.mxu0 %v4705
    %v4707 = vand.u32 %v252, 4294901760
    %4708 = vmatpush.msra.mxu0 %v4707
    %v4709 = vand.u32 %v248, 4294901760
    %4710 = vmatpush.msra.mxu0 %v4709
    %v4711 = vand.u32 %v920, 4294901760
    %v4712 = vsub.f32 %v920, %v4711
    %v4713 = vand.u32 %v4712, 4294901760
    %v4714 = vsub.f32 %v4712, %v4713
    %v4715 = vand.u32 %v4714, 4294901760
    %4716 = vmatmul.f32.gmra.mxu0 %v4715
    %v4717 = vpop.f32.mrf.mxu0
    %v4718 = vadd.f32 %v4677, %v4717
    %4719 = vdwg.mxu0
    %v4720 = vand.u32 %v308, 4294901760
    %v4721 = vsub.f32 %v308, %v4720
    %v4722 = vand.u32 %v4721, 4294901760
    %v4723 = vsub.f32 %v4721, %v4722
    %v4724 = vand.u32 %v4723, 4294901760
    %4725 = vmatpush.msra.mxu0 %v4724
    %v4726 = vand.u32 %v304, 4294901760
    %v4727 = vsub.f32 %v304, %v4726
    %v4728 = vand.u32 %v4727, 4294901760
    %v4729 = vsub.f32 %v4727, %v4728
    %v4730 = vand.u32 %v4729, 4294901760
    %4731 = vmatpush.msra.mxu0 %v4730
    %v4732 = vand.u32 %v300, 4294901760
    %v4733 = vsub.f32 %v300, %v4732
    %v4734 = vand.u32 %v4733, 4294901760
    %v4735 = vsub.f32 %v4733, %v4734
    %v4736 = vand.u32 %v4735, 4294901760
    %4737 = vmatpush.msra.mxu0 %v4736
    %v4738 = vand.u32 %v296, 4294901760
    %v4739 = vsub.f32 %v296, %v4738
    %v4740 = vand.u32 %v4739, 4294901760
    %v4741 = vsub.f32 %v4739, %v4740
    %v4742 = vand.u32 %v4741, 4294901760
    %4743 = vmatpush.msra.mxu0 %v4742
    %v4744 = vand.u32 %v292, 4294901760
    %v4745 = vsub.f32 %v292, %v4744
    %v4746 = vand.u32 %v4745, 4294901760
    %v4747 = vsub.f32 %v4745, %v4746
    %v4748 = vand.u32 %v4747, 4294901760
    %4749 = vmatpush.msra.mxu0 %v4748
    %v4750 = vand.u32 %v288, 4294901760
    %v4751 = vsub.f32 %v288, %v4750
    %v4752 = vand.u32 %v4751, 4294901760
    %v4753 = vsub.f32 %v4751, %v4752
    %v4754 = vand.u32 %v4753, 4294901760
    %4755 = vmatpush.msra.mxu0 %v4754
    %v4756 = vand.u32 %v284, 4294901760
    %v4757 = vsub.f32 %v284, %v4756
    %v4758 = vand.u32 %v4757, 4294901760
    %v4759 = vsub.f32 %v4757, %v4758
    %v4760 = vand.u32 %v4759, 4294901760
    %4761 = vmatpush.msra.mxu0 %v4760
    %v4762 = vand.u32 %v280, 4294901760
    %v4763 = vsub.f32 %v280, %v4762
    %v4764 = vand.u32 %v4763, 4294901760
    %v4765 = vsub.f32 %v4763, %v4764
    %v4766 = vand.u32 %v4765, 4294901760
    %4767 = vmatpush.msra.mxu0 %v4766
    %v4768 = vand.u32 %v276, 4294901760
    %v4769 = vsub.f32 %v276, %v4768
    %v4770 = vand.u32 %v4769, 4294901760
    %v4771 = vsub.f32 %v4769, %v4770
    %v4772 = vand.u32 %v4771, 4294901760
    %4773 = vmatpush.msra.mxu0 %v4772
    %v4774 = vand.u32 %v272, 4294901760
    %v4775 = vsub.f32 %v272, %v4774
    %v4776 = vand.u32 %v4775, 4294901760
    %v4777 = vsub.f32 %v4775, %v4776
    %v4778 = vand.u32 %v4777, 4294901760
    %4779 = vmatpush.msra.mxu0 %v4778
    %v4780 = vand.u32 %v268, 4294901760
    %v4781 = vsub.f32 %v268, %v4780
    %v4782 = vand.u32 %v4781, 4294901760
    %v4783 = vsub.f32 %v4781, %v4782
    %v4784 = vand.u32 %v4783, 4294901760
    %4785 = vmatpush.msra.mxu0 %v4784
    %v4786 = vand.u32 %v264, 4294901760
    %v4787 = vsub.f32 %v264, %v4786
    %v4788 = vand.u32 %v4787, 4294901760
    %v4789 = vsub.f32 %v4787, %v4788
    %v4790 = vand.u32 %v4789, 4294901760
    %4791 = vmatpush.msra.mxu0 %v4790
    %v4792 = vand.u32 %v260, 4294901760
    %v4793 = vsub.f32 %v260, %v4792
    %v4794 = vand.u32 %v4793, 4294901760
    %v4795 = vsub.f32 %v4793, %v4794
    %v4796 = vand.u32 %v4795, 4294901760
    %4797 = vmatpush.msra.mxu0 %v4796
    %v4798 = vand.u32 %v256, 4294901760
    %v4799 = vsub.f32 %v256, %v4798
    %v4800 = vand.u32 %v4799, 4294901760
    %v4801 = vsub.f32 %v4799, %v4800
    %v4802 = vand.u32 %v4801, 4294901760
    %4803 = vmatpush.msra.mxu0 %v4802
    %v4804 = vand.u32 %v252, 4294901760
    %v4805 = vsub.f32 %v252, %v4804
    %v4806 = vand.u32 %v4805, 4294901760
    %v4807 = vsub.f32 %v4805, %v4806
    %v4808 = vand.u32 %v4807, 4294901760
    %4809 = vmatpush.msra.mxu0 %v4808
    %v4810 = vand.u32 %v248, 4294901760
    %v4811 = vsub.f32 %v248, %v4810
    %v4812 = vand.u32 %v4811, 4294901760
    %v4813 = vsub.f32 %v4811, %v4812
    %v4814 = vand.u32 %v4813, 4294901760
    %4815 = vmatpush.msra.mxu0 %v4814
    %v4816 = vand.u32 %v920, 4294901760
    %4817 = vmatmul.f32.gmra.mxu0 %v4816
    %v4818 = vpop.f32.mrf.mxu0
    %v4819 = vadd.f32 %v4718, %v4818
    %4820 = vdwg.mxu0
    %v4821 = vand.u32 %v308, 4294901760
    %v4822 = vsub.f32 %v308, %v4821
    %4823 = vmatpush.msra.mxu0 %v4822
    %v4824 = vand.u32 %v304, 4294901760
    %v4825 = vsub.f32 %v304, %v4824
    %4826 = vmatpush.msra.mxu0 %v4825
    %v4827 = vand.u32 %v300, 4294901760
    %v4828 = vsub.f32 %v300, %v4827
    %4829 = vmatpush.msra.mxu0 %v4828
    %v4830 = vand.u32 %v296, 4294901760
    %v4831 = vsub.f32 %v296, %v4830
    %4832 = vmatpush.msra.mxu0 %v4831
    %v4833 = vand.u32 %v292, 4294901760
    %v4834 = vsub.f32 %v292, %v4833
    %4835 = vmatpush.msra.mxu0 %v4834
    %v4836 = vand.u32 %v288, 4294901760
    %v4837 = vsub.f32 %v288, %v4836
    %4838 = vmatpush.msra.mxu0 %v4837
    %v4839 = vand.u32 %v284, 4294901760
    %v4840 = vsub.f32 %v284, %v4839
    %4841 = vmatpush.msra.mxu0 %v4840
    %v4842 = vand.u32 %v280, 4294901760
    %v4843 = vsub.f32 %v280, %v4842
    %4844 = vmatpush.msra.mxu0 %v4843
    %v4845 = vand.u32 %v276, 4294901760
    %v4846 = vsub.f32 %v276, %v4845
    %4847 = vmatpush.msra.mxu0 %v4846
    %v4848 = vand.u32 %v272, 4294901760
    %v4849 = vsub.f32 %v272, %v4848
    %4850 = vmatpush.msra.mxu0 %v4849
    %v4851 = vand.u32 %v268, 4294901760
    %v4852 = vsub.f32 %v268, %v4851
    %4853 = vmatpush.msra.mxu0 %v4852
    %v4854 = vand.u32 %v264, 4294901760
    %v4855 = vsub.f32 %v264, %v4854
    %4856 = vmatpush.msra.mxu0 %v4855
    %v4857 = vand.u32 %v260, 4294901760
    %v4858 = vsub.f32 %v260, %v4857
    %4859 = vmatpush.msra.mxu0 %v4858
    %v4860 = vand.u32 %v256, 4294901760
    %v4861 = vsub.f32 %v256, %v4860
    %4862 = vmatpush.msra.mxu0 %v4861
    %v4863 = vand.u32 %v252, 4294901760
    %v4864 = vsub.f32 %v252, %v4863
    %4865 = vmatpush.msra.mxu0 %v4864
    %v4866 = vand.u32 %v248, 4294901760
    %v4867 = vsub.f32 %v248, %v4866
    %4868 = vmatpush.msra.mxu0 %v4867
    %v4869 = vand.u32 %v920, 4294901760
    %v4870 = vsub.f32 %v920, %v4869
    %4871 = vmatmul.f32.gmra.mxu0 %v4870
    %v4872 = vpop.f32.mrf.mxu0
    %v4873 = vadd.f32 %v4819, %v4872
    %4874 = vdwg.mxu0
    %v4875 = vand.u32 %v308, 4294901760
    %4876 = vmatpush.msra.mxu0 %v4875
    %v4877 = vand.u32 %v304, 4294901760
    %4878 = vmatpush.msra.mxu0 %v4877
    %v4879 = vand.u32 %v300, 4294901760
    %4880 = vmatpush.msra.mxu0 %v4879
    %v4881 = vand.u32 %v296, 4294901760
    %4882 = vmatpush.msra.mxu0 %v4881
    %v4883 = vand.u32 %v292, 4294901760
    %4884 = vmatpush.msra.mxu0 %v4883
    %v4885 = vand.u32 %v288, 4294901760
    %4886 = vmatpush.msra.mxu0 %v4885
    %v4887 = vand.u32 %v284, 4294901760
    %4888 = vmatpush.msra.mxu0 %v4887
    %v4889 = vand.u32 %v280, 4294901760
    %4890 = vmatpush.msra.mxu0 %v4889
    %v4891 = vand.u32 %v276, 4294901760
    %4892 = vmatpush.msra.mxu0 %v4891
    %v4893 = vand.u32 %v272, 4294901760
    %4894 = vmatpush.msra.mxu0 %v4893
    %v4895 = vand.u32 %v268, 4294901760
    %4896 = vmatpush.msra.mxu0 %v4895
    %v4897 = vand.u32 %v264, 4294901760
    %4898 = vmatpush.msra.mxu0 %v4897
    %v4899 = vand.u32 %v260, 4294901760
    %4900 = vmatpush.msra.mxu0 %v4899
    %v4901 = vand.u32 %v256, 4294901760
    %4902 = vmatpush.msra.mxu0 %v4901
    %v4903 = vand.u32 %v252, 4294901760
    %4904 = vmatpush.msra.mxu0 %v4903
    %v4905 = vand.u32 %v248, 4294901760
    %4906 = vmatpush.msra.mxu0 %v4905
    %v4907 = vand.u32 %v920, 4294901760
    %v4908 = vsub.f32 %v920, %v4907
    %v4909 = vand.u32 %v4908, 4294901760
    %4910 = vmatmul.f32.gmra.mxu0 %v4909
    %v4911 = vpop.f32.mrf.mxu0
    %v4912 = vadd.f32 %v4873, %v4911
    %4913 = vdwg.mxu0
    %v4914 = vand.u32 %v308, 4294901760
    %v4915 = vsub.f32 %v308, %v4914
    %v4916 = vand.u32 %v4915, 4294901760
    %4917 = vmatpush.msra.mxu0 %v4916
    %v4918 = vand.u32 %v304, 4294901760
    %v4919 = vsub.f32 %v304, %v4918
    %v4920 = vand.u32 %v4919, 4294901760
    %4921 = vmatpush.msra.mxu0 %v4920
    %v4922 = vand.u32 %v300, 4294901760
    %v4923 = vsub.f32 %v300, %v4922
    %v4924 = vand.u32 %v4923, 4294901760
    %4925 = vmatpush.msra.mxu0 %v4924
    %v4926 = vand.u32 %v296, 4294901760
    %v4927 = vsub.f32 %v296, %v4926
    %v4928 = vand.u32 %v4927, 4294901760
    %4929 = vmatpush.msra.mxu0 %v4928
    %v4930 = vand.u32 %v292, 4294901760
    %v4931 = vsub.f32 %v292, %v4930
    %v4932 = vand.u32 %v4931, 4294901760
    %4933 = vmatpush.msra.mxu0 %v4932
    %v4934 = vand.u32 %v288, 4294901760
    %v4935 = vsub.f32 %v288, %v4934
    %v4936 = vand.u32 %v4935, 4294901760
    %4937 = vmatpush.msra.mxu0 %v4936
    %v4938 = vand.u32 %v284, 4294901760
    %v4939 = vsub.f32 %v284, %v4938
    %v4940 = vand.u32 %v4939, 4294901760
    %4941 = vmatpush.msra.mxu0 %v4940
    %v4942 = vand.u32 %v280, 4294901760
    %v4943 = vsub.f32 %v280, %v4942
    %v4944 = vand.u32 %v4943, 4294901760
    %4945 = vmatpush.msra.mxu0 %v4944
    %v4946 = vand.u32 %v276, 4294901760
    %v4947 = vsub.f32 %v276, %v4946
    %v4948 = vand.u32 %v4947, 4294901760
    %4949 = vmatpush.msra.mxu0 %v4948
    %v4950 = vand.u32 %v272, 4294901760
    %v4951 = vsub.f32 %v272, %v4950
    %v4952 = vand.u32 %v4951, 4294901760
    %4953 = vmatpush.msra.mxu0 %v4952
    %v4954 = vand.u32 %v268, 4294901760
    %v4955 = vsub.f32 %v268, %v4954
    %v4956 = vand.u32 %v4955, 4294901760
    %4957 = vmatpush.msra.mxu0 %v4956
    %v4958 = vand.u32 %v264, 4294901760
    %v4959 = vsub.f32 %v264, %v4958
    %v4960 = vand.u32 %v4959, 4294901760
    %4961 = vmatpush.msra.mxu0 %v4960
    %v4962 = vand.u32 %v260, 4294901760
    %v4963 = vsub.f32 %v260, %v4962
    %v4964 = vand.u32 %v4963, 4294901760
    %4965 = vmatpush.msra.mxu0 %v4964
    %v4966 = vand.u32 %v256, 4294901760
    %v4967 = vsub.f32 %v256, %v4966
    %v4968 = vand.u32 %v4967, 4294901760
    %4969 = vmatpush.msra.mxu0 %v4968
    %v4970 = vand.u32 %v252, 4294901760
    %v4971 = vsub.f32 %v252, %v4970
    %v4972 = vand.u32 %v4971, 4294901760
    %4973 = vmatpush.msra.mxu0 %v4972
    %v4974 = vand.u32 %v248, 4294901760
    %v4975 = vsub.f32 %v248, %v4974
    %v4976 = vand.u32 %v4975, 4294901760
    %4977 = vmatpush.msra.mxu0 %v4976
    %v4978 = vand.u32 %v920, 4294901760
    %4979 = vmatmul.f32.gmra.mxu0 %v4978
    %v4980 = vpop.f32.mrf.mxu0
    %v4981 = vadd.f32 %v4912, %v4980
    %4982 = vdwg.mxu0
    %v4983 = vand.u32 %v308, 4294901760
    %4984 = vmatpush.msra.mxu0 %v4983
    %v4985 = vand.u32 %v304, 4294901760
    %4986 = vmatpush.msra.mxu0 %v4985
    %v4987 = vand.u32 %v300, 4294901760
    %4988 = vmatpush.msra.mxu0 %v4987
    %v4989 = vand.u32 %v296, 4294901760
    %4990 = vmatpush.msra.mxu0 %v4989
    %v4991 = vand.u32 %v292, 4294901760
    %4992 = vmatpush.msra.mxu0 %v4991
    %v4993 = vand.u32 %v288, 4294901760
    %4994 = vmatpush.msra.mxu0 %v4993
    %v4995 = vand.u32 %v284, 4294901760
    %4996 = vmatpush.msra.mxu0 %v4995
    %v4997 = vand.u32 %v280, 4294901760
    %4998 = vmatpush.msra.mxu0 %v4997
    %v4999 = vand.u32 %v276, 4294901760
    %5000 = vmatpush.msra.mxu0 %v4999
    %v5001 = vand.u32 %v272, 4294901760
    %5002 = vmatpush.msra.mxu0 %v5001
    %v5003 = vand.u32 %v268, 4294901760
    %5004 = vmatpush.msra.mxu0 %v5003
    %v5005 = vand.u32 %v264, 4294901760
    %5006 = vmatpush.msra.mxu0 %v5005
    %v5007 = vand.u32 %v260, 4294901760
    %5008 = vmatpush.msra.mxu0 %v5007
    %v5009 = vand.u32 %v256, 4294901760
    %5010 = vmatpush.msra.mxu0 %v5009
    %v5011 = vand.u32 %v252, 4294901760
    %5012 = vmatpush.msra.mxu0 %v5011
    %v5013 = vand.u32 %v248, 4294901760
    %5014 = vmatpush.msra.mxu0 %v5013
    %v5015 = vand.u32 %v920, 4294901760
    %5016 = vmatmul.f32.gmra.mxu0 %v5015
    %v5017 = vpop.f32.mrf.mxu0
    %v5018 = vadd.f32 %v4981, %v5017
    %5019 = vdwg.mxu0
    %v5020 = vand.u32 %v117, 4294901760
    %5021 = vmatpush.msra.mxu0 %v5020
    %v5022 = vand.u32 %v113, 4294901760
    %5023 = vmatpush.msra.mxu0 %v5022
    %v5024 = vand.u32 %v109, 4294901760
    %5025 = vmatpush.msra.mxu0 %v5024
    %v5026 = vand.u32 %v105, 4294901760
    %5027 = vmatpush.msra.mxu0 %v5026
    %v5028 = vand.u32 %v101, 4294901760
    %5029 = vmatpush.msra.mxu0 %v5028
    %v5030 = vand.u32 %v97, 4294901760
    %5031 = vmatpush.msra.mxu0 %v5030
    %v5032 = vand.u32 %v93, 4294901760
    %5033 = vmatpush.msra.mxu0 %v5032
    %v5034 = vand.u32 %v89, 4294901760
    %5035 = vmatpush.msra.mxu0 %v5034
    %v5036 = vand.u32 %v85, 4294901760
    %5037 = vmatpush.msra.mxu0 %v5036
    %v5038 = vand.u32 %v81, 4294901760
    %5039 = vmatpush.msra.mxu0 %v5038
    %v5040 = vand.u32 %v77, 4294901760
    %5041 = vmatpush.msra.mxu0 %v5040
    %v5042 = vand.u32 %v73, 4294901760
    %5043 = vmatpush.msra.mxu0 %v5042
    %v5044 = vand.u32 %v69, 4294901760
    %5045 = vmatpush.msra.mxu0 %v5044
    %v5046 = vand.u32 %v65, 4294901760
    %5047 = vmatpush.msra.mxu0 %v5046
    %v5048 = vand.u32 %v61, 4294901760
    %5049 = vmatpush.msra.mxu0 %v5048
    %v5050 = vand.u32 %v57, 4294901760
    %5051 = vmatpush.msra.mxu0 %v5050
    %v5052 = vand.u32 %v467, 4294901760
    %v5053 = vsub.f32 %v467, %v5052
    %v5054 = vand.u32 %v5053, 4294901760
    %v5055 = vsub.f32 %v5053, %v5054
    %v5056 = vand.u32 %v5055, 4294901760
    %5057 = vmatmul.f32.gmra.mxu0 %v5056
    %v5058 = vpop.f32.mrf.mxu0
    %v5059 = vadd.f32 %v926, %v5058
    %5060 = vdwg.mxu0
    %v5061 = vand.u32 %v117, 4294901760
    %v5062 = vsub.f32 %v117, %v5061
    %v5063 = vand.u32 %v5062, 4294901760
    %v5064 = vsub.f32 %v5062, %v5063
    %v5065 = vand.u32 %v5064, 4294901760
    %5066 = vmatpush.msra.mxu0 %v5065
    %v5067 = vand.u32 %v113, 4294901760
    %v5068 = vsub.f32 %v113, %v5067
    %v5069 = vand.u32 %v5068, 4294901760
    %v5070 = vsub.f32 %v5068, %v5069
    %v5071 = vand.u32 %v5070, 4294901760
    %5072 = vmatpush.msra.mxu0 %v5071
    %v5073 = vand.u32 %v109, 4294901760
    %v5074 = vsub.f32 %v109, %v5073
    %v5075 = vand.u32 %v5074, 4294901760
    %v5076 = vsub.f32 %v5074, %v5075
    %v5077 = vand.u32 %v5076, 4294901760
    %5078 = vmatpush.msra.mxu0 %v5077
    %v5079 = vand.u32 %v105, 4294901760
    %v5080 = vsub.f32 %v105, %v5079
    %v5081 = vand.u32 %v5080, 4294901760
    %v5082 = vsub.f32 %v5080, %v5081
    %v5083 = vand.u32 %v5082, 4294901760
    %5084 = vmatpush.msra.mxu0 %v5083
    %v5085 = vand.u32 %v101, 4294901760
    %v5086 = vsub.f32 %v101, %v5085
    %v5087 = vand.u32 %v5086, 4294901760
    %v5088 = vsub.f32 %v5086, %v5087
    %v5089 = vand.u32 %v5088, 4294901760
    %5090 = vmatpush.msra.mxu0 %v5089
    %v5091 = vand.u32 %v97, 4294901760
    %v5092 = vsub.f32 %v97, %v5091
    %v5093 = vand.u32 %v5092, 4294901760
    %v5094 = vsub.f32 %v5092, %v5093
    %v5095 = vand.u32 %v5094, 4294901760
    %5096 = vmatpush.msra.mxu0 %v5095
    %v5097 = vand.u32 %v93, 4294901760
    %v5098 = vsub.f32 %v93, %v5097
    %v5099 = vand.u32 %v5098, 4294901760
    %v5100 = vsub.f32 %v5098, %v5099
    %v5101 = vand.u32 %v5100, 4294901760
    %5102 = vmatpush.msra.mxu0 %v5101
    %v5103 = vand.u32 %v89, 4294901760
    %v5104 = vsub.f32 %v89, %v5103
    %v5105 = vand.u32 %v5104, 4294901760
    %v5106 = vsub.f32 %v5104, %v5105
    %v5107 = vand.u32 %v5106, 4294901760
    %5108 = vmatpush.msra.mxu0 %v5107
    %v5109 = vand.u32 %v85, 4294901760
    %v5110 = vsub.f32 %v85, %v5109
    %v5111 = vand.u32 %v5110, 4294901760
    %v5112 = vsub.f32 %v5110, %v5111
    %v5113 = vand.u32 %v5112, 4294901760
    %5114 = vmatpush.msra.mxu0 %v5113
    %v5115 = vand.u32 %v81, 4294901760
    %v5116 = vsub.f32 %v81, %v5115
    %v5117 = vand.u32 %v5116, 4294901760
    %v5118 = vsub.f32 %v5116, %v5117
    %v5119 = vand.u32 %v5118, 4294901760
    %5120 = vmatpush.msra.mxu0 %v5119
    %v5121 = vand.u32 %v77, 4294901760
    %v5122 = vsub.f32 %v77, %v5121
    %v5123 = vand.u32 %v5122, 4294901760
    %v5124 = vsub.f32 %v5122, %v5123
    %v5125 = vand.u32 %v5124, 4294901760
    %5126 = vmatpush.msra.mxu0 %v5125
    %v5127 = vand.u32 %v73, 4294901760
    %v5128 = vsub.f32 %v73, %v5127
    %v5129 = vand.u32 %v5128, 4294901760
    %v5130 = vsub.f32 %v5128, %v5129
    %v5131 = vand.u32 %v5130, 4294901760
    %5132 = vmatpush.msra.mxu0 %v5131
    %v5133 = vand.u32 %v69, 4294901760
    %v5134 = vsub.f32 %v69, %v5133
    %v5135 = vand.u32 %v5134, 4294901760
    %v5136 = vsub.f32 %v5134, %v5135
    %v5137 = vand.u32 %v5136, 4294901760
    %5138 = vmatpush.msra.mxu0 %v5137
    %v5139 = vand.u32 %v65, 4294901760
    %v5140 = vsub.f32 %v65, %v5139
    %v5141 = vand.u32 %v5140, 4294901760
    %v5142 = vsub.f32 %v5140, %v5141
    %v5143 = vand.u32 %v5142, 4294901760
    %5144 = vmatpush.msra.mxu0 %v5143
    %v5145 = vand.u32 %v61, 4294901760
    %v5146 = vsub.f32 %v61, %v5145
    %v5147 = vand.u32 %v5146, 4294901760
    %v5148 = vsub.f32 %v5146, %v5147
    %v5149 = vand.u32 %v5148, 4294901760
    %5150 = vmatpush.msra.mxu0 %v5149
    %v5151 = vand.u32 %v57, 4294901760
    %v5152 = vsub.f32 %v57, %v5151
    %v5153 = vand.u32 %v5152, 4294901760
    %v5154 = vsub.f32 %v5152, %v5153
    %v5155 = vand.u32 %v5154, 4294901760
    %5156 = vmatpush.msra.mxu0 %v5155
    %v5157 = vand.u32 %v467, 4294901760
    %5158 = vmatmul.f32.gmra.mxu0 %v5157
    %v5159 = vpop.f32.mrf.mxu0
    %v5160 = vadd.f32 %v5059, %v5159
    %5161 = vdwg.mxu0
    %v5162 = vand.u32 %v117, 4294901760
    %v5163 = vsub.f32 %v117, %v5162
    %5164 = vmatpush.msra.mxu0 %v5163
    %v5165 = vand.u32 %v113, 4294901760
    %v5166 = vsub.f32 %v113, %v5165
    %5167 = vmatpush.msra.mxu0 %v5166
    %v5168 = vand.u32 %v109, 4294901760
    %v5169 = vsub.f32 %v109, %v5168
    %5170 = vmatpush.msra.mxu0 %v5169
    %v5171 = vand.u32 %v105, 4294901760
    %v5172 = vsub.f32 %v105, %v5171
    %5173 = vmatpush.msra.mxu0 %v5172
    %v5174 = vand.u32 %v101, 4294901760
    %v5175 = vsub.f32 %v101, %v5174
    %5176 = vmatpush.msra.mxu0 %v5175
    %v5177 = vand.u32 %v97, 4294901760
    %v5178 = vsub.f32 %v97, %v5177
    %5179 = vmatpush.msra.mxu0 %v5178
    %v5180 = vand.u32 %v93, 4294901760
    %v5181 = vsub.f32 %v93, %v5180
    %5182 = vmatpush.msra.mxu0 %v5181
    %v5183 = vand.u32 %v89, 4294901760
    %v5184 = vsub.f32 %v89, %v5183
    %5185 = vmatpush.msra.mxu0 %v5184
    %v5186 = vand.u32 %v85, 4294901760
    %v5187 = vsub.f32 %v85, %v5186
    %5188 = vmatpush.msra.mxu0 %v5187
    %v5189 = vand.u32 %v81, 4294901760
    %v5190 = vsub.f32 %v81, %v5189
    %5191 = vmatpush.msra.mxu0 %v5190
    %v5192 = vand.u32 %v77, 4294901760
    %v5193 = vsub.f32 %v77, %v5192
    %5194 = vmatpush.msra.mxu0 %v5193
    %v5195 = vand.u32 %v73, 4294901760
    %v5196 = vsub.f32 %v73, %v5195
    %5197 = vmatpush.msra.mxu0 %v5196
    %v5198 = vand.u32 %v69, 4294901760
    %v5199 = vsub.f32 %v69, %v5198
    %5200 = vmatpush.msra.mxu0 %v5199
    %v5201 = vand.u32 %v65, 4294901760
    %v5202 = vsub.f32 %v65, %v5201
    %5203 = vmatpush.msra.mxu0 %v5202
    %v5204 = vand.u32 %v61, 4294901760
    %v5205 = vsub.f32 %v61, %v5204
    %5206 = vmatpush.msra.mxu0 %v5205
    %v5207 = vand.u32 %v57, 4294901760
    %v5208 = vsub.f32 %v57, %v5207
    %5209 = vmatpush.msra.mxu0 %v5208
    %v5210 = vand.u32 %v467, 4294901760
    %v5211 = vsub.f32 %v467, %v5210
    %5212 = vmatmul.f32.gmra.mxu0 %v5211
    %v5213 = vpop.f32.mrf.mxu0
    %v5214 = vadd.f32 %v5160, %v5213
    %5215 = vdwg.mxu0
    %v5216 = vand.u32 %v117, 4294901760
    %5217 = vmatpush.msra.mxu0 %v5216
    %v5218 = vand.u32 %v113, 4294901760
    %5219 = vmatpush.msra.mxu0 %v5218
    %v5220 = vand.u32 %v109, 4294901760
    %5221 = vmatpush.msra.mxu0 %v5220
    %v5222 = vand.u32 %v105, 4294901760
    %5223 = vmatpush.msra.mxu0 %v5222
    %v5224 = vand.u32 %v101, 4294901760
    %5225 = vmatpush.msra.mxu0 %v5224
    %v5226 = vand.u32 %v97, 4294901760
    %5227 = vmatpush.msra.mxu0 %v5226
    %v5228 = vand.u32 %v93, 4294901760
    %5229 = vmatpush.msra.mxu0 %v5228
    %v5230 = vand.u32 %v89, 4294901760
    %5231 = vmatpush.msra.mxu0 %v5230
    %v5232 = vand.u32 %v85, 4294901760
    %5233 = vmatpush.msra.mxu0 %v5232
    %v5234 = vand.u32 %v81, 4294901760
    %5235 = vmatpush.msra.mxu0 %v5234
    %v5236 = vand.u32 %v77, 4294901760
    %5237 = vmatpush.msra.mxu0 %v5236
    %v5238 = vand.u32 %v73, 4294901760
    %5239 = vmatpush.msra.mxu0 %v5238
    %v5240 = vand.u32 %v69, 4294901760
    %5241 = vmatpush.msra.mxu0 %v5240
    %v5242 = vand.u32 %v65, 4294901760
    %5243 = vmatpush.msra.mxu0 %v5242
    %v5244 = vand.u32 %v61, 4294901760
    %5245 = vmatpush.msra.mxu0 %v5244
    %v5246 = vand.u32 %v57, 4294901760
    %5247 = vmatpush.msra.mxu0 %v5246
    %v5248 = vand.u32 %v467, 4294901760
    %v5249 = vsub.f32 %v467, %v5248
    %v5250 = vand.u32 %v5249, 4294901760
    %5251 = vmatmul.f32.gmra.mxu0 %v5250
    %v5252 = vpop.f32.mrf.mxu0
    %v5253 = vadd.f32 %v5214, %v5252
    %5254 = vdwg.mxu0
    %v5255 = vand.u32 %v117, 4294901760
    %v5256 = vsub.f32 %v117, %v5255
    %v5257 = vand.u32 %v5256, 4294901760
    %5258 = vmatpush.msra.mxu0 %v5257
    %v5259 = vand.u32 %v113, 4294901760
    %v5260 = vsub.f32 %v113, %v5259
    %v5261 = vand.u32 %v5260, 4294901760
    %5262 = vmatpush.msra.mxu0 %v5261
    %v5263 = vand.u32 %v109, 4294901760
    %v5264 = vsub.f32 %v109, %v5263
    %v5265 = vand.u32 %v5264, 4294901760
    %5266 = vmatpush.msra.mxu0 %v5265
    %v5267 = vand.u32 %v105, 4294901760
    %v5268 = vsub.f32 %v105, %v5267
    %v5269 = vand.u32 %v5268, 4294901760
    %5270 = vmatpush.msra.mxu0 %v5269
    %v5271 = vand.u32 %v101, 4294901760
    %v5272 = vsub.f32 %v101, %v5271
    %v5273 = vand.u32 %v5272, 4294901760
    %5274 = vmatpush.msra.mxu0 %v5273
    %v5275 = vand.u32 %v97, 4294901760
    %v5276 = vsub.f32 %v97, %v5275
    %v5277 = vand.u32 %v5276, 4294901760
    %5278 = vmatpush.msra.mxu0 %v5277
    %v5279 = vand.u32 %v93, 4294901760
    %v5280 = vsub.f32 %v93, %v5279
    %v5281 = vand.u32 %v5280, 4294901760
    %5282 = vmatpush.msra.mxu0 %v5281
    %v5283 = vand.u32 %v89, 4294901760
    %v5284 = vsub.f32 %v89, %v5283
    %v5285 = vand.u32 %v5284, 4294901760
    %5286 = vmatpush.msra.mxu0 %v5285
    %v5287 = vand.u32 %v85, 4294901760
    %v5288 = vsub.f32 %v85, %v5287
    %v5289 = vand.u32 %v5288, 4294901760
    %5290 = vmatpush.msra.mxu0 %v5289
    %v5291 = vand.u32 %v81, 4294901760
    %v5292 = vsub.f32 %v81, %v5291
    %v5293 = vand.u32 %v5292, 4294901760
    %5294 = vmatpush.msra.mxu0 %v5293
    %v5295 = vand.u32 %v77, 4294901760
    %v5296 = vsub.f32 %v77, %v5295
    %v5297 = vand.u32 %v5296, 4294901760
    %5298 = vmatpush.msra.mxu0 %v5297
    %v5299 = vand.u32 %v73, 4294901760
    %v5300 = vsub.f32 %v73, %v5299
    %v5301 = vand.u32 %v5300, 4294901760
    %5302 = vmatpush.msra.mxu0 %v5301
    %v5303 = vand.u32 %v69, 4294901760
    %v5304 = vsub.f32 %v69, %v5303
    %v5305 = vand.u32 %v5304, 4294901760
    %5306 = vmatpush.msra.mxu0 %v5305
    %v5307 = vand.u32 %v65, 4294901760
    %v5308 = vsub.f32 %v65, %v5307
    %v5309 = vand.u32 %v5308, 4294901760
    %5310 = vmatpush.msra.mxu0 %v5309
    %v5311 = vand.u32 %v61, 4294901760
    %v5312 = vsub.f32 %v61, %v5311
    %v5313 = vand.u32 %v5312, 4294901760
    %5314 = vmatpush.msra.mxu0 %v5313
    %v5315 = vand.u32 %v57, 4294901760
    %v5316 = vsub.f32 %v57, %v5315
    %v5317 = vand.u32 %v5316, 4294901760
    %5318 = vmatpush.msra.mxu0 %v5317
    %v5319 = vand.u32 %v467, 4294901760
    %5320 = vmatmul.f32.gmra.mxu0 %v5319
    %v5321 = vpop.f32.mrf.mxu0
    %v5322 = vadd.f32 %v5253, %v5321
    %5323 = vdwg.mxu0
    %v5324 = vand.u32 %v117, 4294901760
    %5325 = vmatpush.msra.mxu0 %v5324
    %v5326 = vand.u32 %v113, 4294901760
    %5327 = vmatpush.msra.mxu0 %v5326
    %v5328 = vand.u32 %v109, 4294901760
    %5329 = vmatpush.msra.mxu0 %v5328
    %v5330 = vand.u32 %v105, 4294901760
    %5331 = vmatpush.msra.mxu0 %v5330
    %v5332 = vand.u32 %v101, 4294901760
    %5333 = vmatpush.msra.mxu0 %v5332
    %v5334 = vand.u32 %v97, 4294901760
    %5335 = vmatpush.msra.mxu0 %v5334
    %v5336 = vand.u32 %v93, 4294901760
    %5337 = vmatpush.msra.mxu0 %v5336
    %v5338 = vand.u32 %v89, 4294901760
    %5339 = vmatpush.msra.mxu0 %v5338
    %v5340 = vand.u32 %v85, 4294901760
    %5341 = vmatpush.msra.mxu0 %v5340
    %v5342 = vand.u32 %v81, 4294901760
    %5343 = vmatpush.msra.mxu0 %v5342
    %v5344 = vand.u32 %v77, 4294901760
    %5345 = vmatpush.msra.mxu0 %v5344
    %v5346 = vand.u32 %v73, 4294901760
    %5347 = vmatpush.msra.mxu0 %v5346
    %v5348 = vand.u32 %v69, 4294901760
    %5349 = vmatpush.msra.mxu0 %v5348
    %v5350 = vand.u32 %v65, 4294901760
    %5351 = vmatpush.msra.mxu0 %v5350
    %v5352 = vand.u32 %v61, 4294901760
    %5353 = vmatpush.msra.mxu0 %v5352
    %v5354 = vand.u32 %v57, 4294901760
    %5355 = vmatpush.msra.mxu0 %v5354
    %v5356 = vand.u32 %v467, 4294901760
    %5357 = vmatmul.f32.gmra.mxu0 %v5356
    %v5358 = vpop.f32.mrf.mxu0
    %v5359 = vadd.f32 %v5322, %v5358
    %5360 = vdwg.mxu0
    %v5361 = vand.u32 %v181, 4294901760
    %5362 = vmatpush.msra.mxu0 %v5361
    %v5363 = vand.u32 %v177, 4294901760
    %5364 = vmatpush.msra.mxu0 %v5363
    %v5365 = vand.u32 %v173, 4294901760
    %5366 = vmatpush.msra.mxu0 %v5365
    %v5367 = vand.u32 %v169, 4294901760
    %5368 = vmatpush.msra.mxu0 %v5367
    %v5369 = vand.u32 %v165, 4294901760
    %5370 = vmatpush.msra.mxu0 %v5369
    %v5371 = vand.u32 %v161, 4294901760
    %5372 = vmatpush.msra.mxu0 %v5371
    %v5373 = vand.u32 %v157, 4294901760
    %5374 = vmatpush.msra.mxu0 %v5373
    %v5375 = vand.u32 %v153, 4294901760
    %5376 = vmatpush.msra.mxu0 %v5375
    %v5377 = vand.u32 %v149, 4294901760
    %5378 = vmatpush.msra.mxu0 %v5377
    %v5379 = vand.u32 %v145, 4294901760
    %5380 = vmatpush.msra.mxu0 %v5379
    %v5381 = vand.u32 %v141, 4294901760
    %5382 = vmatpush.msra.mxu0 %v5381
    %v5383 = vand.u32 %v137, 4294901760
    %5384 = vmatpush.msra.mxu0 %v5383
    %v5385 = vand.u32 %v133, 4294901760
    %5386 = vmatpush.msra.mxu0 %v5385
    %v5387 = vand.u32 %v129, 4294901760
    %5388 = vmatpush.msra.mxu0 %v5387
    %v5389 = vand.u32 %v125, 4294901760
    %5390 = vmatpush.msra.mxu0 %v5389
    %v5391 = vand.u32 %v121, 4294901760
    %5392 = vmatpush.msra.mxu0 %v5391
    %v5393 = vand.u32 %v618, 4294901760
    %v5394 = vsub.f32 %v618, %v5393
    %v5395 = vand.u32 %v5394, 4294901760
    %v5396 = vsub.f32 %v5394, %v5395
    %v5397 = vand.u32 %v5396, 4294901760
    %5398 = vmatmul.f32.gmra.mxu0 %v5397
    %v5399 = vpop.f32.mrf.mxu0
    %v5400 = vadd.f32 %v5359, %v5399
    %5401 = vdwg.mxu0
    %v5402 = vand.u32 %v181, 4294901760
    %v5403 = vsub.f32 %v181, %v5402
    %v5404 = vand.u32 %v5403, 4294901760
    %v5405 = vsub.f32 %v5403, %v5404
    %v5406 = vand.u32 %v5405, 4294901760
    %5407 = vmatpush.msra.mxu0 %v5406
    %v5408 = vand.u32 %v177, 4294901760
    %v5409 = vsub.f32 %v177, %v5408
    %v5410 = vand.u32 %v5409, 4294901760
    %v5411 = vsub.f32 %v5409, %v5410
    %v5412 = vand.u32 %v5411, 4294901760
    %5413 = vmatpush.msra.mxu0 %v5412
    %v5414 = vand.u32 %v173, 4294901760
    %v5415 = vsub.f32 %v173, %v5414
    %v5416 = vand.u32 %v5415, 4294901760
    %v5417 = vsub.f32 %v5415, %v5416
    %v5418 = vand.u32 %v5417, 4294901760
    %5419 = vmatpush.msra.mxu0 %v5418
    %v5420 = vand.u32 %v169, 4294901760
    %v5421 = vsub.f32 %v169, %v5420
    %v5422 = vand.u32 %v5421, 4294901760
    %v5423 = vsub.f32 %v5421, %v5422
    %v5424 = vand.u32 %v5423, 4294901760
    %5425 = vmatpush.msra.mxu0 %v5424
    %v5426 = vand.u32 %v165, 4294901760
    %v5427 = vsub.f32 %v165, %v5426
    %v5428 = vand.u32 %v5427, 4294901760
    %v5429 = vsub.f32 %v5427, %v5428
    %v5430 = vand.u32 %v5429, 4294901760
    %5431 = vmatpush.msra.mxu0 %v5430
    %v5432 = vand.u32 %v161, 4294901760
    %v5433 = vsub.f32 %v161, %v5432
    %v5434 = vand.u32 %v5433, 4294901760
    %v5435 = vsub.f32 %v5433, %v5434
    %v5436 = vand.u32 %v5435, 4294901760
    %5437 = vmatpush.msra.mxu0 %v5436
    %v5438 = vand.u32 %v157, 4294901760
    %v5439 = vsub.f32 %v157, %v5438
    %v5440 = vand.u32 %v5439, 4294901760
    %v5441 = vsub.f32 %v5439, %v5440
    %v5442 = vand.u32 %v5441, 4294901760
    %5443 = vmatpush.msra.mxu0 %v5442
    %v5444 = vand.u32 %v153, 4294901760
    %v5445 = vsub.f32 %v153, %v5444
    %v5446 = vand.u32 %v5445, 4294901760
    %v5447 = vsub.f32 %v5445, %v5446
    %v5448 = vand.u32 %v5447, 4294901760
    %5449 = vmatpush.msra.mxu0 %v5448
    %v5450 = vand.u32 %v149, 4294901760
    %v5451 = vsub.f32 %v149, %v5450
    %v5452 = vand.u32 %v5451, 4294901760
    %v5453 = vsub.f32 %v5451, %v5452
    %v5454 = vand.u32 %v5453, 4294901760
    %5455 = vmatpush.msra.mxu0 %v5454
    %v5456 = vand.u32 %v145, 4294901760
    %v5457 = vsub.f32 %v145, %v5456
    %v5458 = vand.u32 %v5457, 4294901760
    %v5459 = vsub.f32 %v5457, %v5458
    %v5460 = vand.u32 %v5459, 4294901760
    %5461 = vmatpush.msra.mxu0 %v5460
    %v5462 = vand.u32 %v141, 4294901760
    %v5463 = vsub.f32 %v141, %v5462
    %v5464 = vand.u32 %v5463, 4294901760
    %v5465 = vsub.f32 %v5463, %v5464
    %v5466 = vand.u32 %v5465, 4294901760
    %5467 = vmatpush.msra.mxu0 %v5466
    %v5468 = vand.u32 %v137, 4294901760
    %v5469 = vsub.f32 %v137, %v5468
    %v5470 = vand.u32 %v5469, 4294901760
    %v5471 = vsub.f32 %v5469, %v5470
    %v5472 = vand.u32 %v5471, 4294901760
    %5473 = vmatpush.msra.mxu0 %v5472
    %v5474 = vand.u32 %v133, 4294901760
    %v5475 = vsub.f32 %v133, %v5474
    %v5476 = vand.u32 %v5475, 4294901760
    %v5477 = vsub.f32 %v5475, %v5476
    %v5478 = vand.u32 %v5477, 4294901760
    %5479 = vmatpush.msra.mxu0 %v5478
    %v5480 = vand.u32 %v129, 4294901760
    %v5481 = vsub.f32 %v129, %v5480
    %v5482 = vand.u32 %v5481, 4294901760
    %v5483 = vsub.f32 %v5481, %v5482
    %v5484 = vand.u32 %v5483, 4294901760
    %5485 = vmatpush.msra.mxu0 %v5484
    %v5486 = vand.u32 %v125, 4294901760
    %v5487 = vsub.f32 %v125, %v5486
    %v5488 = vand.u32 %v5487, 4294901760
    %v5489 = vsub.f32 %v5487, %v5488
    %v5490 = vand.u32 %v5489, 4294901760
    %5491 = vmatpush.msra.mxu0 %v5490
    %v5492 = vand.u32 %v121, 4294901760
    %v5493 = vsub.f32 %v121, %v5492
    %v5494 = vand.u32 %v5493, 4294901760
    %v5495 = vsub.f32 %v5493, %v5494
    %v5496 = vand.u32 %v5495, 4294901760
    %5497 = vmatpush.msra.mxu0 %v5496
    %v5498 = vand.u32 %v618, 4294901760
    %5499 = vmatmul.f32.gmra.mxu0 %v5498
    %v5500 = vpop.f32.mrf.mxu0
    %v5501 = vadd.f32 %v5400, %v5500
    %5502 = vdwg.mxu0
    %v5503 = vand.u32 %v181, 4294901760
    %v5504 = vsub.f32 %v181, %v5503
    %5505 = vmatpush.msra.mxu0 %v5504
    %v5506 = vand.u32 %v177, 4294901760
    %v5507 = vsub.f32 %v177, %v5506
    %5508 = vmatpush.msra.mxu0 %v5507
    %v5509 = vand.u32 %v173, 4294901760
    %v5510 = vsub.f32 %v173, %v5509
    %5511 = vmatpush.msra.mxu0 %v5510
    %v5512 = vand.u32 %v169, 4294901760
    %v5513 = vsub.f32 %v169, %v5512
    %5514 = vmatpush.msra.mxu0 %v5513
    %v5515 = vand.u32 %v165, 4294901760
    %v5516 = vsub.f32 %v165, %v5515
    %5517 = vmatpush.msra.mxu0 %v5516
    %v5518 = vand.u32 %v161, 4294901760
    %v5519 = vsub.f32 %v161, %v5518
    %5520 = vmatpush.msra.mxu0 %v5519
    %v5521 = vand.u32 %v157, 4294901760
    %v5522 = vsub.f32 %v157, %v5521
    %5523 = vmatpush.msra.mxu0 %v5522
    %v5524 = vand.u32 %v153, 4294901760
    %v5525 = vsub.f32 %v153, %v5524
    %5526 = vmatpush.msra.mxu0 %v5525
    %v5527 = vand.u32 %v149, 4294901760
    %v5528 = vsub.f32 %v149, %v5527
    %5529 = vmatpush.msra.mxu0 %v5528
    %v5530 = vand.u32 %v145, 4294901760
    %v5531 = vsub.f32 %v145, %v5530
    %5532 = vmatpush.msra.mxu0 %v5531
    %v5533 = vand.u32 %v141, 4294901760
    %v5534 = vsub.f32 %v141, %v5533
    %5535 = vmatpush.msra.mxu0 %v5534
    %v5536 = vand.u32 %v137, 4294901760
    %v5537 = vsub.f32 %v137, %v5536
    %5538 = vmatpush.msra.mxu0 %v5537
    %v5539 = vand.u32 %v133, 4294901760
    %v5540 = vsub.f32 %v133, %v5539
    %5541 = vmatpush.msra.mxu0 %v5540
    %v5542 = vand.u32 %v129, 4294901760
    %v5543 = vsub.f32 %v129, %v5542
    %5544 = vmatpush.msra.mxu0 %v5543
    %v5545 = vand.u32 %v125, 4294901760
    %v5546 = vsub.f32 %v125, %v5545
    %5547 = vmatpush.msra.mxu0 %v5546
    %v5548 = vand.u32 %v121, 4294901760
    %v5549 = vsub.f32 %v121, %v5548
    %5550 = vmatpush.msra.mxu0 %v5549
    %v5551 = vand.u32 %v618, 4294901760
    %v5552 = vsub.f32 %v618, %v5551
    %5553 = vmatmul.f32.gmra.mxu0 %v5552
    %v5554 = vpop.f32.mrf.mxu0
    %v5555 = vadd.f32 %v5501, %v5554
    %5556 = vdwg.mxu0
    %v5557 = vand.u32 %v181, 4294901760
    %5558 = vmatpush.msra.mxu0 %v5557
    %v5559 = vand.u32 %v177, 4294901760
    %5560 = vmatpush.msra.mxu0 %v5559
    %v5561 = vand.u32 %v173, 4294901760
    %5562 = vmatpush.msra.mxu0 %v5561
    %v5563 = vand.u32 %v169, 4294901760
    %5564 = vmatpush.msra.mxu0 %v5563
    %v5565 = vand.u32 %v165, 4294901760
    %5566 = vmatpush.msra.mxu0 %v5565
    %v5567 = vand.u32 %v161, 4294901760
    %5568 = vmatpush.msra.mxu0 %v5567
    %v5569 = vand.u32 %v157, 4294901760
    %5570 = vmatpush.msra.mxu0 %v5569
    %v5571 = vand.u32 %v153, 4294901760
    %5572 = vmatpush.msra.mxu0 %v5571
    %v5573 = vand.u32 %v149, 4294901760
    %5574 = vmatpush.msra.mxu0 %v5573
    %v5575 = vand.u32 %v145, 4294901760
    %5576 = vmatpush.msra.mxu0 %v5575
    %v5577 = vand.u32 %v141, 4294901760
    %5578 = vmatpush.msra.mxu0 %v5577
    %v5579 = vand.u32 %v137, 4294901760
    %5580 = vmatpush.msra.mxu0 %v5579
    %v5581 = vand.u32 %v133, 4294901760
    %5582 = vmatpush.msra.mxu0 %v5581
    %v5583 = vand.u32 %v129, 4294901760
    %5584 = vmatpush.msra.mxu0 %v5583
    %v5585 = vand.u32 %v125, 4294901760
    %5586 = vmatpush.msra.mxu0 %v5585
    %v5587 = vand.u32 %v121, 4294901760
    %5588 = vmatpush.msra.mxu0 %v5587
    %v5589 = vand.u32 %v618, 4294901760
    %v5590 = vsub.f32 %v618, %v5589
    %v5591 = vand.u32 %v5590, 4294901760
    %5592 = vmatmul.f32.gmra.mxu0 %v5591
    %v5593 = vpop.f32.mrf.mxu0
    %v5594 = vadd.f32 %v5555, %v5593
    %5595 = vdwg.mxu0
    %v5596 = vand.u32 %v181, 4294901760
    %v5597 = vsub.f32 %v181, %v5596
    %v5598 = vand.u32 %v5597, 4294901760
    %5599 = vmatpush.msra.mxu0 %v5598
    %v5600 = vand.u32 %v177, 4294901760
    %v5601 = vsub.f32 %v177, %v5600
    %v5602 = vand.u32 %v5601, 4294901760
    %5603 = vmatpush.msra.mxu0 %v5602
    %v5604 = vand.u32 %v173, 4294901760
    %v5605 = vsub.f32 %v173, %v5604
    %v5606 = vand.u32 %v5605, 4294901760
    %5607 = vmatpush.msra.mxu0 %v5606
    %v5608 = vand.u32 %v169, 4294901760
    %v5609 = vsub.f32 %v169, %v5608
    %v5610 = vand.u32 %v5609, 4294901760
    %5611 = vmatpush.msra.mxu0 %v5610
    %v5612 = vand.u32 %v165, 4294901760
    %v5613 = vsub.f32 %v165, %v5612
    %v5614 = vand.u32 %v5613, 4294901760
    %5615 = vmatpush.msra.mxu0 %v5614
    %v5616 = vand.u32 %v161, 4294901760
    %v5617 = vsub.f32 %v161, %v5616
    %v5618 = vand.u32 %v5617, 4294901760
    %5619 = vmatpush.msra.mxu0 %v5618
    %v5620 = vand.u32 %v157, 4294901760
    %v5621 = vsub.f32 %v157, %v5620
    %v5622 = vand.u32 %v5621, 4294901760
    %5623 = vmatpush.msra.mxu0 %v5622
    %v5624 = vand.u32 %v153, 4294901760
    %v5625 = vsub.f32 %v153, %v5624
    %v5626 = vand.u32 %v5625, 4294901760
    %5627 = vmatpush.msra.mxu0 %v5626
    %v5628 = vand.u32 %v149, 4294901760
    %v5629 = vsub.f32 %v149, %v5628
    %v5630 = vand.u32 %v5629, 4294901760
    %5631 = vmatpush.msra.mxu0 %v5630
    %v5632 = vand.u32 %v145, 4294901760
    %v5633 = vsub.f32 %v145, %v5632
    %v5634 = vand.u32 %v5633, 4294901760
    %5635 = vmatpush.msra.mxu0 %v5634
    %v5636 = vand.u32 %v141, 4294901760
    %v5637 = vsub.f32 %v141, %v5636
    %v5638 = vand.u32 %v5637, 4294901760
    %5639 = vmatpush.msra.mxu0 %v5638
    %v5640 = vand.u32 %v137, 4294901760
    %v5641 = vsub.f32 %v137, %v5640
    %v5642 = vand.u32 %v5641, 4294901760
    %5643 = vmatpush.msra.mxu0 %v5642
    %v5644 = vand.u32 %v133, 4294901760
    %v5645 = vsub.f32 %v133, %v5644
    %v5646 = vand.u32 %v5645, 4294901760
    %5647 = vmatpush.msra.mxu0 %v5646
    %v5648 = vand.u32 %v129, 4294901760
    %v5649 = vsub.f32 %v129, %v5648
    %v5650 = vand.u32 %v5649, 4294901760
    %5651 = vmatpush.msra.mxu0 %v5650
    %v5652 = vand.u32 %v125, 4294901760
    %v5653 = vsub.f32 %v125, %v5652
    %v5654 = vand.u32 %v5653, 4294901760
    %5655 = vmatpush.msra.mxu0 %v5654
    %v5656 = vand.u32 %v121, 4294901760
    %v5657 = vsub.f32 %v121, %v5656
    %v5658 = vand.u32 %v5657, 4294901760
    %5659 = vmatpush.msra.mxu0 %v5658
    %v5660 = vand.u32 %v618, 4294901760
    %5661 = vmatmul.f32.gmra.mxu0 %v5660
    %v5662 = vpop.f32.mrf.mxu0
    %v5663 = vadd.f32 %v5594, %v5662
    %5664 = vdwg.mxu0
    %v5665 = vand.u32 %v181, 4294901760
    %5666 = vmatpush.msra.mxu0 %v5665
    %v5667 = vand.u32 %v177, 4294901760
    %5668 = vmatpush.msra.mxu0 %v5667
    %v5669 = vand.u32 %v173, 4294901760
    %5670 = vmatpush.msra.mxu0 %v5669
    %v5671 = vand.u32 %v169, 4294901760
    %5672 = vmatpush.msra.mxu0 %v5671
    %v5673 = vand.u32 %v165, 4294901760
    %5674 = vmatpush.msra.mxu0 %v5673
    %v5675 = vand.u32 %v161, 4294901760
    %5676 = vmatpush.msra.mxu0 %v5675
    %v5677 = vand.u32 %v157, 4294901760
    %5678 = vmatpush.msra.mxu0 %v5677
    %v5679 = vand.u32 %v153, 4294901760
    %5680 = vmatpush.msra.mxu0 %v5679
    %v5681 = vand.u32 %v149, 4294901760
    %5682 = vmatpush.msra.mxu0 %v5681
    %v5683 = vand.u32 %v145, 4294901760
    %5684 = vmatpush.msra.mxu0 %v5683
    %v5685 = vand.u32 %v141, 4294901760
    %5686 = vmatpush.msra.mxu0 %v5685
    %v5687 = vand.u32 %v137, 4294901760
    %5688 = vmatpush.msra.mxu0 %v5687
    %v5689 = vand.u32 %v133, 4294901760
    %5690 = vmatpush.msra.mxu0 %v5689
    %v5691 = vand.u32 %v129, 4294901760
    %5692 = vmatpush.msra.mxu0 %v5691
    %v5693 = vand.u32 %v125, 4294901760
    %5694 = vmatpush.msra.mxu0 %v5693
    %v5695 = vand.u32 %v121, 4294901760
    %5696 = vmatpush.msra.mxu0 %v5695
    %v5697 = vand.u32 %v618, 4294901760
    %5698 = vmatmul.f32.gmra.mxu0 %v5697
    %v5699 = vpop.f32.mrf.mxu0
    %v5700 = vadd.f32 %v5663, %v5699
    %5701 = vdwg.mxu0
    %v5702 = vand.u32 %v245, 4294901760
    %5703 = vmatpush.msra.mxu0 %v5702
    %v5704 = vand.u32 %v241, 4294901760
    %5705 = vmatpush.msra.mxu0 %v5704
    %v5706 = vand.u32 %v237, 4294901760
    %5707 = vmatpush.msra.mxu0 %v5706
    %v5708 = vand.u32 %v233, 4294901760
    %5709 = vmatpush.msra.mxu0 %v5708
    %v5710 = vand.u32 %v229, 4294901760
    %5711 = vmatpush.msra.mxu0 %v5710
    %v5712 = vand.u32 %v225, 4294901760
    %5713 = vmatpush.msra.mxu0 %v5712
    %v5714 = vand.u32 %v221, 4294901760
    %5715 = vmatpush.msra.mxu0 %v5714
    %v5716 = vand.u32 %v217, 4294901760
    %5717 = vmatpush.msra.mxu0 %v5716
    %v5718 = vand.u32 %v213, 4294901760
    %5719 = vmatpush.msra.mxu0 %v5718
    %v5720 = vand.u32 %v209, 4294901760
    %5721 = vmatpush.msra.mxu0 %v5720
    %v5722 = vand.u32 %v205, 4294901760
    %5723 = vmatpush.msra.mxu0 %v5722
    %v5724 = vand.u32 %v201, 4294901760
    %5725 = vmatpush.msra.mxu0 %v5724
    %v5726 = vand.u32 %v197, 4294901760
    %5727 = vmatpush.msra.mxu0 %v5726
    %v5728 = vand.u32 %v193, 4294901760
    %5729 = vmatpush.msra.mxu0 %v5728
    %v5730 = vand.u32 %v189, 4294901760
    %5731 = vmatpush.msra.mxu0 %v5730
    %v5732 = vand.u32 %v185, 4294901760
    %5733 = vmatpush.msra.mxu0 %v5732
    %v5734 = vand.u32 %v769, 4294901760
    %v5735 = vsub.f32 %v769, %v5734
    %v5736 = vand.u32 %v5735, 4294901760
    %v5737 = vsub.f32 %v5735, %v5736
    %v5738 = vand.u32 %v5737, 4294901760
    %5739 = vmatmul.f32.gmra.mxu0 %v5738
    %v5740 = vpop.f32.mrf.mxu0
    %v5741 = vadd.f32 %v5700, %v5740
    %5742 = vdwg.mxu0
    %v5743 = vand.u32 %v245, 4294901760
    %v5744 = vsub.f32 %v245, %v5743
    %v5745 = vand.u32 %v5744, 4294901760
    %v5746 = vsub.f32 %v5744, %v5745
    %v5747 = vand.u32 %v5746, 4294901760
    %5748 = vmatpush.msra.mxu0 %v5747
    %v5749 = vand.u32 %v241, 4294901760
    %v5750 = vsub.f32 %v241, %v5749
    %v5751 = vand.u32 %v5750, 4294901760
    %v5752 = vsub.f32 %v5750, %v5751
    %v5753 = vand.u32 %v5752, 4294901760
    %5754 = vmatpush.msra.mxu0 %v5753
    %v5755 = vand.u32 %v237, 4294901760
    %v5756 = vsub.f32 %v237, %v5755
    %v5757 = vand.u32 %v5756, 4294901760
    %v5758 = vsub.f32 %v5756, %v5757
    %v5759 = vand.u32 %v5758, 4294901760
    %5760 = vmatpush.msra.mxu0 %v5759
    %v5761 = vand.u32 %v233, 4294901760
    %v5762 = vsub.f32 %v233, %v5761
    %v5763 = vand.u32 %v5762, 4294901760
    %v5764 = vsub.f32 %v5762, %v5763
    %v5765 = vand.u32 %v5764, 4294901760
    %5766 = vmatpush.msra.mxu0 %v5765
    %v5767 = vand.u32 %v229, 4294901760
    %v5768 = vsub.f32 %v229, %v5767
    %v5769 = vand.u32 %v5768, 4294901760
    %v5770 = vsub.f32 %v5768, %v5769
    %v5771 = vand.u32 %v5770, 4294901760
    %5772 = vmatpush.msra.mxu0 %v5771
    %v5773 = vand.u32 %v225, 4294901760
    %v5774 = vsub.f32 %v225, %v5773
    %v5775 = vand.u32 %v5774, 4294901760
    %v5776 = vsub.f32 %v5774, %v5775
    %v5777 = vand.u32 %v5776, 4294901760
    %5778 = vmatpush.msra.mxu0 %v5777
    %v5779 = vand.u32 %v221, 4294901760
    %v5780 = vsub.f32 %v221, %v5779
    %v5781 = vand.u32 %v5780, 4294901760
    %v5782 = vsub.f32 %v5780, %v5781
    %v5783 = vand.u32 %v5782, 4294901760
    %5784 = vmatpush.msra.mxu0 %v5783
    %v5785 = vand.u32 %v217, 4294901760
    %v5786 = vsub.f32 %v217, %v5785
    %v5787 = vand.u32 %v5786, 4294901760
    %v5788 = vsub.f32 %v5786, %v5787
    %v5789 = vand.u32 %v5788, 4294901760
    %5790 = vmatpush.msra.mxu0 %v5789
    %v5791 = vand.u32 %v213, 4294901760
    %v5792 = vsub.f32 %v213, %v5791
    %v5793 = vand.u32 %v5792, 4294901760
    %v5794 = vsub.f32 %v5792, %v5793
    %v5795 = vand.u32 %v5794, 4294901760
    %5796 = vmatpush.msra.mxu0 %v5795
    %v5797 = vand.u32 %v209, 4294901760
    %v5798 = vsub.f32 %v209, %v5797
    %v5799 = vand.u32 %v5798, 4294901760
    %v5800 = vsub.f32 %v5798, %v5799
    %v5801 = vand.u32 %v5800, 4294901760
    %5802 = vmatpush.msra.mxu0 %v5801
    %v5803 = vand.u32 %v205, 4294901760
    %v5804 = vsub.f32 %v205, %v5803
    %v5805 = vand.u32 %v5804, 4294901760
    %v5806 = vsub.f32 %v5804, %v5805
    %v5807 = vand.u32 %v5806, 4294901760
    %5808 = vmatpush.msra.mxu0 %v5807
    %v5809 = vand.u32 %v201, 4294901760
    %v5810 = vsub.f32 %v201, %v5809
    %v5811 = vand.u32 %v5810, 4294901760
    %v5812 = vsub.f32 %v5810, %v5811
    %v5813 = vand.u32 %v5812, 4294901760
    %5814 = vmatpush.msra.mxu0 %v5813
    %v5815 = vand.u32 %v197, 4294901760
    %v5816 = vsub.f32 %v197, %v5815
    %v5817 = vand.u32 %v5816, 4294901760
    %v5818 = vsub.f32 %v5816, %v5817
    %v5819 = vand.u32 %v5818, 4294901760
    %5820 = vmatpush.msra.mxu0 %v5819
    %v5821 = vand.u32 %v193, 4294901760
    %v5822 = vsub.f32 %v193, %v5821
    %v5823 = vand.u32 %v5822, 4294901760
    %v5824 = vsub.f32 %v5822, %v5823
    %v5825 = vand.u32 %v5824, 4294901760
    %5826 = vmatpush.msra.mxu0 %v5825
    %v5827 = vand.u32 %v189, 4294901760
    %v5828 = vsub.f32 %v189, %v5827
    %v5829 = vand.u32 %v5828, 4294901760
    %v5830 = vsub.f32 %v5828, %v5829
    %v5831 = vand.u32 %v5830, 4294901760
    %5832 = vmatpush.msra.mxu0 %v5831
    %v5833 = vand.u32 %v185, 4294901760
    %v5834 = vsub.f32 %v185, %v5833
    %v5835 = vand.u32 %v5834, 4294901760
    %v5836 = vsub.f32 %v5834, %v5835
    %v5837 = vand.u32 %v5836, 4294901760
    %5838 = vmatpush.msra.mxu0 %v5837
    %v5839 = vand.u32 %v769, 4294901760
    %5840 = vmatmul.f32.gmra.mxu0 %v5839
    %v5841 = vpop.f32.mrf.mxu0
    %v5842 = vadd.f32 %v5741, %v5841
    %5843 = vdwg.mxu0
    %v5844 = vand.u32 %v245, 4294901760
    %v5845 = vsub.f32 %v245, %v5844
    %5846 = vmatpush.msra.mxu0 %v5845
    %v5847 = vand.u32 %v241, 4294901760
    %v5848 = vsub.f32 %v241, %v5847
    %5849 = vmatpush.msra.mxu0 %v5848
    %v5850 = vand.u32 %v237, 4294901760
    %v5851 = vsub.f32 %v237, %v5850
    %5852 = vmatpush.msra.mxu0 %v5851
    %v5853 = vand.u32 %v233, 4294901760
    %v5854 = vsub.f32 %v233, %v5853
    %5855 = vmatpush.msra.mxu0 %v5854
    %v5856 = vand.u32 %v229, 4294901760
    %v5857 = vsub.f32 %v229, %v5856
    %5858 = vmatpush.msra.mxu0 %v5857
    %v5859 = vand.u32 %v225, 4294901760
    %v5860 = vsub.f32 %v225, %v5859
    %5861 = vmatpush.msra.mxu0 %v5860
    %v5862 = vand.u32 %v221, 4294901760
    %v5863 = vsub.f32 %v221, %v5862
    %5864 = vmatpush.msra.mxu0 %v5863
    %v5865 = vand.u32 %v217, 4294901760
    %v5866 = vsub.f32 %v217, %v5865
    %5867 = vmatpush.msra.mxu0 %v5866
    %v5868 = vand.u32 %v213, 4294901760
    %v5869 = vsub.f32 %v213, %v5868
    %5870 = vmatpush.msra.mxu0 %v5869
    %v5871 = vand.u32 %v209, 4294901760
    %v5872 = vsub.f32 %v209, %v5871
    %5873 = vmatpush.msra.mxu0 %v5872
    %v5874 = vand.u32 %v205, 4294901760
    %v5875 = vsub.f32 %v205, %v5874
    %5876 = vmatpush.msra.mxu0 %v5875
    %v5877 = vand.u32 %v201, 4294901760
    %v5878 = vsub.f32 %v201, %v5877
    %5879 = vmatpush.msra.mxu0 %v5878
    %v5880 = vand.u32 %v197, 4294901760
    %v5881 = vsub.f32 %v197, %v5880
    %5882 = vmatpush.msra.mxu0 %v5881
    %v5883 = vand.u32 %v193, 4294901760
    %v5884 = vsub.f32 %v193, %v5883
    %5885 = vmatpush.msra.mxu0 %v5884
    %v5886 = vand.u32 %v189, 4294901760
    %v5887 = vsub.f32 %v189, %v5886
    %5888 = vmatpush.msra.mxu0 %v5887
    %v5889 = vand.u32 %v185, 4294901760
    %v5890 = vsub.f32 %v185, %v5889
    %5891 = vmatpush.msra.mxu0 %v5890
    %v5892 = vand.u32 %v769, 4294901760
    %v5893 = vsub.f32 %v769, %v5892
    %5894 = vmatmul.f32.gmra.mxu0 %v5893
    %v5895 = vpop.f32.mrf.mxu0
    %v5896 = vadd.f32 %v5842, %v5895
    %5897 = vdwg.mxu0
    %v5898 = vand.u32 %v245, 4294901760
    %5899 = vmatpush.msra.mxu0 %v5898
    %v5900 = vand.u32 %v241, 4294901760
    %5901 = vmatpush.msra.mxu0 %v5900
    %v5902 = vand.u32 %v237, 4294901760
    %5903 = vmatpush.msra.mxu0 %v5902
    %v5904 = vand.u32 %v233, 4294901760
    %5905 = vmatpush.msra.mxu0 %v5904
    %v5906 = vand.u32 %v229, 4294901760
    %5907 = vmatpush.msra.mxu0 %v5906
    %v5908 = vand.u32 %v225, 4294901760
    %5909 = vmatpush.msra.mxu0 %v5908
    %v5910 = vand.u32 %v221, 4294901760
    %5911 = vmatpush.msra.mxu0 %v5910
    %v5912 = vand.u32 %v217, 4294901760
    %5913 = vmatpush.msra.mxu0 %v5912
    %v5914 = vand.u32 %v213, 4294901760
    %5915 = vmatpush.msra.mxu0 %v5914
    %v5916 = vand.u32 %v209, 4294901760
    %5917 = vmatpush.msra.mxu0 %v5916
    %v5918 = vand.u32 %v205, 4294901760
    %5919 = vmatpush.msra.mxu0 %v5918
    %v5920 = vand.u32 %v201, 4294901760
    %5921 = vmatpush.msra.mxu0 %v5920
    %v5922 = vand.u32 %v197, 4294901760
    %5923 = vmatpush.msra.mxu0 %v5922
    %v5924 = vand.u32 %v193, 4294901760
    %5925 = vmatpush.msra.mxu0 %v5924
    %v5926 = vand.u32 %v189, 4294901760
    %5927 = vmatpush.msra.mxu0 %v5926
    %v5928 = vand.u32 %v185, 4294901760
    %5929 = vmatpush.msra.mxu0 %v5928
    %v5930 = vand.u32 %v769, 4294901760
    %v5931 = vsub.f32 %v769, %v5930
    %v5932 = vand.u32 %v5931, 4294901760
    %5933 = vmatmul.f32.gmra.mxu0 %v5932
    %v5934 = vpop.f32.mrf.mxu0
    %v5935 = vadd.f32 %v5896, %v5934
    %5936 = vdwg.mxu0
    %v5937 = vand.u32 %v245, 4294901760
    %v5938 = vsub.f32 %v245, %v5937
    %v5939 = vand.u32 %v5938, 4294901760
    %5940 = vmatpush.msra.mxu0 %v5939
    %v5941 = vand.u32 %v241, 4294901760
    %v5942 = vsub.f32 %v241, %v5941
    %v5943 = vand.u32 %v5942, 4294901760
    %5944 = vmatpush.msra.mxu0 %v5943
    %v5945 = vand.u32 %v237, 4294901760
    %v5946 = vsub.f32 %v237, %v5945
    %v5947 = vand.u32 %v5946, 4294901760
    %5948 = vmatpush.msra.mxu0 %v5947
    %v5949 = vand.u32 %v233, 4294901760
    %v5950 = vsub.f32 %v233, %v5949
    %v5951 = vand.u32 %v5950, 4294901760
    %5952 = vmatpush.msra.mxu0 %v5951
    %v5953 = vand.u32 %v229, 4294901760
    %v5954 = vsub.f32 %v229, %v5953
    %v5955 = vand.u32 %v5954, 4294901760
    %5956 = vmatpush.msra.mxu0 %v5955
    %v5957 = vand.u32 %v225, 4294901760
    %v5958 = vsub.f32 %v225, %v5957
    %v5959 = vand.u32 %v5958, 4294901760
    %5960 = vmatpush.msra.mxu0 %v5959
    %v5961 = vand.u32 %v221, 4294901760
    %v5962 = vsub.f32 %v221, %v5961
    %v5963 = vand.u32 %v5962, 4294901760
    %5964 = vmatpush.msra.mxu0 %v5963
    %v5965 = vand.u32 %v217, 4294901760
    %v5966 = vsub.f32 %v217, %v5965
    %v5967 = vand.u32 %v5966, 4294901760
    %5968 = vmatpush.msra.mxu0 %v5967
    %v5969 = vand.u32 %v213, 4294901760
    %v5970 = vsub.f32 %v213, %v5969
    %v5971 = vand.u32 %v5970, 4294901760
    %5972 = vmatpush.msra.mxu0 %v5971
    %v5973 = vand.u32 %v209, 4294901760
    %v5974 = vsub.f32 %v209, %v5973
    %v5975 = vand.u32 %v5974, 4294901760
    %5976 = vmatpush.msra.mxu0 %v5975
    %v5977 = vand.u32 %v205, 4294901760
    %v5978 = vsub.f32 %v205, %v5977
    %v5979 = vand.u32 %v5978, 4294901760
    %5980 = vmatpush.msra.mxu0 %v5979
    %v5981 = vand.u32 %v201, 4294901760
    %v5982 = vsub.f32 %v201, %v5981
    %v5983 = vand.u32 %v5982, 4294901760
    %5984 = vmatpush.msra.mxu0 %v5983
    %v5985 = vand.u32 %v197, 4294901760
    %v5986 = vsub.f32 %v197, %v5985
    %v5987 = vand.u32 %v5986, 4294901760
    %5988 = vmatpush.msra.mxu0 %v5987
    %v5989 = vand.u32 %v193, 4294901760
    %v5990 = vsub.f32 %v193, %v5989
    %v5991 = vand.u32 %v5990, 4294901760
    %5992 = vmatpush.msra.mxu0 %v5991
    %v5993 = vand.u32 %v189, 4294901760
    %v5994 = vsub.f32 %v189, %v5993
    %v5995 = vand.u32 %v5994, 4294901760
    %5996 = vmatpush.msra.mxu0 %v5995
    %v5997 = vand.u32 %v185, 4294901760
    %v5998 = vsub.f32 %v185, %v5997
    %v5999 = vand.u32 %v5998, 4294901760
    %6000 = vmatpush.msra.mxu0 %v5999
    %v6001 = vand.u32 %v769, 4294901760
    %6002 = vmatmul.f32.gmra.mxu0 %v6001
    %v6003 = vpop.f32.mrf.mxu0
    %v6004 = vadd.f32 %v5935, %v6003
    %6005 = vdwg.mxu0
    %v6006 = vand.u32 %v245, 4294901760
    %6007 = vmatpush.msra.mxu0 %v6006
    %v6008 = vand.u32 %v241, 4294901760
    %6009 = vmatpush.msra.mxu0 %v6008
    %v6010 = vand.u32 %v237, 4294901760
    %6011 = vmatpush.msra.mxu0 %v6010
    %v6012 = vand.u32 %v233, 4294901760
    %6013 = vmatpush.msra.mxu0 %v6012
    %v6014 = vand.u32 %v229, 4294901760
    %6015 = vmatpush.msra.mxu0 %v6014
    %v6016 = vand.u32 %v225, 4294901760
    %6017 = vmatpush.msra.mxu0 %v6016
    %v6018 = vand.u32 %v221, 4294901760
    %6019 = vmatpush.msra.mxu0 %v6018
    %v6020 = vand.u32 %v217, 4294901760
    %6021 = vmatpush.msra.mxu0 %v6020
    %v6022 = vand.u32 %v213, 4294901760
    %6023 = vmatpush.msra.mxu0 %v6022
    %v6024 = vand.u32 %v209, 4294901760
    %6025 = vmatpush.msra.mxu0 %v6024
    %v6026 = vand.u32 %v205, 4294901760
    %6027 = vmatpush.msra.mxu0 %v6026
    %v6028 = vand.u32 %v201, 4294901760
    %6029 = vmatpush.msra.mxu0 %v6028
    %v6030 = vand.u32 %v197, 4294901760
    %6031 = vmatpush.msra.mxu0 %v6030
    %v6032 = vand.u32 %v193, 4294901760
    %6033 = vmatpush.msra.mxu0 %v6032
    %v6034 = vand.u32 %v189, 4294901760
    %6035 = vmatpush.msra.mxu0 %v6034
    %v6036 = vand.u32 %v185, 4294901760
    %6037 = vmatpush.msra.mxu0 %v6036
    %v6038 = vand.u32 %v769, 4294901760
    %6039 = vmatmul.f32.gmra.mxu0 %v6038
    %v6040 = vpop.f32.mrf.mxu0
    %v6041 = vadd.f32 %v6004, %v6040
    %6042 = vdwg.mxu0
    %v6043 = vand.u32 %v309, 4294901760
    %6044 = vmatpush.msra.mxu0 %v6043
    %v6045 = vand.u32 %v305, 4294901760
    %6046 = vmatpush.msra.mxu0 %v6045
    %v6047 = vand.u32 %v301, 4294901760
    %6048 = vmatpush.msra.mxu0 %v6047
    %v6049 = vand.u32 %v297, 4294901760
    %6050 = vmatpush.msra.mxu0 %v6049
    %v6051 = vand.u32 %v293, 4294901760
    %6052 = vmatpush.msra.mxu0 %v6051
    %v6053 = vand.u32 %v289, 4294901760
    %6054 = vmatpush.msra.mxu0 %v6053
    %v6055 = vand.u32 %v285, 4294901760
    %6056 = vmatpush.msra.mxu0 %v6055
    %v6057 = vand.u32 %v281, 4294901760
    %6058 = vmatpush.msra.mxu0 %v6057
    %v6059 = vand.u32 %v277, 4294901760
    %6060 = vmatpush.msra.mxu0 %v6059
    %v6061 = vand.u32 %v273, 4294901760
    %6062 = vmatpush.msra.mxu0 %v6061
    %v6063 = vand.u32 %v269, 4294901760
    %6064 = vmatpush.msra.mxu0 %v6063
    %v6065 = vand.u32 %v265, 4294901760
    %6066 = vmatpush.msra.mxu0 %v6065
    %v6067 = vand.u32 %v261, 4294901760
    %6068 = vmatpush.msra.mxu0 %v6067
    %v6069 = vand.u32 %v257, 4294901760
    %6070 = vmatpush.msra.mxu0 %v6069
    %v6071 = vand.u32 %v253, 4294901760
    %6072 = vmatpush.msra.mxu0 %v6071
    %v6073 = vand.u32 %v249, 4294901760
    %6074 = vmatpush.msra.mxu0 %v6073
    %v6075 = vand.u32 %v920, 4294901760
    %v6076 = vsub.f32 %v920, %v6075
    %v6077 = vand.u32 %v6076, 4294901760
    %v6078 = vsub.f32 %v6076, %v6077
    %v6079 = vand.u32 %v6078, 4294901760
    %6080 = vmatmul.f32.gmra.mxu0 %v6079
    %v6081 = vpop.f32.mrf.mxu0
    %v6082 = vadd.f32 %v6041, %v6081
    %6083 = vdwg.mxu0
    %v6084 = vand.u32 %v309, 4294901760
    %v6085 = vsub.f32 %v309, %v6084
    %v6086 = vand.u32 %v6085, 4294901760
    %v6087 = vsub.f32 %v6085, %v6086
    %v6088 = vand.u32 %v6087, 4294901760
    %6089 = vmatpush.msra.mxu0 %v6088
    %v6090 = vand.u32 %v305, 4294901760
    %v6091 = vsub.f32 %v305, %v6090
    %v6092 = vand.u32 %v6091, 4294901760
    %v6093 = vsub.f32 %v6091, %v6092
    %v6094 = vand.u32 %v6093, 4294901760
    %6095 = vmatpush.msra.mxu0 %v6094
    %v6096 = vand.u32 %v301, 4294901760
    %v6097 = vsub.f32 %v301, %v6096
    %v6098 = vand.u32 %v6097, 4294901760
    %v6099 = vsub.f32 %v6097, %v6098
    %v6100 = vand.u32 %v6099, 4294901760
    %6101 = vmatpush.msra.mxu0 %v6100
    %v6102 = vand.u32 %v297, 4294901760
    %v6103 = vsub.f32 %v297, %v6102
    %v6104 = vand.u32 %v6103, 4294901760
    %v6105 = vsub.f32 %v6103, %v6104
    %v6106 = vand.u32 %v6105, 4294901760
    %6107 = vmatpush.msra.mxu0 %v6106
    %v6108 = vand.u32 %v293, 4294901760
    %v6109 = vsub.f32 %v293, %v6108
    %v6110 = vand.u32 %v6109, 4294901760
    %v6111 = vsub.f32 %v6109, %v6110
    %v6112 = vand.u32 %v6111, 4294901760
    %6113 = vmatpush.msra.mxu0 %v6112
    %v6114 = vand.u32 %v289, 4294901760
    %v6115 = vsub.f32 %v289, %v6114
    %v6116 = vand.u32 %v6115, 4294901760
    %v6117 = vsub.f32 %v6115, %v6116
    %v6118 = vand.u32 %v6117, 4294901760
    %6119 = vmatpush.msra.mxu0 %v6118
    %v6120 = vand.u32 %v285, 4294901760
    %v6121 = vsub.f32 %v285, %v6120
    %v6122 = vand.u32 %v6121, 4294901760
    %v6123 = vsub.f32 %v6121, %v6122
    %v6124 = vand.u32 %v6123, 4294901760
    %6125 = vmatpush.msra.mxu0 %v6124
    %v6126 = vand.u32 %v281, 4294901760
    %v6127 = vsub.f32 %v281, %v6126
    %v6128 = vand.u32 %v6127, 4294901760
    %v6129 = vsub.f32 %v6127, %v6128
    %v6130 = vand.u32 %v6129, 4294901760
    %6131 = vmatpush.msra.mxu0 %v6130
    %v6132 = vand.u32 %v277, 4294901760
    %v6133 = vsub.f32 %v277, %v6132
    %v6134 = vand.u32 %v6133, 4294901760
    %v6135 = vsub.f32 %v6133, %v6134
    %v6136 = vand.u32 %v6135, 4294901760
    %6137 = vmatpush.msra.mxu0 %v6136
    %v6138 = vand.u32 %v273, 4294901760
    %v6139 = vsub.f32 %v273, %v6138
    %v6140 = vand.u32 %v6139, 4294901760
    %v6141 = vsub.f32 %v6139, %v6140
    %v6142 = vand.u32 %v6141, 4294901760
    %6143 = vmatpush.msra.mxu0 %v6142
    %v6144 = vand.u32 %v269, 4294901760
    %v6145 = vsub.f32 %v269, %v6144
    %v6146 = vand.u32 %v6145, 4294901760
    %v6147 = vsub.f32 %v6145, %v6146
    %v6148 = vand.u32 %v6147, 4294901760
    %6149 = vmatpush.msra.mxu0 %v6148
    %v6150 = vand.u32 %v265, 4294901760
    %v6151 = vsub.f32 %v265, %v6150
    %v6152 = vand.u32 %v6151, 4294901760
    %v6153 = vsub.f32 %v6151, %v6152
    %v6154 = vand.u32 %v6153, 4294901760
    %6155 = vmatpush.msra.mxu0 %v6154
    %v6156 = vand.u32 %v261, 4294901760
    %v6157 = vsub.f32 %v261, %v6156
    %v6158 = vand.u32 %v6157, 4294901760
    %v6159 = vsub.f32 %v6157, %v6158
    %v6160 = vand.u32 %v6159, 4294901760
    %6161 = vmatpush.msra.mxu0 %v6160
    %v6162 = vand.u32 %v257, 4294901760
    %v6163 = vsub.f32 %v257, %v6162
    %v6164 = vand.u32 %v6163, 4294901760
    %v6165 = vsub.f32 %v6163, %v6164
    %v6166 = vand.u32 %v6165, 4294901760
    %6167 = vmatpush.msra.mxu0 %v6166
    %v6168 = vand.u32 %v253, 4294901760
    %v6169 = vsub.f32 %v253, %v6168
    %v6170 = vand.u32 %v6169, 4294901760
    %v6171 = vsub.f32 %v6169, %v6170
    %v6172 = vand.u32 %v6171, 4294901760
    %6173 = vmatpush.msra.mxu0 %v6172
    %v6174 = vand.u32 %v249, 4294901760
    %v6175 = vsub.f32 %v249, %v6174
    %v6176 = vand.u32 %v6175, 4294901760
    %v6177 = vsub.f32 %v6175, %v6176
    %v6178 = vand.u32 %v6177, 4294901760
    %6179 = vmatpush.msra.mxu0 %v6178
    %v6180 = vand.u32 %v920, 4294901760
    %6181 = vmatmul.f32.gmra.mxu0 %v6180
    %v6182 = vpop.f32.mrf.mxu0
    %v6183 = vadd.f32 %v6082, %v6182
    %6184 = vdwg.mxu0
    %v6185 = vand.u32 %v309, 4294901760
    %v6186 = vsub.f32 %v309, %v6185
    %6187 = vmatpush.msra.mxu0 %v6186
    %v6188 = vand.u32 %v305, 4294901760
    %v6189 = vsub.f32 %v305, %v6188
    %6190 = vmatpush.msra.mxu0 %v6189
    %v6191 = vand.u32 %v301, 4294901760
    %v6192 = vsub.f32 %v301, %v6191
    %6193 = vmatpush.msra.mxu0 %v6192
    %v6194 = vand.u32 %v297, 4294901760
    %v6195 = vsub.f32 %v297, %v6194
    %6196 = vmatpush.msra.mxu0 %v6195
    %v6197 = vand.u32 %v293, 4294901760
    %v6198 = vsub.f32 %v293, %v6197
    %6199 = vmatpush.msra.mxu0 %v6198
    %v6200 = vand.u32 %v289, 4294901760
    %v6201 = vsub.f32 %v289, %v6200
    %6202 = vmatpush.msra.mxu0 %v6201
    %v6203 = vand.u32 %v285, 4294901760
    %v6204 = vsub.f32 %v285, %v6203
    %6205 = vmatpush.msra.mxu0 %v6204
    %v6206 = vand.u32 %v281, 4294901760
    %v6207 = vsub.f32 %v281, %v6206
    %6208 = vmatpush.msra.mxu0 %v6207
    %v6209 = vand.u32 %v277, 4294901760
    %v6210 = vsub.f32 %v277, %v6209
    %6211 = vmatpush.msra.mxu0 %v6210
    %v6212 = vand.u32 %v273, 4294901760
    %v6213 = vsub.f32 %v273, %v6212
    %6214 = vmatpush.msra.mxu0 %v6213
    %v6215 = vand.u32 %v269, 4294901760
    %v6216 = vsub.f32 %v269, %v6215
    %6217 = vmatpush.msra.mxu0 %v6216
    %v6218 = vand.u32 %v265, 4294901760
    %v6219 = vsub.f32 %v265, %v6218
    %6220 = vmatpush.msra.mxu0 %v6219
    %v6221 = vand.u32 %v261, 4294901760
    %v6222 = vsub.f32 %v261, %v6221
    %6223 = vmatpush.msra.mxu0 %v6222
    %v6224 = vand.u32 %v257, 4294901760
    %v6225 = vsub.f32 %v257, %v6224
    %6226 = vmatpush.msra.mxu0 %v6225
    %v6227 = vand.u32 %v253, 4294901760
    %v6228 = vsub.f32 %v253, %v6227
    %6229 = vmatpush.msra.mxu0 %v6228
    %v6230 = vand.u32 %v249, 4294901760
    %v6231 = vsub.f32 %v249, %v6230
    %6232 = vmatpush.msra.mxu0 %v6231
    %v6233 = vand.u32 %v920, 4294901760
    %v6234 = vsub.f32 %v920, %v6233
    %6235 = vmatmul.f32.gmra.mxu0 %v6234
    %v6236 = vpop.f32.mrf.mxu0
    %v6237 = vadd.f32 %v6183, %v6236
    %6238 = vdwg.mxu0
    %v6239 = vand.u32 %v309, 4294901760
    %6240 = vmatpush.msra.mxu0 %v6239
    %v6241 = vand.u32 %v305, 4294901760
    %6242 = vmatpush.msra.mxu0 %v6241
    %v6243 = vand.u32 %v301, 4294901760
    %6244 = vmatpush.msra.mxu0 %v6243
    %v6245 = vand.u32 %v297, 4294901760
    %6246 = vmatpush.msra.mxu0 %v6245
    %v6247 = vand.u32 %v293, 4294901760
    %6248 = vmatpush.msra.mxu0 %v6247
    %v6249 = vand.u32 %v289, 4294901760
    %6250 = vmatpush.msra.mxu0 %v6249
    %v6251 = vand.u32 %v285, 4294901760
    %6252 = vmatpush.msra.mxu0 %v6251
    %v6253 = vand.u32 %v281, 4294901760
    %6254 = vmatpush.msra.mxu0 %v6253
    %v6255 = vand.u32 %v277, 4294901760
    %6256 = vmatpush.msra.mxu0 %v6255
    %v6257 = vand.u32 %v273, 4294901760
    %6258 = vmatpush.msra.mxu0 %v6257
    %v6259 = vand.u32 %v269, 4294901760
    %6260 = vmatpush.msra.mxu0 %v6259
    %v6261 = vand.u32 %v265, 4294901760
    %6262 = vmatpush.msra.mxu0 %v6261
    %v6263 = vand.u32 %v261, 4294901760
    %6264 = vmatpush.msra.mxu0 %v6263
    %v6265 = vand.u32 %v257, 4294901760
    %6266 = vmatpush.msra.mxu0 %v6265
    %v6267 = vand.u32 %v253, 4294901760
    %6268 = vmatpush.msra.mxu0 %v6267
    %v6269 = vand.u32 %v249, 4294901760
    %6270 = vmatpush.msra.mxu0 %v6269
    %v6271 = vand.u32 %v920, 4294901760
    %v6272 = vsub.f32 %v920, %v6271
    %v6273 = vand.u32 %v6272, 4294901760
    %6274 = vmatmul.f32.gmra.mxu0 %v6273
    %v6275 = vpop.f32.mrf.mxu0
    %v6276 = vadd.f32 %v6237, %v6275
    %6277 = vdwg.mxu0
    %v6278 = vand.u32 %v309, 4294901760
    %v6279 = vsub.f32 %v309, %v6278
    %v6280 = vand.u32 %v6279, 4294901760
    %6281 = vmatpush.msra.mxu0 %v6280
    %v6282 = vand.u32 %v305, 4294901760
    %v6283 = vsub.f32 %v305, %v6282
    %v6284 = vand.u32 %v6283, 4294901760
    %6285 = vmatpush.msra.mxu0 %v6284
    %v6286 = vand.u32 %v301, 4294901760
    %v6287 = vsub.f32 %v301, %v6286
    %v6288 = vand.u32 %v6287, 4294901760
    %6289 = vmatpush.msra.mxu0 %v6288
    %v6290 = vand.u32 %v297, 4294901760
    %v6291 = vsub.f32 %v297, %v6290
    %v6292 = vand.u32 %v6291, 4294901760
    %6293 = vmatpush.msra.mxu0 %v6292
    %v6294 = vand.u32 %v293, 4294901760
    %v6295 = vsub.f32 %v293, %v6294
    %v6296 = vand.u32 %v6295, 4294901760
    %6297 = vmatpush.msra.mxu0 %v6296
    %v6298 = vand.u32 %v289, 4294901760
    %v6299 = vsub.f32 %v289, %v6298
    %v6300 = vand.u32 %v6299, 4294901760
    %6301 = vmatpush.msra.mxu0 %v6300
    %v6302 = vand.u32 %v285, 4294901760
    %v6303 = vsub.f32 %v285, %v6302
    %v6304 = vand.u32 %v6303, 4294901760
    %6305 = vmatpush.msra.mxu0 %v6304
    %v6306 = vand.u32 %v281, 4294901760
    %v6307 = vsub.f32 %v281, %v6306
    %v6308 = vand.u32 %v6307, 4294901760
    %6309 = vmatpush.msra.mxu0 %v6308
    %v6310 = vand.u32 %v277, 4294901760
    %v6311 = vsub.f32 %v277, %v6310
    %v6312 = vand.u32 %v6311, 4294901760
    %6313 = vmatpush.msra.mxu0 %v6312
    %v6314 = vand.u32 %v273, 4294901760
    %v6315 = vsub.f32 %v273, %v6314
    %v6316 = vand.u32 %v6315, 4294901760
    %6317 = vmatpush.msra.mxu0 %v6316
    %v6318 = vand.u32 %v269, 4294901760
    %v6319 = vsub.f32 %v269, %v6318
    %v6320 = vand.u32 %v6319, 4294901760
    %6321 = vmatpush.msra.mxu0 %v6320
    %v6322 = vand.u32 %v265, 4294901760
    %v6323 = vsub.f32 %v265, %v6322
    %v6324 = vand.u32 %v6323, 4294901760
    %6325 = vmatpush.msra.mxu0 %v6324
    %v6326 = vand.u32 %v261, 4294901760
    %v6327 = vsub.f32 %v261, %v6326
    %v6328 = vand.u32 %v6327, 4294901760
    %6329 = vmatpush.msra.mxu0 %v6328
    %v6330 = vand.u32 %v257, 4294901760
    %v6331 = vsub.f32 %v257, %v6330
    %v6332 = vand.u32 %v6331, 4294901760
    %6333 = vmatpush.msra.mxu0 %v6332
    %v6334 = vand.u32 %v253, 4294901760
    %v6335 = vsub.f32 %v253, %v6334
    %v6336 = vand.u32 %v6335, 4294901760
    %6337 = vmatpush.msra.mxu0 %v6336
    %v6338 = vand.u32 %v249, 4294901760
    %v6339 = vsub.f32 %v249, %v6338
    %v6340 = vand.u32 %v6339, 4294901760
    %6341 = vmatpush.msra.mxu0 %v6340
    %v6342 = vand.u32 %v920, 4294901760
    %6343 = vmatmul.f32.gmra.mxu0 %v6342
    %v6344 = vpop.f32.mrf.mxu0
    %v6345 = vadd.f32 %v6276, %v6344
    %6346 = vdwg.mxu0
    %v6347 = vand.u32 %v309, 4294901760
    %6348 = vmatpush.msra.mxu0 %v6347
    %v6349 = vand.u32 %v305, 4294901760
    %6350 = vmatpush.msra.mxu0 %v6349
    %v6351 = vand.u32 %v301, 4294901760
    %6352 = vmatpush.msra.mxu0 %v6351
    %v6353 = vand.u32 %v297, 4294901760
    %6354 = vmatpush.msra.mxu0 %v6353
    %v6355 = vand.u32 %v293, 4294901760
    %6356 = vmatpush.msra.mxu0 %v6355
    %v6357 = vand.u32 %v289, 4294901760
    %6358 = vmatpush.msra.mxu0 %v6357
    %v6359 = vand.u32 %v285, 4294901760
    %6360 = vmatpush.msra.mxu0 %v6359
    %v6361 = vand.u32 %v281, 4294901760
    %6362 = vmatpush.msra.mxu0 %v6361
    %v6363 = vand.u32 %v277, 4294901760
    %6364 = vmatpush.msra.mxu0 %v6363
    %v6365 = vand.u32 %v273, 4294901760
    %6366 = vmatpush.msra.mxu0 %v6365
    %v6367 = vand.u32 %v269, 4294901760
    %6368 = vmatpush.msra.mxu0 %v6367
    %v6369 = vand.u32 %v265, 4294901760
    %6370 = vmatpush.msra.mxu0 %v6369
    %v6371 = vand.u32 %v261, 4294901760
    %6372 = vmatpush.msra.mxu0 %v6371
    %v6373 = vand.u32 %v257, 4294901760
    %6374 = vmatpush.msra.mxu0 %v6373
    %v6375 = vand.u32 %v253, 4294901760
    %6376 = vmatpush.msra.mxu0 %v6375
    %v6377 = vand.u32 %v249, 4294901760
    %6378 = vmatpush.msra.mxu0 %v6377
    %v6379 = vand.u32 %v920, 4294901760
    %6380 = vmatmul.f32.gmra.mxu0 %v6379
    %v6381 = vpop.f32.mrf.mxu0
    %v6382 = vadd.f32 %v6345, %v6381
    %6383 = vdwg.mxu0
    %s6386 = scalar_lea.vmem [#allocation1], 1
    %6387 = vst [vmem:[%s6386] ss:$2 sm:$0xff] %v52
    %s6388 = scalar_lea.vmem [#allocation1], 17
    %6389 = vst [vmem:[%s6388] ss:$2 sm:$0xff] %v53
    %v6390 = vld.sshfl [vmem:[#allocation1] sm:$0xff pattern:$0x75316420]
    %v6391 = vld.sshfl [vmem:[#allocation1 + $0x8] sm:$0xff pattern:$0x75316420]
    %v6392 = vld.sshfl [vmem:[#allocation1 + $0x10] sm:$0xff pattern:$0x75316420]
    %v6393 = vld.sshfl [vmem:[#allocation1 + $0x18] sm:$0xff pattern:$0x75316420]
    %vm6398 = vcmask 1043456
    %v6399 = vsel %vm6398, %v2290, %v6390
    %v6400 = vsel %vm6398, %v3654, %v6391
    %v6401 = vsel %vm6398, %v5018, %v6392
    %v6402 = vsel %vm6398, %v6382, %v6393
    %6403 = vrot.lane.b32.xlu0 %v6399, 17
    %v6404 = vpop.permute.xlu0 %6403
    %6405 = vrot.lane.b32.xlu0 %v6400, 17
    %v6406 = vpop.permute.xlu0 %6405
    %6407 = vrot.lane.b32.xlu0 %v6401, 17
    %v6408 = vpop.permute.xlu0 %6407
    %6409 = vrot.lane.b32.xlu0 %v6402, 17
    %v6410 = vpop.permute.xlu0 %6409
    %v6411 = vlaneseq
    %v6412 = vand.u32 %v6411, 127
    %vm6413 = vcmp.lt.s32.totalorder %v6412, 17
    %v6414 = vsel %vm6413, %v6408, %v6410
    %v6415 = vsel %vm6413, %v6406, %v6408
    %v6416 = vsel %vm6413, %v6404, %v6406
    %v6417 = vsel %vm6413, %v6410, %v6404
    %v6418 = vperm.slane %v310, 0
    %v6419 = vperm.slane %v311, 0
    %v6420 = vperm.slane %v312, 0
    %v6421 = vperm.slane %v313, 0
    %v6422 = vmul.f32 %v6417, %v6418
    %v6423 = vmul.f32 %v6416, %v6419
    %v6424 = vmul.f32 %v6415, %v6420
    %v6425 = vmul.f32 %v6414, %v6421
    %6426 = vrot.lane.b32.xlu0 %v6399, 16
    %v6427 = vpop.permute.xlu0 %6426
    %6428 = vrot.lane.b32.xlu0 %v6400, 16
    %v6429 = vpop.permute.xlu0 %6428
    %6430 = vrot.lane.b32.xlu0 %v6401, 16
    %v6431 = vpop.permute.xlu0 %6430
    %6432 = vrot.lane.b32.xlu0 %v6402, 16
    %v6433 = vpop.permute.xlu0 %6432
    %vm6434 = vcmp.lt.s32.totalorder %v6412, 16
    %v6435 = vsel %vm6434, %v6431, %v6433
    %v6436 = vsel %vm6434, %v6429, %v6431
    %v6437 = vsel %vm6434, %v6427, %v6429
    %v6438 = vsel %vm6434, %v6433, %v6427
    %v6439 = vperm.slane %v310, 1
    %v6440 = vperm.slane %v311, 1
    %v6441 = vperm.slane %v312, 1
    %v6442 = vperm.slane %v313, 1
    %v6443 = vmul.f32 %v6438, %v6439
    %v6444 = vmul.f32 %v6437, %v6440
    %v6445 = vmul.f32 %v6436, %v6441
    %v6446 = vmul.f32 %v6435, %v6442
    %6447 = vrot.lane.b32.xlu0 %v6399, 15
    %v6448 = vpop.permute.xlu0 %6447
    %6449 = vrot.lane.b32.xlu0 %v6400, 15
    %v6450 = vpop.permute.xlu0 %6449
    %6451 = vrot.lane.b32.xlu0 %v6401, 15
    %v6452 = vpop.permute.xlu0 %6451
    %6453 = vrot.lane.b32.xlu0 %v6402, 15
    %v6454 = vpop.permute.xlu0 %6453
    %vm6455 = vcmp.lt.s32.totalorder %v6412, 15
    %v6456 = vsel %vm6455, %v6452, %v6454
    %v6457 = vsel %vm6455, %v6450, %v6452
    %v6458 = vsel %vm6455, %v6448, %v6450
    %v6459 = vsel %vm6455, %v6454, %v6448
    %v6460 = vperm.slane %v310, 2
    %v6461 = vperm.slane %v311, 2
    %v6462 = vperm.slane %v312, 2
    %v6463 = vperm.slane %v313, 2
    %v6464 = vmul.f32 %v6459, %v6460
    %v6465 = vmul.f32 %v6458, %v6461
    %v6466 = vmul.f32 %v6457, %v6462
    %v6467 = vmul.f32 %v6456, %v6463
    %6468 = vrot.lane.b32.xlu0 %v6399, 1
    %v6469 = vpop.permute.xlu0 %6468
    %6470 = vrot.lane.b32.xlu0 %v6400, 1
    %v6471 = vpop.permute.xlu0 %6470
    %6472 = vrot.lane.b32.xlu0 %v6401, 1
    %v6473 = vpop.permute.xlu0 %6472
    %6474 = vrot.lane.b32.xlu0 %v6402, 1
    %v6475 = vpop.permute.xlu0 %6474
    %vm6476 = vcmp.lt.s32.totalorder %v6412, 1
    %v6477 = vsel %vm6476, %v6473, %v6475
    %v6478 = vsel %vm6476, %v6471, %v6473
    %v6479 = vsel %vm6476, %v6469, %v6471
    %v6480 = vsel %vm6476, %v6475, %v6469
    %v6481 = vperm.slane %v310, 3
    %v6482 = vperm.slane %v311, 3
    %v6483 = vperm.slane %v312, 3
    %v6484 = vperm.slane %v313, 3
    %v6485 = vmul.f32 %v6480, %v6481
    %v6486 = vmul.f32 %v6479, %v6482
    %v6487 = vmul.f32 %v6478, %v6483
    %v6488 = vmul.f32 %v6477, %v6484
    %6489 = vrot.lane.b32.xlu0 %v6399, 127
    %v6490 = vpop.permute.xlu0 %6489
    %6491 = vrot.lane.b32.xlu0 %v6400, 127
    %v6492 = vpop.permute.xlu0 %6491
    %6493 = vrot.lane.b32.xlu0 %v6401, 127
    %v6494 = vpop.permute.xlu0 %6493
    %6495 = vrot.lane.b32.xlu0 %v6402, 127
    %v6496 = vpop.permute.xlu0 %6495
    %vm6497 = vcmp.lt.s32.totalorder %v6412, 127
    %v6498 = vsel %vm6497, %v6494, %v6496
    %v6499 = vsel %vm6497, %v6492, %v6494
    %v6500 = vsel %vm6497, %v6490, %v6492
    %v6501 = vsel %vm6497, %v6496, %v6490
    %v6502 = vperm.slane %v310, 5
    %v6503 = vperm.slane %v311, 5
    %v6504 = vperm.slane %v312, 5
    %v6505 = vperm.slane %v313, 5
    %v6506 = vmul.f32 %v6500, %v6502
    %v6507 = vmul.f32 %v6499, %v6503
    %v6508 = vmul.f32 %v6498, %v6504
    %v6509 = vmul.f32 %v6501, %v6505
    %6510 = vrot.lane.b32.xlu0 %v6399, 113
    %v6511 = vpop.permute.xlu0 %6510
    %6512 = vrot.lane.b32.xlu0 %v6400, 113
    %v6513 = vpop.permute.xlu0 %6512
    %6514 = vrot.lane.b32.xlu0 %v6401, 113
    %v6515 = vpop.permute.xlu0 %6514
    %6516 = vrot.lane.b32.xlu0 %v6402, 113
    %v6517 = vpop.permute.xlu0 %6516
    %vm6518 = vcmp.lt.s32.totalorder %v6412, 113
    %v6519 = vsel %vm6518, %v6515, %v6517
    %v6520 = vsel %vm6518, %v6513, %v6515
    %v6521 = vsel %vm6518, %v6511, %v6513
    %v6522 = vsel %vm6518, %v6517, %v6511
    %v6523 = vperm.slane %v310, 6
    %v6524 = vperm.slane %v311, 6
    %v6525 = vperm.slane %v312, 6
    %v6526 = vperm.slane %v313, 6
    %v6527 = vmul.f32 %v6521, %v6523
    %v6528 = vmul.f32 %v6520, %v6524
    %v6529 = vmul.f32 %v6519, %v6525
    %v6530 = vmul.f32 %v6522, %v6526
    %6531 = vrot.lane.b32.xlu0 %v6399, 112
    %v6532 = vpop.permute.xlu0 %6531
    %6533 = vrot.lane.b32.xlu0 %v6400, 112
    %v6534 = vpop.permute.xlu0 %6533
    %6535 = vrot.lane.b32.xlu0 %v6401, 112
    %v6536 = vpop.permute.xlu0 %6535
    %6537 = vrot.lane.b32.xlu0 %v6402, 112
    %v6538 = vpop.permute.xlu0 %6537
    %vm6539 = vcmp.lt.s32.totalorder %v6412, 112
    %v6540 = vsel %vm6539, %v6536, %v6538
    %v6541 = vsel %vm6539, %v6534, %v6536
    %v6542 = vsel %vm6539, %v6532, %v6534
    %v6543 = vsel %vm6539, %v6538, %v6532
    %v6544 = vperm.slane %v310, 7
    %v6545 = vperm.slane %v311, 7
    %v6546 = vperm.slane %v312, 7
    %v6547 = vperm.slane %v313, 7
    %v6548 = vmul.f32 %v6542, %v6544
    %v6549 = vmul.f32 %v6541, %v6545
    %v6550 = vmul.f32 %v6540, %v6546
    %v6551 = vmul.f32 %v6543, %v6547
    %6552 = vrot.lane.b32.xlu0 %v6399, 111
    %v6553 = vpop.permute.xlu0 %6552
    %6554 = vrot.lane.b32.xlu0 %v6400, 111
    %v6555 = vpop.permute.xlu0 %6554
    %6556 = vrot.lane.b32.xlu0 %v6401, 111
    %v6557 = vpop.permute.xlu0 %6556
    %6558 = vrot.lane.b32.xlu0 %v6402, 111
    %v6559 = vpop.permute.xlu0 %6558
    %vm6560 = vcmp.lt.s32.totalorder %v6412, 111
    %v6561 = vsel %vm6560, %v6557, %v6559
    %v6562 = vsel %vm6560, %v6555, %v6557
    %v6563 = vsel %vm6560, %v6553, %v6555
    %v6564 = vsel %vm6560, %v6559, %v6553
    %v6565 = vperm.slane %v314, 0
    %v6566 = vperm.slane %v315, 0
    %v6567 = vperm.slane %v316, 0
    %v6568 = vperm.slane %v317, 0
    %v6569 = vmul.f32 %v6563, %v6565
    %v6570 = vmul.f32 %v6562, %v6566
    %v6571 = vmul.f32 %v6561, %v6567
    %v6572 = vmul.f32 %v6564, %v6568
    %v6573 = vld [vmem:[%s6] sm:$0xf]
    %v6574 = vld [vmem:[%s7] sm:$0xf]
    %6576 = vset.pattern.permute.xlu0 0
    %6577 = vperm.xlu0 %6576, %v6574
    %v6578 = vpop.permute.xlu0 %6577
    %vm6580 = vcmask 588800
    %v6582 = vsel %vm6580, %v6573, 0
    %6584 = vmatpush.msra.mxu0 0.0
    %6585 = vmatpush.msra.mxu0 0.0
    %6586 = vmatpush.msra.mxu0 0.0
    %6587 = vmatpush.msra.mxu0 0.0
    %6588 = vmatpush.msra.mxu0 0.0
    %6589 = vmatpush.msra.mxu0 0.0
    %6590 = vmatpush.msra.mxu0 0.0
    %v6591 = vand.u32 %v6569, 4294901760
    %6592 = vmatpush.msra.mxu0 %v6591
    %v6593 = vand.u32 %v6548, 4294901760
    %6594 = vmatpush.msra.mxu0 %v6593
    %v6595 = vand.u32 %v6527, 4294901760
    %6596 = vmatpush.msra.mxu0 %v6595
    %v6597 = vand.u32 %v6506, 4294901760
    %6598 = vmatpush.msra.mxu0 %v6597
    %v6599 = vand.u32 %v6399, 4294901760
    %6600 = vmatpush.msra.mxu0 %v6599
    %v6601 = vand.u32 %v6485, 4294901760
    %6602 = vmatpush.msra.mxu0 %v6601
    %v6603 = vand.u32 %v6464, 4294901760
    %6604 = vmatpush.msra.mxu0 %v6603
    %v6605 = vand.u32 %v6443, 4294901760
    %6606 = vmatpush.msra.mxu0 %v6605
    %v6607 = vand.u32 %v6422, 4294901760
    %6608 = vmatpush.msra.mxu0 %v6607
    %v6609 = vand.u32 %v6582, 4294901760
    %v6610 = vsub.f32 %v6582, %v6609
    %v6611 = vand.u32 %v6610, 4294901760
    %v6612 = vsub.f32 %v6610, %v6611
    %v6613 = vand.u32 %v6612, 4294901760
    %6614 = vmatmul.f32.gmra.mxu0 %v6613
    %v6615 = vpop.f32.mrf.mxu0
    %v6616 = vadd.f32 %v6578, %v6615
    %6617 = vdwg.mxu0
    %6618 = vmatpush.msra.mxu0 0.0
    %6619 = vmatpush.msra.mxu0 0.0
    %6620 = vmatpush.msra.mxu0 0.0
    %6621 = vmatpush.msra.mxu0 0.0
    %6622 = vmatpush.msra.mxu0 0.0
    %6623 = vmatpush.msra.mxu0 0.0
    %6624 = vmatpush.msra.mxu0 0.0
    %v6625 = vand.u32 %v6569, 4294901760
    %v6626 = vsub.f32 %v6569, %v6625
    %v6627 = vand.u32 %v6626, 4294901760
    %v6628 = vsub.f32 %v6626, %v6627
    %v6629 = vand.u32 %v6628, 4294901760
    %6630 = vmatpush.msra.mxu0 %v6629
    %v6631 = vand.u32 %v6548, 4294901760
    %v6632 = vsub.f32 %v6548, %v6631
    %v6633 = vand.u32 %v6632, 4294901760
    %v6634 = vsub.f32 %v6632, %v6633
    %v6635 = vand.u32 %v6634, 4294901760
    %6636 = vmatpush.msra.mxu0 %v6635
    %v6637 = vand.u32 %v6527, 4294901760
    %v6638 = vsub.f32 %v6527, %v6637
    %v6639 = vand.u32 %v6638, 4294901760
    %v6640 = vsub.f32 %v6638, %v6639
    %v6641 = vand.u32 %v6640, 4294901760
    %6642 = vmatpush.msra.mxu0 %v6641
    %v6643 = vand.u32 %v6506, 4294901760
    %v6644 = vsub.f32 %v6506, %v6643
    %v6645 = vand.u32 %v6644, 4294901760
    %v6646 = vsub.f32 %v6644, %v6645
    %v6647 = vand.u32 %v6646, 4294901760
    %6648 = vmatpush.msra.mxu0 %v6647
    %v6649 = vand.u32 %v6399, 4294901760
    %v6650 = vsub.f32 %v6399, %v6649
    %v6651 = vand.u32 %v6650, 4294901760
    %v6652 = vsub.f32 %v6650, %v6651
    %v6653 = vand.u32 %v6652, 4294901760
    %6654 = vmatpush.msra.mxu0 %v6653
    %v6655 = vand.u32 %v6485, 4294901760
    %v6656 = vsub.f32 %v6485, %v6655
    %v6657 = vand.u32 %v6656, 4294901760
    %v6658 = vsub.f32 %v6656, %v6657
    %v6659 = vand.u32 %v6658, 4294901760
    %6660 = vmatpush.msra.mxu0 %v6659
    %v6661 = vand.u32 %v6464, 4294901760
    %v6662 = vsub.f32 %v6464, %v6661
    %v6663 = vand.u32 %v6662, 4294901760
    %v6664 = vsub.f32 %v6662, %v6663
    %v6665 = vand.u32 %v6664, 4294901760
    %6666 = vmatpush.msra.mxu0 %v6665
    %v6667 = vand.u32 %v6443, 4294901760
    %v6668 = vsub.f32 %v6443, %v6667
    %v6669 = vand.u32 %v6668, 4294901760
    %v6670 = vsub.f32 %v6668, %v6669
    %v6671 = vand.u32 %v6670, 4294901760
    %6672 = vmatpush.msra.mxu0 %v6671
    %v6673 = vand.u32 %v6422, 4294901760
    %v6674 = vsub.f32 %v6422, %v6673
    %v6675 = vand.u32 %v6674, 4294901760
    %v6676 = vsub.f32 %v6674, %v6675
    %v6677 = vand.u32 %v6676, 4294901760
    %6678 = vmatpush.msra.mxu0 %v6677
    %v6679 = vand.u32 %v6582, 4294901760
    %6680 = vmatmul.f32.gmra.mxu0 %v6679
    %v6681 = vpop.f32.mrf.mxu0
    %v6682 = vadd.f32 %v6616, %v6681
    %6683 = vdwg.mxu0
    %6684 = vmatpush.msra.mxu0 0.0
    %6685 = vmatpush.msra.mxu0 0.0
    %6686 = vmatpush.msra.mxu0 0.0
    %6687 = vmatpush.msra.mxu0 0.0
    %6688 = vmatpush.msra.mxu0 0.0
    %6689 = vmatpush.msra.mxu0 0.0
    %6690 = vmatpush.msra.mxu0 0.0
    %v6691 = vand.u32 %v6569, 4294901760
    %v6692 = vsub.f32 %v6569, %v6691
    %6693 = vmatpush.msra.mxu0 %v6692
    %v6694 = vand.u32 %v6548, 4294901760
    %v6695 = vsub.f32 %v6548, %v6694
    %6696 = vmatpush.msra.mxu0 %v6695
    %v6697 = vand.u32 %v6527, 4294901760
    %v6698 = vsub.f32 %v6527, %v6697
    %6699 = vmatpush.msra.mxu0 %v6698
    %v6700 = vand.u32 %v6506, 4294901760
    %v6701 = vsub.f32 %v6506, %v6700
    %6702 = vmatpush.msra.mxu0 %v6701
    %v6703 = vand.u32 %v6399, 4294901760
    %v6704 = vsub.f32 %v6399, %v6703
    %6705 = vmatpush.msra.mxu0 %v6704
    %v6706 = vand.u32 %v6485, 4294901760
    %v6707 = vsub.f32 %v6485, %v6706
    %6708 = vmatpush.msra.mxu0 %v6707
    %v6709 = vand.u32 %v6464, 4294901760
    %v6710 = vsub.f32 %v6464, %v6709
    %6711 = vmatpush.msra.mxu0 %v6710
    %v6712 = vand.u32 %v6443, 4294901760
    %v6713 = vsub.f32 %v6443, %v6712
    %6714 = vmatpush.msra.mxu0 %v6713
    %v6715 = vand.u32 %v6422, 4294901760
    %v6716 = vsub.f32 %v6422, %v6715
    %6717 = vmatpush.msra.mxu0 %v6716
    %v6718 = vand.u32 %v6582, 4294901760
    %v6719 = vsub.f32 %v6582, %v6718
    %6720 = vmatmul.f32.gmra.mxu0 %v6719
    %v6721 = vpop.f32.mrf.mxu0
    %v6722 = vadd.f32 %v6682, %v6721
    %6723 = vdwg.mxu0
    %6724 = vmatpush.msra.mxu0 0.0
    %6725 = vmatpush.msra.mxu0 0.0
    %6726 = vmatpush.msra.mxu0 0.0
    %6727 = vmatpush.msra.mxu0 0.0
    %6728 = vmatpush.msra.mxu0 0.0
    %6729 = vmatpush.msra.mxu0 0.0
    %6730 = vmatpush.msra.mxu0 0.0
    %v6731 = vand.u32 %v6569, 4294901760
    %6732 = vmatpush.msra.mxu0 %v6731
    %v6733 = vand.u32 %v6548, 4294901760
    %6734 = vmatpush.msra.mxu0 %v6733
    %v6735 = vand.u32 %v6527, 4294901760
    %6736 = vmatpush.msra.mxu0 %v6735
    %v6737 = vand.u32 %v6506, 4294901760
    %6738 = vmatpush.msra.mxu0 %v6737
    %v6739 = vand.u32 %v6399, 4294901760
    %6740 = vmatpush.msra.mxu0 %v6739
    %v6741 = vand.u32 %v6485, 4294901760
    %6742 = vmatpush.msra.mxu0 %v6741
    %v6743 = vand.u32 %v6464, 4294901760
    %6744 = vmatpush.msra.mxu0 %v6743
    %v6745 = vand.u32 %v6443, 4294901760
    %6746 = vmatpush.msra.mxu0 %v6745
    %v6747 = vand.u32 %v6422, 4294901760
    %6748 = vmatpush.msra.mxu0 %v6747
    %v6749 = vand.u32 %v6582, 4294901760
    %v6750 = vsub.f32 %v6582, %v6749
    %v6751 = vand.u32 %v6750, 4294901760
    %6752 = vmatmul.f32.gmra.mxu0 %v6751
    %v6753 = vpop.f32.mrf.mxu0
    %v6754 = vadd.f32 %v6722, %v6753
    %6755 = vdwg.mxu0
    %6756 = vmatpush.msra.mxu0 0.0
    %6757 = vmatpush.msra.mxu0 0.0
    %6758 = vmatpush.msra.mxu0 0.0
    %6759 = vmatpush.msra.mxu0 0.0
    %6760 = vmatpush.msra.mxu0 0.0
    %6761 = vmatpush.msra.mxu0 0.0
    %6762 = vmatpush.msra.mxu0 0.0
    %v6763 = vand.u32 %v6569, 4294901760
    %v6764 = vsub.f32 %v6569, %v6763
    %v6765 = vand.u32 %v6764, 4294901760
    %6766 = vmatpush.msra.mxu0 %v6765
    %v6767 = vand.u32 %v6548, 4294901760
    %v6768 = vsub.f32 %v6548, %v6767
    %v6769 = vand.u32 %v6768, 4294901760
    %6770 = vmatpush.msra.mxu0 %v6769
    %v6771 = vand.u32 %v6527, 4294901760
    %v6772 = vsub.f32 %v6527, %v6771
    %v6773 = vand.u32 %v6772, 4294901760
    %6774 = vmatpush.msra.mxu0 %v6773
    %v6775 = vand.u32 %v6506, 4294901760
    %v6776 = vsub.f32 %v6506, %v6775
    %v6777 = vand.u32 %v6776, 4294901760
    %6778 = vmatpush.msra.mxu0 %v6777
    %v6779 = vand.u32 %v6399, 4294901760
    %v6780 = vsub.f32 %v6399, %v6779
    %v6781 = vand.u32 %v6780, 4294901760
    %6782 = vmatpush.msra.mxu0 %v6781
    %v6783 = vand.u32 %v6485, 4294901760
    %v6784 = vsub.f32 %v6485, %v6783
    %v6785 = vand.u32 %v6784, 4294901760
    %6786 = vmatpush.msra.mxu0 %v6785
    %v6787 = vand.u32 %v6464, 4294901760
    %v6788 = vsub.f32 %v6464, %v6787
    %v6789 = vand.u32 %v6788, 4294901760
    %6790 = vmatpush.msra.mxu0 %v6789
    %v6791 = vand.u32 %v6443, 4294901760
    %v6792 = vsub.f32 %v6443, %v6791
    %v6793 = vand.u32 %v6792, 4294901760
    %6794 = vmatpush.msra.mxu0 %v6793
    %v6795 = vand.u32 %v6422, 4294901760
    %v6796 = vsub.f32 %v6422, %v6795
    %v6797 = vand.u32 %v6796, 4294901760
    %6798 = vmatpush.msra.mxu0 %v6797
    %v6799 = vand.u32 %v6582, 4294901760
    %6800 = vmatmul.f32.gmra.mxu0 %v6799
    %v6801 = vpop.f32.mrf.mxu0
    %v6802 = vadd.f32 %v6754, %v6801
    %6803 = vdwg.mxu0
    %6804 = vmatpush.msra.mxu0 0.0
    %6805 = vmatpush.msra.mxu0 0.0
    %6806 = vmatpush.msra.mxu0 0.0
    %6807 = vmatpush.msra.mxu0 0.0
    %6808 = vmatpush.msra.mxu0 0.0
    %6809 = vmatpush.msra.mxu0 0.0
    %6810 = vmatpush.msra.mxu0 0.0
    %v6811 = vand.u32 %v6569, 4294901760
    %6812 = vmatpush.msra.mxu0 %v6811
    %v6813 = vand.u32 %v6548, 4294901760
    %6814 = vmatpush.msra.mxu0 %v6813
    %v6815 = vand.u32 %v6527, 4294901760
    %6816 = vmatpush.msra.mxu0 %v6815
    %v6817 = vand.u32 %v6506, 4294901760
    %6818 = vmatpush.msra.mxu0 %v6817
    %v6819 = vand.u32 %v6399, 4294901760
    %6820 = vmatpush.msra.mxu0 %v6819
    %v6821 = vand.u32 %v6485, 4294901760
    %6822 = vmatpush.msra.mxu0 %v6821
    %v6823 = vand.u32 %v6464, 4294901760
    %6824 = vmatpush.msra.mxu0 %v6823
    %v6825 = vand.u32 %v6443, 4294901760
    %6826 = vmatpush.msra.mxu0 %v6825
    %v6827 = vand.u32 %v6422, 4294901760
    %6828 = vmatpush.msra.mxu0 %v6827
    %v6829 = vand.u32 %v6582, 4294901760
    %6830 = vmatmul.f32.gmra.mxu0 %v6829
    %v6831 = vpop.f32.mrf.mxu0
    %v6832 = vadd.f32 %v6802, %v6831
    %6833 = vdwg.mxu0
    %6834 = vmatpush.msra.mxu0 0.0
    %6835 = vmatpush.msra.mxu0 0.0
    %6836 = vmatpush.msra.mxu0 0.0
    %6837 = vmatpush.msra.mxu0 0.0
    %6838 = vmatpush.msra.mxu0 0.0
    %6839 = vmatpush.msra.mxu0 0.0
    %6840 = vmatpush.msra.mxu0 0.0
    %v6841 = vand.u32 %v6570, 4294901760
    %6842 = vmatpush.msra.mxu0 %v6841
    %v6843 = vand.u32 %v6549, 4294901760
    %6844 = vmatpush.msra.mxu0 %v6843
    %v6845 = vand.u32 %v6528, 4294901760
    %6846 = vmatpush.msra.mxu0 %v6845
    %v6847 = vand.u32 %v6507, 4294901760
    %6848 = vmatpush.msra.mxu0 %v6847
    %v6849 = vand.u32 %v6400, 4294901760
    %6850 = vmatpush.msra.mxu0 %v6849
    %v6851 = vand.u32 %v6486, 4294901760
    %6852 = vmatpush.msra.mxu0 %v6851
    %v6853 = vand.u32 %v6465, 4294901760
    %6854 = vmatpush.msra.mxu0 %v6853
    %v6855 = vand.u32 %v6444, 4294901760
    %6856 = vmatpush.msra.mxu0 %v6855
    %v6857 = vand.u32 %v6423, 4294901760
    %6858 = vmatpush.msra.mxu0 %v6857
    %v6859 = vand.u32 %v6582, 4294901760
    %v6860 = vsub.f32 %v6582, %v6859
    %v6861 = vand.u32 %v6860, 4294901760
    %v6862 = vsub.f32 %v6860, %v6861
    %v6863 = vand.u32 %v6862, 4294901760
    %6864 = vmatmul.f32.gmra.mxu0 %v6863
    %v6865 = vpop.f32.mrf.mxu0
    %v6866 = vadd.f32 %v6578, %v6865
    %6867 = vdwg.mxu0
    %6868 = vmatpush.msra.mxu0 0.0
    %6869 = vmatpush.msra.mxu0 0.0
    %6870 = vmatpush.msra.mxu0 0.0
    %6871 = vmatpush.msra.mxu0 0.0
    %6872 = vmatpush.msra.mxu0 0.0
    %6873 = vmatpush.msra.mxu0 0.0
    %6874 = vmatpush.msra.mxu0 0.0
    %v6875 = vand.u32 %v6570, 4294901760
    %v6876 = vsub.f32 %v6570, %v6875
    %v6877 = vand.u32 %v6876, 4294901760
    %v6878 = vsub.f32 %v6876, %v6877
    %v6879 = vand.u32 %v6878, 4294901760
    %6880 = vmatpush.msra.mxu0 %v6879
    %v6881 = vand.u32 %v6549, 4294901760
    %v6882 = vsub.f32 %v6549, %v6881
    %v6883 = vand.u32 %v6882, 4294901760
    %v6884 = vsub.f32 %v6882, %v6883
    %v6885 = vand.u32 %v6884, 4294901760
    %6886 = vmatpush.msra.mxu0 %v6885
    %v6887 = vand.u32 %v6528, 4294901760
    %v6888 = vsub.f32 %v6528, %v6887
    %v6889 = vand.u32 %v6888, 4294901760
    %v6890 = vsub.f32 %v6888, %v6889
    %v6891 = vand.u32 %v6890, 4294901760
    %6892 = vmatpush.msra.mxu0 %v6891
    %v6893 = vand.u32 %v6507, 4294901760
    %v6894 = vsub.f32 %v6507, %v6893
    %v6895 = vand.u32 %v6894, 4294901760
    %v6896 = vsub.f32 %v6894, %v6895
    %v6897 = vand.u32 %v6896, 4294901760
    %6898 = vmatpush.msra.mxu0 %v6897
    %v6899 = vand.u32 %v6400, 4294901760
    %v6900 = vsub.f32 %v6400, %v6899
    %v6901 = vand.u32 %v6900, 4294901760
    %v6902 = vsub.f32 %v6900, %v6901
    %v6903 = vand.u32 %v6902, 4294901760
    %6904 = vmatpush.msra.mxu0 %v6903
    %v6905 = vand.u32 %v6486, 4294901760
    %v6906 = vsub.f32 %v6486, %v6905
    %v6907 = vand.u32 %v6906, 4294901760
    %v6908 = vsub.f32 %v6906, %v6907
    %v6909 = vand.u32 %v6908, 4294901760
    %6910 = vmatpush.msra.mxu0 %v6909
    %v6911 = vand.u32 %v6465, 4294901760
    %v6912 = vsub.f32 %v6465, %v6911
    %v6913 = vand.u32 %v6912, 4294901760
    %v6914 = vsub.f32 %v6912, %v6913
    %v6915 = vand.u32 %v6914, 4294901760
    %6916 = vmatpush.msra.mxu0 %v6915
    %v6917 = vand.u32 %v6444, 4294901760
    %v6918 = vsub.f32 %v6444, %v6917
    %v6919 = vand.u32 %v6918, 4294901760
    %v6920 = vsub.f32 %v6918, %v6919
    %v6921 = vand.u32 %v6920, 4294901760
    %6922 = vmatpush.msra.mxu0 %v6921
    %v6923 = vand.u32 %v6423, 4294901760
    %v6924 = vsub.f32 %v6423, %v6923
    %v6925 = vand.u32 %v6924, 4294901760
    %v6926 = vsub.f32 %v6924, %v6925
    %v6927 = vand.u32 %v6926, 4294901760
    %6928 = vmatpush.msra.mxu0 %v6927
    %v6929 = vand.u32 %v6582, 4294901760
    %6930 = vmatmul.f32.gmra.mxu0 %v6929
    %v6931 = vpop.f32.mrf.mxu0
    %v6932 = vadd.f32 %v6866, %v6931
    %6933 = vdwg.mxu0
    %6934 = vmatpush.msra.mxu0 0.0
    %6935 = vmatpush.msra.mxu0 0.0
    %6936 = vmatpush.msra.mxu0 0.0
    %6937 = vmatpush.msra.mxu0 0.0
    %6938 = vmatpush.msra.mxu0 0.0
    %6939 = vmatpush.msra.mxu0 0.0
    %6940 = vmatpush.msra.mxu0 0.0
    %v6941 = vand.u32 %v6570, 4294901760
    %v6942 = vsub.f32 %v6570, %v6941
    %6943 = vmatpush.msra.mxu0 %v6942
    %v6944 = vand.u32 %v6549, 4294901760
    %v6945 = vsub.f32 %v6549, %v6944
    %6946 = vmatpush.msra.mxu0 %v6945
    %v6947 = vand.u32 %v6528, 4294901760
    %v6948 = vsub.f32 %v6528, %v6947
    %6949 = vmatpush.msra.mxu0 %v6948
    %v6950 = vand.u32 %v6507, 4294901760
    %v6951 = vsub.f32 %v6507, %v6950
    %6952 = vmatpush.msra.mxu0 %v6951
    %v6953 = vand.u32 %v6400, 4294901760
    %v6954 = vsub.f32 %v6400, %v6953
    %6955 = vmatpush.msra.mxu0 %v6954
    %v6956 = vand.u32 %v6486, 4294901760
    %v6957 = vsub.f32 %v6486, %v6956
    %6958 = vmatpush.msra.mxu0 %v6957
    %v6959 = vand.u32 %v6465, 4294901760
    %v6960 = vsub.f32 %v6465, %v6959
    %6961 = vmatpush.msra.mxu0 %v6960
    %v6962 = vand.u32 %v6444, 4294901760
    %v6963 = vsub.f32 %v6444, %v6962
    %6964 = vmatpush.msra.mxu0 %v6963
    %v6965 = vand.u32 %v6423, 4294901760
    %v6966 = vsub.f32 %v6423, %v6965
    %6967 = vmatpush.msra.mxu0 %v6966
    %v6968 = vand.u32 %v6582, 4294901760
    %v6969 = vsub.f32 %v6582, %v6968
    %6970 = vmatmul.f32.gmra.mxu0 %v6969
    %v6971 = vpop.f32.mrf.mxu0
    %v6972 = vadd.f32 %v6932, %v6971
    %6973 = vdwg.mxu0
    %6974 = vmatpush.msra.mxu0 0.0
    %6975 = vmatpush.msra.mxu0 0.0
    %6976 = vmatpush.msra.mxu0 0.0
    %6977 = vmatpush.msra.mxu0 0.0
    %6978 = vmatpush.msra.mxu0 0.0
    %6979 = vmatpush.msra.mxu0 0.0
    %6980 = vmatpush.msra.mxu0 0.0
    %v6981 = vand.u32 %v6570, 4294901760
    %6982 = vmatpush.msra.mxu0 %v6981
    %v6983 = vand.u32 %v6549, 4294901760
    %6984 = vmatpush.msra.mxu0 %v6983
    %v6985 = vand.u32 %v6528, 4294901760
    %6986 = vmatpush.msra.mxu0 %v6985
    %v6987 = vand.u32 %v6507, 4294901760
    %6988 = vmatpush.msra.mxu0 %v6987
    %v6989 = vand.u32 %v6400, 4294901760
    %6990 = vmatpush.msra.mxu0 %v6989
    %v6991 = vand.u32 %v6486, 4294901760
    %6992 = vmatpush.msra.mxu0 %v6991
    %v6993 = vand.u32 %v6465, 4294901760
    %6994 = vmatpush.msra.mxu0 %v6993
    %v6995 = vand.u32 %v6444, 4294901760
    %6996 = vmatpush.msra.mxu0 %v6995
    %v6997 = vand.u32 %v6423, 4294901760
    %6998 = vmatpush.msra.mxu0 %v6997
    %v6999 = vand.u32 %v6582, 4294901760
    %v7000 = vsub.f32 %v6582, %v6999
    %v7001 = vand.u32 %v7000, 4294901760
    %7002 = vmatmul.f32.gmra.mxu0 %v7001
    %v7003 = vpop.f32.mrf.mxu0
    %v7004 = vadd.f32 %v6972, %v7003
    %7005 = vdwg.mxu0
    %7006 = vmatpush.msra.mxu0 0.0
    %7007 = vmatpush.msra.mxu0 0.0
    %7008 = vmatpush.msra.mxu0 0.0
    %7009 = vmatpush.msra.mxu0 0.0
    %7010 = vmatpush.msra.mxu0 0.0
    %7011 = vmatpush.msra.mxu0 0.0
    %7012 = vmatpush.msra.mxu0 0.0
    %v7013 = vand.u32 %v6570, 4294901760
    %v7014 = vsub.f32 %v6570, %v7013
    %v7015 = vand.u32 %v7014, 4294901760
    %7016 = vmatpush.msra.mxu0 %v7015
    %v7017 = vand.u32 %v6549, 4294901760
    %v7018 = vsub.f32 %v6549, %v7017
    %v7019 = vand.u32 %v7018, 4294901760
    %7020 = vmatpush.msra.mxu0 %v7019
    %v7021 = vand.u32 %v6528, 4294901760
    %v7022 = vsub.f32 %v6528, %v7021
    %v7023 = vand.u32 %v7022, 4294901760
    %7024 = vmatpush.msra.mxu0 %v7023
    %v7025 = vand.u32 %v6507, 4294901760
    %v7026 = vsub.f32 %v6507, %v7025
    %v7027 = vand.u32 %v7026, 4294901760
    %7028 = vmatpush.msra.mxu0 %v7027
    %v7029 = vand.u32 %v6400, 4294901760
    %v7030 = vsub.f32 %v6400, %v7029
    %v7031 = vand.u32 %v7030, 4294901760
    %7032 = vmatpush.msra.mxu0 %v7031
    %v7033 = vand.u32 %v6486, 4294901760
    %v7034 = vsub.f32 %v6486, %v7033
    %v7035 = vand.u32 %v7034, 4294901760
    %7036 = vmatpush.msra.mxu0 %v7035
    %v7037 = vand.u32 %v6465, 4294901760
    %v7038 = vsub.f32 %v6465, %v7037
    %v7039 = vand.u32 %v7038, 4294901760
    %7040 = vmatpush.msra.mxu0 %v7039
    %v7041 = vand.u32 %v6444, 4294901760
    %v7042 = vsub.f32 %v6444, %v7041
    %v7043 = vand.u32 %v7042, 4294901760
    %7044 = vmatpush.msra.mxu0 %v7043
    %v7045 = vand.u32 %v6423, 4294901760
    %v7046 = vsub.f32 %v6423, %v7045
    %v7047 = vand.u32 %v7046, 4294901760
    %7048 = vmatpush.msra.mxu0 %v7047
    %v7049 = vand.u32 %v6582, 4294901760
    %7050 = vmatmul.f32.gmra.mxu0 %v7049
    %v7051 = vpop.f32.mrf.mxu0
    %v7052 = vadd.f32 %v7004, %v7051
    %7053 = vdwg.mxu0
    %7054 = vmatpush.msra.mxu0 0.0
    %7055 = vmatpush.msra.mxu0 0.0
    %7056 = vmatpush.msra.mxu0 0.0
    %7057 = vmatpush.msra.mxu0 0.0
    %7058 = vmatpush.msra.mxu0 0.0
    %7059 = vmatpush.msra.mxu0 0.0
    %7060 = vmatpush.msra.mxu0 0.0
    %v7061 = vand.u32 %v6570, 4294901760
    %7062 = vmatpush.msra.mxu0 %v7061
    %v7063 = vand.u32 %v6549, 4294901760
    %7064 = vmatpush.msra.mxu0 %v7063
    %v7065 = vand.u32 %v6528, 4294901760
    %7066 = vmatpush.msra.mxu0 %v7065
    %v7067 = vand.u32 %v6507, 4294901760
    %7068 = vmatpush.msra.mxu0 %v7067
    %v7069 = vand.u32 %v6400, 4294901760
    %7070 = vmatpush.msra.mxu0 %v7069
    %v7071 = vand.u32 %v6486, 4294901760
    %7072 = vmatpush.msra.mxu0 %v7071
    %v7073 = vand.u32 %v6465, 4294901760
    %7074 = vmatpush.msra.mxu0 %v7073
    %v7075 = vand.u32 %v6444, 4294901760
    %7076 = vmatpush.msra.mxu0 %v7075
    %v7077 = vand.u32 %v6423, 4294901760
    %7078 = vmatpush.msra.mxu0 %v7077
    %v7079 = vand.u32 %v6582, 4294901760
    %7080 = vmatmul.f32.gmra.mxu0 %v7079
    %v7081 = vpop.f32.mrf.mxu0
    %v7082 = vadd.f32 %v7052, %v7081
    %7083 = vdwg.mxu0
    %7084 = vmatpush.msra.mxu0 0.0
    %7085 = vmatpush.msra.mxu0 0.0
    %7086 = vmatpush.msra.mxu0 0.0
    %7087 = vmatpush.msra.mxu0 0.0
    %7088 = vmatpush.msra.mxu0 0.0
    %7089 = vmatpush.msra.mxu0 0.0
    %7090 = vmatpush.msra.mxu0 0.0
    %v7091 = vand.u32 %v6571, 4294901760
    %7092 = vmatpush.msra.mxu0 %v7091
    %v7093 = vand.u32 %v6550, 4294901760
    %7094 = vmatpush.msra.mxu0 %v7093
    %v7095 = vand.u32 %v6529, 4294901760
    %7096 = vmatpush.msra.mxu0 %v7095
    %v7097 = vand.u32 %v6508, 4294901760
    %7098 = vmatpush.msra.mxu0 %v7097
    %v7099 = vand.u32 %v6401, 4294901760
    %7100 = vmatpush.msra.mxu0 %v7099
    %v7101 = vand.u32 %v6487, 4294901760
    %7102 = vmatpush.msra.mxu0 %v7101
    %v7103 = vand.u32 %v6466, 4294901760
    %7104 = vmatpush.msra.mxu0 %v7103
    %v7105 = vand.u32 %v6445, 4294901760
    %7106 = vmatpush.msra.mxu0 %v7105
    %v7107 = vand.u32 %v6424, 4294901760
    %7108 = vmatpush.msra.mxu0 %v7107
    %v7109 = vand.u32 %v6582, 4294901760
    %v7110 = vsub.f32 %v6582, %v7109
    %v7111 = vand.u32 %v7110, 4294901760
    %v7112 = vsub.f32 %v7110, %v7111
    %v7113 = vand.u32 %v7112, 4294901760
    %7114 = vmatmul.f32.gmra.mxu0 %v7113
    %v7115 = vpop.f32.mrf.mxu0
    %v7116 = vadd.f32 %v6578, %v7115
    %7117 = vdwg.mxu0
    %7118 = vmatpush.msra.mxu0 0.0
    %7119 = vmatpush.msra.mxu0 0.0
    %7120 = vmatpush.msra.mxu0 0.0
    %7121 = vmatpush.msra.mxu0 0.0
    %7122 = vmatpush.msra.mxu0 0.0
    %7123 = vmatpush.msra.mxu0 0.0
    %7124 = vmatpush.msra.mxu0 0.0
    %v7125 = vand.u32 %v6571, 4294901760
    %v7126 = vsub.f32 %v6571, %v7125
    %v7127 = vand.u32 %v7126, 4294901760
    %v7128 = vsub.f32 %v7126, %v7127
    %v7129 = vand.u32 %v7128, 4294901760
    %7130 = vmatpush.msra.mxu0 %v7129
    %v7131 = vand.u32 %v6550, 4294901760
    %v7132 = vsub.f32 %v6550, %v7131
    %v7133 = vand.u32 %v7132, 4294901760
    %v7134 = vsub.f32 %v7132, %v7133
    %v7135 = vand.u32 %v7134, 4294901760
    %7136 = vmatpush.msra.mxu0 %v7135
    %v7137 = vand.u32 %v6529, 4294901760
    %v7138 = vsub.f32 %v6529, %v7137
    %v7139 = vand.u32 %v7138, 4294901760
    %v7140 = vsub.f32 %v7138, %v7139
    %v7141 = vand.u32 %v7140, 4294901760
    %7142 = vmatpush.msra.mxu0 %v7141
    %v7143 = vand.u32 %v6508, 4294901760
    %v7144 = vsub.f32 %v6508, %v7143
    %v7145 = vand.u32 %v7144, 4294901760
    %v7146 = vsub.f32 %v7144, %v7145
    %v7147 = vand.u32 %v7146, 4294901760
    %7148 = vmatpush.msra.mxu0 %v7147
    %v7149 = vand.u32 %v6401, 4294901760
    %v7150 = vsub.f32 %v6401, %v7149
    %v7151 = vand.u32 %v7150, 4294901760
    %v7152 = vsub.f32 %v7150, %v7151
    %v7153 = vand.u32 %v7152, 4294901760
    %7154 = vmatpush.msra.mxu0 %v7153
    %v7155 = vand.u32 %v6487, 4294901760
    %v7156 = vsub.f32 %v6487, %v7155
    %v7157 = vand.u32 %v7156, 4294901760
    %v7158 = vsub.f32 %v7156, %v7157
    %v7159 = vand.u32 %v7158, 4294901760
    %7160 = vmatpush.msra.mxu0 %v7159
    %v7161 = vand.u32 %v6466, 4294901760
    %v7162 = vsub.f32 %v6466, %v7161
    %v7163 = vand.u32 %v7162, 4294901760
    %v7164 = vsub.f32 %v7162, %v7163
    %v7165 = vand.u32 %v7164, 4294901760
    %7166 = vmatpush.msra.mxu0 %v7165
    %v7167 = vand.u32 %v6445, 4294901760
    %v7168 = vsub.f32 %v6445, %v7167
    %v7169 = vand.u32 %v7168, 4294901760
    %v7170 = vsub.f32 %v7168, %v7169
    %v7171 = vand.u32 %v7170, 4294901760
    %7172 = vmatpush.msra.mxu0 %v7171
    %v7173 = vand.u32 %v6424, 4294901760
    %v7174 = vsub.f32 %v6424, %v7173
    %v7175 = vand.u32 %v7174, 4294901760
    %v7176 = vsub.f32 %v7174, %v7175
    %v7177 = vand.u32 %v7176, 4294901760
    %7178 = vmatpush.msra.mxu0 %v7177
    %v7179 = vand.u32 %v6582, 4294901760
    %7180 = vmatmul.f32.gmra.mxu0 %v7179
    %v7181 = vpop.f32.mrf.mxu0
    %v7182 = vadd.f32 %v7116, %v7181
    %7183 = vdwg.mxu0
    %7184 = vmatpush.msra.mxu0 0.0
    %7185 = vmatpush.msra.mxu0 0.0
    %7186 = vmatpush.msra.mxu0 0.0
    %7187 = vmatpush.msra.mxu0 0.0
    %7188 = vmatpush.msra.mxu0 0.0
    %7189 = vmatpush.msra.mxu0 0.0
    %7190 = vmatpush.msra.mxu0 0.0
    %v7191 = vand.u32 %v6571, 4294901760
    %v7192 = vsub.f32 %v6571, %v7191
    %7193 = vmatpush.msra.mxu0 %v7192
    %v7194 = vand.u32 %v6550, 4294901760
    %v7195 = vsub.f32 %v6550, %v7194
    %7196 = vmatpush.msra.mxu0 %v7195
    %v7197 = vand.u32 %v6529, 4294901760
    %v7198 = vsub.f32 %v6529, %v7197
    %7199 = vmatpush.msra.mxu0 %v7198
    %v7200 = vand.u32 %v6508, 4294901760
    %v7201 = vsub.f32 %v6508, %v7200
    %7202 = vmatpush.msra.mxu0 %v7201
    %v7203 = vand.u32 %v6401, 4294901760
    %v7204 = vsub.f32 %v6401, %v7203
    %7205 = vmatpush.msra.mxu0 %v7204
    %v7206 = vand.u32 %v6487, 4294901760
    %v7207 = vsub.f32 %v6487, %v7206
    %7208 = vmatpush.msra.mxu0 %v7207
    %v7209 = vand.u32 %v6466, 4294901760
    %v7210 = vsub.f32 %v6466, %v7209
    %7211 = vmatpush.msra.mxu0 %v7210
    %v7212 = vand.u32 %v6445, 4294901760
    %v7213 = vsub.f32 %v6445, %v7212
    %7214 = vmatpush.msra.mxu0 %v7213
    %v7215 = vand.u32 %v6424, 4294901760
    %v7216 = vsub.f32 %v6424, %v7215
    %7217 = vmatpush.msra.mxu0 %v7216
    %v7218 = vand.u32 %v6582, 4294901760
    %v7219 = vsub.f32 %v6582, %v7218
    %7220 = vmatmul.f32.gmra.mxu0 %v7219
    %v7221 = vpop.f32.mrf.mxu0
    %v7222 = vadd.f32 %v7182, %v7221
    %7223 = vdwg.mxu0
    %7224 = vmatpush.msra.mxu0 0.0
    %7225 = vmatpush.msra.mxu0 0.0
    %7226 = vmatpush.msra.mxu0 0.0
    %7227 = vmatpush.msra.mxu0 0.0
    %7228 = vmatpush.msra.mxu0 0.0
    %7229 = vmatpush.msra.mxu0 0.0
    %7230 = vmatpush.msra.mxu0 0.0
    %v7231 = vand.u32 %v6571, 4294901760
    %7232 = vmatpush.msra.mxu0 %v7231
    %v7233 = vand.u32 %v6550, 4294901760
    %7234 = vmatpush.msra.mxu0 %v7233
    %v7235 = vand.u32 %v6529, 4294901760
    %7236 = vmatpush.msra.mxu0 %v7235
    %v7237 = vand.u32 %v6508, 4294901760
    %7238 = vmatpush.msra.mxu0 %v7237
    %v7239 = vand.u32 %v6401, 4294901760
    %7240 = vmatpush.msra.mxu0 %v7239
    %v7241 = vand.u32 %v6487, 4294901760
    %7242 = vmatpush.msra.mxu0 %v7241
    %v7243 = vand.u32 %v6466, 4294901760
    %7244 = vmatpush.msra.mxu0 %v7243
    %v7245 = vand.u32 %v6445, 4294901760
    %7246 = vmatpush.msra.mxu0 %v7245
    %v7247 = vand.u32 %v6424, 4294901760
    %7248 = vmatpush.msra.mxu0 %v7247
    %v7249 = vand.u32 %v6582, 4294901760
    %v7250 = vsub.f32 %v6582, %v7249
    %v7251 = vand.u32 %v7250, 4294901760
    %7252 = vmatmul.f32.gmra.mxu0 %v7251
    %v7253 = vpop.f32.mrf.mxu0
    %v7254 = vadd.f32 %v7222, %v7253
    %7255 = vdwg.mxu0
    %7256 = vmatpush.msra.mxu0 0.0
    %7257 = vmatpush.msra.mxu0 0.0
    %7258 = vmatpush.msra.mxu0 0.0
    %7259 = vmatpush.msra.mxu0 0.0
    %7260 = vmatpush.msra.mxu0 0.0
    %7261 = vmatpush.msra.mxu0 0.0
    %7262 = vmatpush.msra.mxu0 0.0
    %v7263 = vand.u32 %v6571, 4294901760
    %v7264 = vsub.f32 %v6571, %v7263
    %v7265 = vand.u32 %v7264, 4294901760
    %7266 = vmatpush.msra.mxu0 %v7265
    %v7267 = vand.u32 %v6550, 4294901760
    %v7268 = vsub.f32 %v6550, %v7267
    %v7269 = vand.u32 %v7268, 4294901760
    %7270 = vmatpush.msra.mxu0 %v7269
    %v7271 = vand.u32 %v6529, 4294901760
    %v7272 = vsub.f32 %v6529, %v7271
    %v7273 = vand.u32 %v7272, 4294901760
    %7274 = vmatpush.msra.mxu0 %v7273
    %v7275 = vand.u32 %v6508, 4294901760
    %v7276 = vsub.f32 %v6508, %v7275
    %v7277 = vand.u32 %v7276, 4294901760
    %7278 = vmatpush.msra.mxu0 %v7277
    %v7279 = vand.u32 %v6401, 4294901760
    %v7280 = vsub.f32 %v6401, %v7279
    %v7281 = vand.u32 %v7280, 4294901760
    %7282 = vmatpush.msra.mxu0 %v7281
    %v7283 = vand.u32 %v6487, 4294901760
    %v7284 = vsub.f32 %v6487, %v7283
    %v7285 = vand.u32 %v7284, 4294901760
    %7286 = vmatpush.msra.mxu0 %v7285
    %v7287 = vand.u32 %v6466, 4294901760
    %v7288 = vsub.f32 %v6466, %v7287
    %v7289 = vand.u32 %v7288, 4294901760
    %7290 = vmatpush.msra.mxu0 %v7289
    %v7291 = vand.u32 %v6445, 4294901760
    %v7292 = vsub.f32 %v6445, %v7291
    %v7293 = vand.u32 %v7292, 4294901760
    %7294 = vmatpush.msra.mxu0 %v7293
    %v7295 = vand.u32 %v6424, 4294901760
    %v7296 = vsub.f32 %v6424, %v7295
    %v7297 = vand.u32 %v7296, 4294901760
    %7298 = vmatpush.msra.mxu0 %v7297
    %v7299 = vand.u32 %v6582, 4294901760
    %7300 = vmatmul.f32.gmra.mxu0 %v7299
    %v7301 = vpop.f32.mrf.mxu0
    %v7302 = vadd.f32 %v7254, %v7301
    %7303 = vdwg.mxu0
    %7304 = vmatpush.msra.mxu0 0.0
    %7305 = vmatpush.msra.mxu0 0.0
    %7306 = vmatpush.msra.mxu0 0.0
    %7307 = vmatpush.msra.mxu0 0.0
    %7308 = vmatpush.msra.mxu0 0.0
    %7309 = vmatpush.msra.mxu0 0.0
    %7310 = vmatpush.msra.mxu0 0.0
    %v7311 = vand.u32 %v6571, 4294901760
    %7312 = vmatpush.msra.mxu0 %v7311
    %v7313 = vand.u32 %v6550, 4294901760
    %7314 = vmatpush.msra.mxu0 %v7313
    %v7315 = vand.u32 %v6529, 4294901760
    %7316 = vmatpush.msra.mxu0 %v7315
    %v7317 = vand.u32 %v6508, 4294901760
    %7318 = vmatpush.msra.mxu0 %v7317
    %v7319 = vand.u32 %v6401, 4294901760
    %7320 = vmatpush.msra.mxu0 %v7319
    %v7321 = vand.u32 %v6487, 4294901760
    %7322 = vmatpush.msra.mxu0 %v7321
    %v7323 = vand.u32 %v6466, 4294901760
    %7324 = vmatpush.msra.mxu0 %v7323
    %v7325 = vand.u32 %v6445, 4294901760
    %7326 = vmatpush.msra.mxu0 %v7325
    %v7327 = vand.u32 %v6424, 4294901760
    %7328 = vmatpush.msra.mxu0 %v7327
    %v7329 = vand.u32 %v6582, 4294901760
    %7330 = vmatmul.f32.gmra.mxu0 %v7329
    %v7331 = vpop.f32.mrf.mxu0
    %v7332 = vadd.f32 %v7302, %v7331
    %7333 = vdwg.mxu0
    %7334 = vmatpush.msra.mxu0 0.0
    %7335 = vmatpush.msra.mxu0 0.0
    %7336 = vmatpush.msra.mxu0 0.0
    %7337 = vmatpush.msra.mxu0 0.0
    %7338 = vmatpush.msra.mxu0 0.0
    %7339 = vmatpush.msra.mxu0 0.0
    %7340 = vmatpush.msra.mxu0 0.0
    %v7341 = vand.u32 %v6572, 4294901760
    %7342 = vmatpush.msra.mxu0 %v7341
    %v7343 = vand.u32 %v6551, 4294901760
    %7344 = vmatpush.msra.mxu0 %v7343
    %v7345 = vand.u32 %v6530, 4294901760
    %7346 = vmatpush.msra.mxu0 %v7345
    %v7347 = vand.u32 %v6509, 4294901760
    %7348 = vmatpush.msra.mxu0 %v7347
    %v7349 = vand.u32 %v6402, 4294901760
    %7350 = vmatpush.msra.mxu0 %v7349
    %v7351 = vand.u32 %v6488, 4294901760
    %7352 = vmatpush.msra.mxu0 %v7351
    %v7353 = vand.u32 %v6467, 4294901760
    %7354 = vmatpush.msra.mxu0 %v7353
    %v7355 = vand.u32 %v6446, 4294901760
    %7356 = vmatpush.msra.mxu0 %v7355
    %v7357 = vand.u32 %v6425, 4294901760
    %7358 = vmatpush.msra.mxu0 %v7357
    %v7359 = vand.u32 %v6582, 4294901760
    %v7360 = vsub.f32 %v6582, %v7359
    %v7361 = vand.u32 %v7360, 4294901760
    %v7362 = vsub.f32 %v7360, %v7361
    %v7363 = vand.u32 %v7362, 4294901760
    %7364 = vmatmul.f32.gmra.mxu0 %v7363
    %v7365 = vpop.f32.mrf.mxu0
    %v7366 = vadd.f32 %v6578, %v7365
    %7367 = vdwg.mxu0
    %7368 = vmatpush.msra.mxu0 0.0
    %7369 = vmatpush.msra.mxu0 0.0
    %7370 = vmatpush.msra.mxu0 0.0
    %7371 = vmatpush.msra.mxu0 0.0
    %7372 = vmatpush.msra.mxu0 0.0
    %7373 = vmatpush.msra.mxu0 0.0
    %7374 = vmatpush.msra.mxu0 0.0
    %v7375 = vand.u32 %v6572, 4294901760
    %v7376 = vsub.f32 %v6572, %v7375
    %v7377 = vand.u32 %v7376, 4294901760
    %v7378 = vsub.f32 %v7376, %v7377
    %v7379 = vand.u32 %v7378, 4294901760
    %7380 = vmatpush.msra.mxu0 %v7379
    %v7381 = vand.u32 %v6551, 4294901760
    %v7382 = vsub.f32 %v6551, %v7381
    %v7383 = vand.u32 %v7382, 4294901760
    %v7384 = vsub.f32 %v7382, %v7383
    %v7385 = vand.u32 %v7384, 4294901760
    %7386 = vmatpush.msra.mxu0 %v7385
    %v7387 = vand.u32 %v6530, 4294901760
    %v7388 = vsub.f32 %v6530, %v7387
    %v7389 = vand.u32 %v7388, 4294901760
    %v7390 = vsub.f32 %v7388, %v7389
    %v7391 = vand.u32 %v7390, 4294901760
    %7392 = vmatpush.msra.mxu0 %v7391
    %v7393 = vand.u32 %v6509, 4294901760
    %v7394 = vsub.f32 %v6509, %v7393
    %v7395 = vand.u32 %v7394, 4294901760
    %v7396 = vsub.f32 %v7394, %v7395
    %v7397 = vand.u32 %v7396, 4294901760
    %7398 = vmatpush.msra.mxu0 %v7397
    %v7399 = vand.u32 %v6402, 4294901760
    %v7400 = vsub.f32 %v6402, %v7399
    %v7401 = vand.u32 %v7400, 4294901760
    %v7402 = vsub.f32 %v7400, %v7401
    %v7403 = vand.u32 %v7402, 4294901760
    %7404 = vmatpush.msra.mxu0 %v7403
    %v7405 = vand.u32 %v6488, 4294901760
    %v7406 = vsub.f32 %v6488, %v7405
    %v7407 = vand.u32 %v7406, 4294901760
    %v7408 = vsub.f32 %v7406, %v7407
    %v7409 = vand.u32 %v7408, 4294901760
    %7410 = vmatpush.msra.mxu0 %v7409
    %v7411 = vand.u32 %v6467, 4294901760
    %v7412 = vsub.f32 %v6467, %v7411
    %v7413 = vand.u32 %v7412, 4294901760
    %v7414 = vsub.f32 %v7412, %v7413
    %v7415 = vand.u32 %v7414, 4294901760
    %7416 = vmatpush.msra.mxu0 %v7415
    %v7417 = vand.u32 %v6446, 4294901760
    %v7418 = vsub.f32 %v6446, %v7417
    %v7419 = vand.u32 %v7418, 4294901760
    %v7420 = vsub.f32 %v7418, %v7419
    %v7421 = vand.u32 %v7420, 4294901760
    %7422 = vmatpush.msra.mxu0 %v7421
    %v7423 = vand.u32 %v6425, 4294901760
    %v7424 = vsub.f32 %v6425, %v7423
    %v7425 = vand.u32 %v7424, 4294901760
    %v7426 = vsub.f32 %v7424, %v7425
    %v7427 = vand.u32 %v7426, 4294901760
    %7428 = vmatpush.msra.mxu0 %v7427
    %v7429 = vand.u32 %v6582, 4294901760
    %7430 = vmatmul.f32.gmra.mxu0 %v7429
    %v7431 = vpop.f32.mrf.mxu0
    %v7432 = vadd.f32 %v7366, %v7431
    %7433 = vdwg.mxu0
    %7434 = vmatpush.msra.mxu0 0.0
    %7435 = vmatpush.msra.mxu0 0.0
    %7436 = vmatpush.msra.mxu0 0.0
    %7437 = vmatpush.msra.mxu0 0.0
    %7438 = vmatpush.msra.mxu0 0.0
    %7439 = vmatpush.msra.mxu0 0.0
    %7440 = vmatpush.msra.mxu0 0.0
    %v7441 = vand.u32 %v6572, 4294901760
    %v7442 = vsub.f32 %v6572, %v7441
    %7443 = vmatpush.msra.mxu0 %v7442
    %v7444 = vand.u32 %v6551, 4294901760
    %v7445 = vsub.f32 %v6551, %v7444
    %7446 = vmatpush.msra.mxu0 %v7445
    %v7447 = vand.u32 %v6530, 4294901760
    %v7448 = vsub.f32 %v6530, %v7447
    %7449 = vmatpush.msra.mxu0 %v7448
    %v7450 = vand.u32 %v6509, 4294901760
    %v7451 = vsub.f32 %v6509, %v7450
    %7452 = vmatpush.msra.mxu0 %v7451
    %v7453 = vand.u32 %v6402, 4294901760
    %v7454 = vsub.f32 %v6402, %v7453
    %7455 = vmatpush.msra.mxu0 %v7454
    %v7456 = vand.u32 %v6488, 4294901760
    %v7457 = vsub.f32 %v6488, %v7456
    %7458 = vmatpush.msra.mxu0 %v7457
    %v7459 = vand.u32 %v6467, 4294901760
    %v7460 = vsub.f32 %v6467, %v7459
    %7461 = vmatpush.msra.mxu0 %v7460
    %v7462 = vand.u32 %v6446, 4294901760
    %v7463 = vsub.f32 %v6446, %v7462
    %7464 = vmatpush.msra.mxu0 %v7463
    %v7465 = vand.u32 %v6425, 4294901760
    %v7466 = vsub.f32 %v6425, %v7465
    %7467 = vmatpush.msra.mxu0 %v7466
    %v7468 = vand.u32 %v6582, 4294901760
    %v7469 = vsub.f32 %v6582, %v7468
    %7470 = vmatmul.f32.gmra.mxu0 %v7469
    %v7471 = vpop.f32.mrf.mxu0
    %v7472 = vadd.f32 %v7432, %v7471
    %7473 = vdwg.mxu0
    %7474 = vmatpush.msra.mxu0 0.0
    %7475 = vmatpush.msra.mxu0 0.0
    %7476 = vmatpush.msra.mxu0 0.0
    %7477 = vmatpush.msra.mxu0 0.0
    %7478 = vmatpush.msra.mxu0 0.0
    %7479 = vmatpush.msra.mxu0 0.0
    %7480 = vmatpush.msra.mxu0 0.0
    %v7481 = vand.u32 %v6572, 4294901760
    %7482 = vmatpush.msra.mxu0 %v7481
    %v7483 = vand.u32 %v6551, 4294901760
    %7484 = vmatpush.msra.mxu0 %v7483
    %v7485 = vand.u32 %v6530, 4294901760
    %7486 = vmatpush.msra.mxu0 %v7485
    %v7487 = vand.u32 %v6509, 4294901760
    %7488 = vmatpush.msra.mxu0 %v7487
    %v7489 = vand.u32 %v6402, 4294901760
    %7490 = vmatpush.msra.mxu0 %v7489
    %v7491 = vand.u32 %v6488, 4294901760
    %7492 = vmatpush.msra.mxu0 %v7491
    %v7493 = vand.u32 %v6467, 4294901760
    %7494 = vmatpush.msra.mxu0 %v7493
    %v7495 = vand.u32 %v6446, 4294901760
    %7496 = vmatpush.msra.mxu0 %v7495
    %v7497 = vand.u32 %v6425, 4294901760
    %7498 = vmatpush.msra.mxu0 %v7497
    %v7499 = vand.u32 %v6582, 4294901760
    %v7500 = vsub.f32 %v6582, %v7499
    %v7501 = vand.u32 %v7500, 4294901760
    %7502 = vmatmul.f32.gmra.mxu0 %v7501
    %v7503 = vpop.f32.mrf.mxu0
    %v7504 = vadd.f32 %v7472, %v7503
    %7505 = vdwg.mxu0
    %7506 = vmatpush.msra.mxu0 0.0
    %7507 = vmatpush.msra.mxu0 0.0
    %7508 = vmatpush.msra.mxu0 0.0
    %7509 = vmatpush.msra.mxu0 0.0
    %7510 = vmatpush.msra.mxu0 0.0
    %7511 = vmatpush.msra.mxu0 0.0
    %7512 = vmatpush.msra.mxu0 0.0
    %v7513 = vand.u32 %v6572, 4294901760
    %v7514 = vsub.f32 %v6572, %v7513
    %v7515 = vand.u32 %v7514, 4294901760
    %7516 = vmatpush.msra.mxu0 %v7515
    %v7517 = vand.u32 %v6551, 4294901760
    %v7518 = vsub.f32 %v6551, %v7517
    %v7519 = vand.u32 %v7518, 4294901760
    %7520 = vmatpush.msra.mxu0 %v7519
    %v7521 = vand.u32 %v6530, 4294901760
    %v7522 = vsub.f32 %v6530, %v7521
    %v7523 = vand.u32 %v7522, 4294901760
    %7524 = vmatpush.msra.mxu0 %v7523
    %v7525 = vand.u32 %v6509, 4294901760
    %v7526 = vsub.f32 %v6509, %v7525
    %v7527 = vand.u32 %v7526, 4294901760
    %7528 = vmatpush.msra.mxu0 %v7527
    %v7529 = vand.u32 %v6402, 4294901760
    %v7530 = vsub.f32 %v6402, %v7529
    %v7531 = vand.u32 %v7530, 4294901760
    %7532 = vmatpush.msra.mxu0 %v7531
    %v7533 = vand.u32 %v6488, 4294901760
    %v7534 = vsub.f32 %v6488, %v7533
    %v7535 = vand.u32 %v7534, 4294901760
    %7536 = vmatpush.msra.mxu0 %v7535
    %v7537 = vand.u32 %v6467, 4294901760
    %v7538 = vsub.f32 %v6467, %v7537
    %v7539 = vand.u32 %v7538, 4294901760
    %7540 = vmatpush.msra.mxu0 %v7539
    %v7541 = vand.u32 %v6446, 4294901760
    %v7542 = vsub.f32 %v6446, %v7541
    %v7543 = vand.u32 %v7542, 4294901760
    %7544 = vmatpush.msra.mxu0 %v7543
    %v7545 = vand.u32 %v6425, 4294901760
    %v7546 = vsub.f32 %v6425, %v7545
    %v7547 = vand.u32 %v7546, 4294901760
    %7548 = vmatpush.msra.mxu0 %v7547
    %v7549 = vand.u32 %v6582, 4294901760
    %7550 = vmatmul.f32.gmra.mxu0 %v7549
    %v7551 = vpop.f32.mrf.mxu0
    %v7552 = vadd.f32 %v7504, %v7551
    %7553 = vdwg.mxu0
    %7554 = vmatpush.msra.mxu0 0.0
    %7555 = vmatpush.msra.mxu0 0.0
    %7556 = vmatpush.msra.mxu0 0.0
    %7557 = vmatpush.msra.mxu0 0.0
    %7558 = vmatpush.msra.mxu0 0.0
    %7559 = vmatpush.msra.mxu0 0.0
    %7560 = vmatpush.msra.mxu0 0.0
    %v7561 = vand.u32 %v6572, 4294901760
    %7562 = vmatpush.msra.mxu0 %v7561
    %v7563 = vand.u32 %v6551, 4294901760
    %7564 = vmatpush.msra.mxu0 %v7563
    %v7565 = vand.u32 %v6530, 4294901760
    %7566 = vmatpush.msra.mxu0 %v7565
    %v7567 = vand.u32 %v6509, 4294901760
    %7568 = vmatpush.msra.mxu0 %v7567
    %v7569 = vand.u32 %v6402, 4294901760
    %7570 = vmatpush.msra.mxu0 %v7569
    %v7571 = vand.u32 %v6488, 4294901760
    %7572 = vmatpush.msra.mxu0 %v7571
    %v7573 = vand.u32 %v6467, 4294901760
    %7574 = vmatpush.msra.mxu0 %v7573
    %v7575 = vand.u32 %v6446, 4294901760
    %7576 = vmatpush.msra.mxu0 %v7575
    %v7577 = vand.u32 %v6425, 4294901760
    %7578 = vmatpush.msra.mxu0 %v7577
    %v7579 = vand.u32 %v6582, 4294901760
    %7580 = vmatmul.f32.gmra.mxu0 %v7579
    %v7581 = vpop.f32.mrf.mxu0
    %v7582 = vadd.f32 %v7552, %v7581
    %7583 = vdwg.mxu0
    %v7584 = vmax.f32 %v6832, 0.0
    %v7585 = vmax.f32 %v7082, 0.0
    %v7586 = vmax.f32 %v7332, 0.0
    %v7587 = vmax.f32 %v7582, 0.0
    %7588 = vrot.lane.b32.xlu0 %v7584, 17
    %v7589 = vpop.permute.xlu0 %7588
    %7590 = vrot.lane.b32.xlu0 %v7585, 17
    %v7591 = vpop.permute.xlu0 %7590
    %7592 = vrot.lane.b32.xlu0 %v7586, 17
    %v7593 = vpop.permute.xlu0 %7592
    %7594 = vrot.lane.b32.xlu0 %v7587, 17
    %v7595 = vpop.permute.xlu0 %7594
    %v7596 = vsel %vm6413, %v7593, %v7595
    %v7597 = vsel %vm6413, %v7591, %v7593
    %v7598 = vsel %vm6413, %v7589, %v7591
    %v7599 = vsel %vm6413, %v7595, %v7589
    %v7600 = vmul.f32 %v7599, %v6418
    %v7601 = vmul.f32 %v7598, %v6419
    %v7602 = vmul.f32 %v7597, %v6420
    %v7603 = vmul.f32 %v7596, %v6421
    %7604 = vrot.lane.b32.xlu0 %v7584, 16
    %v7605 = vpop.permute.xlu0 %7604
    %7606 = vrot.lane.b32.xlu0 %v7585, 16
    %v7607 = vpop.permute.xlu0 %7606
    %7608 = vrot.lane.b32.xlu0 %v7586, 16
    %v7609 = vpop.permute.xlu0 %7608
    %7610 = vrot.lane.b32.xlu0 %v7587, 16
    %v7611 = vpop.permute.xlu0 %7610
    %v7612 = vsel %vm6434, %v7609, %v7611
    %v7613 = vsel %vm6434, %v7607, %v7609
    %v7614 = vsel %vm6434, %v7605, %v7607
    %v7615 = vsel %vm6434, %v7611, %v7605
    %v7616 = vmul.f32 %v7615, %v6439
    %v7617 = vmul.f32 %v7614, %v6440
    %v7618 = vmul.f32 %v7613, %v6441
    %v7619 = vmul.f32 %v7612, %v6442
    %7620 = vrot.lane.b32.xlu0 %v7584, 15
    %v7621 = vpop.permute.xlu0 %7620
    %7622 = vrot.lane.b32.xlu0 %v7585, 15
    %v7623 = vpop.permute.xlu0 %7622
    %7624 = vrot.lane.b32.xlu0 %v7586, 15
    %v7625 = vpop.permute.xlu0 %7624
    %7626 = vrot.lane.b32.xlu0 %v7587, 15
    %v7627 = vpop.permute.xlu0 %7626
    %v7628 = vsel %vm6455, %v7625, %v7627
    %v7629 = vsel %vm6455, %v7623, %v7625
    %v7630 = vsel %vm6455, %v7621, %v7623
    %v7631 = vsel %vm6455, %v7627, %v7621
    %v7632 = vmul.f32 %v7631, %v6460
    %v7633 = vmul.f32 %v7630, %v6461
    %v7634 = vmul.f32 %v7629, %v6462
    %v7635 = vmul.f32 %v7628, %v6463
    %7636 = vrot.lane.b32.xlu0 %v7584, 1
    %v7637 = vpop.permute.xlu0 %7636
    %7638 = vrot.lane.b32.xlu0 %v7585, 1
    %v7639 = vpop.permute.xlu0 %7638
    %7640 = vrot.lane.b32.xlu0 %v7586, 1
    %v7641 = vpop.permute.xlu0 %7640
    %7642 = vrot.lane.b32.xlu0 %v7587, 1
    %v7643 = vpop.permute.xlu0 %7642
    %v7644 = vsel %vm6476, %v7641, %v7643
    %v7645 = vsel %vm6476, %v7639, %v7641
    %v7646 = vsel %vm6476, %v7637, %v7639
    %v7647 = vsel %vm6476, %v7643, %v7637
    %v7648 = vmul.f32 %v7647, %v6481
    %v7649 = vmul.f32 %v7646, %v6482
    %v7650 = vmul.f32 %v7645, %v6483
    %v7651 = vmul.f32 %v7644, %v6484
    %7652 = vrot.lane.b32.xlu0 %v7584, 127
    %v7653 = vpop.permute.xlu0 %7652
    %7654 = vrot.lane.b32.xlu0 %v7585, 127
    %v7655 = vpop.permute.xlu0 %7654
    %7656 = vrot.lane.b32.xlu0 %v7586, 127
    %v7657 = vpop.permute.xlu0 %7656
    %7658 = vrot.lane.b32.xlu0 %v7587, 127
    %v7659 = vpop.permute.xlu0 %7658
    %v7660 = vsel %vm6497, %v7657, %v7659
    %v7661 = vsel %vm6497, %v7655, %v7657
    %v7662 = vsel %vm6497, %v7653, %v7655
    %v7663 = vsel %vm6497, %v7659, %v7653
    %v7664 = vmul.f32 %v7662, %v6502
    %v7665 = vmul.f32 %v7661, %v6503
    %v7666 = vmul.f32 %v7660, %v6504
    %v7667 = vmul.f32 %v7663, %v6505
    %7668 = vrot.lane.b32.xlu0 %v7584, 113
    %v7669 = vpop.permute.xlu0 %7668
    %7670 = vrot.lane.b32.xlu0 %v7585, 113
    %v7671 = vpop.permute.xlu0 %7670
    %7672 = vrot.lane.b32.xlu0 %v7586, 113
    %v7673 = vpop.permute.xlu0 %7672
    %7674 = vrot.lane.b32.xlu0 %v7587, 113
    %v7675 = vpop.permute.xlu0 %7674
    %v7676 = vsel %vm6518, %v7673, %v7675
    %v7677 = vsel %vm6518, %v7671, %v7673
    %v7678 = vsel %vm6518, %v7669, %v7671
    %v7679 = vsel %vm6518, %v7675, %v7669
    %v7680 = vmul.f32 %v7678, %v6523
    %v7681 = vmul.f32 %v7677, %v6524
    %v7682 = vmul.f32 %v7676, %v6525
    %v7683 = vmul.f32 %v7679, %v6526
    %7684 = vrot.lane.b32.xlu0 %v7584, 112
    %v7685 = vpop.permute.xlu0 %7684
    %7686 = vrot.lane.b32.xlu0 %v7585, 112
    %v7687 = vpop.permute.xlu0 %7686
    %7688 = vrot.lane.b32.xlu0 %v7586, 112
    %v7689 = vpop.permute.xlu0 %7688
    %7690 = vrot.lane.b32.xlu0 %v7587, 112
    %v7691 = vpop.permute.xlu0 %7690
    %v7692 = vsel %vm6539, %v7689, %v7691
    %v7693 = vsel %vm6539, %v7687, %v7689
    %v7694 = vsel %vm6539, %v7685, %v7687
    %v7695 = vsel %vm6539, %v7691, %v7685
    %v7696 = vmul.f32 %v7694, %v6544
    %v7697 = vmul.f32 %v7693, %v6545
    %v7698 = vmul.f32 %v7692, %v6546
    %v7699 = vmul.f32 %v7695, %v6547
    %7700 = vrot.lane.b32.xlu0 %v7584, 111
    %v7701 = vpop.permute.xlu0 %7700
    %7702 = vrot.lane.b32.xlu0 %v7585, 111
    %v7703 = vpop.permute.xlu0 %7702
    %7704 = vrot.lane.b32.xlu0 %v7586, 111
    %v7705 = vpop.permute.xlu0 %7704
    %7706 = vrot.lane.b32.xlu0 %v7587, 111
    %v7707 = vpop.permute.xlu0 %7706
    %v7708 = vsel %vm6560, %v7705, %v7707
    %v7709 = vsel %vm6560, %v7703, %v7705
    %v7710 = vsel %vm6560, %v7701, %v7703
    %v7711 = vsel %vm6560, %v7707, %v7701
    %v7712 = vmul.f32 %v7710, %v6565
    %v7713 = vmul.f32 %v7709, %v6566
    %v7714 = vmul.f32 %v7708, %v6567
    %v7715 = vmul.f32 %v7711, %v6568
    %v7720 = vrot.slane %v7616, 4
    %v7721 = vrot.slane %v7617, 4
    %v7722 = vrot.slane %v7618, 4
    %v7723 = vrot.slane %v7619, 4
    %v7732 = vrot.slane %v7648, 4
    %v7733 = vrot.slane %v7649, 4
    %v7734 = vrot.slane %v7650, 4
    %v7735 = vrot.slane %v7651, 4
    %v7744 = vrot.slane %v7664, 4
    %v7745 = vrot.slane %v7665, 4
    %v7746 = vrot.slane %v7666, 4
    %v7747 = vrot.slane %v7667, 4
    %v7756 = vrot.slane %v7696, 4
    %v7757 = vrot.slane %v7697, 4
    %v7758 = vrot.slane %v7698, 4
    %v7759 = vrot.slane %v7699, 4
    %v7764 = vsel %vm6398, %v7600, %v7720
    %v7765 = vsel %vm6398, %v7601, %v7721
    %v7766 = vsel %vm6398, %v7602, %v7722
    %v7767 = vsel %vm6398, %v7603, %v7723
    %v7768 = vsel %vm6398, %v7632, %v7732
    %v7769 = vsel %vm6398, %v7633, %v7733
    %v7770 = vsel %vm6398, %v7634, %v7734
    %v7771 = vsel %vm6398, %v7635, %v7735
    %v7772 = vsel %vm6398, %v7584, %v7744
    %v7773 = vsel %vm6398, %v7585, %v7745
    %v7774 = vsel %vm6398, %v7586, %v7746
    %v7775 = vsel %vm6398, %v7587, %v7747
    %v7776 = vsel %vm6398, %v7680, %v7756
    %v7777 = vsel %vm6398, %v7681, %v7757
    %v7778 = vsel %vm6398, %v7682, %v7758
    %v7779 = vsel %vm6398, %v7683, %v7759
    %v7780 = vld [vmem:[%s8] sm:$0xf]
    %v7781 = vld [vmem:[%s9] sm:$0xf]
    %7783 = vset.pattern.permute.xlu0 0
    %7784 = vperm.xlu0 %7783, %v7781
    %v7785 = vpop.permute.xlu0 %7784
    %vm7787 = vcmask 293888
    %v7789 = vsel %vm7787, %v7780, 0
    %v7792 = vsel %vm6398, %v7712, 0
    %v7795 = vsel %vm6398, %v7713, 0
    %v7798 = vsel %vm6398, %v7714, 0
    %v7801 = vsel %vm6398, %v7715, 0
    %7803 = vmatpush.msra.mxu0 0.0
    %7804 = vmatpush.msra.mxu0 0.0
    %7805 = vmatpush.msra.mxu0 0.0
    %7806 = vmatpush.msra.mxu0 0.0
    %7807 = vmatpush.msra.mxu0 0.0
    %7808 = vmatpush.msra.mxu0 0.0
    %7809 = vmatpush.msra.mxu0 0.0
    %7810 = vmatpush.msra.mxu0 0.0
    %7811 = vmatpush.msra.mxu0 0.0
    %7812 = vmatpush.msra.mxu0 0.0
    %7813 = vmatpush.msra.mxu0 0.0
    %v7814 = vand.u32 %v7792, 4294901760
    %7815 = vmatpush.msra.mxu0 %v7814
    %v7816 = vand.u32 %v7776, 4294901760
    %7817 = vmatpush.msra.mxu0 %v7816
    %v7818 = vand.u32 %v7772, 4294901760
    %7819 = vmatpush.msra.mxu0 %v7818
    %v7820 = vand.u32 %v7768, 4294901760
    %7821 = vmatpush.msra.mxu0 %v7820
    %v7822 = vand.u32 %v7764, 4294901760
    %7823 = vmatpush.msra.mxu0 %v7822
    %v7824 = vand.u32 %v7789, 4294901760
    %v7825 = vsub.f32 %v7789, %v7824
    %v7826 = vand.u32 %v7825, 4294901760
    %v7827 = vsub.f32 %v7825, %v7826
    %v7828 = vand.u32 %v7827, 4294901760
    %7829 = vmatmul.f32.gmra.mxu0 %v7828
    %v7830 = vpop.f32.mrf.mxu0
    %v7831 = vadd.f32 %v7785, %v7830
    %7832 = vdwg.mxu0
    %7833 = vmatpush.msra.mxu0 0.0
    %7834 = vmatpush.msra.mxu0 0.0
    %7835 = vmatpush.msra.mxu0 0.0
    %7836 = vmatpush.msra.mxu0 0.0
    %7837 = vmatpush.msra.mxu0 0.0
    %7838 = vmatpush.msra.mxu0 0.0
    %7839 = vmatpush.msra.mxu0 0.0
    %7840 = vmatpush.msra.mxu0 0.0
    %7841 = vmatpush.msra.mxu0 0.0
    %7842 = vmatpush.msra.mxu0 0.0
    %7843 = vmatpush.msra.mxu0 0.0
    %v7844 = vand.u32 %v7792, 4294901760
    %v7845 = vsub.f32 %v7792, %v7844
    %v7846 = vand.u32 %v7845, 4294901760
    %v7847 = vsub.f32 %v7845, %v7846
    %v7848 = vand.u32 %v7847, 4294901760
    %7849 = vmatpush.msra.mxu0 %v7848
    %v7850 = vand.u32 %v7776, 4294901760
    %v7851 = vsub.f32 %v7776, %v7850
    %v7852 = vand.u32 %v7851, 4294901760
    %v7853 = vsub.f32 %v7851, %v7852
    %v7854 = vand.u32 %v7853, 4294901760
    %7855 = vmatpush.msra.mxu0 %v7854
    %v7856 = vand.u32 %v7772, 4294901760
    %v7857 = vsub.f32 %v7772, %v7856
    %v7858 = vand.u32 %v7857, 4294901760
    %v7859 = vsub.f32 %v7857, %v7858
    %v7860 = vand.u32 %v7859, 4294901760
    %7861 = vmatpush.msra.mxu0 %v7860
    %v7862 = vand.u32 %v7768, 4294901760
    %v7863 = vsub.f32 %v7768, %v7862
    %v7864 = vand.u32 %v7863, 4294901760
    %v7865 = vsub.f32 %v7863, %v7864
    %v7866 = vand.u32 %v7865, 4294901760
    %7867 = vmatpush.msra.mxu0 %v7866
    %v7868 = vand.u32 %v7764, 4294901760
    %v7869 = vsub.f32 %v7764, %v7868
    %v7870 = vand.u32 %v7869, 4294901760
    %v7871 = vsub.f32 %v7869, %v7870
    %v7872 = vand.u32 %v7871, 4294901760
    %7873 = vmatpush.msra.mxu0 %v7872
    %v7874 = vand.u32 %v7789, 4294901760
    %7875 = vmatmul.f32.gmra.mxu0 %v7874
    %v7876 = vpop.f32.mrf.mxu0
    %v7877 = vadd.f32 %v7831, %v7876
    %7878 = vdwg.mxu0
    %7879 = vmatpush.msra.mxu0 0.0
    %7880 = vmatpush.msra.mxu0 0.0
    %7881 = vmatpush.msra.mxu0 0.0
    %7882 = vmatpush.msra.mxu0 0.0
    %7883 = vmatpush.msra.mxu0 0.0
    %7884 = vmatpush.msra.mxu0 0.0
    %7885 = vmatpush.msra.mxu0 0.0
    %7886 = vmatpush.msra.mxu0 0.0
    %7887 = vmatpush.msra.mxu0 0.0
    %7888 = vmatpush.msra.mxu0 0.0
    %7889 = vmatpush.msra.mxu0 0.0
    %v7890 = vand.u32 %v7792, 4294901760
    %v7891 = vsub.f32 %v7792, %v7890
    %7892 = vmatpush.msra.mxu0 %v7891
    %v7893 = vand.u32 %v7776, 4294901760
    %v7894 = vsub.f32 %v7776, %v7893
    %7895 = vmatpush.msra.mxu0 %v7894
    %v7896 = vand.u32 %v7772, 4294901760
    %v7897 = vsub.f32 %v7772, %v7896
    %7898 = vmatpush.msra.mxu0 %v7897
    %v7899 = vand.u32 %v7768, 4294901760
    %v7900 = vsub.f32 %v7768, %v7899
    %7901 = vmatpush.msra.mxu0 %v7900
    %v7902 = vand.u32 %v7764, 4294901760
    %v7903 = vsub.f32 %v7764, %v7902
    %7904 = vmatpush.msra.mxu0 %v7903
    %v7905 = vand.u32 %v7789, 4294901760
    %v7906 = vsub.f32 %v7789, %v7905
    %7907 = vmatmul.f32.gmra.mxu0 %v7906
    %v7908 = vpop.f32.mrf.mxu0
    %v7909 = vadd.f32 %v7877, %v7908
    %7910 = vdwg.mxu0
    %7911 = vmatpush.msra.mxu0 0.0
    %7912 = vmatpush.msra.mxu0 0.0
    %7913 = vmatpush.msra.mxu0 0.0
    %7914 = vmatpush.msra.mxu0 0.0
    %7915 = vmatpush.msra.mxu0 0.0
    %7916 = vmatpush.msra.mxu0 0.0
    %7917 = vmatpush.msra.mxu0 0.0
    %7918 = vmatpush.msra.mxu0 0.0
    %7919 = vmatpush.msra.mxu0 0.0
    %7920 = vmatpush.msra.mxu0 0.0
    %7921 = vmatpush.msra.mxu0 0.0
    %v7922 = vand.u32 %v7792, 4294901760
    %7923 = vmatpush.msra.mxu0 %v7922
    %v7924 = vand.u32 %v7776, 4294901760
    %7925 = vmatpush.msra.mxu0 %v7924
    %v7926 = vand.u32 %v7772, 4294901760
    %7927 = vmatpush.msra.mxu0 %v7926
    %v7928 = vand.u32 %v7768, 4294901760
    %7929 = vmatpush.msra.mxu0 %v7928
    %v7930 = vand.u32 %v7764, 4294901760
    %7931 = vmatpush.msra.mxu0 %v7930
    %v7932 = vand.u32 %v7789, 4294901760
    %v7933 = vsub.f32 %v7789, %v7932
    %v7934 = vand.u32 %v7933, 4294901760
    %7935 = vmatmul.f32.gmra.mxu0 %v7934
    %v7936 = vpop.f32.mrf.mxu0
    %v7937 = vadd.f32 %v7909, %v7936
    %7938 = vdwg.mxu0
    %7939 = vmatpush.msra.mxu0 0.0
    %7940 = vmatpush.msra.mxu0 0.0
    %7941 = vmatpush.msra.mxu0 0.0
    %7942 = vmatpush.msra.mxu0 0.0
    %7943 = vmatpush.msra.mxu0 0.0
    %7944 = vmatpush.msra.mxu0 0.0
    %7945 = vmatpush.msra.mxu0 0.0
    %7946 = vmatpush.msra.mxu0 0.0
    %7947 = vmatpush.msra.mxu0 0.0
    %7948 = vmatpush.msra.mxu0 0.0
    %7949 = vmatpush.msra.mxu0 0.0
    %v7950 = vand.u32 %v7792, 4294901760
    %v7951 = vsub.f32 %v7792, %v7950
    %v7952 = vand.u32 %v7951, 4294901760
    %7953 = vmatpush.msra.mxu0 %v7952
    %v7954 = vand.u32 %v7776, 4294901760
    %v7955 = vsub.f32 %v7776, %v7954
    %v7956 = vand.u32 %v7955, 4294901760
    %7957 = vmatpush.msra.mxu0 %v7956
    %v7958 = vand.u32 %v7772, 4294901760
    %v7959 = vsub.f32 %v7772, %v7958
    %v7960 = vand.u32 %v7959, 4294901760
    %7961 = vmatpush.msra.mxu0 %v7960
    %v7962 = vand.u32 %v7768, 4294901760
    %v7963 = vsub.f32 %v7768, %v7962
    %v7964 = vand.u32 %v7963, 4294901760
    %7965 = vmatpush.msra.mxu0 %v7964
    %v7966 = vand.u32 %v7764, 4294901760
    %v7967 = vsub.f32 %v7764, %v7966
    %v7968 = vand.u32 %v7967, 4294901760
    %7969 = vmatpush.msra.mxu0 %v7968
    %v7970 = vand.u32 %v7789, 4294901760
    %7971 = vmatmul.f32.gmra.mxu0 %v7970
    %v7972 = vpop.f32.mrf.mxu0
    %v7973 = vadd.f32 %v7937, %v7972
    %7974 = vdwg.mxu0
    %7975 = vmatpush.msra.mxu0 0.0
    %7976 = vmatpush.msra.mxu0 0.0
    %7977 = vmatpush.msra.mxu0 0.0
    %7978 = vmatpush.msra.mxu0 0.0
    %7979 = vmatpush.msra.mxu0 0.0
    %7980 = vmatpush.msra.mxu0 0.0
    %7981 = vmatpush.msra.mxu0 0.0
    %7982 = vmatpush.msra.mxu0 0.0
    %7983 = vmatpush.msra.mxu0 0.0
    %7984 = vmatpush.msra.mxu0 0.0
    %7985 = vmatpush.msra.mxu0 0.0
    %v7986 = vand.u32 %v7792, 4294901760
    %7987 = vmatpush.msra.mxu0 %v7986
    %v7988 = vand.u32 %v7776, 4294901760
    %7989 = vmatpush.msra.mxu0 %v7988
    %v7990 = vand.u32 %v7772, 4294901760
    %7991 = vmatpush.msra.mxu0 %v7990
    %v7992 = vand.u32 %v7768, 4294901760
    %7993 = vmatpush.msra.mxu0 %v7992
    %v7994 = vand.u32 %v7764, 4294901760
    %7995 = vmatpush.msra.mxu0 %v7994
    %v7996 = vand.u32 %v7789, 4294901760
    %7997 = vmatmul.f32.gmra.mxu0 %v7996
    %v7998 = vpop.f32.mrf.mxu0
    %v7999 = vadd.f32 %v7973, %v7998
    %8000 = vdwg.mxu0
    %8001 = vmatpush.msra.mxu0 0.0
    %8002 = vmatpush.msra.mxu0 0.0
    %8003 = vmatpush.msra.mxu0 0.0
    %8004 = vmatpush.msra.mxu0 0.0
    %8005 = vmatpush.msra.mxu0 0.0
    %8006 = vmatpush.msra.mxu0 0.0
    %8007 = vmatpush.msra.mxu0 0.0
    %8008 = vmatpush.msra.mxu0 0.0
    %8009 = vmatpush.msra.mxu0 0.0
    %8010 = vmatpush.msra.mxu0 0.0
    %8011 = vmatpush.msra.mxu0 0.0
    %v8012 = vand.u32 %v7795, 4294901760
    %8013 = vmatpush.msra.mxu0 %v8012
    %v8014 = vand.u32 %v7777, 4294901760
    %8015 = vmatpush.msra.mxu0 %v8014
    %v8016 = vand.u32 %v7773, 4294901760
    %8017 = vmatpush.msra.mxu0 %v8016
    %v8018 = vand.u32 %v7769, 4294901760
    %8019 = vmatpush.msra.mxu0 %v8018
    %v8020 = vand.u32 %v7765, 4294901760
    %8021 = vmatpush.msra.mxu0 %v8020
    %v8022 = vand.u32 %v7789, 4294901760
    %v8023 = vsub.f32 %v7789, %v8022
    %v8024 = vand.u32 %v8023, 4294901760
    %v8025 = vsub.f32 %v8023, %v8024
    %v8026 = vand.u32 %v8025, 4294901760
    %8027 = vmatmul.f32.gmra.mxu0 %v8026
    %v8028 = vpop.f32.mrf.mxu0
    %v8029 = vadd.f32 %v7785, %v8028
    %8030 = vdwg.mxu0
    %8031 = vmatpush.msra.mxu0 0.0
    %8032 = vmatpush.msra.mxu0 0.0
    %8033 = vmatpush.msra.mxu0 0.0
    %8034 = vmatpush.msra.mxu0 0.0
    %8035 = vmatpush.msra.mxu0 0.0
    %8036 = vmatpush.msra.mxu0 0.0
    %8037 = vmatpush.msra.mxu0 0.0
    %8038 = vmatpush.msra.mxu0 0.0
    %8039 = vmatpush.msra.mxu0 0.0
    %8040 = vmatpush.msra.mxu0 0.0
    %8041 = vmatpush.msra.mxu0 0.0
    %v8042 = vand.u32 %v7795, 4294901760
    %v8043 = vsub.f32 %v7795, %v8042
    %v8044 = vand.u32 %v8043, 4294901760
    %v8045 = vsub.f32 %v8043, %v8044
    %v8046 = vand.u32 %v8045, 4294901760
    %8047 = vmatpush.msra.mxu0 %v8046
    %v8048 = vand.u32 %v7777, 4294901760
    %v8049 = vsub.f32 %v7777, %v8048
    %v8050 = vand.u32 %v8049, 4294901760
    %v8051 = vsub.f32 %v8049, %v8050
    %v8052 = vand.u32 %v8051, 4294901760
    %8053 = vmatpush.msra.mxu0 %v8052
    %v8054 = vand.u32 %v7773, 4294901760
    %v8055 = vsub.f32 %v7773, %v8054
    %v8056 = vand.u32 %v8055, 4294901760
    %v8057 = vsub.f32 %v8055, %v8056
    %v8058 = vand.u32 %v8057, 4294901760
    %8059 = vmatpush.msra.mxu0 %v8058
    %v8060 = vand.u32 %v7769, 4294901760
    %v8061 = vsub.f32 %v7769, %v8060
    %v8062 = vand.u32 %v8061, 4294901760
    %v8063 = vsub.f32 %v8061, %v8062
    %v8064 = vand.u32 %v8063, 4294901760
    %8065 = vmatpush.msra.mxu0 %v8064
    %v8066 = vand.u32 %v7765, 4294901760
    %v8067 = vsub.f32 %v7765, %v8066
    %v8068 = vand.u32 %v8067, 4294901760
    %v8069 = vsub.f32 %v8067, %v8068
    %v8070 = vand.u32 %v8069, 4294901760
    %8071 = vmatpush.msra.mxu0 %v8070
    %v8072 = vand.u32 %v7789, 4294901760
    %8073 = vmatmul.f32.gmra.mxu0 %v8072
    %v8074 = vpop.f32.mrf.mxu0
    %v8075 = vadd.f32 %v8029, %v8074
    %8076 = vdwg.mxu0
    %8077 = vmatpush.msra.mxu0 0.0
    %8078 = vmatpush.msra.mxu0 0.0
    %8079 = vmatpush.msra.mxu0 0.0
    %8080 = vmatpush.msra.mxu0 0.0
    %8081 = vmatpush.msra.mxu0 0.0
    %8082 = vmatpush.msra.mxu0 0.0
    %8083 = vmatpush.msra.mxu0 0.0
    %8084 = vmatpush.msra.mxu0 0.0
    %8085 = vmatpush.msra.mxu0 0.0
    %8086 = vmatpush.msra.mxu0 0.0
    %8087 = vmatpush.msra.mxu0 0.0
    %v8088 = vand.u32 %v7795, 4294901760
    %v8089 = vsub.f32 %v7795, %v8088
    %8090 = vmatpush.msra.mxu0 %v8089
    %v8091 = vand.u32 %v7777, 4294901760
    %v8092 = vsub.f32 %v7777, %v8091
    %8093 = vmatpush.msra.mxu0 %v8092
    %v8094 = vand.u32 %v7773, 4294901760
    %v8095 = vsub.f32 %v7773, %v8094
    %8096 = vmatpush.msra.mxu0 %v8095
    %v8097 = vand.u32 %v7769, 4294901760
    %v8098 = vsub.f32 %v7769, %v8097
    %8099 = vmatpush.msra.mxu0 %v8098
    %v8100 = vand.u32 %v7765, 4294901760
    %v8101 = vsub.f32 %v7765, %v8100
    %8102 = vmatpush.msra.mxu0 %v8101
    %v8103 = vand.u32 %v7789, 4294901760
    %v8104 = vsub.f32 %v7789, %v8103
    %8105 = vmatmul.f32.gmra.mxu0 %v8104
    %v8106 = vpop.f32.mrf.mxu0
    %v8107 = vadd.f32 %v8075, %v8106
    %8108 = vdwg.mxu0
    %8109 = vmatpush.msra.mxu0 0.0
    %8110 = vmatpush.msra.mxu0 0.0
    %8111 = vmatpush.msra.mxu0 0.0
    %8112 = vmatpush.msra.mxu0 0.0
    %8113 = vmatpush.msra.mxu0 0.0
    %8114 = vmatpush.msra.mxu0 0.0
    %8115 = vmatpush.msra.mxu0 0.0
    %8116 = vmatpush.msra.mxu0 0.0
    %8117 = vmatpush.msra.mxu0 0.0
    %8118 = vmatpush.msra.mxu0 0.0
    %8119 = vmatpush.msra.mxu0 0.0
    %v8120 = vand.u32 %v7795, 4294901760
    %8121 = vmatpush.msra.mxu0 %v8120
    %v8122 = vand.u32 %v7777, 4294901760
    %8123 = vmatpush.msra.mxu0 %v8122
    %v8124 = vand.u32 %v7773, 4294901760
    %8125 = vmatpush.msra.mxu0 %v8124
    %v8126 = vand.u32 %v7769, 4294901760
    %8127 = vmatpush.msra.mxu0 %v8126
    %v8128 = vand.u32 %v7765, 4294901760
    %8129 = vmatpush.msra.mxu0 %v8128
    %v8130 = vand.u32 %v7789, 4294901760
    %v8131 = vsub.f32 %v7789, %v8130
    %v8132 = vand.u32 %v8131, 4294901760
    %8133 = vmatmul.f32.gmra.mxu0 %v8132
    %v8134 = vpop.f32.mrf.mxu0
    %v8135 = vadd.f32 %v8107, %v8134
    %8136 = vdwg.mxu0
    %8137 = vmatpush.msra.mxu0 0.0
    %8138 = vmatpush.msra.mxu0 0.0
    %8139 = vmatpush.msra.mxu0 0.0
    %8140 = vmatpush.msra.mxu0 0.0
    %8141 = vmatpush.msra.mxu0 0.0
    %8142 = vmatpush.msra.mxu0 0.0
    %8143 = vmatpush.msra.mxu0 0.0
    %8144 = vmatpush.msra.mxu0 0.0
    %8145 = vmatpush.msra.mxu0 0.0
    %8146 = vmatpush.msra.mxu0 0.0
    %8147 = vmatpush.msra.mxu0 0.0
    %v8148 = vand.u32 %v7795, 4294901760
    %v8149 = vsub.f32 %v7795, %v8148
    %v8150 = vand.u32 %v8149, 4294901760
    %8151 = vmatpush.msra.mxu0 %v8150
    %v8152 = vand.u32 %v7777, 4294901760
    %v8153 = vsub.f32 %v7777, %v8152
    %v8154 = vand.u32 %v8153, 4294901760
    %8155 = vmatpush.msra.mxu0 %v8154
    %v8156 = vand.u32 %v7773, 4294901760
    %v8157 = vsub.f32 %v7773, %v8156
    %v8158 = vand.u32 %v8157, 4294901760
    %8159 = vmatpush.msra.mxu0 %v8158
    %v8160 = vand.u32 %v7769, 4294901760
    %v8161 = vsub.f32 %v7769, %v8160
    %v8162 = vand.u32 %v8161, 4294901760
    %8163 = vmatpush.msra.mxu0 %v8162
    %v8164 = vand.u32 %v7765, 4294901760
    %v8165 = vsub.f32 %v7765, %v8164
    %v8166 = vand.u32 %v8165, 4294901760
    %8167 = vmatpush.msra.mxu0 %v8166
    %v8168 = vand.u32 %v7789, 4294901760
    %8169 = vmatmul.f32.gmra.mxu0 %v8168
    %v8170 = vpop.f32.mrf.mxu0
    %v8171 = vadd.f32 %v8135, %v8170
    %8172 = vdwg.mxu0
    %8173 = vmatpush.msra.mxu0 0.0
    %8174 = vmatpush.msra.mxu0 0.0
    %8175 = vmatpush.msra.mxu0 0.0
    %8176 = vmatpush.msra.mxu0 0.0
    %8177 = vmatpush.msra.mxu0 0.0
    %8178 = vmatpush.msra.mxu0 0.0
    %8179 = vmatpush.msra.mxu0 0.0
    %8180 = vmatpush.msra.mxu0 0.0
    %8181 = vmatpush.msra.mxu0 0.0
    %8182 = vmatpush.msra.mxu0 0.0
    %8183 = vmatpush.msra.mxu0 0.0
    %v8184 = vand.u32 %v7795, 4294901760
    %8185 = vmatpush.msra.mxu0 %v8184
    %v8186 = vand.u32 %v7777, 4294901760
    %8187 = vmatpush.msra.mxu0 %v8186
    %v8188 = vand.u32 %v7773, 4294901760
    %8189 = vmatpush.msra.mxu0 %v8188
    %v8190 = vand.u32 %v7769, 4294901760
    %8191 = vmatpush.msra.mxu0 %v8190
    %v8192 = vand.u32 %v7765, 4294901760
    %8193 = vmatpush.msra.mxu0 %v8192
    %v8194 = vand.u32 %v7789, 4294901760
    %8195 = vmatmul.f32.gmra.mxu0 %v8194
    %v8196 = vpop.f32.mrf.mxu0
    %v8197 = vadd.f32 %v8171, %v8196
    %8198 = vdwg.mxu0
    %8199 = vmatpush.msra.mxu0 0.0
    %8200 = vmatpush.msra.mxu0 0.0
    %8201 = vmatpush.msra.mxu0 0.0
    %8202 = vmatpush.msra.mxu0 0.0
    %8203 = vmatpush.msra.mxu0 0.0
    %8204 = vmatpush.msra.mxu0 0.0
    %8205 = vmatpush.msra.mxu0 0.0
    %8206 = vmatpush.msra.mxu0 0.0
    %8207 = vmatpush.msra.mxu0 0.0
    %8208 = vmatpush.msra.mxu0 0.0
    %8209 = vmatpush.msra.mxu0 0.0
    %v8210 = vand.u32 %v7798, 4294901760
    %8211 = vmatpush.msra.mxu0 %v8210
    %v8212 = vand.u32 %v7778, 4294901760
    %8213 = vmatpush.msra.mxu0 %v8212
    %v8214 = vand.u32 %v7774, 4294901760
    %8215 = vmatpush.msra.mxu0 %v8214
    %v8216 = vand.u32 %v7770, 4294901760
    %8217 = vmatpush.msra.mxu0 %v8216
    %v8218 = vand.u32 %v7766, 4294901760
    %8219 = vmatpush.msra.mxu0 %v8218
    %v8220 = vand.u32 %v7789, 4294901760
    %v8221 = vsub.f32 %v7789, %v8220
    %v8222 = vand.u32 %v8221, 4294901760
    %v8223 = vsub.f32 %v8221, %v8222
    %v8224 = vand.u32 %v8223, 4294901760
    %8225 = vmatmul.f32.gmra.mxu0 %v8224
    %v8226 = vpop.f32.mrf.mxu0
    %v8227 = vadd.f32 %v7785, %v8226
    %8228 = vdwg.mxu0
    %8229 = vmatpush.msra.mxu0 0.0
    %8230 = vmatpush.msra.mxu0 0.0
    %8231 = vmatpush.msra.mxu0 0.0
    %8232 = vmatpush.msra.mxu0 0.0
    %8233 = vmatpush.msra.mxu0 0.0
    %8234 = vmatpush.msra.mxu0 0.0
    %8235 = vmatpush.msra.mxu0 0.0
    %8236 = vmatpush.msra.mxu0 0.0
    %8237 = vmatpush.msra.mxu0 0.0
    %8238 = vmatpush.msra.mxu0 0.0
    %8239 = vmatpush.msra.mxu0 0.0
    %v8240 = vand.u32 %v7798, 4294901760
    %v8241 = vsub.f32 %v7798, %v8240
    %v8242 = vand.u32 %v8241, 4294901760
    %v8243 = vsub.f32 %v8241, %v8242
    %v8244 = vand.u32 %v8243, 4294901760
    %8245 = vmatpush.msra.mxu0 %v8244
    %v8246 = vand.u32 %v7778, 4294901760
    %v8247 = vsub.f32 %v7778, %v8246
    %v8248 = vand.u32 %v8247, 4294901760
    %v8249 = vsub.f32 %v8247, %v8248
    %v8250 = vand.u32 %v8249, 4294901760
    %8251 = vmatpush.msra.mxu0 %v8250
    %v8252 = vand.u32 %v7774, 4294901760
    %v8253 = vsub.f32 %v7774, %v8252
    %v8254 = vand.u32 %v8253, 4294901760
    %v8255 = vsub.f32 %v8253, %v8254
    %v8256 = vand.u32 %v8255, 4294901760
    %8257 = vmatpush.msra.mxu0 %v8256
    %v8258 = vand.u32 %v7770, 4294901760
    %v8259 = vsub.f32 %v7770, %v8258
    %v8260 = vand.u32 %v8259, 4294901760
    %v8261 = vsub.f32 %v8259, %v8260
    %v8262 = vand.u32 %v8261, 4294901760
    %8263 = vmatpush.msra.mxu0 %v8262
    %v8264 = vand.u32 %v7766, 4294901760
    %v8265 = vsub.f32 %v7766, %v8264
    %v8266 = vand.u32 %v8265, 4294901760
    %v8267 = vsub.f32 %v8265, %v8266
    %v8268 = vand.u32 %v8267, 4294901760
    %8269 = vmatpush.msra.mxu0 %v8268
    %v8270 = vand.u32 %v7789, 4294901760
    %8271 = vmatmul.f32.gmra.mxu0 %v8270
    %v8272 = vpop.f32.mrf.mxu0
    %v8273 = vadd.f32 %v8227, %v8272
    %8274 = vdwg.mxu0
    %8275 = vmatpush.msra.mxu0 0.0
    %8276 = vmatpush.msra.mxu0 0.0
    %8277 = vmatpush.msra.mxu0 0.0
    %8278 = vmatpush.msra.mxu0 0.0
    %8279 = vmatpush.msra.mxu0 0.0
    %8280 = vmatpush.msra.mxu0 0.0
    %8281 = vmatpush.msra.mxu0 0.0
    %8282 = vmatpush.msra.mxu0 0.0
    %8283 = vmatpush.msra.mxu0 0.0
    %8284 = vmatpush.msra.mxu0 0.0
    %8285 = vmatpush.msra.mxu0 0.0
    %v8286 = vand.u32 %v7798, 4294901760
    %v8287 = vsub.f32 %v7798, %v8286
    %8288 = vmatpush.msra.mxu0 %v8287
    %v8289 = vand.u32 %v7778, 4294901760
    %v8290 = vsub.f32 %v7778, %v8289
    %8291 = vmatpush.msra.mxu0 %v8290
    %v8292 = vand.u32 %v7774, 4294901760
    %v8293 = vsub.f32 %v7774, %v8292
    %8294 = vmatpush.msra.mxu0 %v8293
    %v8295 = vand.u32 %v7770, 4294901760
    %v8296 = vsub.f32 %v7770, %v8295
    %8297 = vmatpush.msra.mxu0 %v8296
    %v8298 = vand.u32 %v7766, 4294901760
    %v8299 = vsub.f32 %v7766, %v8298
    %8300 = vmatpush.msra.mxu0 %v8299
    %v8301 = vand.u32 %v7789, 4294901760
    %v8302 = vsub.f32 %v7789, %v8301
    %8303 = vmatmul.f32.gmra.mxu0 %v8302
    %v8304 = vpop.f32.mrf.mxu0
    %v8305 = vadd.f32 %v8273, %v8304
    %8306 = vdwg.mxu0
    %8307 = vmatpush.msra.mxu0 0.0
    %8308 = vmatpush.msra.mxu0 0.0
    %8309 = vmatpush.msra.mxu0 0.0
    %8310 = vmatpush.msra.mxu0 0.0
    %8311 = vmatpush.msra.mxu0 0.0
    %8312 = vmatpush.msra.mxu0 0.0
    %8313 = vmatpush.msra.mxu0 0.0
    %8314 = vmatpush.msra.mxu0 0.0
    %8315 = vmatpush.msra.mxu0 0.0
    %8316 = vmatpush.msra.mxu0 0.0
    %8317 = vmatpush.msra.mxu0 0.0
    %v8318 = vand.u32 %v7798, 4294901760
    %8319 = vmatpush.msra.mxu0 %v8318
    %v8320 = vand.u32 %v7778, 4294901760
    %8321 = vmatpush.msra.mxu0 %v8320
    %v8322 = vand.u32 %v7774, 4294901760
    %8323 = vmatpush.msra.mxu0 %v8322
    %v8324 = vand.u32 %v7770, 4294901760
    %8325 = vmatpush.msra.mxu0 %v8324
    %v8326 = vand.u32 %v7766, 4294901760
    %8327 = vmatpush.msra.mxu0 %v8326
    %v8328 = vand.u32 %v7789, 4294901760
    %v8329 = vsub.f32 %v7789, %v8328
    %v8330 = vand.u32 %v8329, 4294901760
    %8331 = vmatmul.f32.gmra.mxu0 %v8330
    %v8332 = vpop.f32.mrf.mxu0
    %v8333 = vadd.f32 %v8305, %v8332
    %8334 = vdwg.mxu0
    %8335 = vmatpush.msra.mxu0 0.0
    %8336 = vmatpush.msra.mxu0 0.0
    %8337 = vmatpush.msra.mxu0 0.0
    %8338 = vmatpush.msra.mxu0 0.0
    %8339 = vmatpush.msra.mxu0 0.0
    %8340 = vmatpush.msra.mxu0 0.0
    %8341 = vmatpush.msra.mxu0 0.0
    %8342 = vmatpush.msra.mxu0 0.0
    %8343 = vmatpush.msra.mxu0 0.0
    %8344 = vmatpush.msra.mxu0 0.0
    %8345 = vmatpush.msra.mxu0 0.0
    %v8346 = vand.u32 %v7798, 4294901760
    %v8347 = vsub.f32 %v7798, %v8346
    %v8348 = vand.u32 %v8347, 4294901760
    %8349 = vmatpush.msra.mxu0 %v8348
    %v8350 = vand.u32 %v7778, 4294901760
    %v8351 = vsub.f32 %v7778, %v8350
    %v8352 = vand.u32 %v8351, 4294901760
    %8353 = vmatpush.msra.mxu0 %v8352
    %v8354 = vand.u32 %v7774, 4294901760
    %v8355 = vsub.f32 %v7774, %v8354
    %v8356 = vand.u32 %v8355, 4294901760
    %8357 = vmatpush.msra.mxu0 %v8356
    %v8358 = vand.u32 %v7770, 4294901760
    %v8359 = vsub.f32 %v7770, %v8358
    %v8360 = vand.u32 %v8359, 4294901760
    %8361 = vmatpush.msra.mxu0 %v8360
    %v8362 = vand.u32 %v7766, 4294901760
    %v8363 = vsub.f32 %v7766, %v8362
    %v8364 = vand.u32 %v8363, 4294901760
    %8365 = vmatpush.msra.mxu0 %v8364
    %v8366 = vand.u32 %v7789, 4294901760
    %8367 = vmatmul.f32.gmra.mxu0 %v8366
    %v8368 = vpop.f32.mrf.mxu0
    %v8369 = vadd.f32 %v8333, %v8368
    %8370 = vdwg.mxu0
    %8371 = vmatpush.msra.mxu0 0.0
    %8372 = vmatpush.msra.mxu0 0.0
    %8373 = vmatpush.msra.mxu0 0.0
    %8374 = vmatpush.msra.mxu0 0.0
    %8375 = vmatpush.msra.mxu0 0.0
    %8376 = vmatpush.msra.mxu0 0.0
    %8377 = vmatpush.msra.mxu0 0.0
    %8378 = vmatpush.msra.mxu0 0.0
    %8379 = vmatpush.msra.mxu0 0.0
    %8380 = vmatpush.msra.mxu0 0.0
    %8381 = vmatpush.msra.mxu0 0.0
    %v8382 = vand.u32 %v7798, 4294901760
    %8383 = vmatpush.msra.mxu0 %v8382
    %v8384 = vand.u32 %v7778, 4294901760
    %8385 = vmatpush.msra.mxu0 %v8384
    %v8386 = vand.u32 %v7774, 4294901760
    %8387 = vmatpush.msra.mxu0 %v8386
    %v8388 = vand.u32 %v7770, 4294901760
    %8389 = vmatpush.msra.mxu0 %v8388
    %v8390 = vand.u32 %v7766, 4294901760
    %8391 = vmatpush.msra.mxu0 %v8390
    %v8392 = vand.u32 %v7789, 4294901760
    %8393 = vmatmul.f32.gmra.mxu0 %v8392
    %v8394 = vpop.f32.mrf.mxu0
    %v8395 = vadd.f32 %v8369, %v8394
    %8396 = vdwg.mxu0
    %8397 = vmatpush.msra.mxu0 0.0
    %8398 = vmatpush.msra.mxu0 0.0
    %8399 = vmatpush.msra.mxu0 0.0
    %8400 = vmatpush.msra.mxu0 0.0
    %8401 = vmatpush.msra.mxu0 0.0
    %8402 = vmatpush.msra.mxu0 0.0
    %8403 = vmatpush.msra.mxu0 0.0
    %8404 = vmatpush.msra.mxu0 0.0
    %8405 = vmatpush.msra.mxu0 0.0
    %8406 = vmatpush.msra.mxu0 0.0
    %8407 = vmatpush.msra.mxu0 0.0
    %v8408 = vand.u32 %v7801, 4294901760
    %8409 = vmatpush.msra.mxu0 %v8408
    %v8410 = vand.u32 %v7779, 4294901760
    %8411 = vmatpush.msra.mxu0 %v8410
    %v8412 = vand.u32 %v7775, 4294901760
    %8413 = vmatpush.msra.mxu0 %v8412
    %v8414 = vand.u32 %v7771, 4294901760
    %8415 = vmatpush.msra.mxu0 %v8414
    %v8416 = vand.u32 %v7767, 4294901760
    %8417 = vmatpush.msra.mxu0 %v8416
    %v8418 = vand.u32 %v7789, 4294901760
    %v8419 = vsub.f32 %v7789, %v8418
    %v8420 = vand.u32 %v8419, 4294901760
    %v8421 = vsub.f32 %v8419, %v8420
    %v8422 = vand.u32 %v8421, 4294901760
    %8423 = vmatmul.f32.gmra.mxu0 %v8422
    %v8424 = vpop.f32.mrf.mxu0
    %v8425 = vadd.f32 %v7785, %v8424
    %8426 = vdwg.mxu0
    %8427 = vmatpush.msra.mxu0 0.0
    %8428 = vmatpush.msra.mxu0 0.0
    %8429 = vmatpush.msra.mxu0 0.0
    %8430 = vmatpush.msra.mxu0 0.0
    %8431 = vmatpush.msra.mxu0 0.0
    %8432 = vmatpush.msra.mxu0 0.0
    %8433 = vmatpush.msra.mxu0 0.0
    %8434 = vmatpush.msra.mxu0 0.0
    %8435 = vmatpush.msra.mxu0 0.0
    %8436 = vmatpush.msra.mxu0 0.0
    %8437 = vmatpush.msra.mxu0 0.0
    %v8438 = vand.u32 %v7801, 4294901760
    %v8439 = vsub.f32 %v7801, %v8438
    %v8440 = vand.u32 %v8439, 4294901760
    %v8441 = vsub.f32 %v8439, %v8440
    %v8442 = vand.u32 %v8441, 4294901760
    %8443 = vmatpush.msra.mxu0 %v8442
    %v8444 = vand.u32 %v7779, 4294901760
    %v8445 = vsub.f32 %v7779, %v8444
    %v8446 = vand.u32 %v8445, 4294901760
    %v8447 = vsub.f32 %v8445, %v8446
    %v8448 = vand.u32 %v8447, 4294901760
    %8449 = vmatpush.msra.mxu0 %v8448
    %v8450 = vand.u32 %v7775, 4294901760
    %v8451 = vsub.f32 %v7775, %v8450
    %v8452 = vand.u32 %v8451, 4294901760
    %v8453 = vsub.f32 %v8451, %v8452
    %v8454 = vand.u32 %v8453, 4294901760
    %8455 = vmatpush.msra.mxu0 %v8454
    %v8456 = vand.u32 %v7771, 4294901760
    %v8457 = vsub.f32 %v7771, %v8456
    %v8458 = vand.u32 %v8457, 4294901760
    %v8459 = vsub.f32 %v8457, %v8458
    %v8460 = vand.u32 %v8459, 4294901760
    %8461 = vmatpush.msra.mxu0 %v8460
    %v8462 = vand.u32 %v7767, 4294901760
    %v8463 = vsub.f32 %v7767, %v8462
    %v8464 = vand.u32 %v8463, 4294901760
    %v8465 = vsub.f32 %v8463, %v8464
    %v8466 = vand.u32 %v8465, 4294901760
    %8467 = vmatpush.msra.mxu0 %v8466
    %v8468 = vand.u32 %v7789, 4294901760
    %8469 = vmatmul.f32.gmra.mxu0 %v8468
    %v8470 = vpop.f32.mrf.mxu0
    %v8471 = vadd.f32 %v8425, %v8470
    %8472 = vdwg.mxu0
    %8473 = vmatpush.msra.mxu0 0.0
    %8474 = vmatpush.msra.mxu0 0.0
    %8475 = vmatpush.msra.mxu0 0.0
    %8476 = vmatpush.msra.mxu0 0.0
    %8477 = vmatpush.msra.mxu0 0.0
    %8478 = vmatpush.msra.mxu0 0.0
    %8479 = vmatpush.msra.mxu0 0.0
    %8480 = vmatpush.msra.mxu0 0.0
    %8481 = vmatpush.msra.mxu0 0.0
    %8482 = vmatpush.msra.mxu0 0.0
    %8483 = vmatpush.msra.mxu0 0.0
    %v8484 = vand.u32 %v7801, 4294901760
    %v8485 = vsub.f32 %v7801, %v8484
    %8486 = vmatpush.msra.mxu0 %v8485
    %v8487 = vand.u32 %v7779, 4294901760
    %v8488 = vsub.f32 %v7779, %v8487
    %8489 = vmatpush.msra.mxu0 %v8488
    %v8490 = vand.u32 %v7775, 4294901760
    %v8491 = vsub.f32 %v7775, %v8490
    %8492 = vmatpush.msra.mxu0 %v8491
    %v8493 = vand.u32 %v7771, 4294901760
    %v8494 = vsub.f32 %v7771, %v8493
    %8495 = vmatpush.msra.mxu0 %v8494
    %v8496 = vand.u32 %v7767, 4294901760
    %v8497 = vsub.f32 %v7767, %v8496
    %8498 = vmatpush.msra.mxu0 %v8497
    %v8499 = vand.u32 %v7789, 4294901760
    %v8500 = vsub.f32 %v7789, %v8499
    %8501 = vmatmul.f32.gmra.mxu0 %v8500
    %v8502 = vpop.f32.mrf.mxu0
    %v8503 = vadd.f32 %v8471, %v8502
    %8504 = vdwg.mxu0
    %8505 = vmatpush.msra.mxu0 0.0
    %8506 = vmatpush.msra.mxu0 0.0
    %8507 = vmatpush.msra.mxu0 0.0
    %8508 = vmatpush.msra.mxu0 0.0
    %8509 = vmatpush.msra.mxu0 0.0
    %8510 = vmatpush.msra.mxu0 0.0
    %8511 = vmatpush.msra.mxu0 0.0
    %8512 = vmatpush.msra.mxu0 0.0
    %8513 = vmatpush.msra.mxu0 0.0
    %8514 = vmatpush.msra.mxu0 0.0
    %8515 = vmatpush.msra.mxu0 0.0
    %v8516 = vand.u32 %v7801, 4294901760
    %8517 = vmatpush.msra.mxu0 %v8516
    %v8518 = vand.u32 %v7779, 4294901760
    %8519 = vmatpush.msra.mxu0 %v8518
    %v8520 = vand.u32 %v7775, 4294901760
    %8521 = vmatpush.msra.mxu0 %v8520
    %v8522 = vand.u32 %v7771, 4294901760
    %8523 = vmatpush.msra.mxu0 %v8522
    %v8524 = vand.u32 %v7767, 4294901760
    %8525 = vmatpush.msra.mxu0 %v8524
    %v8526 = vand.u32 %v7789, 4294901760
    %v8527 = vsub.f32 %v7789, %v8526
    %v8528 = vand.u32 %v8527, 4294901760
    %8529 = vmatmul.f32.gmra.mxu0 %v8528
    %v8530 = vpop.f32.mrf.mxu0
    %v8531 = vadd.f32 %v8503, %v8530
    %8532 = vdwg.mxu0
    %8533 = vmatpush.msra.mxu0 0.0
    %8534 = vmatpush.msra.mxu0 0.0
    %8535 = vmatpush.msra.mxu0 0.0
    %8536 = vmatpush.msra.mxu0 0.0
    %8537 = vmatpush.msra.mxu0 0.0
    %8538 = vmatpush.msra.mxu0 0.0
    %8539 = vmatpush.msra.mxu0 0.0
    %8540 = vmatpush.msra.mxu0 0.0
    %8541 = vmatpush.msra.mxu0 0.0
    %8542 = vmatpush.msra.mxu0 0.0
    %8543 = vmatpush.msra.mxu0 0.0
    %v8544 = vand.u32 %v7801, 4294901760
    %v8545 = vsub.f32 %v7801, %v8544
    %v8546 = vand.u32 %v8545, 4294901760
    %8547 = vmatpush.msra.mxu0 %v8546
    %v8548 = vand.u32 %v7779, 4294901760
    %v8549 = vsub.f32 %v7779, %v8548
    %v8550 = vand.u32 %v8549, 4294901760
    %8551 = vmatpush.msra.mxu0 %v8550
    %v8552 = vand.u32 %v7775, 4294901760
    %v8553 = vsub.f32 %v7775, %v8552
    %v8554 = vand.u32 %v8553, 4294901760
    %8555 = vmatpush.msra.mxu0 %v8554
    %v8556 = vand.u32 %v7771, 4294901760
    %v8557 = vsub.f32 %v7771, %v8556
    %v8558 = vand.u32 %v8557, 4294901760
    %8559 = vmatpush.msra.mxu0 %v8558
    %v8560 = vand.u32 %v7767, 4294901760
    %v8561 = vsub.f32 %v7767, %v8560
    %v8562 = vand.u32 %v8561, 4294901760
    %8563 = vmatpush.msra.mxu0 %v8562
    %v8564 = vand.u32 %v7789, 4294901760
    %8565 = vmatmul.f32.gmra.mxu0 %v8564
    %v8566 = vpop.f32.mrf.mxu0
    %v8567 = vadd.f32 %v8531, %v8566
    %8568 = vdwg.mxu0
    %8569 = vmatpush.msra.mxu0 0.0
    %8570 = vmatpush.msra.mxu0 0.0
    %8571 = vmatpush.msra.mxu0 0.0
    %8572 = vmatpush.msra.mxu0 0.0
    %8573 = vmatpush.msra.mxu0 0.0
    %8574 = vmatpush.msra.mxu0 0.0
    %8575 = vmatpush.msra.mxu0 0.0
    %8576 = vmatpush.msra.mxu0 0.0
    %8577 = vmatpush.msra.mxu0 0.0
    %8578 = vmatpush.msra.mxu0 0.0
    %8579 = vmatpush.msra.mxu0 0.0
    %v8580 = vand.u32 %v7801, 4294901760
    %8581 = vmatpush.msra.mxu0 %v8580
    %v8582 = vand.u32 %v7779, 4294901760
    %8583 = vmatpush.msra.mxu0 %v8582
    %v8584 = vand.u32 %v7775, 4294901760
    %8585 = vmatpush.msra.mxu0 %v8584
    %v8586 = vand.u32 %v7771, 4294901760
    %8587 = vmatpush.msra.mxu0 %v8586
    %v8588 = vand.u32 %v7767, 4294901760
    %8589 = vmatpush.msra.mxu0 %v8588
    %v8590 = vand.u32 %v7789, 4294901760
    %8591 = vmatmul.f32.gmra.mxu0 %v8590
    %v8592 = vpop.f32.mrf.mxu0
    %v8593 = vadd.f32 %v8567, %v8592
    %8594 = vdwg.mxu0
    %v8595 = vmax.f32 %v7999, 0.0
    %v8596 = vmax.f32 %v8197, 0.0
    %v8597 = vmax.f32 %v8395, 0.0
    %v8598 = vmax.f32 %v8593, 0.0
    %v8603 = vrot.slane %v8596, 4
    %v8604 = vrot.slane %v8598, 4
    %v8605 = vsel %vm6398, %v8595, %v8603
    %v8606 = vsel %vm6398, %v8597, %v8604
    %8609 = vst [vmem:[%s10] sm:$0xff] %v8605
    %8610 = vst [vmem:[%s10 + $0x8] sm:$0xff] %v8606
    // Predicated region
    $region46: #{unet_up_block_forward.1} parent=1 // pred_check
      _
    $region47: #{unet_up_block_forward.1} parent=1 // pred_check_branch
      %8612 = sbr.rel (0) target = $region49
    $region48: #{unet_up_block_forward.1} parent=1 // pred_region
      _
    $region49: #{unet_up_block_forward.1} parent=1 // pred_fallthru
      _
    // Predicated region
    $region50: #{unet_up_block_forward.1} parent=1 // pred_check
      _
    $region51: #{unet_up_block_forward.1} parent=1 // pred_check_branch
      %8614 = sbr.rel (0) target = $region53
    $region52: #{unet_up_block_forward.1} parent=1 // pred_region
      _
    $region53: #{unet_up_block_forward.1} parent=1 // pred_fallthru
      _
    %8615 = vsyncpa [#allocation3], 1

</llo_original>
